<compile_context>
chip_gen: v6e
topology: v6e:2x2x1
jax: 0.10.0
libtpu: 0.0.40
codegen_flags: <defaults>
</compile_context>

<pallas_src>
import functools

import jax
import jax.numpy as jnp
import numpy as np
from jax.experimental import pallas as pl
from jax.experimental.pallas import tpu as pltpu

# ----------------------------- tiny SiglipVisionConfig -----------------------------
BATCH = 2
CHANNELS = 3
IMAGE = 16
PATCH = 4
HIDDEN = 64          # config.hidden_size
HEADS = 4            # config.num_attention_heads
HEAD_DIM = HIDDEN // HEADS
INTER = 128          # config.intermediate_size
LAYERS = 2           # config.num_hidden_layers
EPS = 1e-6           # config.layer_norm_eps
NPATCH = (IMAGE // PATCH) ** 2          # num_positions / sequence length
PATCH_DIM = CHANNELS * PATCH * PATCH    # flattened conv kernel size (48)
K_PAD = 64                              # patch-embed K padded (bf16 needs mult. of 16)


# ----------------------------- in-kernel helpers -----------------------------
def _ln(x, w, b, eps):
    # PyTorch nn.LayerNorm semantics (biased variance over last axis), f32 math.
    mu = jnp.mean(x, axis=-1, keepdims=True)
    xc = x - mu
    var = jnp.mean(xc * xc, axis=-1, keepdims=True)
    return xc * jax.lax.rsqrt(var + eps) * w + b


# ----------------------------- fused Pallas kernel -----------------------------
def _siglip_fwd_kernel(patch_ref, pw_ref, pos_ref, pb_ref,
                       ln1w_ref, ln1b_ref, qkvw_ref, qkvb_ref,
                       ow_ref, ob_ref, ln2w_ref, ln2b_ref,
                       f1w_ref, f1b_ref, f2w_ref, f2b_ref,
                       postw_ref, postb_ref,
                       o_ref, *, seq, num_heads, num_layers, eps):
    """One grid step == one image: (S, D) activations stay VMEM/vreg resident."""
    D = o_ref.shape[-1]
    hd = D // num_heads

    # ---- patch embedding: (S, Kpad) @ (Kpad, D) + conv bias + position table ----
    x = (jnp.dot(patch_ref[0], pw_ref[...], preferred_element_type=jnp.float32)
         + pos_ref[...] + pb_ref[...])                                  # (S, D) f32

    # ---- encoder layers (static unroll; weights stacked on leading L axis) ----
    # TODO(synk): for real SigLIP sizes (27 layers x ~30MB bf16 weights) turn this
    # static unroll into an "arbitrary" layer grid axis that streams one layer's
    # weights per step (BlockSpec (1, ...), index_map lambda ..., l: (l, 0, 0)),
    # keep x in a persistent VMEM scratch, and budget vmem_limit_bytes per
    # generation (64 MiB on v7x => split fc1/fc2 along INTER).
    for l in range(num_layers):
        # --- self-attention (softmax scale pre-folded into Q weight columns) ---
        h = _ln(x, ln1w_ref[l], ln1b_ref[l], eps)
        qkv = jnp.dot(h.astype(jnp.bfloat16), qkvw_ref[l],
                      preferred_element_type=jnp.float32) + qkvb_ref[l]  # (S, 3D)

        # slice q/k/v once, batched multi-head einsums (no per-head loop, no scratch)
        q = qkv[:, 0 * D:1 * D].reshape(seq, num_heads, hd).astype(jnp.bfloat16)
        k = qkv[:, 1 * D:2 * D].reshape(seq, num_heads, hd).astype(jnp.bfloat16)
        v = qkv[:, 2 * D:3 * D].reshape(seq, num_heads, hd).astype(jnp.bfloat16)

        s = jnp.einsum('qhd,khd->hqk', q, k,
                       preferred_element_type=jnp.float32)               # (H, S, S)
        s = s - jnp.max(s, axis=-1, keepdims=True)
        p = jnp.exp(s)
        p = p * pl.reciprocal(jnp.sum(p, axis=-1, keepdims=True), approx=True)

        ctx = jnp.einsum('hqk,khd->qhd', p.astype(jnp.bfloat16), v,
                         preferred_element_type=jnp.float32)             # (S, H, hd)
        ctx = ctx.reshape(seq, D)                                        # (S, D)

        attn = jnp.dot(ctx.astype(jnp.bfloat16), ow_ref[l],
                       preferred_element_type=jnp.float32) + ob_ref[l]
        x = x + attn

        # --- MLP block (QuickGELU), f32 elementwise (keep f32 for v5e) ---
        h = _ln(x, ln2w_ref[l], ln2b_ref[l], eps)
        h1 = jnp.dot(h.astype(jnp.bfloat16), f1w_ref[l],
                     preferred_element_type=jnp.float32) + f1b_ref[l]
        h1 = h1 * jax.nn.sigmoid(1.702 * h1)
        h2 = jnp.dot(h1.astype(jnp.bfloat16), f2w_ref[l],
                     preferred_element_type=jnp.float32) + f2b_ref[l]
        x = x + h2

    # ---- post layernorm + single store of the (S, D) result ----
    # TODO(synk): at real HIDDEN (768/1152, multiples of 128) this store is
    # lane-dense; at the toy HIDDEN=64 it is a masked vst, acceptable here.
    o_ref[0] = _ln(x, postw_ref[...], postb_ref[...], eps)


# ----------------------------- wrapper / glue (plain JAX) -----------------------------
def extract_patches(x):
    # (B, C, H, W) -> (B, N, C*P*P) with per-patch flatten order (c, ph, pw),
    # matching nn.Conv2d(weight (D, C, P, P)) with stride = kernel = P.
    B, C, H, W = x.shape
    gh, gw = H // PATCH, W // PATCH
    x = x.reshape(B, C, gh, PATCH, gw, PATCH)
    x = x.transpose(0, 2, 4, 1, 3, 5)             # (B, gh, gw, C, P, P)
    return x.reshape(B, gh * gw, C * PATCH * PATCH)


def prepare_params(params):
    """One-time weight preprocessing: stack per-layer weights on a leading L axis,
    pad the patch-embed K dim to K_PAD, fold the softmax scale into the Q columns,
    and cast matmul weights to bf16 (biases / LN params stay f32)."""
    scale = float(HEAD_DIM) ** -0.5

    pw = jnp.zeros((K_PAD, HIDDEN), jnp.float32).at[:PATCH_DIM, :].set(params["patch_w"])

    def stack(name):
        return jnp.stack([lp[name] for lp in params["layers"]], axis=0)

    qkv_w = stack("qkv_w")                                   # (L, D, 3D)
    qkv_b = stack("qkv_b")                                   # (L, 1, 3D)
    qkv_w = qkv_w.at[:, :, :HIDDEN].multiply(scale)          # fold 1/sqrt(hd) into Q
    qkv_b = qkv_b.at[:, :, :HIDDEN].multiply(scale)

    return dict(
        patch_w=pw.astype(jnp.bfloat16),
        pos=params["pos"],                                   # (N, D), NOT batch-tiled
        patch_b=params["patch_b"],                           # (1, D)
        ln1_w=stack("ln1_w"), ln1_b=stack("ln1_b"),
        qkv_w=qkv_w.astype(jnp.bfloat16), qkv_b=qkv_b,
        out_w=stack("out_w").astype(jnp.bfloat16), out_b=stack("out_b"),
        ln2_w=stack("ln2_w"), ln2_b=stack("ln2_b"),
        fc1_w=stack("fc1_w").astype(jnp.bfloat16), fc1_b=stack("fc1_b"),
        fc2_w=stack("fc2_w").astype(jnp.bfloat16), fc2_b=stack("fc2_b"),
        post_w=params["post_w"], post_b=params["post_b"],
    )


def siglip_vision_model(pixel_values, prep):
    patches = extract_patches(pixel_values.astype(jnp.float32))        # (B, N, 48)
    B, N, K = patches.shape
    patches = jnp.pad(patches, ((0, 0), (0, 0), (0, K_PAD - K))).astype(jnp.bfloat16)

    kern = functools.partial(_siglip_fwd_kernel, seq=N, num_heads=HEADS,
                             num_layers=LAYERS, eps=EPS)

    def full_spec(arr):
        nd = arr.ndim
        return pl.BlockSpec(arr.shape, lambda b, nd=nd: (0,) * nd)

    weight_args = (prep["patch_w"], prep["pos"], prep["patch_b"],
                   prep["ln1_w"], prep["ln1_b"], prep["qkv_w"], prep["qkv_b"],
                   prep["out_w"], prep["out_b"], prep["ln2_w"], prep["ln2_b"],
                   prep["fc1_w"], prep["fc1_b"], prep["fc2_w"], prep["fc2_b"],
                   prep["post_w"], prep["post_b"])

    in_specs = ([pl.BlockSpec((1, N, K_PAD), lambda b: (b, 0, 0))]       # per-image patches
                + [full_spec(a) for a in weight_args])                   # weights resident
    out_specs = pl.BlockSpec((1, N, HIDDEN), lambda b: (b, 0, 0))

    # Advisory cost estimate (keeps XLA scheduling sane around the fused call).
    mm_flops_tok = 2 * (K_PAD * HIDDEN + LAYERS * (3 * HIDDEN * HIDDEN
                        + 2 * N * HIDDEN + HIDDEN * HIDDEN + 2 * HIDDEN * INTER))
    cost = pl.CostEstimate(
        flops=int(B * N * mm_flops_tok),
        transcendentals=int(B * LAYERS * (HEADS * N * N + N * INTER)),
        bytes_accessed=int(patches.size * patches.dtype.itemsize
                           + sum(int(a.size) * a.dtype.itemsize for a in weight_args)
                           + B * N * HIDDEN * 4))

    out = pl.pallas_call(
        kern,
        out_shape=jax.ShapeDtypeStruct((B, N, HIDDEN), jnp.float32),
        grid_spec=pltpu.PrefetchScalarGridSpec(
            num_scalar_prefetch=0, grid=(B,),
            in_specs=in_specs, out_specs=out_specs),
        compiler_params=pltpu.CompilerParams(
            dimension_semantics=("parallel",)),       # shards images over v7x's 2 TCs
        cost_estimate=cost,
    )(patches, *weight_args)
    return out


# ----------------------------- deterministic params -----------------------------
def init_params(key):
    ks = iter(jax.random.split(key, 64))

    def nrm(shape, scale=0.02):
        return scale * jax.random.normal(next(ks), shape, jnp.float32)

    conv_w = nrm((HIDDEN, CHANNELS, PATCH, PATCH))          # Conv2d weight (D,C,P,P)
    patch_w = conv_w.reshape(HIDDEN, PATCH_DIM).T           # (K, D) for x @ W
    patch_b = nrm((1, HIDDEN))
    pos = nrm((NPATCH, HIDDEN))                             # VocabParallelEmbedding table

    layers = []
    for _ in range(LAYERS):
        layers.append(dict(
            ln1_w=1.0 + nrm((1, HIDDEN)), ln1_b=nrm((1, HIDDEN)),
            qkv_w=nrm((HIDDEN, 3 * HIDDEN)), qkv_b=nrm((1, 3 * HIDDEN)),
            out_w=nrm((HIDDEN, HIDDEN)), out_b=nrm((1, HIDDEN)),
            ln2_w=1.0 + nrm((1, HIDDEN)), ln2_b=nrm((1, HIDDEN)),
            fc1_w=nrm((HIDDEN, INTER)), fc1_b=nrm((1, INTER)),
            fc2_w=nrm((INTER, HIDDEN)), fc2_b=nrm((1, HIDDEN)),
        ))
    post_w = 1.0 + nrm((1, HIDDEN))
    post_b = nrm((1, HIDDEN))
    return dict(patch_w=patch_w, patch_b=patch_b, pos=pos, layers=layers,
                post_w=post_w, post_b=post_b)


# ----------------------------- pure-JAX f32 reference -----------------------------
def _ln_ref(x, w, b):
    mu = jnp.mean(x, -1, keepdims=True)
    xc = x - mu
    var = jnp.mean(xc * xc, -1, keepdims=True)
    return xc * jax.lax.rsqrt(var + EPS) * w + b


def reference(pixel_values, params):
    patches = extract_patches(pixel_values.astype(jnp.float32))
    h = patches @ params["patch_w"] + params["patch_b"] + params["pos"]
    for lp in params["layers"]:
        x = h
        t = _ln_ref(x, lp["ln1_w"], lp["ln1_b"])
        qkv = t @ lp["qkv_w"] + lp["qkv_b"]
        q, k, v = jnp.split(qkv, 3, axis=-1)
        B, S, D = q.shape
        hd = D // HEADS
        q = q.reshape(B, S, HEADS, hd).transpose(0, 2, 1, 3)
        k = k.reshape(B, S, HEADS, hd).transpose(0, 2, 1, 3)
        v = v.reshape(B, S, HEADS, hd).transpose(0, 2, 1, 3)
        s = jnp.einsum('bhqd,bhkd->bhqk', q, k) * (hd ** -0.5)
        p = jax.nn.softmax(s, axis=-1)
        c = jnp.einsum('bhqk,bhkd->bhqd', p, v).transpose(0, 2, 1, 3).reshape(B, S, D)
        x = x + (c @ lp["out_w"] + lp["out_b"])
        t = _ln_ref(x, lp["ln2_w"], lp["ln2_b"])
        t1 = t @ lp["fc1_w"] + lp["fc1_b"]
        t1 = t1 * jax.nn.sigmoid(1.702 * t1)
        h = x + (t1 @ lp["fc2_w"] + lp["fc2_b"])
    return _ln_ref(h, params["post_w"], params["post_b"])


# ----------------------------- main -----------------------------
if __name__ == "__main__":
    key = jax.random.PRNGKey(0)
    k_px, k_params = jax.random.split(key)
    pixel_values = jax.random.normal(k_px, (BATCH, CHANNELS, IMAGE, IMAGE), jnp.float32)
    params = init_params(k_params)
    prep = prepare_params(params)

    fwd = jax.jit(siglip_vision_model)
    out = jax.block_until_ready(fwd(pixel_values, prep))

    ref = jax.block_until_ready(reference(pixel_values, params))
    assert out.shape == (BATCH, NPATCH, HIDDEN)
    # Tolerance accounts for bf16 matmul operands (f32 acc) + approx reciprocal
    # in the softmax normalization vs. the f32 reference.
    assert np.allclose(np.asarray(out), np.asarray(ref), atol=3e-2, rtol=3e-2)

    print("KERNEL_OK")
</pallas_src>

<mosaic_0001>
module attributes {stable_mosaic.version = 11 : i64} {
  func.func @_siglip_fwd_kernel(%arg0: i32, %arg1: memref<1x16x64xbf16, #tpu.memory_space<vmem>>, %arg2: memref<64x64xbf16, #tpu.memory_space<vmem>>, %arg3: memref<16x64xf32, #tpu.memory_space<vmem>>, %arg4: memref<1x64xf32, #tpu.memory_space<vmem>>, %arg5: memref<2x1x64xf32, #tpu.memory_space<vmem>>, %arg6: memref<2x1x64xf32, #tpu.memory_space<vmem>>, %arg7: memref<2x64x192xbf16, #tpu.memory_space<vmem>>, %arg8: memref<2x1x192xf32, #tpu.memory_space<vmem>>, %arg9: memref<2x64x64xbf16, #tpu.memory_space<vmem>>, %arg10: memref<2x1x64xf32, #tpu.memory_space<vmem>>, %arg11: memref<2x1x64xf32, #tpu.memory_space<vmem>>, %arg12: memref<2x1x64xf32, #tpu.memory_space<vmem>>, %arg13: memref<2x64x128xbf16, #tpu.memory_space<vmem>>, %arg14: memref<2x1x128xf32, #tpu.memory_space<vmem>>, %arg15: memref<2x128x64xbf16, #tpu.memory_space<vmem>>, %arg16: memref<2x1x64xf32, #tpu.memory_space<vmem>>, %arg17: memref<1x64xf32, #tpu.memory_space<vmem>>, %arg18: memref<1x64xf32, #tpu.memory_space<vmem>>, %arg19: memref<1x16x64xf32, #tpu.memory_space<vmem>>) attributes {dimension_semantics = [#tpu.dimension_semantics<parallel>], iteration_bounds = array<i64: 2>, scalar_prefetch = 0 : i64, scratch_operands = 0 : i64, tpu.core_type = #tpu.core_type<tc>, window_params = [{transform_indices = @transform_0, window_bounds = array<i64: 1, 16, 64>}, {pipeline_mode = #tpu.pipeline_mode<synchronous>, transform_indices = @transform_1, window_bounds = array<i64: 64, 64>}, {pipeline_mode = #tpu.pipeline_mode<synchronous>, transform_indices = @transform_2, window_bounds = array<i64: 16, 64>}, {pipeline_mode = #tpu.pipeline_mode<synchronous>, transform_indices = @transform_3, window_bounds = array<i64: 1, 64>}, {pipeline_mode = #tpu.pipeline_mode<synchronous>, transform_indices = @transform_4, window_bounds = array<i64: 2, 1, 64>}, {pipeline_mode = #tpu.pipeline_mode<synchronous>, transform_indices = @transform_5, window_bounds = array<i64: 2, 1, 64>}, {pipeline_mode = #tpu.pipeline_mode<synchronous>, transform_indices = @transform_6, window_bounds = array<i64: 2, 64, 192>}, {pipeline_mode = #tpu.pipeline_mode<synchronous>, transform_indices = @transform_7, window_bounds = array<i64: 2, 1, 192>}, {pipeline_mode = #tpu.pipeline_mode<synchronous>, transform_indices = @transform_8, window_bounds = array<i64: 2, 64, 64>}, {pipeline_mode = #tpu.pipeline_mode<synchronous>, transform_indices = @transform_9, window_bounds = array<i64: 2, 1, 64>}, {pipeline_mode = #tpu.pipeline_mode<synchronous>, transform_indices = @transform_10, window_bounds = array<i64: 2, 1, 64>}, {pipeline_mode = #tpu.pipeline_mode<synchronous>, transform_indices = @transform_11, window_bounds = array<i64: 2, 1, 64>}, {pipeline_mode = #tpu.pipeline_mode<synchronous>, transform_indices = @transform_12, window_bounds = array<i64: 2, 64, 128>}, {pipeline_mode = #tpu.pipeline_mode<synchronous>, transform_indices = @transform_13, window_bounds = array<i64: 2, 1, 128>}, {pipeline_mode = #tpu.pipeline_mode<synchronous>, transform_indices = @transform_14, window_bounds = array<i64: 2, 128, 64>}, {pipeline_mode = #tpu.pipeline_mode<synchronous>, transform_indices = @transform_15, window_bounds = array<i64: 2, 1, 64>}, {pipeline_mode = #tpu.pipeline_mode<synchronous>, transform_indices = @transform_16, window_bounds = array<i64: 1, 64>}, {pipeline_mode = #tpu.pipeline_mode<synchronous>, transform_indices = @transform_17, window_bounds = array<i64: 1, 64>}, {transform_indices = @transform_18, window_bounds = array<i64: 1, 16, 64>}]} {
    %c0 = arith.constant 0 : index
    %c0_0 = arith.constant 0 : index
    %c0_1 = arith.constant 0 : index
    %0 = vector.load %arg1[%c0, %c0_0, %c0_1] : memref<1x16x64xbf16, #tpu.memory_space<vmem>>, vector<1x16x64xbf16>
    %1 = vector.shape_cast %0 : vector<1x16x64xbf16> to vector<16x64xbf16>
    %c0_2 = arith.constant 0 : index
    %c0_3 = arith.constant 0 : index
    %2 = vector.load %arg2[%c0_2, %c0_3] : memref<64x64xbf16, #tpu.memory_space<vmem>>, vector<64x64xbf16>
    %cst = arith.constant dense<0.000000e+00> : vector<16x64xf32>
    %3 = tpu.matmul %1, %2, %cst {dimension_numbers = #tpu.dot_dimension_numbers<[1], [0], [0], [1], [0, 0, 1, 1], [], []>} : vector<16x64xbf16>, vector<64x64xbf16>, vector<16x64xf32> -> vector<16x64xf32>
    %c0_4 = arith.constant 0 : index
    %c0_5 = arith.constant 0 : index
    %4 = vector.load %arg3[%c0_4, %c0_5] : memref<16x64xf32, #tpu.memory_space<vmem>>, vector<16x64xf32>
    %5 = arith.addf %3, %4 : vector<16x64xf32>
    %c0_6 = arith.constant 0 : index
    %c0_7 = arith.constant 0 : index
    %6 = vector.load %arg4[%c0_6, %c0_7] : memref<1x64xf32, #tpu.memory_space<vmem>>, vector<1x64xf32>
    %7 = vector.broadcast %6 : vector<1x64xf32> to vector<16x64xf32>
    %8 = arith.addf %5, %7 : vector<16x64xf32>
    %c0_8 = arith.constant 0 : index
    %c0_9 = arith.constant 0 : index
    %c0_10 = arith.constant 0 : index
    %9 = vector.load %arg5[%c0_8, %c0_9, %c0_10] : memref<2x1x64xf32, #tpu.memory_space<vmem>>, vector<1x1x64xf32>
    %10 = vector.shape_cast %9 : vector<1x1x64xf32> to vector<1x64xf32>
    %c0_11 = arith.constant 0 : index
    %c0_12 = arith.constant 0 : index
    %c0_13 = arith.constant 0 : index
    %11 = vector.load %arg6[%c0_11, %c0_12, %c0_13] : memref<2x1x64xf32, #tpu.memory_space<vmem>>, vector<1x1x64xf32>
    %12 = vector.shape_cast %11 : vector<1x1x64xf32> to vector<1x64xf32>
    %cst_14 = arith.constant dense<0.000000e+00> : vector<16xf32>
    %13 = vector.multi_reduction <add>, %8, %cst_14 [1] : vector<16x64xf32> to vector<16xf32>
    %14 = vector.shape_cast %13 : vector<16xf32> to vector<16x1xf32>
    %cst_15 = arith.constant 6.400000e+01 : f32
    %15 = vector.broadcast %cst_15 : f32 to vector<16x1xf32>
    %16 = arith.divf %14, %15 : vector<16x1xf32>
    %17 = vector.broadcast %16 : vector<16x1xf32> to vector<16x64xf32>
    %18 = arith.subf %8, %17 : vector<16x64xf32>
    %19 = arith.mulf %18, %18 : vector<16x64xf32>
    %cst_16 = arith.constant dense<0.000000e+00> : vector<16xf32>
    %20 = vector.multi_reduction <add>, %19, %cst_16 [1] : vector<16x64xf32> to vector<16xf32>
    %21 = vector.shape_cast %20 : vector<16xf32> to vector<16x1xf32>
    %cst_17 = arith.constant 6.400000e+01 : f32
    %22 = vector.broadcast %cst_17 : f32 to vector<16x1xf32>
    %23 = arith.divf %21, %22 : vector<16x1xf32>
    %cst_18 = arith.constant 9.99999997E-7 : f32
    %24 = vector.broadcast %cst_18 : f32 to vector<16x1xf32>
    %25 = arith.addf %23, %24 : vector<16x1xf32>
    %26 = math.rsqrt %25 : vector<16x1xf32>
    %27 = vector.broadcast %26 : vector<16x1xf32> to vector<16x64xf32>
    %28 = arith.mulf %18, %27 : vector<16x64xf32>
    %29 = vector.broadcast %10 : vector<1x64xf32> to vector<16x64xf32>
    %30 = arith.mulf %28, %29 : vector<16x64xf32>
    %31 = vector.broadcast %12 : vector<1x64xf32> to vector<16x64xf32>
    %32 = arith.addf %30, %31 : vector<16x64xf32>
    %33 = arith.truncf %32 : vector<16x64xf32> to vector<16x64xbf16>
    %c0_19 = arith.constant 0 : index
    %c0_20 = arith.constant 0 : index
    %c0_21 = arith.constant 0 : index
    %34 = vector.load %arg7[%c0_19, %c0_20, %c0_21] : memref<2x64x192xbf16, #tpu.memory_space<vmem>>, vector<1x64x192xbf16>
    %35 = vector.shape_cast %34 : vector<1x64x192xbf16> to vector<64x192xbf16>
    %cst_22 = arith.constant dense<0.000000e+00> : vector<16x192xf32>
    %36 = tpu.matmul %33, %35, %cst_22 {dimension_numbers = #tpu.dot_dimension_numbers<[1], [0], [0], [1], [0, 0, 1, 1], [], []>} : vector<16x64xbf16>, vector<64x192xbf16>, vector<16x192xf32> -> vector<16x192xf32>
    %c0_23 = arith.constant 0 : index
    %c0_24 = arith.constant 0 : index
    %c0_25 = arith.constant 0 : index
    %37 = vector.load %arg8[%c0_23, %c0_24, %c0_25] : memref<2x1x192xf32, #tpu.memory_space<vmem>>, vector<1x1x192xf32>
    %38 = vector.shape_cast %37 : vector<1x1x192xf32> to vector<1x192xf32>
    %39 = vector.broadcast %38 : vector<1x192xf32> to vector<16x192xf32>
    %40 = arith.addf %36, %39 : vector<16x192xf32>
    %41 = vector.extract_strided_slice %40 {offsets = [0, 0], sizes = [16, 64], strides = [1, 1]} : vector<16x192xf32> to vector<16x64xf32>
    %42 = vector.shape_cast %41 : vector<16x64xf32> to vector<16x4x16xf32>
    %43 = arith.truncf %42 : vector<16x4x16xf32> to vector<16x4x16xbf16>
    %44 = vector.extract_strided_slice %40 {offsets = [0, 64], sizes = [16, 64], strides = [1, 1]} : vector<16x192xf32> to vector<16x64xf32>
    %45 = vector.shape_cast %44 : vector<16x64xf32> to vector<16x4x16xf32>
    %46 = arith.truncf %45 : vector<16x4x16xf32> to vector<16x4x16xbf16>
    %47 = vector.extract_strided_slice %40 {offsets = [0, 128], sizes = [16, 64], strides = [1, 1]} : vector<16x192xf32> to vector<16x64xf32>
    %48 = vector.shape_cast %47 : vector<16x64xf32> to vector<16x4x16xf32>
    %49 = arith.truncf %48 : vector<16x4x16xf32> to vector<16x4x16xbf16>
    "tpu.trace_start"() <{level = 10 : i32, message = "qhd,khd->hqk"}> : () -> ()
    %cst_26 = arith.constant dense<0.000000e+00> : vector<4x16x16xf32>
    %50 = tpu.matmul %43, %46, %cst_26 {dimension_numbers = #tpu.dot_dimension_numbers<[2], [2], [0], [0], [0, 1, 0, 0, 1, 0], [1], [1]>} : vector<16x4x16xbf16>, vector<16x4x16xbf16>, vector<4x16x16xf32> -> vector<4x16x16xf32>
    "tpu.trace_stop"() : () -> ()
    %cst_27 = arith.constant dense<0xFF800000> : vector<4x16xf32>
    %51 = vector.multi_reduction <maximumf>, %50, %cst_27 [2] : vector<4x16x16xf32> to vector<4x16xf32>
    %52 = vector.shape_cast %51 : vector<4x16xf32> to vector<4x16x1xf32>
    %53 = vector.broadcast %52 : vector<4x16x1xf32> to vector<4x16x16xf32>
    %54 = arith.subf %50, %53 : vector<4x16x16xf32>
    %55 = math.exp %54 : vector<4x16x16xf32>
    %cst_28 = arith.constant dense<0.000000e+00> : vector<4x16xf32>
    %56 = vector.multi_reduction <add>, %55, %cst_28 [2] : vector<4x16x16xf32> to vector<4x16xf32>
    %57 = vector.shape_cast %56 : vector<4x16xf32> to vector<4x16x1xf32>
    %58 = tpu.reciprocal %57 {approx = true} : vector<4x16x1xf32> -> vector<4x16x1xf32>
    %59 = vector.broadcast %58 : vector<4x16x1xf32> to vector<4x16x16xf32>
    %60 = arith.mulf %55, %59 : vector<4x16x16xf32>
    %61 = arith.truncf %60 : vector<4x16x16xf32> to vector<4x16x16xbf16>
    "tpu.trace_start"() <{level = 10 : i32, message = "hqk,khd->qhd"}> : () -> ()
    %cst_29 = arith.constant dense<0.000000e+00> : vector<4x16x16xf32>
    %62 = tpu.matmul %49, %61, %cst_29 {dimension_numbers = #tpu.dot_dimension_numbers<[0], [2], [2], [1], [0, 1, 0, 2, 1, 1], [1], [0]>} : vector<16x4x16xbf16>, vector<4x16x16xbf16>, vector<4x16x16xf32> -> vector<4x16x16xf32>
    %63 = tpu.transpose %62, [2, 0, 1] : vector<4x16x16xf32> -> vector<16x4x16xf32>
    "tpu.trace_stop"() : () -> ()
    %64 = vector.shape_cast %63 : vector<16x4x16xf32> to vector<16x64xf32>
    %65 = arith.truncf %64 : vector<16x64xf32> to vector<16x64xbf16>
    %c0_30 = arith.constant 0 : index
    %c0_31 = arith.constant 0 : index
    %c0_32 = arith.constant 0 : index
    %66 = vector.load %arg9[%c0_30, %c0_31, %c0_32] : memref<2x64x64xbf16, #tpu.memory_space<vmem>>, vector<1x64x64xbf16>
    %67 = vector.shape_cast %66 : vector<1x64x64xbf16> to vector<64x64xbf16>
    %cst_33 = arith.constant dense<0.000000e+00> : vector<16x64xf32>
    %68 = tpu.matmul %65, %67, %cst_33 {dimension_numbers = #tpu.dot_dimension_numbers<[1], [0], [0], [1], [0, 0, 1, 1], [], []>} : vector<16x64xbf16>, vector<64x64xbf16>, vector<16x64xf32> -> vector<16x64xf32>
    %c0_34 = arith.constant 0 : index
    %c0_35 = arith.constant 0 : index
    %c0_36 = arith.constant 0 : index
    %69 = vector.load %arg10[%c0_34, %c0_35, %c0_36] : memref<2x1x64xf32, #tpu.memory_space<vmem>>, vector<1x1x64xf32>
    %70 = vector.shape_cast %69 : vector<1x1x64xf32> to vector<1x64xf32>
    %71 = vector.broadcast %70 : vector<1x64xf32> to vector<16x64xf32>
    %72 = arith.addf %68, %71 : vector<16x64xf32>
    %73 = arith.addf %8, %72 : vector<16x64xf32>
    %c0_37 = arith.constant 0 : index
    %c0_38 = arith.constant 0 : index
    %c0_39 = arith.constant 0 : index
    %74 = vector.load %arg11[%c0_37, %c0_38, %c0_39] : memref<2x1x64xf32, #tpu.memory_space<vmem>>, vector<1x1x64xf32>
    %75 = vector.shape_cast %74 : vector<1x1x64xf32> to vector<1x64xf32>
    %c0_40 = arith.constant 0 : index
    %c0_41 = arith.constant 0 : index
    %c0_42 = arith.constant 0 : index
    %76 = vector.load %arg12[%c0_40, %c0_41, %c0_42] : memref<2x1x64xf32, #tpu.memory_space<vmem>>, vector<1x1x64xf32>
    %77 = vector.shape_cast %76 : vector<1x1x64xf32> to vector<1x64xf32>
    %cst_43 = arith.constant dense<0.000000e+00> : vector<16xf32>
    %78 = vector.multi_reduction <add>, %73, %cst_43 [1] : vector<16x64xf32> to vector<16xf32>
    %79 = vector.shape_cast %78 : vector<16xf32> to vector<16x1xf32>
    %cst_44 = arith.constant 6.400000e+01 : f32
    %80 = vector.broadcast %cst_44 : f32 to vector<16x1xf32>
    %81 = arith.divf %79, %80 : vector<16x1xf32>
    %82 = vector.broadcast %81 : vector<16x1xf32> to vector<16x64xf32>
    %83 = arith.subf %73, %82 : vector<16x64xf32>
    %84 = arith.mulf %83, %83 : vector<16x64xf32>
    %cst_45 = arith.constant dense<0.000000e+00> : vector<16xf32>
    %85 = vector.multi_reduction <add>, %84, %cst_45 [1] : vector<16x64xf32> to vector<16xf32>
    %86 = vector.shape_cast %85 : vector<16xf32> to vector<16x1xf32>
    %cst_46 = arith.constant 6.400000e+01 : f32
    %87 = vector.broadcast %cst_46 : f32 to vector<16x1xf32>
    %88 = arith.divf %86, %87 : vector<16x1xf32>
    %cst_47 = arith.constant 9.99999997E-7 : f32
    %89 = vector.broadcast %cst_47 : f32 to vector<16x1xf32>
    %90 = arith.addf %88, %89 : vector<16x1xf32>
    %91 = math.rsqrt %90 : vector<16x1xf32>
    %92 = vector.broadcast %91 : vector<16x1xf32> to vector<16x64xf32>
    %93 = arith.mulf %83, %92 : vector<16x64xf32>
    %94 = vector.broadcast %75 : vector<1x64xf32> to vector<16x64xf32>
    %95 = arith.mulf %93, %94 : vector<16x64xf32>
    %96 = vector.broadcast %77 : vector<1x64xf32> to vector<16x64xf32>
    %97 = arith.addf %95, %96 : vector<16x64xf32>
    %98 = arith.truncf %97 : vector<16x64xf32> to vector<16x64xbf16>
    %c0_48 = arith.constant 0 : index
    %c0_49 = arith.constant 0 : index
    %c0_50 = arith.constant 0 : index
    %99 = vector.load %arg13[%c0_48, %c0_49, %c0_50] : memref<2x64x128xbf16, #tpu.memory_space<vmem>>, vector<1x64x128xbf16>
    %100 = vector.shape_cast %99 : vector<1x64x128xbf16> to vector<64x128xbf16>
    %cst_51 = arith.constant dense<0.000000e+00> : vector<16x128xf32>
    %101 = tpu.matmul %98, %100, %cst_51 {dimension_numbers = #tpu.dot_dimension_numbers<[1], [0], [0], [1], [0, 0, 1, 1], [], []>} : vector<16x64xbf16>, vector<64x128xbf16>, vector<16x128xf32> -> vector<16x128xf32>
    %c0_52 = arith.constant 0 : index
    %c0_53 = arith.constant 0 : index
    %c0_54 = arith.constant 0 : index
    %102 = vector.load %arg14[%c0_52, %c0_53, %c0_54] : memref<2x1x128xf32, #tpu.memory_space<vmem>>, vector<1x1x128xf32>
    %103 = vector.shape_cast %102 : vector<1x1x128xf32> to vector<1x128xf32>
    %104 = vector.broadcast %103 : vector<1x128xf32> to vector<16x128xf32>
    %105 = arith.addf %101, %104 : vector<16x128xf32>
    %cst_55 = arith.constant 1.702000e+00 : f32
    %106 = vector.broadcast %cst_55 : f32 to vector<16x128xf32>
    %107 = arith.mulf %106, %105 : vector<16x128xf32>
    %108 = arith.negf %107 : vector<16x128xf32>
    %109 = math.exp %108 : vector<16x128xf32>
    %cst_56 = arith.constant 1.000000e+00 : f32
    %110 = vector.broadcast %cst_56 : f32 to vector<16x128xf32>
    %111 = arith.addf %110, %109 : vector<16x128xf32>
    %112 = arith.divf %110, %111 : vector<16x128xf32>
    %113 = arith.mulf %105, %112 : vector<16x128xf32>
    %114 = arith.truncf %113 : vector<16x128xf32> to vector<16x128xbf16>
    %c0_57 = arith.constant 0 : index
    %c0_58 = arith.constant 0 : index
    %c0_59 = arith.constant 0 : index
    %115 = vector.load %arg15[%c0_57, %c0_58, %c0_59] : memref<2x128x64xbf16, #tpu.memory_space<vmem>>, vector<1x128x64xbf16>
    %116 = vector.shape_cast %115 : vector<1x128x64xbf16> to vector<128x64xbf16>
    %cst_60 = arith.constant dense<0.000000e+00> : vector<16x64xf32>
    %117 = tpu.matmul %114, %116, %cst_60 {dimension_numbers = #tpu.dot_dimension_numbers<[1], [0], [0], [1], [0, 0, 1, 1], [], []>} : vector<16x128xbf16>, vector<128x64xbf16>, vector<16x64xf32> -> vector<16x64xf32>
    %c0_61 = arith.constant 0 : index
    %c0_62 = arith.constant 0 : index
    %c0_63 = arith.constant 0 : index
    %118 = vector.load %arg16[%c0_61, %c0_62, %c0_63] : memref<2x1x64xf32, #tpu.memory_space<vmem>>, vector<1x1x64xf32>
    %119 = vector.shape_cast %118 : vector<1x1x64xf32> to vector<1x64xf32>
    %120 = vector.broadcast %119 : vector<1x64xf32> to vector<16x64xf32>
    %121 = arith.addf %117, %120 : vector<16x64xf32>
    %122 = arith.addf %73, %121 : vector<16x64xf32>
    %c1 = arith.constant 1 : index
    %c0_64 = arith.constant 0 : index
    %c0_65 = arith.constant 0 : index
    %123 = vector.load %arg5[%c1, %c0_64, %c0_65] : memref<2x1x64xf32, #tpu.memory_space<vmem>>, vector<1x1x64xf32>
    %124 = vector.shape_cast %123 : vector<1x1x64xf32> to vector<1x64xf32>
    %c1_66 = arith.constant 1 : index
    %c0_67 = arith.constant 0 : index
    %c0_68 = arith.constant 0 : index
    %125 = vector.load %arg6[%c1_66, %c0_67, %c0_68] : memref<2x1x64xf32, #tpu.memory_space<vmem>>, vector<1x1x64xf32>
    %126 = vector.shape_cast %125 : vector<1x1x64xf32> to vector<1x64xf32>
    %cst_69 = arith.constant dense<0.000000e+00> : vector<16xf32>
    %127 = vector.multi_reduction <add>, %122, %cst_69 [1] : vector<16x64xf32> to vector<16xf32>
    %128 = vector.shape_cast %127 : vector<16xf32> to vector<16x1xf32>
    %cst_70 = arith.constant 6.400000e+01 : f32
    %129 = vector.broadcast %cst_70 : f32 to vector<16x1xf32>
    %130 = arith.divf %128, %129 : vector<16x1xf32>
    %131 = vector.broadcast %130 : vector<16x1xf32> to vector<16x64xf32>
    %132 = arith.subf %122, %131 : vector<16x64xf32>
    %133 = arith.mulf %132, %132 : vector<16x64xf32>
    %cst_71 = arith.constant dense<0.000000e+00> : vector<16xf32>
    %134 = vector.multi_reduction <add>, %133, %cst_71 [1] : vector<16x64xf32> to vector<16xf32>
    %135 = vector.shape_cast %134 : vector<16xf32> to vector<16x1xf32>
    %cst_72 = arith.constant 6.400000e+01 : f32
    %136 = vector.broadcast %cst_72 : f32 to vector<16x1xf32>
    %137 = arith.divf %135, %136 : vector<16x1xf32>
    %cst_73 = arith.constant 9.99999997E-7 : f32
    %138 = vector.broadcast %cst_73 : f32 to vector<16x1xf32>
    %139 = arith.addf %137, %138 : vector<16x1xf32>
    %140 = math.rsqrt %139 : vector<16x1xf32>
    %141 = vector.broadcast %140 : vector<16x1xf32> to vector<16x64xf32>
    %142 = arith.mulf %132, %141 : vector<16x64xf32>
    %143 = vector.broadcast %124 : vector<1x64xf32> to vector<16x64xf32>
    %144 = arith.mulf %142, %143 : vector<16x64xf32>
    %145 = vector.broadcast %126 : vector<1x64xf32> to vector<16x64xf32>
    %146 = arith.addf %144, %145 : vector<16x64xf32>
    %147 = arith.truncf %146 : vector<16x64xf32> to vector<16x64xbf16>
    %c1_74 = arith.constant 1 : index
    %c0_75 = arith.constant 0 : index
    %c0_76 = arith.constant 0 : index
    %148 = vector.load %arg7[%c1_74, %c0_75, %c0_76] : memref<2x64x192xbf16, #tpu.memory_space<vmem>>, vector<1x64x192xbf16>
    %149 = vector.shape_cast %148 : vector<1x64x192xbf16> to vector<64x192xbf16>
    %cst_77 = arith.constant dense<0.000000e+00> : vector<16x192xf32>
    %150 = tpu.matmul %147, %149, %cst_77 {dimension_numbers = #tpu.dot_dimension_numbers<[1], [0], [0], [1], [0, 0, 1, 1], [], []>} : vector<16x64xbf16>, vector<64x192xbf16>, vector<16x192xf32> -> vector<16x192xf32>
    %c1_78 = arith.constant 1 : index
    %c0_79 = arith.constant 0 : index
    %c0_80 = arith.constant 0 : index
    %151 = vector.load %arg8[%c1_78, %c0_79, %c0_80] : memref<2x1x192xf32, #tpu.memory_space<vmem>>, vector<1x1x192xf32>
    %152 = vector.shape_cast %151 : vector<1x1x192xf32> to vector<1x192xf32>
    %153 = vector.broadcast %152 : vector<1x192xf32> to vector<16x192xf32>
    %154 = arith.addf %150, %153 : vector<16x192xf32>
    %155 = vector.extract_strided_slice %154 {offsets = [0, 0], sizes = [16, 64], strides = [1, 1]} : vector<16x192xf32> to vector<16x64xf32>
    %156 = vector.shape_cast %155 : vector<16x64xf32> to vector<16x4x16xf32>
    %157 = arith.truncf %156 : vector<16x4x16xf32> to vector<16x4x16xbf16>
    %158 = vector.extract_strided_slice %154 {offsets = [0, 64], sizes = [16, 64], strides = [1, 1]} : vector<16x192xf32> to vector<16x64xf32>
    %159 = vector.shape_cast %158 : vector<16x64xf32> to vector<16x4x16xf32>
    %160 = arith.truncf %159 : vector<16x4x16xf32> to vector<16x4x16xbf16>
    %161 = vector.extract_strided_slice %154 {offsets = [0, 128], sizes = [16, 64], strides = [1, 1]} : vector<16x192xf32> to vector<16x64xf32>
    %162 = vector.shape_cast %161 : vector<16x64xf32> to vector<16x4x16xf32>
    %163 = arith.truncf %162 : vector<16x4x16xf32> to vector<16x4x16xbf16>
    "tpu.trace_start"() <{level = 10 : i32, message = "qhd,khd->hqk"}> : () -> ()
    %cst_81 = arith.constant dense<0.000000e+00> : vector<4x16x16xf32>
    %164 = tpu.matmul %157, %160, %cst_81 {dimension_numbers = #tpu.dot_dimension_numbers<[2], [2], [0], [0], [0, 1, 0, 0, 1, 0], [1], [1]>} : vector<16x4x16xbf16>, vector<16x4x16xbf16>, vector<4x16x16xf32> -> vector<4x16x16xf32>
    "tpu.trace_stop"() : () -> ()
    %cst_82 = arith.constant dense<0xFF800000> : vector<4x16xf32>
    %165 = vector.multi_reduction <maximumf>, %164, %cst_82 [2] : vector<4x16x16xf32> to vector<4x16xf32>
    %166 = vector.shape_cast %165 : vector<4x16xf32> to vector<4x16x1xf32>
    %167 = vector.broadcast %166 : vector<4x16x1xf32> to vector<4x16x16xf32>
    %168 = arith.subf %164, %167 : vector<4x16x16xf32>
    %169 = math.exp %168 : vector<4x16x16xf32>
    %cst_83 = arith.constant dense<0.000000e+00> : vector<4x16xf32>
    %170 = vector.multi_reduction <add>, %169, %cst_83 [2] : vector<4x16x16xf32> to vector<4x16xf32>
    %171 = vector.shape_cast %170 : vector<4x16xf32> to vector<4x16x1xf32>
    %172 = tpu.reciprocal %171 {approx = true} : vector<4x16x1xf32> -> vector<4x16x1xf32>
    %173 = vector.broadcast %172 : vector<4x16x1xf32> to vector<4x16x16xf32>
    %174 = arith.mulf %169, %173 : vector<4x16x16xf32>
    %175 = arith.truncf %174 : vector<4x16x16xf32> to vector<4x16x16xbf16>
    "tpu.trace_start"() <{level = 10 : i32, message = "hqk,khd->qhd"}> : () -> ()
    %cst_84 = arith.constant dense<0.000000e+00> : vector<4x16x16xf32>
    %176 = tpu.matmul %163, %175, %cst_84 {dimension_numbers = #tpu.dot_dimension_numbers<[0], [2], [2], [1], [0, 1, 0, 2, 1, 1], [1], [0]>} : vector<16x4x16xbf16>, vector<4x16x16xbf16>, vector<4x16x16xf32> -> vector<4x16x16xf32>
    %177 = tpu.transpose %176, [2, 0, 1] : vector<4x16x16xf32> -> vector<16x4x16xf32>
    "tpu.trace_stop"() : () -> ()
    %178 = vector.shape_cast %177 : vector<16x4x16xf32> to vector<16x64xf32>
    %179 = arith.truncf %178 : vector<16x64xf32> to vector<16x64xbf16>
    %c1_85 = arith.constant 1 : index
    %c0_86 = arith.constant 0 : index
    %c0_87 = arith.constant 0 : index
    %180 = vector.load %arg9[%c1_85, %c0_86, %c0_87] : memref<2x64x64xbf16, #tpu.memory_space<vmem>>, vector<1x64x64xbf16>
    %181 = vector.shape_cast %180 : vector<1x64x64xbf16> to vector<64x64xbf16>
    %cst_88 = arith.constant dense<0.000000e+00> : vector<16x64xf32>
    %182 = tpu.matmul %179, %181, %cst_88 {dimension_numbers = #tpu.dot_dimension_numbers<[1], [0], [0], [1], [0, 0, 1, 1], [], []>} : vector<16x64xbf16>, vector<64x64xbf16>, vector<16x64xf32> -> vector<16x64xf32>
    %c1_89 = arith.constant 1 : index
    %c0_90 = arith.constant 0 : index
    %c0_91 = arith.constant 0 : index
    %183 = vector.load %arg10[%c1_89, %c0_90, %c0_91] : memref<2x1x64xf32, #tpu.memory_space<vmem>>, vector<1x1x64xf32>
    %184 = vector.shape_cast %183 : vector<1x1x64xf32> to vector<1x64xf32>
    %185 = vector.broadcast %184 : vector<1x64xf32> to vector<16x64xf32>
    %186 = arith.addf %182, %185 : vector<16x64xf32>
    %187 = arith.addf %122, %186 : vector<16x64xf32>
    %c1_92 = arith.constant 1 : index
    %c0_93 = arith.constant 0 : index
    %c0_94 = arith.constant 0 : index
    %188 = vector.load %arg11[%c1_92, %c0_93, %c0_94] : memref<2x1x64xf32, #tpu.memory_space<vmem>>, vector<1x1x64xf32>
    %189 = vector.shape_cast %188 : vector<1x1x64xf32> to vector<1x64xf32>
    %c1_95 = arith.constant 1 : index
    %c0_96 = arith.constant 0 : index
    %c0_97 = arith.constant 0 : index
    %190 = vector.load %arg12[%c1_95, %c0_96, %c0_97] : memref<2x1x64xf32, #tpu.memory_space<vmem>>, vector<1x1x64xf32>
    %191 = vector.shape_cast %190 : vector<1x1x64xf32> to vector<1x64xf32>
    %cst_98 = arith.constant dense<0.000000e+00> : vector<16xf32>
    %192 = vector.multi_reduction <add>, %187, %cst_98 [1] : vector<16x64xf32> to vector<16xf32>
    %193 = vector.shape_cast %192 : vector<16xf32> to vector<16x1xf32>
    %cst_99 = arith.constant 6.400000e+01 : f32
    %194 = vector.broadcast %cst_99 : f32 to vector<16x1xf32>
    %195 = arith.divf %193, %194 : vector<16x1xf32>
    %196 = vector.broadcast %195 : vector<16x1xf32> to vector<16x64xf32>
    %197 = arith.subf %187, %196 : vector<16x64xf32>
    %198 = arith.mulf %197, %197 : vector<16x64xf32>
    %cst_100 = arith.constant dense<0.000000e+00> : vector<16xf32>
    %199 = vector.multi_reduction <add>, %198, %cst_100 [1] : vector<16x64xf32> to vector<16xf32>
    %200 = vector.shape_cast %199 : vector<16xf32> to vector<16x1xf32>
    %cst_101 = arith.constant 6.400000e+01 : f32
    %201 = vector.broadcast %cst_101 : f32 to vector<16x1xf32>
    %202 = arith.divf %200, %201 : vector<16x1xf32>
    %cst_102 = arith.constant 9.99999997E-7 : f32
    %203 = vector.broadcast %cst_102 : f32 to vector<16x1xf32>
    %204 = arith.addf %202, %203 : vector<16x1xf32>
    %205 = math.rsqrt %204 : vector<16x1xf32>
    %206 = vector.broadcast %205 : vector<16x1xf32> to vector<16x64xf32>
    %207 = arith.mulf %197, %206 : vector<16x64xf32>
    %208 = vector.broadcast %189 : vector<1x64xf32> to vector<16x64xf32>
    %209 = arith.mulf %207, %208 : vector<16x64xf32>
    %210 = vector.broadcast %191 : vector<1x64xf32> to vector<16x64xf32>
    %211 = arith.addf %209, %210 : vector<16x64xf32>
    %212 = arith.truncf %211 : vector<16x64xf32> to vector<16x64xbf16>
    %c1_103 = arith.constant 1 : index
    %c0_104 = arith.constant 0 : index
    %c0_105 = arith.constant 0 : index
    %213 = vector.load %arg13[%c1_103, %c0_104, %c0_105] : memref<2x64x128xbf16, #tpu.memory_space<vmem>>, vector<1x64x128xbf16>
    %214 = vector.shape_cast %213 : vector<1x64x128xbf16> to vector<64x128xbf16>
    %cst_106 = arith.constant dense<0.000000e+00> : vector<16x128xf32>
    %215 = tpu.matmul %212, %214, %cst_106 {dimension_numbers = #tpu.dot_dimension_numbers<[1], [0], [0], [1], [0, 0, 1, 1], [], []>} : vector<16x64xbf16>, vector<64x128xbf16>, vector<16x128xf32> -> vector<16x128xf32>
    %c1_107 = arith.constant 1 : index
    %c0_108 = arith.constant 0 : index
    %c0_109 = arith.constant 0 : index
    %216 = vector.load %arg14[%c1_107, %c0_108, %c0_109] : memref<2x1x128xf32, #tpu.memory_space<vmem>>, vector<1x1x128xf32>
    %217 = vector.shape_cast %216 : vector<1x1x128xf32> to vector<1x128xf32>
    %218 = vector.broadcast %217 : vector<1x128xf32> to vector<16x128xf32>
    %219 = arith.addf %215, %218 : vector<16x128xf32>
    %cst_110 = arith.constant 1.702000e+00 : f32
    %220 = vector.broadcast %cst_110 : f32 to vector<16x128xf32>
    %221 = arith.mulf %220, %219 : vector<16x128xf32>
    %222 = arith.negf %221 : vector<16x128xf32>
    %223 = math.exp %222 : vector<16x128xf32>
    %cst_111 = arith.constant 1.000000e+00 : f32
    %224 = vector.broadcast %cst_111 : f32 to vector<16x128xf32>
    %225 = arith.addf %224, %223 : vector<16x128xf32>
    %226 = arith.divf %224, %225 : vector<16x128xf32>
    %227 = arith.mulf %219, %226 : vector<16x128xf32>
    %228 = arith.truncf %227 : vector<16x128xf32> to vector<16x128xbf16>
    %c1_112 = arith.constant 1 : index
    %c0_113 = arith.constant 0 : index
    %c0_114 = arith.constant 0 : index
    %229 = vector.load %arg15[%c1_112, %c0_113, %c0_114] : memref<2x128x64xbf16, #tpu.memory_space<vmem>>, vector<1x128x64xbf16>
    %230 = vector.shape_cast %229 : vector<1x128x64xbf16> to vector<128x64xbf16>
    %cst_115 = arith.constant dense<0.000000e+00> : vector<16x64xf32>
    %231 = tpu.matmul %228, %230, %cst_115 {dimension_numbers = #tpu.dot_dimension_numbers<[1], [0], [0], [1], [0, 0, 1, 1], [], []>} : vector<16x128xbf16>, vector<128x64xbf16>, vector<16x64xf32> -> vector<16x64xf32>
    %c1_116 = arith.constant 1 : index
    %c0_117 = arith.constant 0 : index
    %c0_118 = arith.constant 0 : index
    %232 = vector.load %arg16[%c1_116, %c0_117, %c0_118] : memref<2x1x64xf32, #tpu.memory_space<vmem>>, vector<1x1x64xf32>
    %233 = vector.shape_cast %232 : vector<1x1x64xf32> to vector<1x64xf32>
    %234 = vector.broadcast %233 : vector<1x64xf32> to vector<16x64xf32>
    %235 = arith.addf %231, %234 : vector<16x64xf32>
    %236 = arith.addf %187, %235 : vector<16x64xf32>
    %c0_119 = arith.constant 0 : index
    %c0_120 = arith.constant 0 : index
    %237 = vector.load %arg17[%c0_119, %c0_120] : memref<1x64xf32, #tpu.memory_space<vmem>>, vector<1x64xf32>
    %c0_121 = arith.constant 0 : index
    %c0_122 = arith.constant 0 : index
    %238 = vector.load %arg18[%c0_121, %c0_122] : memref<1x64xf32, #tpu.memory_space<vmem>>, vector<1x64xf32>
    %cst_123 = arith.constant dense<0.000000e+00> : vector<16xf32>
    %239 = vector.multi_reduction <add>, %236, %cst_123 [1] : vector<16x64xf32> to vector<16xf32>
    %240 = vector.shape_cast %239 : vector<16xf32> to vector<16x1xf32>
    %cst_124 = arith.constant 6.400000e+01 : f32
    %241 = vector.broadcast %cst_124 : f32 to vector<16x1xf32>
    %242 = arith.divf %240, %241 : vector<16x1xf32>
    %243 = vector.broadcast %242 : vector<16x1xf32> to vector<16x64xf32>
    %244 = arith.subf %236, %243 : vector<16x64xf32>
    %245 = arith.mulf %244, %244 : vector<16x64xf32>
    %cst_125 = arith.constant dense<0.000000e+00> : vector<16xf32>
    %246 = vector.multi_reduction <add>, %245, %cst_125 [1] : vector<16x64xf32> to vector<16xf32>
    %247 = vector.shape_cast %246 : vector<16xf32> to vector<16x1xf32>
    %cst_126 = arith.constant 6.400000e+01 : f32
    %248 = vector.broadcast %cst_126 : f32 to vector<16x1xf32>
    %249 = arith.divf %247, %248 : vector<16x1xf32>
    %cst_127 = arith.constant 9.99999997E-7 : f32
    %250 = vector.broadcast %cst_127 : f32 to vector<16x1xf32>
    %251 = arith.addf %249, %250 : vector<16x1xf32>
    %252 = math.rsqrt %251 : vector<16x1xf32>
    %253 = vector.broadcast %252 : vector<16x1xf32> to vector<16x64xf32>
    %254 = arith.mulf %244, %253 : vector<16x64xf32>
    %255 = vector.broadcast %237 : vector<1x64xf32> to vector<16x64xf32>
    %256 = arith.mulf %254, %255 : vector<16x64xf32>
    %257 = vector.broadcast %238 : vector<1x64xf32> to vector<16x64xf32>
    %258 = arith.addf %256, %257 : vector<16x64xf32>
    %c0_128 = arith.constant 0 : index
    %c0_129 = arith.constant 0 : index
    %c0_130 = arith.constant 0 : index
    %259 = vector.load %arg19[%c0_128, %c0_129, %c0_130] : memref<1x16x64xf32, #tpu.memory_space<vmem>>, vector<1x16x64xf32>
    %260 = vector.shape_cast %259 : vector<1x16x64xf32> to vector<16x64xf32>
    %261 = vector.shape_cast %258 : vector<16x64xf32> to vector<1x16x64xf32>
    tpu.vector_store %arg19[%c0_128, %c0_129, %c0_130], %261 {strides = array<i32>} : memref<1x16x64xf32, #tpu.memory_space<vmem>>, vector<1x16x64xf32>,
    return
  }
  func.func @transform_0(%arg0: i32) -> (i32, i32, i32) {
    %c0_i32 = arith.constant 0 : i32
    %c0_i32_0 = arith.constant 0 : i32
    %c0_i32_1 = arith.constant 0 : i32
    return %arg0, %c0_i32, %c0_i32_0 : i32, i32, i32
  }
  func.func @transform_1(%arg0: i32) -> (i32, i32) {
    %c0_i32 = arith.constant 0 : i32
    %c0_i32_0 = arith.constant 0 : i32
    %c0_i32_1 = arith.constant 0 : i32
    return %c0_i32, %c0_i32_0 : i32, i32
  }
  func.func @transform_2(%arg0: i32) -> (i32, i32) {
    %c0_i32 = arith.constant 0 : i32
    %c0_i32_0 = arith.constant 0 : i32
    %c0_i32_1 = arith.constant 0 : i32
    return %c0_i32, %c0_i32_0 : i32, i32
  }
  func.func @transform_3(%arg0: i32) -> (i32, i32) {
    %c0_i32 = arith.constant 0 : i32
    %c0_i32_0 = arith.constant 0 : i32
    %c0_i32_1 = arith.constant 0 : i32
    return %c0_i32, %c0_i32_0 : i32, i32
  }
  func.func @transform_4(%arg0: i32) -> (i32, i32, i32) {
    %c0_i32 = arith.constant 0 : i32
    %c0_i32_0 = arith.constant 0 : i32
    %c0_i32_1 = arith.constant 0 : i32
    %c0_i32_2 = arith.constant 0 : i32
    return %c0_i32, %c0_i32_0, %c0_i32_1 : i32, i32, i32
  }
  func.func @transform_5(%arg0: i32) -> (i32, i32, i32) {
    %c0_i32 = arith.constant 0 : i32
    %c0_i32_0 = arith.constant 0 : i32
    %c0_i32_1 = arith.constant 0 : i32
    %c0_i32_2 = arith.constant 0 : i32
    return %c0_i32, %c0_i32_0, %c0_i32_1 : i32, i32, i32
  }
  func.func @transform_6(%arg0: i32) -> (i32, i32, i32) {
    %c0_i32 = arith.constant 0 : i32
    %c0_i32_0 = arith.constant 0 : i32
    %c0_i32_1 = arith.constant 0 : i32
    %c0_i32_2 = arith.constant 0 : i32
    return %c0_i32, %c0_i32_0, %c0_i32_1 : i32, i32, i32
  }
  func.func @transform_7(%arg0: i32) -> (i32, i32, i32) {
    %c0_i32 = arith.constant 0 : i32
    %c0_i32_0 = arith.constant 0 : i32
    %c0_i32_1 = arith.constant 0 : i32
    %c0_i32_2 = arith.constant 0 : i32
    return %c0_i32, %c0_i32_0, %c0_i32_1 : i32, i32, i32
  }
  func.func @transform_8(%arg0: i32) -> (i32, i32, i32) {
    %c0_i32 = arith.constant 0 : i32
    %c0_i32_0 = arith.constant 0 : i32
    %c0_i32_1 = arith.constant 0 : i32
    %c0_i32_2 = arith.constant 0 : i32
    return %c0_i32, %c0_i32_0, %c0_i32_1 : i32, i32, i32
  }
  func.func @transform_9(%arg0: i32) -> (i32, i32, i32) {
    %c0_i32 = arith.constant 0 : i32
    %c0_i32_0 = arith.constant 0 : i32
    %c0_i32_1 = arith.constant 0 : i32
    %c0_i32_2 = arith.constant 0 : i32
    return %c0_i32, %c0_i32_0, %c0_i32_1 : i32, i32, i32
  }
  func.func @transform_10(%arg0: i32) -> (i32, i32, i32) {
    %c0_i32 = arith.constant 0 : i32
    %c0_i32_0 = arith.constant 0 : i32
    %c0_i32_1 = arith.constant 0 : i32
    %c0_i32_2 = arith.constant 0 : i32
    return %c0_i32, %c0_i32_0, %c0_i32_1 : i32, i32, i32
  }
  func.func @transform_11(%arg0: i32) -> (i32, i32, i32) {
    %c0_i32 = arith.constant 0 : i32
    %c0_i32_0 = arith.constant 0 : i32
    %c0_i32_1 = arith.constant 0 : i32
    %c0_i32_2 = arith.constant 0 : i32
    return %c0_i32, %c0_i32_0, %c0_i32_1 : i32, i32, i32
  }
  func.func @transform_12(%arg0: i32) -> (i32, i32, i32) {
    %c0_i32 = arith.constant 0 : i32
    %c0_i32_0 = arith.constant 0 : i32
    %c0_i32_1 = arith.constant 0 : i32
    %c0_i32_2 = arith.constant 0 : i32
    return %c0_i32, %c0_i32_0, %c0_i32_1 : i32, i32, i32
  }
  func.func @transform_13(%arg0: i32) -> (i32, i32, i32) {
    %c0_i32 = arith.constant 0 : i32
    %c0_i32_0 = arith.constant 0 : i32
    %c0_i32_1 = arith.constant 0 : i32
    %c0_i32_2 = arith.constant 0 : i32
    return %c0_i32, %c0_i32_0, %c0_i32_1 : i32, i32, i32
  }
  func.func @transform_14(%arg0: i32) -> (i32, i32, i32) {
    %c0_i32 = arith.constant 0 : i32
    %c0_i32_0 = arith.constant 0 : i32
    %c0_i32_1 = arith.constant 0 : i32
    %c0_i32_2 = arith.constant 0 : i32
    return %c0_i32, %c0_i32_0, %c0_i32_1 : i32, i32, i32
  }
  func.func @transform_15(%arg0: i32) -> (i32, i32, i32) {
    %c0_i32 = arith.constant 0 : i32
    %c0_i32_0 = arith.constant 0 : i32
    %c0_i32_1 = arith.constant 0 : i32
    %c0_i32_2 = arith.constant 0 : i32
    return %c0_i32, %c0_i32_0, %c0_i32_1 : i32, i32, i32
  }
  func.func @transform_16(%arg0: i32) -> (i32, i32) {
    %c0_i32 = arith.constant 0 : i32
    %c0_i32_0 = arith.constant 0 : i32
    %c0_i32_1 = arith.constant 0 : i32
    return %c0_i32, %c0_i32_0 : i32, i32
  }
  func.func @transform_17(%arg0: i32) -> (i32, i32) {
    %c0_i32 = arith.constant 0 : i32
    %c0_i32_0 = arith.constant 0 : i32
    %c0_i32_1 = arith.constant 0 : i32
    return %c0_i32, %c0_i32_0 : i32, i32
  }
  func.func @transform_18(%arg0: i32) -> (i32, i32, i32) {
    %c0_i32 = arith.constant 0 : i32
    %c0_i32_0 = arith.constant 0 : i32
    %c0_i32_1 = arith.constant 0 : i32
    return %arg0, %c0_i32, %c0_i32_0 : i32, i32, i32
  }
}

</mosaic_0001>

<llo_original>
// kernel: siglip_vision_model.1
$region0: #{siglip_vision_model.1}
  #allocation0 [shape = 'u32[]', space=smem, size = 0x4, offset = 0x4, fixed_abs, tag = 'smem constant byte address 0x4 - core index']
  #allocation1 [shape = 'u32[144,128]{1,0:T(1,128)}', space=vmem, size = 0x12000, scoped, tag = 'internal scratch']
  %s0 = inlined_call_operand.vmem [shape: bf16[2,16,64], index: 0, kind: input, shape index: {}]
  %s1 = inlined_call_operand.vmem [shape: bf16[64,64], index: 1, kind: input, shape index: {}]
  %s2 = inlined_call_operand.vmem [shape: f32[16,64], index: 2, kind: input, shape index: {}]
  %s3 = inlined_call_operand.vmem [shape: f32[1,64], index: 3, kind: input, shape index: {}]
  %s4 = inlined_call_operand.vmem [shape: f32[2,1,64], index: 4, kind: input, shape index: {}]
  %s5 = inlined_call_operand.vmem [shape: f32[2,1,64], index: 5, kind: input, shape index: {}]
  %s6 = inlined_call_operand.vmem [shape: bf16[2,64,192], index: 6, kind: input, shape index: {}]
  %s7 = inlined_call_operand.vmem [shape: f32[2,1,192], index: 7, kind: input, shape index: {}]
  %s8 = inlined_call_operand.vmem [shape: bf16[2,64,64], index: 8, kind: input, shape index: {}]
  %s9 = inlined_call_operand.vmem [shape: f32[2,1,64], index: 9, kind: input, shape index: {}]
  %s10 = inlined_call_operand.vmem [shape: f32[2,1,64], index: 10, kind: input, shape index: {}]
  %s11 = inlined_call_operand.vmem [shape: f32[2,1,64], index: 11, kind: input, shape index: {}]
  %s12 = inlined_call_operand.vmem [shape: bf16[2,64,128], index: 12, kind: input, shape index: {}]
  %s13 = inlined_call_operand.vmem [shape: f32[2,1,128], index: 13, kind: input, shape index: {}]
  %s14 = inlined_call_operand.vmem [shape: bf16[2,128,64], index: 14, kind: input, shape index: {}]
  %s15 = inlined_call_operand.vmem [shape: f32[2,1,64], index: 15, kind: input, shape index: {}]
  %s16 = inlined_call_operand.vmem [shape: f32[1,64], index: 16, kind: input, shape index: {}]
  %s17 = inlined_call_operand.vmem [shape: f32[1,64], index: 17, kind: input, shape index: {}]
  %s18 = inlined_call_operand.hbm [shape: f32[2,16,64], index: 18, kind: output, shape index: {}]
  %s19 = sld [smem:[#allocation0]]
  $region105: #{siglip_vision_model.1} parent=0
    _
  %s21 = ssub.s32 1, %s19
  %s22 = scalar_select 0, %s21, %s19
  $region1: #{siglip_vision_model.1} parent=0
    #allocation2 [shape = 'u8[16384]{0}', space=vmem, size = 0x4000, scoped, tag = 'output window, operand 0']
    #allocation3 [shape = 's32[2]{0}', space=sflag, size = 0x8, scoped, tag = 'scoped memory for siglip_vision_model.1']
    %23 = vsyncpa [#allocation3], 0
    %s24 = scalar_lea.sflag [#allocation3], 1
    %25 = vsyncpa %s24, 0
    loop: start=0, step=1, limit=4
    $region2: #{siglip_vision_model.1} parent=1 // loop_pre_header
      _
    $region3: #{siglip_vision_model.1} parent=1 // loop_header
      %s27 = sphi 0, %s31
      %p28 = scmp.ge.s32.totalorder %s27, 4
      %s37 = sphi 0, %s39
      %s40 = sphi 0, %s37
      %s41 = sphi 0, %s40
      %s57 = sphi 0, %s41
      %s61 = sphi 0, %s61
      %s63 = sphi 0, %s61
      %s64 = sphi 0, %s63
      %s78 = sphi 0, %s64
      %s82 = sphi 0, %s82
      %s84 = sphi 0, %s82
      %s85 = sphi 0, %s84
      %s99 = sphi 0, %s85
      %s103 = sphi 0, %s103
      %s105 = sphi 0, %s103
      %s106 = sphi 0, %s105
      %s120 = sphi 0, %s106
      %s124 = sphi 0, %s124
      %s126 = sphi 0, %s124
      %s127 = sphi 0, %s126
      %s141 = sphi 0, %s127
      %s145 = sphi 0, %s145
      %s147 = sphi 0, %s145
      %s148 = sphi 0, %s147
      %s162 = sphi 0, %s148
      %s166 = sphi 0, %s166
      %s168 = sphi 0, %s166
      %s169 = sphi 0, %s168
      %s183 = sphi 0, %s169
      %s187 = sphi 0, %s187
      %s189 = sphi 0, %s187
      %s190 = sphi 0, %s189
      %s204 = sphi 0, %s190
      %s208 = sphi 0, %s208
      %s210 = sphi 0, %s208
      %s211 = sphi 0, %s210
      %s225 = sphi 0, %s211
      %s229 = sphi 0, %s229
      %s231 = sphi 0, %s229
      %s232 = sphi 0, %s231
      %s246 = sphi 0, %s232
      %s250 = sphi 0, %s250
      %s252 = sphi 0, %s250
      %s253 = sphi 0, %s252
      %s267 = sphi 0, %s253
      %s271 = sphi 0, %s271
      %s273 = sphi 0, %s271
      %s274 = sphi 0, %s273
      %s288 = sphi 0, %s274
      %s292 = sphi 0, %s292
      %s294 = sphi 0, %s292
      %s295 = sphi 0, %s294
      %s309 = sphi 0, %s295
      %s313 = sphi 0, %s313
      %s315 = sphi 0, %s313
      %s316 = sphi 0, %s315
      %s330 = sphi 0, %s316
      %s334 = sphi 0, %s334
      %s336 = sphi 0, %s334
      %s337 = sphi 0, %s336
      %s351 = sphi 0, %s337
      %s355 = sphi 0, %s355
      %s357 = sphi 0, %s355
      %s358 = sphi 0, %s357
      %s372 = sphi 0, %s358
      %s376 = sphi 0, %s376
      %s378 = sphi 0, %s376
      %s379 = sphi 0, %s378
      %s393 = sphi 0, %s379
      %s397 = sphi 0, %s397
      %s399 = sphi 0, %s397
      %s400 = sphi 0, %s399
      %s414 = sphi 0, %s400
      %s420 = sphi 0, %s422
      %s423 = sphi 0, %s420
      %s424 = sphi 0, %s423
      %s440 = sphi 0, %s424
    $region4: #{siglip_vision_model.1} parent=1 // loop_header_branch
      %30 = sbr.rel (%p28) target = $region8
    $region5: #{siglip_vision_model.1} parent=1 // loop_body
      %s32 = ssub.s32 %s27, 1
      %s33 = ssub.s32 %s27, 2
      %s34 = sadd.s32 %s27, 1
      %s35 = ssub.s32 %s27, %s34
      %p36 = scmp.eq.s32.totalorder %s35, 0
      %s38 = sadd.s32 %s37, 1
      %s39 = scalar_select %p36, %s37, %s38
      %p42 = pneg %p36
      %p43 = scmp.eq.s32.totalorder %s27, 1
      %p44 = por %p42, %p43
      %p45 = scmp.ne.s32.totalorder %s37, %s40
      %p46 = scmp.eq.s32.totalorder %s27, 0
      %p47 = por %p45, %p46
      %p48 = scmp.ne.s32.totalorder %s37, %s40
      %p49 = scmp.eq.s32.totalorder %s32, 1
      %p50 = por %p48, %p49
      %p51 = scmp.ne.s32.totalorder %s40, %s41
      %p52 = scmp.eq.s32.totalorder %s32, 0
      %p53 = por %p51, %p52
      %p54 = scmp.ne.s32.totalorder %s40, %s41
      %p55 = scmp.eq.s32.totalorder %s33, 1
      %p56 = por %p54, %p55
      %p58 = scmp.ne.s32.totalorder %s41, %s57
      %p59 = scmp.eq.s32.totalorder %s33, 0
      %p60 = por %p58, %p59
      %s62 = sadd.s32 %s61, 1
      %p65 = scmp.eq.s32.totalorder %s27, 1
      %p66 = scmp.ne.s32.totalorder %s61, %s63
      %p67 = scmp.eq.s32.totalorder %s27, 0
      %p68 = por %p66, %p67
      %p69 = scmp.ne.s32.totalorder %s61, %s63
      %p70 = scmp.eq.s32.totalorder %s32, 1
      %p71 = por %p69, %p70
      %p72 = scmp.ne.s32.totalorder %s63, %s64
      %p73 = scmp.eq.s32.totalorder %s32, 0
      %p74 = por %p72, %p73
      %p75 = scmp.ne.s32.totalorder %s63, %s64
      %p76 = scmp.eq.s32.totalorder %s33, 1
      %p77 = por %p75, %p76
      %p79 = scmp.ne.s32.totalorder %s64, %s78
      %p80 = scmp.eq.s32.totalorder %s33, 0
      %p81 = por %p79, %p80
      %s83 = sadd.s32 %s82, 1
      %p86 = scmp.eq.s32.totalorder %s27, 1
      %p87 = scmp.ne.s32.totalorder %s82, %s84
      %p88 = scmp.eq.s32.totalorder %s27, 0
      %p89 = por %p87, %p88
      %p90 = scmp.ne.s32.totalorder %s82, %s84
      %p91 = scmp.eq.s32.totalorder %s32, 1
      %p92 = por %p90, %p91
      %p93 = scmp.ne.s32.totalorder %s84, %s85
      %p94 = scmp.eq.s32.totalorder %s32, 0
      %p95 = por %p93, %p94
      %p96 = scmp.ne.s32.totalorder %s84, %s85
      %p97 = scmp.eq.s32.totalorder %s33, 1
      %p98 = por %p96, %p97
      %p100 = scmp.ne.s32.totalorder %s85, %s99
      %p101 = scmp.eq.s32.totalorder %s33, 0
      %p102 = por %p100, %p101
      %s104 = sadd.s32 %s103, 1
      %p107 = scmp.eq.s32.totalorder %s27, 1
      %p108 = scmp.ne.s32.totalorder %s103, %s105
      %p109 = scmp.eq.s32.totalorder %s27, 0
      %p110 = por %p108, %p109
      %p111 = scmp.ne.s32.totalorder %s103, %s105
      %p112 = scmp.eq.s32.totalorder %s32, 1
      %p113 = por %p111, %p112
      %p114 = scmp.ne.s32.totalorder %s105, %s106
      %p115 = scmp.eq.s32.totalorder %s32, 0
      %p116 = por %p114, %p115
      %p117 = scmp.ne.s32.totalorder %s105, %s106
      %p118 = scmp.eq.s32.totalorder %s33, 1
      %p119 = por %p117, %p118
      %p121 = scmp.ne.s32.totalorder %s106, %s120
      %p122 = scmp.eq.s32.totalorder %s33, 0
      %p123 = por %p121, %p122
      %s125 = sadd.s32 %s124, 1
      %p128 = scmp.eq.s32.totalorder %s27, 1
      %p129 = scmp.ne.s32.totalorder %s124, %s126
      %p130 = scmp.eq.s32.totalorder %s27, 0
      %p131 = por %p129, %p130
      %p132 = scmp.ne.s32.totalorder %s124, %s126
      %p133 = scmp.eq.s32.totalorder %s32, 1
      %p134 = por %p132, %p133
      %p135 = scmp.ne.s32.totalorder %s126, %s127
      %p136 = scmp.eq.s32.totalorder %s32, 0
      %p137 = por %p135, %p136
      %p138 = scmp.ne.s32.totalorder %s126, %s127
      %p139 = scmp.eq.s32.totalorder %s33, 1
      %p140 = por %p138, %p139
      %p142 = scmp.ne.s32.totalorder %s127, %s141
      %p143 = scmp.eq.s32.totalorder %s33, 0
      %p144 = por %p142, %p143
      %s146 = sadd.s32 %s145, 1
      %p149 = scmp.eq.s32.totalorder %s27, 1
      %p150 = scmp.ne.s32.totalorder %s145, %s147
      %p151 = scmp.eq.s32.totalorder %s27, 0
      %p152 = por %p150, %p151
      %p153 = scmp.ne.s32.totalorder %s145, %s147
      %p154 = scmp.eq.s32.totalorder %s32, 1
      %p155 = por %p153, %p154
      %p156 = scmp.ne.s32.totalorder %s147, %s148
      %p157 = scmp.eq.s32.totalorder %s32, 0
      %p158 = por %p156, %p157
      %p159 = scmp.ne.s32.totalorder %s147, %s148
      %p160 = scmp.eq.s32.totalorder %s33, 1
      %p161 = por %p159, %p160
      %p163 = scmp.ne.s32.totalorder %s148, %s162
      %p164 = scmp.eq.s32.totalorder %s33, 0
      %p165 = por %p163, %p164
      %s167 = sadd.s32 %s166, 1
      %p170 = scmp.eq.s32.totalorder %s27, 1
      %p171 = scmp.ne.s32.totalorder %s166, %s168
      %p172 = scmp.eq.s32.totalorder %s27, 0
      %p173 = por %p171, %p172
      %p174 = scmp.ne.s32.totalorder %s166, %s168
      %p175 = scmp.eq.s32.totalorder %s32, 1
      %p176 = por %p174, %p175
      %p177 = scmp.ne.s32.totalorder %s168, %s169
      %p178 = scmp.eq.s32.totalorder %s32, 0
      %p179 = por %p177, %p178
      %p180 = scmp.ne.s32.totalorder %s168, %s169
      %p181 = scmp.eq.s32.totalorder %s33, 1
      %p182 = por %p180, %p181
      %p184 = scmp.ne.s32.totalorder %s169, %s183
      %p185 = scmp.eq.s32.totalorder %s33, 0
      %p186 = por %p184, %p185
      %s188 = sadd.s32 %s187, 1
      %p191 = scmp.eq.s32.totalorder %s27, 1
      %p192 = scmp.ne.s32.totalorder %s187, %s189
      %p193 = scmp.eq.s32.totalorder %s27, 0
      %p194 = por %p192, %p193
      %p195 = scmp.ne.s32.totalorder %s187, %s189
      %p196 = scmp.eq.s32.totalorder %s32, 1
      %p197 = por %p195, %p196
      %p198 = scmp.ne.s32.totalorder %s189, %s190
      %p199 = scmp.eq.s32.totalorder %s32, 0
      %p200 = por %p198, %p199
      %p201 = scmp.ne.s32.totalorder %s189, %s190
      %p202 = scmp.eq.s32.totalorder %s33, 1
      %p203 = por %p201, %p202
      %p205 = scmp.ne.s32.totalorder %s190, %s204
      %p206 = scmp.eq.s32.totalorder %s33, 0
      %p207 = por %p205, %p206
      %s209 = sadd.s32 %s208, 1
      %p212 = scmp.eq.s32.totalorder %s27, 1
      %p213 = scmp.ne.s32.totalorder %s208, %s210
      %p214 = scmp.eq.s32.totalorder %s27, 0
      %p215 = por %p213, %p214
      %p216 = scmp.ne.s32.totalorder %s208, %s210
      %p217 = scmp.eq.s32.totalorder %s32, 1
      %p218 = por %p216, %p217
      %p219 = scmp.ne.s32.totalorder %s210, %s211
      %p220 = scmp.eq.s32.totalorder %s32, 0
      %p221 = por %p219, %p220
      %p222 = scmp.ne.s32.totalorder %s210, %s211
      %p223 = scmp.eq.s32.totalorder %s33, 1
      %p224 = por %p222, %p223
      %p226 = scmp.ne.s32.totalorder %s211, %s225
      %p227 = scmp.eq.s32.totalorder %s33, 0
      %p228 = por %p226, %p227
      %s230 = sadd.s32 %s229, 1
      %p233 = scmp.eq.s32.totalorder %s27, 1
      %p234 = scmp.ne.s32.totalorder %s229, %s231
      %p235 = scmp.eq.s32.totalorder %s27, 0
      %p236 = por %p234, %p235
      %p237 = scmp.ne.s32.totalorder %s229, %s231
      %p238 = scmp.eq.s32.totalorder %s32, 1
      %p239 = por %p237, %p238
      %p240 = scmp.ne.s32.totalorder %s231, %s232
      %p241 = scmp.eq.s32.totalorder %s32, 0
      %p242 = por %p240, %p241
      %p243 = scmp.ne.s32.totalorder %s231, %s232
      %p244 = scmp.eq.s32.totalorder %s33, 1
      %p245 = por %p243, %p244
      %p247 = scmp.ne.s32.totalorder %s232, %s246
      %p248 = scmp.eq.s32.totalorder %s33, 0
      %p249 = por %p247, %p248
      %s251 = sadd.s32 %s250, 1
      %p254 = scmp.eq.s32.totalorder %s27, 1
      %p255 = scmp.ne.s32.totalorder %s250, %s252
      %p256 = scmp.eq.s32.totalorder %s27, 0
      %p257 = por %p255, %p256
      %p258 = scmp.ne.s32.totalorder %s250, %s252
      %p259 = scmp.eq.s32.totalorder %s32, 1
      %p260 = por %p258, %p259
      %p261 = scmp.ne.s32.totalorder %s252, %s253
      %p262 = scmp.eq.s32.totalorder %s32, 0
      %p263 = por %p261, %p262
      %p264 = scmp.ne.s32.totalorder %s252, %s253
      %p265 = scmp.eq.s32.totalorder %s33, 1
      %p266 = por %p264, %p265
      %p268 = scmp.ne.s32.totalorder %s253, %s267
      %p269 = scmp.eq.s32.totalorder %s33, 0
      %p270 = por %p268, %p269
      %s272 = sadd.s32 %s271, 1
      %p275 = scmp.eq.s32.totalorder %s27, 1
      %p276 = scmp.ne.s32.totalorder %s271, %s273
      %p277 = scmp.eq.s32.totalorder %s27, 0
      %p278 = por %p276, %p277
      %p279 = scmp.ne.s32.totalorder %s271, %s273
      %p280 = scmp.eq.s32.totalorder %s32, 1
      %p281 = por %p279, %p280
      %p282 = scmp.ne.s32.totalorder %s273, %s274
      %p283 = scmp.eq.s32.totalorder %s32, 0
      %p284 = por %p282, %p283
      %p285 = scmp.ne.s32.totalorder %s273, %s274
      %p286 = scmp.eq.s32.totalorder %s33, 1
      %p287 = por %p285, %p286
      %p289 = scmp.ne.s32.totalorder %s274, %s288
      %p290 = scmp.eq.s32.totalorder %s33, 0
      %p291 = por %p289, %p290
      %s293 = sadd.s32 %s292, 1
      %p296 = scmp.eq.s32.totalorder %s27, 1
      %p297 = scmp.ne.s32.totalorder %s292, %s294
      %p298 = scmp.eq.s32.totalorder %s27, 0
      %p299 = por %p297, %p298
      %p300 = scmp.ne.s32.totalorder %s292, %s294
      %p301 = scmp.eq.s32.totalorder %s32, 1
      %p302 = por %p300, %p301
      %p303 = scmp.ne.s32.totalorder %s294, %s295
      %p304 = scmp.eq.s32.totalorder %s32, 0
      %p305 = por %p303, %p304
      %p306 = scmp.ne.s32.totalorder %s294, %s295
      %p307 = scmp.eq.s32.totalorder %s33, 1
      %p308 = por %p306, %p307
      %p310 = scmp.ne.s32.totalorder %s295, %s309
      %p311 = scmp.eq.s32.totalorder %s33, 0
      %p312 = por %p310, %p311
      %s314 = sadd.s32 %s313, 1
      %p317 = scmp.eq.s32.totalorder %s27, 1
      %p318 = scmp.ne.s32.totalorder %s313, %s315
      %p319 = scmp.eq.s32.totalorder %s27, 0
      %p320 = por %p318, %p319
      %p321 = scmp.ne.s32.totalorder %s313, %s315
      %p322 = scmp.eq.s32.totalorder %s32, 1
      %p323 = por %p321, %p322
      %p324 = scmp.ne.s32.totalorder %s315, %s316
      %p325 = scmp.eq.s32.totalorder %s32, 0
      %p326 = por %p324, %p325
      %p327 = scmp.ne.s32.totalorder %s315, %s316
      %p328 = scmp.eq.s32.totalorder %s33, 1
      %p329 = por %p327, %p328
      %p331 = scmp.ne.s32.totalorder %s316, %s330
      %p332 = scmp.eq.s32.totalorder %s33, 0
      %p333 = por %p331, %p332
      %s335 = sadd.s32 %s334, 1
      %p338 = scmp.eq.s32.totalorder %s27, 1
      %p339 = scmp.ne.s32.totalorder %s334, %s336
      %p340 = scmp.eq.s32.totalorder %s27, 0
      %p341 = por %p339, %p340
      %p342 = scmp.ne.s32.totalorder %s334, %s336
      %p343 = scmp.eq.s32.totalorder %s32, 1
      %p344 = por %p342, %p343
      %p345 = scmp.ne.s32.totalorder %s336, %s337
      %p346 = scmp.eq.s32.totalorder %s32, 0
      %p347 = por %p345, %p346
      %p348 = scmp.ne.s32.totalorder %s336, %s337
      %p349 = scmp.eq.s32.totalorder %s33, 1
      %p350 = por %p348, %p349
      %p352 = scmp.ne.s32.totalorder %s337, %s351
      %p353 = scmp.eq.s32.totalorder %s33, 0
      %p354 = por %p352, %p353
      %s356 = sadd.s32 %s355, 1
      %p359 = scmp.eq.s32.totalorder %s27, 1
      %p360 = scmp.ne.s32.totalorder %s355, %s357
      %p361 = scmp.eq.s32.totalorder %s27, 0
      %p362 = por %p360, %p361
      %p363 = scmp.ne.s32.totalorder %s355, %s357
      %p364 = scmp.eq.s32.totalorder %s32, 1
      %p365 = por %p363, %p364
      %p366 = scmp.ne.s32.totalorder %s357, %s358
      %p367 = scmp.eq.s32.totalorder %s32, 0
      %p368 = por %p366, %p367
      %p369 = scmp.ne.s32.totalorder %s357, %s358
      %p370 = scmp.eq.s32.totalorder %s33, 1
      %p371 = por %p369, %p370
      %p373 = scmp.ne.s32.totalorder %s358, %s372
      %p374 = scmp.eq.s32.totalorder %s33, 0
      %p375 = por %p373, %p374
      %s377 = sadd.s32 %s376, 1
      %p380 = scmp.eq.s32.totalorder %s27, 1
      %p381 = scmp.ne.s32.totalorder %s376, %s378
      %p382 = scmp.eq.s32.totalorder %s27, 0
      %p383 = por %p381, %p382
      %p384 = scmp.ne.s32.totalorder %s376, %s378
      %p385 = scmp.eq.s32.totalorder %s32, 1
      %p386 = por %p384, %p385
      %p387 = scmp.ne.s32.totalorder %s378, %s379
      %p388 = scmp.eq.s32.totalorder %s32, 0
      %p389 = por %p387, %p388
      %p390 = scmp.ne.s32.totalorder %s378, %s379
      %p391 = scmp.eq.s32.totalorder %s33, 1
      %p392 = por %p390, %p391
      %p394 = scmp.ne.s32.totalorder %s379, %s393
      %p395 = scmp.eq.s32.totalorder %s33, 0
      %p396 = por %p394, %p395
      %s398 = sadd.s32 %s397, 1
      %p401 = scmp.eq.s32.totalorder %s27, 1
      %p402 = scmp.ne.s32.totalorder %s397, %s399
      %p403 = scmp.eq.s32.totalorder %s27, 0
      %p404 = por %p402, %p403
      %p405 = scmp.ne.s32.totalorder %s397, %s399
      %p406 = scmp.eq.s32.totalorder %s32, 1
      %p407 = por %p405, %p406
      %p408 = scmp.ne.s32.totalorder %s399, %s400
      %p409 = scmp.eq.s32.totalorder %s32, 0
      %p410 = por %p408, %p409
      %p411 = scmp.ne.s32.totalorder %s399, %s400
      %p412 = scmp.eq.s32.totalorder %s33, 1
      %p413 = por %p411, %p412
      %p415 = scmp.ne.s32.totalorder %s400, %s414
      %p416 = scmp.eq.s32.totalorder %s33, 0
      %p417 = por %p415, %p416
      %s418 = ssub.s32 %s27, %s34
      %p419 = scmp.eq.s32.totalorder %s418, 0
      %s421 = sadd.s32 %s420, 1
      %s422 = scalar_select %p419, %s420, %s421
      %p425 = pneg %p419
      %p426 = scmp.eq.s32.totalorder %s27, 1
      %p427 = por %p425, %p426
      %p428 = scmp.ne.s32.totalorder %s420, %s423
      %p429 = scmp.eq.s32.totalorder %s27, 0
      %p430 = por %p428, %p429
      %p431 = scmp.ne.s32.totalorder %s420, %s423
      %p432 = scmp.eq.s32.totalorder %s32, 1
      %p433 = por %p431, %p432
      %p434 = scmp.ne.s32.totalorder %s423, %s424
      %p435 = scmp.eq.s32.totalorder %s32, 0
      %p436 = por %p434, %p435
      %p437 = scmp.ne.s32.totalorder %s423, %s424
      %p438 = scmp.eq.s32.totalorder %s33, 1
      %p439 = por %p437, %p438
      %p441 = scmp.ne.s32.totalorder %s424, %s440
      %p442 = scmp.eq.s32.totalorder %s33, 0
      %p443 = por %p441, %p442
      %p444 = scmp.le.s32.totalorder 1, %s27
      %p445 = scmp.lt.s32.totalorder %s27, 3
      %p446 = pnand %p444, %p445
      %p447 = pneg %p446
      // Predicated region
      $region9: #{siglip_vision_model.1} parent=5 // pred_check
        _
      $region10: #{siglip_vision_model.1} parent=5 // pred_check_branch
        %449 = sbr.rel (%p446) target = $region12
      $region11: #{siglip_vision_model.1} parent=5 // pred_region
        %s450 = ssub.s32 %s27, 1
        // Predicated region
        $region13: #{siglip_vision_model.1} parent=11 // pred_check
          %p451 = pneg %p74
        $region14: #{siglip_vision_model.1} parent=11 // pred_check_branch
          %453 = sbr.rel (%p451) target = $region16
        $region15: #{siglip_vision_model.1} parent=11 // pred_region
          _
        $region16: #{siglip_vision_model.1} parent=11 // pred_fallthru
          _
        // Predicated region
        $region17: #{siglip_vision_model.1} parent=11 // pred_check
          %p454 = pneg %p95
        $region18: #{siglip_vision_model.1} parent=11 // pred_check_branch
          %456 = sbr.rel (%p454) target = $region20
        $region19: #{siglip_vision_model.1} parent=11 // pred_region
          _
        $region20: #{siglip_vision_model.1} parent=11 // pred_fallthru
          _
        // Predicated region
        $region21: #{siglip_vision_model.1} parent=11 // pred_check
          %p457 = pneg %p116
        $region22: #{siglip_vision_model.1} parent=11 // pred_check_branch
          %459 = sbr.rel (%p457) target = $region24
        $region23: #{siglip_vision_model.1} parent=11 // pred_region
          _
        $region24: #{siglip_vision_model.1} parent=11 // pred_fallthru
          _
        // Predicated region
        $region25: #{siglip_vision_model.1} parent=11 // pred_check
          %p460 = pneg %p137
        $region26: #{siglip_vision_model.1} parent=11 // pred_check_branch
          %462 = sbr.rel (%p460) target = $region28
        $region27: #{siglip_vision_model.1} parent=11 // pred_region
          _
        $region28: #{siglip_vision_model.1} parent=11 // pred_fallthru
          _
        // Predicated region
        $region29: #{siglip_vision_model.1} parent=11 // pred_check
          %p463 = pneg %p158
        $region30: #{siglip_vision_model.1} parent=11 // pred_check_branch
          %465 = sbr.rel (%p463) target = $region32
        $region31: #{siglip_vision_model.1} parent=11 // pred_region
          _
        $region32: #{siglip_vision_model.1} parent=11 // pred_fallthru
          _
        // Predicated region
        $region33: #{siglip_vision_model.1} parent=11 // pred_check
          %p466 = pneg %p179
        $region34: #{siglip_vision_model.1} parent=11 // pred_check_branch
          %468 = sbr.rel (%p466) target = $region36
        $region35: #{siglip_vision_model.1} parent=11 // pred_region
          _
        $region36: #{siglip_vision_model.1} parent=11 // pred_fallthru
          _
        // Predicated region
        $region37: #{siglip_vision_model.1} parent=11 // pred_check
          %p469 = pneg %p200
        $region38: #{siglip_vision_model.1} parent=11 // pred_check_branch
          %471 = sbr.rel (%p469) target = $region40
        $region39: #{siglip_vision_model.1} parent=11 // pred_region
          _
        $region40: #{siglip_vision_model.1} parent=11 // pred_fallthru
          _
        // Predicated region
        $region41: #{siglip_vision_model.1} parent=11 // pred_check
          %p472 = pneg %p221
        $region42: #{siglip_vision_model.1} parent=11 // pred_check_branch
          %474 = sbr.rel (%p472) target = $region44
        $region43: #{siglip_vision_model.1} parent=11 // pred_region
          _
        $region44: #{siglip_vision_model.1} parent=11 // pred_fallthru
          _
        // Predicated region
        $region45: #{siglip_vision_model.1} parent=11 // pred_check
          %p475 = pneg %p242
        $region46: #{siglip_vision_model.1} parent=11 // pred_check_branch
          %477 = sbr.rel (%p475) target = $region48
        $region47: #{siglip_vision_model.1} parent=11 // pred_region
          _
        $region48: #{siglip_vision_model.1} parent=11 // pred_fallthru
          _
        // Predicated region
        $region49: #{siglip_vision_model.1} parent=11 // pred_check
          %p478 = pneg %p263
        $region50: #{siglip_vision_model.1} parent=11 // pred_check_branch
          %480 = sbr.rel (%p478) target = $region52
        $region51: #{siglip_vision_model.1} parent=11 // pred_region
          _
        $region52: #{siglip_vision_model.1} parent=11 // pred_fallthru
          _
        // Predicated region
        $region53: #{siglip_vision_model.1} parent=11 // pred_check
          %p481 = pneg %p284
        $region54: #{siglip_vision_model.1} parent=11 // pred_check_branch
          %483 = sbr.rel (%p481) target = $region56
        $region55: #{siglip_vision_model.1} parent=11 // pred_region
          _
        $region56: #{siglip_vision_model.1} parent=11 // pred_fallthru
          _
        // Predicated region
        $region57: #{siglip_vision_model.1} parent=11 // pred_check
          %p484 = pneg %p305
        $region58: #{siglip_vision_model.1} parent=11 // pred_check_branch
          %486 = sbr.rel (%p484) target = $region60
        $region59: #{siglip_vision_model.1} parent=11 // pred_region
          _
        $region60: #{siglip_vision_model.1} parent=11 // pred_fallthru
          _
        // Predicated region
        $region61: #{siglip_vision_model.1} parent=11 // pred_check
          %p487 = pneg %p326
        $region62: #{siglip_vision_model.1} parent=11 // pred_check_branch
          %489 = sbr.rel (%p487) target = $region64
        $region63: #{siglip_vision_model.1} parent=11 // pred_region
          _
        $region64: #{siglip_vision_model.1} parent=11 // pred_fallthru
          _
        // Predicated region
        $region65: #{siglip_vision_model.1} parent=11 // pred_check
          %p490 = pneg %p347
        $region66: #{siglip_vision_model.1} parent=11 // pred_check_branch
          %492 = sbr.rel (%p490) target = $region68
        $region67: #{siglip_vision_model.1} parent=11 // pred_region
          _
        $region68: #{siglip_vision_model.1} parent=11 // pred_fallthru
          _
        // Predicated region
        $region69: #{siglip_vision_model.1} parent=11 // pred_check
          %p493 = pneg %p368
        $region70: #{siglip_vision_model.1} parent=11 // pred_check_branch
          %495 = sbr.rel (%p493) target = $region72
        $region71: #{siglip_vision_model.1} parent=11 // pred_region
          _
        $region72: #{siglip_vision_model.1} parent=11 // pred_fallthru
          _
        // Predicated region
        $region73: #{siglip_vision_model.1} parent=11 // pred_check
          %p496 = pneg %p389
        $region74: #{siglip_vision_model.1} parent=11 // pred_check_branch
          %498 = sbr.rel (%p496) target = $region76
        $region75: #{siglip_vision_model.1} parent=11 // pred_region
          _
        $region76: #{siglip_vision_model.1} parent=11 // pred_fallthru
          _
        // Predicated region
        $region77: #{siglip_vision_model.1} parent=11 // pred_check
          %p499 = pneg %p410
        $region78: #{siglip_vision_model.1} parent=11 // pred_check_branch
          %501 = sbr.rel (%p499) target = $region80
        $region79: #{siglip_vision_model.1} parent=11 // pred_region
          _
        $region80: #{siglip_vision_model.1} parent=11 // pred_fallthru
          _
      $region12: #{siglip_vision_model.1} parent=5 // pred_fallthru
        _
      %p502 = scmp.lt.s32.totalorder %s27, 2
      // Predicated region
      $region81: #{siglip_vision_model.1} parent=5 // pred_check
        %p503 = pneg %p502
      $region82: #{siglip_vision_model.1} parent=5 // pred_check_branch
        %505 = sbr.rel (%p503) target = $region84
      $region83: #{siglip_vision_model.1} parent=5 // pred_region
        // Predicated region
        $region85: #{siglip_vision_model.1} parent=83 // pred_check
          %p506 = pneg %p47
        $region86: #{siglip_vision_model.1} parent=83 // pred_check_branch
          %508 = sbr.rel (%p506) target = $region88
        $region87: #{siglip_vision_model.1} parent=83 // pred_region
          %p509 = scmp.lt.s32.totalorder %s27, 1
          %s510 = scalar_select %p509, %s27, 1
          %s511 = smul.addr %s510, 2
          %s512 = smul.addr %s511, 4
          %s513 = scalar_lea.vmem %s0, %s512
        $region88: #{siglip_vision_model.1} parent=83 // pred_fallthru
          _
      $region84: #{siglip_vision_model.1} parent=5 // pred_fallthru
        _
      %p514 = scmp.le.s32.totalorder 1, %s27
      %p515 = scmp.lt.s32.totalorder %s27, 3
      %p516 = pnand %p514, %p515
      %p517 = pneg %p516
      // Predicated region
      $region89: #{siglip_vision_model.1} parent=5 // pred_check
        _
      $region90: #{siglip_vision_model.1} parent=5 // pred_check_branch
        %519 = sbr.rel (%p516) target = $region92
      $region91: #{siglip_vision_model.1} parent=5 // pred_region
        %s520 = ssub.s32 %s27, 1
        %p521 = scmp.lt.s32.totalorder %s32, 1
        %s522 = scalar_select %p521, %s32, 1
        %s523 = smul.addr %s522, 2
        %s524 = smul.addr %s523, 4
        %s525 = scalar_lea.vmem %s0, %s524
        %p526 = pneg %p53
        %p527 = pneg %p50
        %p528 = pneg %p74
        %p529 = pneg %p71
        %p530 = pneg %p95
        %p531 = pneg %p92
        %p532 = pneg %p116
        %p533 = pneg %p113
        %p534 = pneg %p137
        %p535 = pneg %p134
        %p536 = pneg %p158
        %p537 = pneg %p155
        %p538 = pneg %p179
        %p539 = pneg %p176
        %p540 = pneg %p200
        %p541 = pneg %p197
        %p542 = pneg %p221
        %p543 = pneg %p218
        %p544 = pneg %p242
        %p545 = pneg %p239
        %p546 = pneg %p263
        %p547 = pneg %p260
        %p548 = pneg %p284
        %p549 = pneg %p281
        %p550 = pneg %p305
        %p551 = pneg %p302
        %p552 = pneg %p326
        %p553 = pneg %p323
        %p554 = pneg %p347
        %p555 = pneg %p344
        %p556 = pneg %p368
        %p557 = pneg %p365
        %p558 = pneg %p389
        %p559 = pneg %p386
        %p560 = pneg %p410
        %p561 = pneg %p407
        %p562 = pneg %p436
        %p563 = pneg %p433
        %s564 = sand.u32 %s423, 1
        %s565 = scalar_lea.sflag [#allocation3], %s564
        %s566 = sand.u32 %s423, 1
        %s567 = smul.addr %s566, 16
        %s568 = scalar_lea.vmem [#allocation2], %s567
        %p569 = scmp.lt.s32.totalorder %s32, 1
        %s570 = scalar_select %p569, %s32, 1
        %s571 = smul.addr %s570, 2
        %s572 = smul.addr %s571, 4
        %s573 = scalar_lea.vmem %s0, %s572
        %v575 = vld [vmem:[%s573] sm:$0xf]
        %v576 = vld [vmem:[%s573 + $0x4] sm:$0xf]
        %v577 = vld [vmem:[%s1] sm:$0xf]
        %v578 = vld [vmem:[%s1 + $0x4] sm:$0xf]
        %v579 = vld [vmem:[%s1 + $0x8] sm:$0xf]
        %v580 = vld [vmem:[%s1 + $0xc] sm:$0xf]
        %v581 = vld [vmem:[%s1 + $0x10] sm:$0xf]
        %v582 = vld [vmem:[%s1 + $0x14] sm:$0xf]
        %v583 = vld [vmem:[%s1 + $0x18] sm:$0xf]
        %v584 = vld [vmem:[%s1 + $0x1c] sm:$0xf]
        %v585 = vld [vmem:[%s2] sm:$0xff]
        %v586 = vld [vmem:[%s2 + $0x8] sm:$0xff]
        %v589 = vunpack.c.l.b16 %v575
        %v590 = vunpack.c.l.b16 %v576
        %v591 = vpack.c.b16 %v590, %v589
        %v600 = vunpack.c.l.b16 %v577
        %v601 = vunpack.c.l.b16 %v578
        %v602 = vunpack.c.l.b16 %v579
        %v603 = vunpack.c.l.b16 %v580
        %v604 = vunpack.c.l.b16 %v581
        %v605 = vunpack.c.l.b16 %v582
        %v606 = vunpack.c.l.b16 %v583
        %v607 = vunpack.c.l.b16 %v584
        %v608 = vpack.c.b16 %v601, %v600
        %v609 = vpack.c.b16 %v603, %v602
        %v610 = vpack.c.b16 %v605, %v604
        %v611 = vpack.c.b16 %v607, %v606
        %vm616 = vcmask 523264
        %v618 = vsel %vm616, %v591, 0
        %620 = vmatprep.subr.bf16.mxu0 0
        %621 = vmatpush1.bf16.msra.mxu0 0
        %622 = vmatprep.subr.bf16.mxu0 0
        %623 = vmatpush1.bf16.msra.mxu0 0
        %624 = vmatprep.subr.bf16.mxu0 0
        %625 = vmatpush1.bf16.msra.mxu0 0
        %626 = vmatprep.subr.bf16.mxu0 0
        %627 = vmatpush1.bf16.msra.mxu0 0
        %628 = vmatprep.subr.bf16.mxu0 0
        %629 = vmatpush1.bf16.msra.mxu0 %v611
        %630 = vmatprep.subr.bf16.mxu0 0
        %631 = vmatpush1.bf16.msra.mxu0 %v610
        %632 = vmatprep.subr.bf16.mxu0 0
        %633 = vmatpush1.bf16.msra.mxu0 %v609
        %634 = vmatprep.subr.bf16.mxu0 0
        %635 = vmatpush1.bf16.msra.mxu0 %v608
        %636 = vmatprep.subr.bf16.mxu0 0
        %637 = vmatpush2.bf16.msra.mxu0 0
        %638 = vmatprep.subr.bf16.mxu0 0
        %639 = vmatpush2.bf16.msra.mxu0 0
        %640 = vmatprep.subr.bf16.mxu0 0
        %641 = vmatpush2.bf16.msra.mxu0 0
        %642 = vmatprep.subr.bf16.mxu0 0
        %643 = vmatpush2.bf16.msra.mxu0 0
        %644 = vmatprep.subr.bf16.mxu0 0
        %645 = vmatpush2.bf16.msra.mxu0 0
        %646 = vmatprep.subr.bf16.mxu0 0
        %647 = vmatpush2.bf16.msra.mxu0 0
        %648 = vmatprep.subr.bf16.mxu0 0
        %649 = vmatpush2.bf16.msra.mxu0 0
        %650 = vmatprep.subr.bf16.mxu0 0
        %651 = vmatpush2.bf16.msra.mxu0 0
        %652 = vmatprep.mubr.bf16.mxu0 0
        %653 = vmatmul.mubr.bf16.gmra.mxu0 %v618
        %v654 = vpop.f32.mrf.mxu0
        %v655 = vadd.f32 %v585, %v654
        %v656 = vpop.f32.mrf.mxu0
        %v657 = vpop.f32.mrf.mxu0
        %v658 = vadd.f32 %v586, %v657
        %v659 = vpop.f32.mrf.mxu0
        %660 = vdwg.mxu0
        %v661 = vld [vmem:[%s3] sm:$0x1]
        %v663 = vlaneseq
        %v664 = vshrl.u32 %v663, 7
        %v665 = vsub.s32 0, %v664
        %v666 = vrot.slane %v661, %v665
        %v668 = vadd.f32 %v655, %v666
        %v669 = vadd.f32 %v658, %v666
        %v670 = vld [vmem:[%s4] sm:$0x1]
        %v671 = vld [vmem:[%s5] sm:$0x1]
        %v672 = vsel %vm616, %v668, 0.0
        %673 = vadd.xlane.f32.xlu0 %v672
        %v674 = vpop.xlane.xlu0 %673
        %v675 = vsel %vm616, %v669, 0.0
        %676 = vadd.xlane.f32.xlu0 %v675
        %v677 = vpop.xlane.xlu0 %676
        %v678 = vrcp.pop 64.0
        %v679 = vmul.f32 %v674, %v678
        %v680 = vmul.f32 %v677, %v678
        %v681 = vsub.f32 %v668, %v679
        %v682 = vsub.f32 %v669, %v680
        %v683 = vmul.f32 %v681, %v681
        %v684 = vmul.f32 %v682, %v682
        %v685 = vsel %vm616, %v683, 0.0
        %686 = vadd.xlane.f32.xlu0 %v685
        %v687 = vpop.xlane.xlu0 %686
        %v688 = vsel %vm616, %v684, 0.0
        %689 = vadd.xlane.f32.xlu0 %v688
        %v690 = vpop.xlane.xlu0 %689
        %v691 = vmul.f32 %v687, %v678
        %v692 = vmul.f32 %v690, %v678
        %v693 = vadd.f32 %v691, 1e-06
        %v694 = vadd.f32 %v692, 1e-06
        %v695 = vrsqrt.pop %v693
        %v696 = vrsqrt.pop %v694
        %v697 = vmul.f32 %v681, %v695
        %v698 = vmul.f32 %v682, %v696
        %v700 = vlaneseq
        %v701 = vshrl.u32 %v700, 7
        %v702 = vsub.s32 0, %v701
        %v703 = vrot.slane %v670, %v702
        %v705 = vmul.f32 %v697, %v703
        %v706 = vmul.f32 %v698, %v703
        %v708 = vlaneseq
        %v709 = vshrl.u32 %v708, 7
        %v710 = vsub.s32 0, %v709
        %v711 = vrot.slane %v671, %v710
        %v713 = vadd.f32 %v705, %v711
        %v714 = vadd.f32 %v706, %v711
        %v715 = vpack.c.bf16 %v714, %v713
        %v716 = vld [vmem:[%s6] sm:$0xff]
        %v717 = vld [vmem:[%s6 + $0x8] sm:$0xff]
        %v718 = vld [vmem:[%s6 + $0x10] sm:$0xff]
        %v719 = vld [vmem:[%s6 + $0x18] sm:$0xff]
        %v720 = vld [vmem:[%s6 + $0x20] sm:$0xff]
        %v721 = vld [vmem:[%s6 + $0x28] sm:$0xff]
        %v722 = vld [vmem:[%s6 + $0x30] sm:$0xff]
        %v723 = vld [vmem:[%s6 + $0x38] sm:$0xff]
        %v724 = vld [vmem:[%s7] sm:$0x3]
        %v726 = vlaneseq
        %v727 = vshrl.u32 %v726, 7
        %v728 = vsub.s32 0, %v727
        %v729 = vrot.slane %v724, %v728
        %v730 = vlaneseq
        %v731 = vshrl.u32 %v730, 7
        %v732 = vsub.s32 1, %v731
        %v733 = vrot.slane %v724, %v732
        %v744 = vunpack.c.l.b16 %v716
        %v745 = vunpack.c.h.b16 %v716
        %v746 = vunpack.c.l.b16 %v717
        %v747 = vunpack.c.h.b16 %v717
        %v748 = vunpack.c.l.b16 %v718
        %v749 = vunpack.c.h.b16 %v718
        %v750 = vunpack.c.l.b16 %v719
        %v751 = vunpack.c.h.b16 %v719
        %v752 = vunpack.c.l.b16 %v720
        %v753 = vunpack.c.h.b16 %v720
        %v754 = vunpack.c.l.b16 %v721
        %v755 = vunpack.c.h.b16 %v721
        %v756 = vunpack.c.l.b16 %v722
        %v757 = vunpack.c.h.b16 %v722
        %v758 = vunpack.c.l.b16 %v723
        %v759 = vunpack.c.h.b16 %v723
        %v760 = vpack.c.b16 %v746, %v744
        %v761 = vpack.c.b16 %v747, %v745
        %v762 = vpack.c.b16 %v750, %v748
        %v763 = vpack.c.b16 %v751, %v749
        %v764 = vpack.c.b16 %v754, %v752
        %v765 = vpack.c.b16 %v755, %v753
        %v766 = vpack.c.b16 %v758, %v756
        %v767 = vpack.c.b16 %v759, %v757
        %v777 = vsel %vm616, %v715, 0
        %779 = vmatprep.subr.bf16.mxu0 0
        %780 = vmatpush1.bf16.msra.mxu0 0
        %781 = vmatprep.subr.bf16.mxu0 0
        %782 = vmatpush1.bf16.msra.mxu0 0
        %783 = vmatprep.subr.bf16.mxu0 0
        %784 = vmatpush1.bf16.msra.mxu0 0
        %785 = vmatprep.subr.bf16.mxu0 0
        %786 = vmatpush1.bf16.msra.mxu0 0
        %787 = vmatprep.subr.bf16.mxu0 %v767
        %788 = vmatpush1.bf16.msra.mxu0 %v766
        %789 = vmatprep.subr.bf16.mxu0 %v765
        %790 = vmatpush1.bf16.msra.mxu0 %v764
        %791 = vmatprep.subr.bf16.mxu0 %v763
        %792 = vmatpush1.bf16.msra.mxu0 %v762
        %793 = vmatprep.subr.bf16.mxu0 %v761
        %794 = vmatpush1.bf16.msra.mxu0 %v760
        %795 = vmatprep.subr.bf16.mxu0 0
        %796 = vmatpush2.bf16.msra.mxu0 0
        %797 = vmatprep.subr.bf16.mxu0 0
        %798 = vmatpush2.bf16.msra.mxu0 0
        %799 = vmatprep.subr.bf16.mxu0 0
        %800 = vmatpush2.bf16.msra.mxu0 0
        %801 = vmatprep.subr.bf16.mxu0 0
        %802 = vmatpush2.bf16.msra.mxu0 0
        %803 = vmatprep.subr.bf16.mxu0 0
        %804 = vmatpush2.bf16.msra.mxu0 0
        %805 = vmatprep.subr.bf16.mxu0 0
        %806 = vmatpush2.bf16.msra.mxu0 0
        %807 = vmatprep.subr.bf16.mxu0 0
        %808 = vmatpush2.bf16.msra.mxu0 0
        %809 = vmatprep.subr.bf16.mxu0 0
        %810 = vmatpush2.bf16.msra.mxu0 0
        %811 = vmatprep.mubr.bf16.mxu0 0
        %812 = vmatmul.mubr.bf16.gmra.mxu0 %v777
        %v813 = vpop.f32.mrf.mxu0
        %v814 = vadd.f32 %v729, %v813
        %v815 = vpop.f32.mrf.mxu0
        %v816 = vadd.f32 %v733, %v815
        %v817 = vpop.f32.mrf.mxu0
        %v818 = vadd.f32 %v729, %v817
        %v819 = vpop.f32.mrf.mxu0
        %v820 = vadd.f32 %v733, %v819
        %821 = vdwg.mxu0
        %824 = vrot.lane.b32.xlu0 %v814, 112
        %v825 = vpop.permute.xlu0 %824
        %826 = vrot.lane.b32.xlu0 %v818, 112
        %v827 = vpop.permute.xlu0 %826
        %830 = vrot.lane.b32.xlu0 %v814, 96
        %v831 = vpop.permute.xlu0 %830
        %832 = vrot.lane.b32.xlu0 %v818, 96
        %v833 = vpop.permute.xlu0 %832
        %836 = vrot.lane.b32.xlu0 %v814, 80
        %v837 = vpop.permute.xlu0 %836
        %838 = vrot.lane.b32.xlu0 %v818, 80
        %v839 = vpop.permute.xlu0 %838
        %v842 = vcombine.low %v814, %v831
        %v843 = vcombine.high %v814, %v831
        %v845 = vunpack.c.l.s4 1983009808
        %v846 = vunpack.c.0.s8 %v845
        %v847 = vlaneseq
        %v848 = vshrl.u32 %v847, 7
        %v849 = vsub.s32 %v846, %v848
        %v850 = vrot.slane %v842, %v849
        %v852 = vunpack.c.l.s4 1983009808
        %v853 = vunpack.c.0.s8 %v852
        %v854 = vlaneseq
        %v855 = vshrl.u32 %v854, 7
        %v856 = vsub.s32 %v853, %v855
        %v857 = vrot.slane %v843, %v856
        %v858 = vcombine.low %v825, %v837
        %v859 = vcombine.high %v825, %v837
        %v861 = vunpack.c.l.s4 1983009808
        %v862 = vunpack.c.0.s8 %v861
        %v863 = vlaneseq
        %v864 = vshrl.u32 %v863, 7
        %v865 = vsub.s32 %v862, %v864
        %v866 = vrot.slane %v858, %v865
        %v868 = vunpack.c.l.s4 1983009808
        %v869 = vunpack.c.0.s8 %v868
        %v870 = vlaneseq
        %v871 = vshrl.u32 %v870, 7
        %v872 = vsub.s32 %v869, %v871
        %v873 = vrot.slane %v859, %v872
        %v874 = vcombine.low %v850, %v866
        %v875 = vcombine.high %v850, %v866
        %v877 = vunpack.c.l.s4 1934713408
        %v878 = vunpack.c.0.s8 %v877
        %v879 = vlaneseq
        %v880 = vshrl.u32 %v879, 7
        %v881 = vsub.s32 %v878, %v880
        %v882 = vrot.slane %v874, %v881
        %v884 = vunpack.c.l.s4 1934713408
        %v885 = vunpack.c.0.s8 %v884
        %v886 = vlaneseq
        %v887 = vshrl.u32 %v886, 7
        %v888 = vsub.s32 %v885, %v887
        %v889 = vrot.slane %v875, %v888
        %v890 = vcombine.low %v857, %v873
        %v891 = vcombine.high %v857, %v873
        %v893 = vunpack.c.l.s4 1934713408
        %v894 = vunpack.c.0.s8 %v893
        %v895 = vlaneseq
        %v896 = vshrl.u32 %v895, 7
        %v897 = vsub.s32 %v894, %v896
        %v898 = vrot.slane %v890, %v897
        %v900 = vunpack.c.l.s4 1934713408
        %v901 = vunpack.c.0.s8 %v900
        %v902 = vlaneseq
        %v903 = vshrl.u32 %v902, 7
        %v904 = vsub.s32 %v901, %v903
        %v905 = vrot.slane %v891, %v904
        %v906 = vcombine.high %v882, 0.0
        %v907 = vcombine.high %v889, 0.0
        %v908 = vcombine.high %v898, 0.0
        %v909 = vcombine.high %v905, 0.0
        %v910 = vcombine.low %v818, %v833
        %v911 = vcombine.high %v818, %v833
        %v913 = vunpack.c.l.s4 1983009808
        %v914 = vunpack.c.0.s8 %v913
        %v915 = vlaneseq
        %v916 = vshrl.u32 %v915, 7
        %v917 = vsub.s32 %v914, %v916
        %v918 = vrot.slane %v910, %v917
        %v920 = vunpack.c.l.s4 1983009808
        %v921 = vunpack.c.0.s8 %v920
        %v922 = vlaneseq
        %v923 = vshrl.u32 %v922, 7
        %v924 = vsub.s32 %v921, %v923
        %v925 = vrot.slane %v911, %v924
        %v926 = vcombine.low %v827, %v839
        %v927 = vcombine.high %v827, %v839
        %v929 = vunpack.c.l.s4 1983009808
        %v930 = vunpack.c.0.s8 %v929
        %v931 = vlaneseq
        %v932 = vshrl.u32 %v931, 7
        %v933 = vsub.s32 %v930, %v932
        %v934 = vrot.slane %v926, %v933
        %v936 = vunpack.c.l.s4 1983009808
        %v937 = vunpack.c.0.s8 %v936
        %v938 = vlaneseq
        %v939 = vshrl.u32 %v938, 7
        %v940 = vsub.s32 %v937, %v939
        %v941 = vrot.slane %v927, %v940
        %v942 = vcombine.low %v918, %v934
        %v943 = vcombine.high %v918, %v934
        %v945 = vunpack.c.l.s4 1934713408
        %v946 = vunpack.c.0.s8 %v945
        %v947 = vlaneseq
        %v948 = vshrl.u32 %v947, 7
        %v949 = vsub.s32 %v946, %v948
        %v950 = vrot.slane %v942, %v949
        %v952 = vunpack.c.l.s4 1934713408
        %v953 = vunpack.c.0.s8 %v952
        %v954 = vlaneseq
        %v955 = vshrl.u32 %v954, 7
        %v956 = vsub.s32 %v953, %v955
        %v957 = vrot.slane %v943, %v956
        %v958 = vcombine.low %v925, %v941
        %v959 = vcombine.high %v925, %v941
        %v961 = vunpack.c.l.s4 1934713408
        %v962 = vunpack.c.0.s8 %v961
        %v963 = vlaneseq
        %v964 = vshrl.u32 %v963, 7
        %v965 = vsub.s32 %v962, %v964
        %v966 = vrot.slane %v958, %v965
        %v968 = vunpack.c.l.s4 1934713408
        %v969 = vunpack.c.0.s8 %v968
        %v970 = vlaneseq
        %v971 = vshrl.u32 %v970, 7
        %v972 = vsub.s32 %v969, %v971
        %v973 = vrot.slane %v959, %v972
        %v974 = vcombine.high %v950, 0.0
        %v975 = vcombine.high %v957, 0.0
        %v976 = vcombine.high %v966, 0.0
        %v977 = vcombine.high %v973, 0.0
        %v978 = vpack.c.bf16 %v882, %v882
        %v979 = vpack.c.bf16 %v906, %v906
        %v980 = vpack.c.bf16 %v889, %v889
        %v981 = vpack.c.bf16 %v907, %v907
        %v982 = vpack.c.bf16 %v898, %v898
        %v983 = vpack.c.bf16 %v908, %v908
        %v984 = vpack.c.bf16 %v905, %v905
        %v985 = vpack.c.bf16 %v909, %v909
        %v986 = vpack.c.bf16 %v950, %v950
        %v987 = vpack.c.bf16 %v974, %v974
        %v988 = vpack.c.bf16 %v957, %v957
        %v989 = vpack.c.bf16 %v975, %v975
        %v990 = vpack.c.bf16 %v966, %v966
        %v991 = vpack.c.bf16 %v976, %v976
        %v992 = vpack.c.bf16 %v973, %v973
        %v993 = vpack.c.bf16 %v977, %v977
        %994 = vrot.lane.b32.xlu0 %v814, 64
        %v995 = vpop.permute.xlu0 %994
        %996 = vrot.lane.b32.xlu0 %v818, 64
        %v997 = vpop.permute.xlu0 %996
        %998 = vrot.lane.b32.xlu0 %v825, 64
        %v999 = vpop.permute.xlu0 %998
        %1000 = vrot.lane.b32.xlu0 %v827, 64
        %v1001 = vpop.permute.xlu0 %1000
        %1002 = vrot.lane.b32.xlu0 %v831, 64
        %v1003 = vpop.permute.xlu0 %1002
        %1004 = vrot.lane.b32.xlu0 %v833, 64
        %v1005 = vpop.permute.xlu0 %1004
        %1006 = vrot.lane.b32.xlu0 %v837, 64
        %v1007 = vpop.permute.xlu0 %1006
        %1008 = vrot.lane.b32.xlu0 %v839, 64
        %v1009 = vpop.permute.xlu0 %1008
        %v1018 = vcombine.low %v995, %v1003
        %v1019 = vcombine.high %v995, %v1003
        %v1021 = vunpack.c.l.s4 1983009808
        %v1022 = vunpack.c.0.s8 %v1021
        %v1023 = vlaneseq
        %v1024 = vshrl.u32 %v1023, 7
        %v1025 = vsub.s32 %v1022, %v1024
        %v1026 = vrot.slane %v1018, %v1025
        %v1028 = vunpack.c.l.s4 1983009808
        %v1029 = vunpack.c.0.s8 %v1028
        %v1030 = vlaneseq
        %v1031 = vshrl.u32 %v1030, 7
        %v1032 = vsub.s32 %v1029, %v1031
        %v1033 = vrot.slane %v1019, %v1032
        %v1034 = vcombine.low %v999, %v1007
        %v1035 = vcombine.high %v999, %v1007
        %v1037 = vunpack.c.l.s4 1983009808
        %v1038 = vunpack.c.0.s8 %v1037
        %v1039 = vlaneseq
        %v1040 = vshrl.u32 %v1039, 7
        %v1041 = vsub.s32 %v1038, %v1040
        %v1042 = vrot.slane %v1034, %v1041
        %v1044 = vunpack.c.l.s4 1983009808
        %v1045 = vunpack.c.0.s8 %v1044
        %v1046 = vlaneseq
        %v1047 = vshrl.u32 %v1046, 7
        %v1048 = vsub.s32 %v1045, %v1047
        %v1049 = vrot.slane %v1035, %v1048
        %v1050 = vcombine.low %v1026, %v1042
        %v1051 = vcombine.high %v1026, %v1042
        %v1053 = vunpack.c.l.s4 1934713408
        %v1054 = vunpack.c.0.s8 %v1053
        %v1055 = vlaneseq
        %v1056 = vshrl.u32 %v1055, 7
        %v1057 = vsub.s32 %v1054, %v1056
        %v1058 = vrot.slane %v1050, %v1057
        %v1060 = vunpack.c.l.s4 1934713408
        %v1061 = vunpack.c.0.s8 %v1060
        %v1062 = vlaneseq
        %v1063 = vshrl.u32 %v1062, 7
        %v1064 = vsub.s32 %v1061, %v1063
        %v1065 = vrot.slane %v1051, %v1064
        %v1066 = vcombine.low %v1033, %v1049
        %v1067 = vcombine.high %v1033, %v1049
        %v1069 = vunpack.c.l.s4 1934713408
        %v1070 = vunpack.c.0.s8 %v1069
        %v1071 = vlaneseq
        %v1072 = vshrl.u32 %v1071, 7
        %v1073 = vsub.s32 %v1070, %v1072
        %v1074 = vrot.slane %v1066, %v1073
        %v1076 = vunpack.c.l.s4 1934713408
        %v1077 = vunpack.c.0.s8 %v1076
        %v1078 = vlaneseq
        %v1079 = vshrl.u32 %v1078, 7
        %v1080 = vsub.s32 %v1077, %v1079
        %v1081 = vrot.slane %v1067, %v1080
        %v1082 = vcombine.high %v1058, 0.0
        %v1083 = vcombine.high %v1065, 0.0
        %v1084 = vcombine.high %v1074, 0.0
        %v1085 = vcombine.high %v1081, 0.0
        %v1086 = vcombine.low %v997, %v1005
        %v1087 = vcombine.high %v997, %v1005
        %v1089 = vunpack.c.l.s4 1983009808
        %v1090 = vunpack.c.0.s8 %v1089
        %v1091 = vlaneseq
        %v1092 = vshrl.u32 %v1091, 7
        %v1093 = vsub.s32 %v1090, %v1092
        %v1094 = vrot.slane %v1086, %v1093
        %v1096 = vunpack.c.l.s4 1983009808
        %v1097 = vunpack.c.0.s8 %v1096
        %v1098 = vlaneseq
        %v1099 = vshrl.u32 %v1098, 7
        %v1100 = vsub.s32 %v1097, %v1099
        %v1101 = vrot.slane %v1087, %v1100
        %v1102 = vcombine.low %v1001, %v1009
        %v1103 = vcombine.high %v1001, %v1009
        %v1105 = vunpack.c.l.s4 1983009808
        %v1106 = vunpack.c.0.s8 %v1105
        %v1107 = vlaneseq
        %v1108 = vshrl.u32 %v1107, 7
        %v1109 = vsub.s32 %v1106, %v1108
        %v1110 = vrot.slane %v1102, %v1109
        %v1112 = vunpack.c.l.s4 1983009808
        %v1113 = vunpack.c.0.s8 %v1112
        %v1114 = vlaneseq
        %v1115 = vshrl.u32 %v1114, 7
        %v1116 = vsub.s32 %v1113, %v1115
        %v1117 = vrot.slane %v1103, %v1116
        %v1118 = vcombine.low %v1094, %v1110
        %v1119 = vcombine.high %v1094, %v1110
        %v1121 = vunpack.c.l.s4 1934713408
        %v1122 = vunpack.c.0.s8 %v1121
        %v1123 = vlaneseq
        %v1124 = vshrl.u32 %v1123, 7
        %v1125 = vsub.s32 %v1122, %v1124
        %v1126 = vrot.slane %v1118, %v1125
        %v1128 = vunpack.c.l.s4 1934713408
        %v1129 = vunpack.c.0.s8 %v1128
        %v1130 = vlaneseq
        %v1131 = vshrl.u32 %v1130, 7
        %v1132 = vsub.s32 %v1129, %v1131
        %v1133 = vrot.slane %v1119, %v1132
        %v1134 = vcombine.low %v1101, %v1117
        %v1135 = vcombine.high %v1101, %v1117
        %v1137 = vunpack.c.l.s4 1934713408
        %v1138 = vunpack.c.0.s8 %v1137
        %v1139 = vlaneseq
        %v1140 = vshrl.u32 %v1139, 7
        %v1141 = vsub.s32 %v1138, %v1140
        %v1142 = vrot.slane %v1134, %v1141
        %v1144 = vunpack.c.l.s4 1934713408
        %v1145 = vunpack.c.0.s8 %v1144
        %v1146 = vlaneseq
        %v1147 = vshrl.u32 %v1146, 7
        %v1148 = vsub.s32 %v1145, %v1147
        %v1149 = vrot.slane %v1135, %v1148
        %v1150 = vcombine.high %v1126, 0.0
        %v1151 = vcombine.high %v1133, 0.0
        %v1152 = vcombine.high %v1142, 0.0
        %v1153 = vcombine.high %v1149, 0.0
        %v1154 = vpack.c.bf16 %v1058, %v1058
        %v1155 = vpack.c.bf16 %v1082, %v1082
        %v1156 = vpack.c.bf16 %v1065, %v1065
        %v1157 = vpack.c.bf16 %v1083, %v1083
        %v1158 = vpack.c.bf16 %v1074, %v1074
        %v1159 = vpack.c.bf16 %v1084, %v1084
        %v1160 = vpack.c.bf16 %v1081, %v1081
        %v1161 = vpack.c.bf16 %v1085, %v1085
        %v1162 = vpack.c.bf16 %v1126, %v1126
        %v1163 = vpack.c.bf16 %v1150, %v1150
        %v1164 = vpack.c.bf16 %v1133, %v1133
        %v1165 = vpack.c.bf16 %v1151, %v1151
        %v1166 = vpack.c.bf16 %v1142, %v1142
        %v1167 = vpack.c.bf16 %v1152, %v1152
        %v1168 = vpack.c.bf16 %v1149, %v1149
        %v1169 = vpack.c.bf16 %v1153, %v1153
        %1172 = vrot.lane.b32.xlu0 %v816, 112
        %v1173 = vpop.permute.xlu0 %1172
        %1174 = vrot.lane.b32.xlu0 %v820, 112
        %v1175 = vpop.permute.xlu0 %1174
        %1178 = vrot.lane.b32.xlu0 %v816, 96
        %v1179 = vpop.permute.xlu0 %1178
        %1180 = vrot.lane.b32.xlu0 %v820, 96
        %v1181 = vpop.permute.xlu0 %1180
        %1184 = vrot.lane.b32.xlu0 %v816, 80
        %v1185 = vpop.permute.xlu0 %1184
        %1186 = vrot.lane.b32.xlu0 %v820, 80
        %v1187 = vpop.permute.xlu0 %1186
        %v1190 = vcombine.low %v816, %v1179
        %v1191 = vcombine.high %v816, %v1179
        %v1193 = vunpack.c.l.s4 1983009808
        %v1194 = vunpack.c.0.s8 %v1193
        %v1195 = vlaneseq
        %v1196 = vshrl.u32 %v1195, 7
        %v1197 = vsub.s32 %v1194, %v1196
        %v1198 = vrot.slane %v1190, %v1197
        %v1200 = vunpack.c.l.s4 1983009808
        %v1201 = vunpack.c.0.s8 %v1200
        %v1202 = vlaneseq
        %v1203 = vshrl.u32 %v1202, 7
        %v1204 = vsub.s32 %v1201, %v1203
        %v1205 = vrot.slane %v1191, %v1204
        %v1206 = vcombine.low %v1173, %v1185
        %v1207 = vcombine.high %v1173, %v1185
        %v1209 = vunpack.c.l.s4 1983009808
        %v1210 = vunpack.c.0.s8 %v1209
        %v1211 = vlaneseq
        %v1212 = vshrl.u32 %v1211, 7
        %v1213 = vsub.s32 %v1210, %v1212
        %v1214 = vrot.slane %v1206, %v1213
        %v1216 = vunpack.c.l.s4 1983009808
        %v1217 = vunpack.c.0.s8 %v1216
        %v1218 = vlaneseq
        %v1219 = vshrl.u32 %v1218, 7
        %v1220 = vsub.s32 %v1217, %v1219
        %v1221 = vrot.slane %v1207, %v1220
        %v1222 = vcombine.low %v1198, %v1214
        %v1223 = vcombine.high %v1198, %v1214
        %v1225 = vunpack.c.l.s4 1934713408
        %v1226 = vunpack.c.0.s8 %v1225
        %v1227 = vlaneseq
        %v1228 = vshrl.u32 %v1227, 7
        %v1229 = vsub.s32 %v1226, %v1228
        %v1230 = vrot.slane %v1222, %v1229
        %v1232 = vunpack.c.l.s4 1934713408
        %v1233 = vunpack.c.0.s8 %v1232
        %v1234 = vlaneseq
        %v1235 = vshrl.u32 %v1234, 7
        %v1236 = vsub.s32 %v1233, %v1235
        %v1237 = vrot.slane %v1223, %v1236
        %v1238 = vcombine.low %v1205, %v1221
        %v1239 = vcombine.high %v1205, %v1221
        %v1241 = vunpack.c.l.s4 1934713408
        %v1242 = vunpack.c.0.s8 %v1241
        %v1243 = vlaneseq
        %v1244 = vshrl.u32 %v1243, 7
        %v1245 = vsub.s32 %v1242, %v1244
        %v1246 = vrot.slane %v1238, %v1245
        %v1248 = vunpack.c.l.s4 1934713408
        %v1249 = vunpack.c.0.s8 %v1248
        %v1250 = vlaneseq
        %v1251 = vshrl.u32 %v1250, 7
        %v1252 = vsub.s32 %v1249, %v1251
        %v1253 = vrot.slane %v1239, %v1252
        %v1254 = vcombine.high %v1230, 0.0
        %v1255 = vcombine.high %v1237, 0.0
        %v1256 = vcombine.high %v1246, 0.0
        %v1257 = vcombine.high %v1253, 0.0
        %v1258 = vcombine.low %v820, %v1181
        %v1259 = vcombine.high %v820, %v1181
        %v1261 = vunpack.c.l.s4 1983009808
        %v1262 = vunpack.c.0.s8 %v1261
        %v1263 = vlaneseq
        %v1264 = vshrl.u32 %v1263, 7
        %v1265 = vsub.s32 %v1262, %v1264
        %v1266 = vrot.slane %v1258, %v1265
        %v1268 = vunpack.c.l.s4 1983009808
        %v1269 = vunpack.c.0.s8 %v1268
        %v1270 = vlaneseq
        %v1271 = vshrl.u32 %v1270, 7
        %v1272 = vsub.s32 %v1269, %v1271
        %v1273 = vrot.slane %v1259, %v1272
        %v1274 = vcombine.low %v1175, %v1187
        %v1275 = vcombine.high %v1175, %v1187
        %v1277 = vunpack.c.l.s4 1983009808
        %v1278 = vunpack.c.0.s8 %v1277
        %v1279 = vlaneseq
        %v1280 = vshrl.u32 %v1279, 7
        %v1281 = vsub.s32 %v1278, %v1280
        %v1282 = vrot.slane %v1274, %v1281
        %v1284 = vunpack.c.l.s4 1983009808
        %v1285 = vunpack.c.0.s8 %v1284
        %v1286 = vlaneseq
        %v1287 = vshrl.u32 %v1286, 7
        %v1288 = vsub.s32 %v1285, %v1287
        %v1289 = vrot.slane %v1275, %v1288
        %v1290 = vcombine.low %v1266, %v1282
        %v1291 = vcombine.high %v1266, %v1282
        %v1293 = vunpack.c.l.s4 1934713408
        %v1294 = vunpack.c.0.s8 %v1293
        %v1295 = vlaneseq
        %v1296 = vshrl.u32 %v1295, 7
        %v1297 = vsub.s32 %v1294, %v1296
        %v1298 = vrot.slane %v1290, %v1297
        %v1300 = vunpack.c.l.s4 1934713408
        %v1301 = vunpack.c.0.s8 %v1300
        %v1302 = vlaneseq
        %v1303 = vshrl.u32 %v1302, 7
        %v1304 = vsub.s32 %v1301, %v1303
        %v1305 = vrot.slane %v1291, %v1304
        %v1306 = vcombine.low %v1273, %v1289
        %v1307 = vcombine.high %v1273, %v1289
        %v1309 = vunpack.c.l.s4 1934713408
        %v1310 = vunpack.c.0.s8 %v1309
        %v1311 = vlaneseq
        %v1312 = vshrl.u32 %v1311, 7
        %v1313 = vsub.s32 %v1310, %v1312
        %v1314 = vrot.slane %v1306, %v1313
        %v1316 = vunpack.c.l.s4 1934713408
        %v1317 = vunpack.c.0.s8 %v1316
        %v1318 = vlaneseq
        %v1319 = vshrl.u32 %v1318, 7
        %v1320 = vsub.s32 %v1317, %v1319
        %v1321 = vrot.slane %v1307, %v1320
        %v1322 = vcombine.high %v1298, 0.0
        %v1323 = vcombine.high %v1305, 0.0
        %v1324 = vcombine.high %v1314, 0.0
        %v1325 = vcombine.high %v1321, 0.0
        %v1326 = vpack.c.bf16 %v1230, %v1230
        %v1327 = vpack.c.bf16 %v1254, %v1254
        %v1328 = vpack.c.bf16 %v1237, %v1237
        %v1329 = vpack.c.bf16 %v1255, %v1255
        %v1330 = vpack.c.bf16 %v1246, %v1246
        %v1331 = vpack.c.bf16 %v1256, %v1256
        %v1332 = vpack.c.bf16 %v1253, %v1253
        %v1333 = vpack.c.bf16 %v1257, %v1257
        %v1334 = vpack.c.bf16 %v1298, %v1298
        %v1335 = vpack.c.bf16 %v1322, %v1322
        %v1336 = vpack.c.bf16 %v1305, %v1305
        %v1337 = vpack.c.bf16 %v1323, %v1323
        %v1338 = vpack.c.bf16 %v1314, %v1314
        %v1339 = vpack.c.bf16 %v1324, %v1324
        %v1340 = vpack.c.bf16 %v1321, %v1321
        %v1341 = vpack.c.bf16 %v1325, %v1325
        %v1342 = vcombine.low %v978, %v982
        %v1344 = vunpack.c.l.s4 1983009808
        %v1345 = vunpack.c.0.s8 %v1344
        %v1346 = vlaneseq
        %v1347 = vshrl.u32 %v1346, 7
        %v1348 = vsub.s32 %v1345, %v1347
        %v1349 = vrot.slane %v1342, %v1348
        %v1350 = vcombine.low %v980, %v984
        %v1352 = vunpack.c.l.s4 1983009808
        %v1353 = vunpack.c.0.s8 %v1352
        %v1354 = vlaneseq
        %v1355 = vshrl.u32 %v1354, 7
        %v1356 = vsub.s32 %v1353, %v1355
        %v1357 = vrot.slane %v1350, %v1356
        %v1358 = vcombine.low %v986, %v990
        %v1360 = vunpack.c.l.s4 1983009808
        %v1361 = vunpack.c.0.s8 %v1360
        %v1362 = vlaneseq
        %v1363 = vshrl.u32 %v1362, 7
        %v1364 = vsub.s32 %v1361, %v1363
        %v1365 = vrot.slane %v1358, %v1364
        %v1366 = vcombine.low %v988, %v992
        %v1368 = vunpack.c.l.s4 1983009808
        %v1369 = vunpack.c.0.s8 %v1368
        %v1370 = vlaneseq
        %v1371 = vshrl.u32 %v1370, 7
        %v1372 = vsub.s32 %v1369, %v1371
        %v1373 = vrot.slane %v1366, %v1372
        %v1374 = vcombine.low %v1349, %v1357
        %v1376 = vunpack.c.l.s4 1934713408
        %v1377 = vunpack.c.0.s8 %v1376
        %v1378 = vlaneseq
        %v1379 = vshrl.u32 %v1378, 7
        %v1380 = vsub.s32 %v1377, %v1379
        %v1381 = vrot.slane %v1374, %v1380
        %v1382 = vcombine.low %v1365, %v1373
        %v1384 = vunpack.c.l.s4 1934713408
        %v1385 = vunpack.c.0.s8 %v1384
        %v1386 = vlaneseq
        %v1387 = vshrl.u32 %v1386, 7
        %v1388 = vsub.s32 %v1385, %v1387
        %v1389 = vrot.slane %v1382, %v1388
        %v1390 = vcombine.low %v1381, %v1389
        %v1391 = vcombine.high %v1381, %v1389
        %v1392 = vcombine.low %v979, %v983
        %v1394 = vunpack.c.l.s4 1983009808
        %v1395 = vunpack.c.0.s8 %v1394
        %v1396 = vlaneseq
        %v1397 = vshrl.u32 %v1396, 7
        %v1398 = vsub.s32 %v1395, %v1397
        %v1399 = vrot.slane %v1392, %v1398
        %v1400 = vcombine.low %v981, %v985
        %v1402 = vunpack.c.l.s4 1983009808
        %v1403 = vunpack.c.0.s8 %v1402
        %v1404 = vlaneseq
        %v1405 = vshrl.u32 %v1404, 7
        %v1406 = vsub.s32 %v1403, %v1405
        %v1407 = vrot.slane %v1400, %v1406
        %v1408 = vcombine.low %v987, %v991
        %v1410 = vunpack.c.l.s4 1983009808
        %v1411 = vunpack.c.0.s8 %v1410
        %v1412 = vlaneseq
        %v1413 = vshrl.u32 %v1412, 7
        %v1414 = vsub.s32 %v1411, %v1413
        %v1415 = vrot.slane %v1408, %v1414
        %v1416 = vcombine.low %v989, %v993
        %v1418 = vunpack.c.l.s4 1983009808
        %v1419 = vunpack.c.0.s8 %v1418
        %v1420 = vlaneseq
        %v1421 = vshrl.u32 %v1420, 7
        %v1422 = vsub.s32 %v1419, %v1421
        %v1423 = vrot.slane %v1416, %v1422
        %v1424 = vcombine.low %v1399, %v1407
        %v1426 = vunpack.c.l.s4 1934713408
        %v1427 = vunpack.c.0.s8 %v1426
        %v1428 = vlaneseq
        %v1429 = vshrl.u32 %v1428, 7
        %v1430 = vsub.s32 %v1427, %v1429
        %v1431 = vrot.slane %v1424, %v1430
        %v1432 = vcombine.low %v1415, %v1423
        %v1434 = vunpack.c.l.s4 1934713408
        %v1435 = vunpack.c.0.s8 %v1434
        %v1436 = vlaneseq
        %v1437 = vshrl.u32 %v1436, 7
        %v1438 = vsub.s32 %v1435, %v1437
        %v1439 = vrot.slane %v1432, %v1438
        %v1440 = vcombine.low %v1431, %v1439
        %v1441 = vcombine.high %v1431, %v1439
        %v1444 = vpack.i.b16 %v1440, %v1390
        %v1445 = vshrl.u32 %v1390, 16
        %v1446 = vshrl.u32 %v1440, 16
        %v1447 = vpack.i.b16 %v1446, %v1445
        %v1450 = vpack.i.b16 %v1441, %v1391
        %v1451 = vshrl.u32 %v1391, 16
        %v1452 = vshrl.u32 %v1441, 16
        %v1453 = vpack.i.b16 %v1452, %v1451
        %1454 = vxpose.xlu0.c.b16.start [1/8] %v1154, 128
        %1455 = vxpose.xlu0.c.b16.cont [2/8] 0, 128
        %1456 = vxpose.xlu0.c.b16.cont [3/8] 0, 128
        %1457 = vxpose.xlu0.c.b16.cont [4/8] 0, 128
        %1458 = vxpose.xlu0.c.b16.cont [5/8] 0, 128
        %1459 = vxpose.xlu0.c.b16.cont [6/8] 0, 128
        %1460 = vxpose.xlu0.c.b16.cont [7/8] 0, 128
        %1461 = vxpose.xlu0.c.b16.end [8/8] 0, 128
        %v1462 = vpop.trf.xlu0
        %v1463 = vpop.trf.xlu0
        %v1464 = vpop.trf.xlu0
        %v1465 = vpop.trf.xlu0
        %v1466 = vpop.trf.xlu0
        %v1467 = vpop.trf.xlu0
        %v1468 = vpop.trf.xlu0
        %v1469 = vpop.trf.xlu0
        %1470 = vxpose.xlu0.c.b16.start [1/8] %v1155, 128
        %1471 = vxpose.xlu0.c.b16.cont [2/8] 0, 128
        %1472 = vxpose.xlu0.c.b16.cont [3/8] 0, 128
        %1473 = vxpose.xlu0.c.b16.cont [4/8] 0, 128
        %1474 = vxpose.xlu0.c.b16.cont [5/8] 0, 128
        %1475 = vxpose.xlu0.c.b16.cont [6/8] 0, 128
        %1476 = vxpose.xlu0.c.b16.cont [7/8] 0, 128
        %1477 = vxpose.xlu0.c.b16.end [8/8] 0, 128
        %v1478 = vpop.trf.xlu0
        %v1479 = vpop.trf.xlu0
        %v1480 = vpop.trf.xlu0
        %v1481 = vpop.trf.xlu0
        %v1482 = vpop.trf.xlu0
        %v1483 = vpop.trf.xlu0
        %v1484 = vpop.trf.xlu0
        %v1485 = vpop.trf.xlu0
        %1486 = vxpose.xlu0.c.b16.start [1/8] %v1156, 128
        %1487 = vxpose.xlu0.c.b16.cont [2/8] 0, 128
        %1488 = vxpose.xlu0.c.b16.cont [3/8] 0, 128
        %1489 = vxpose.xlu0.c.b16.cont [4/8] 0, 128
        %1490 = vxpose.xlu0.c.b16.cont [5/8] 0, 128
        %1491 = vxpose.xlu0.c.b16.cont [6/8] 0, 128
        %1492 = vxpose.xlu0.c.b16.cont [7/8] 0, 128
        %1493 = vxpose.xlu0.c.b16.end [8/8] 0, 128
        %v1494 = vpop.trf.xlu0
        %v1495 = vpop.trf.xlu0
        %v1496 = vpop.trf.xlu0
        %v1497 = vpop.trf.xlu0
        %v1498 = vpop.trf.xlu0
        %v1499 = vpop.trf.xlu0
        %v1500 = vpop.trf.xlu0
        %v1501 = vpop.trf.xlu0
        %1502 = vxpose.xlu0.c.b16.start [1/8] %v1157, 128
        %1503 = vxpose.xlu0.c.b16.cont [2/8] 0, 128
        %1504 = vxpose.xlu0.c.b16.cont [3/8] 0, 128
        %1505 = vxpose.xlu0.c.b16.cont [4/8] 0, 128
        %1506 = vxpose.xlu0.c.b16.cont [5/8] 0, 128
        %1507 = vxpose.xlu0.c.b16.cont [6/8] 0, 128
        %1508 = vxpose.xlu0.c.b16.cont [7/8] 0, 128
        %1509 = vxpose.xlu0.c.b16.end [8/8] 0, 128
        %v1510 = vpop.trf.xlu0
        %v1511 = vpop.trf.xlu0
        %v1512 = vpop.trf.xlu0
        %v1513 = vpop.trf.xlu0
        %v1514 = vpop.trf.xlu0
        %v1515 = vpop.trf.xlu0
        %v1516 = vpop.trf.xlu0
        %v1517 = vpop.trf.xlu0
        %1518 = vxpose.xlu0.c.b16.start [1/8] %v1158, 128
        %1519 = vxpose.xlu0.c.b16.cont [2/8] 0, 128
        %1520 = vxpose.xlu0.c.b16.cont [3/8] 0, 128
        %1521 = vxpose.xlu0.c.b16.cont [4/8] 0, 128
        %1522 = vxpose.xlu0.c.b16.cont [5/8] 0, 128
        %1523 = vxpose.xlu0.c.b16.cont [6/8] 0, 128
        %1524 = vxpose.xlu0.c.b16.cont [7/8] 0, 128
        %1525 = vxpose.xlu0.c.b16.end [8/8] 0, 128
        %v1526 = vpop.trf.xlu0
        %v1527 = vpop.trf.xlu0
        %v1528 = vpop.trf.xlu0
        %v1529 = vpop.trf.xlu0
        %v1530 = vpop.trf.xlu0
        %v1531 = vpop.trf.xlu0
        %v1532 = vpop.trf.xlu0
        %v1533 = vpop.trf.xlu0
        %1534 = vxpose.xlu0.c.b16.start [1/8] %v1159, 128
        %1535 = vxpose.xlu0.c.b16.cont [2/8] 0, 128
        %1536 = vxpose.xlu0.c.b16.cont [3/8] 0, 128
        %1537 = vxpose.xlu0.c.b16.cont [4/8] 0, 128
        %1538 = vxpose.xlu0.c.b16.cont [5/8] 0, 128
        %1539 = vxpose.xlu0.c.b16.cont [6/8] 0, 128
        %1540 = vxpose.xlu0.c.b16.cont [7/8] 0, 128
        %1541 = vxpose.xlu0.c.b16.end [8/8] 0, 128
        %v1542 = vpop.trf.xlu0
        %v1543 = vpop.trf.xlu0
        %v1544 = vpop.trf.xlu0
        %v1545 = vpop.trf.xlu0
        %v1546 = vpop.trf.xlu0
        %v1547 = vpop.trf.xlu0
        %v1548 = vpop.trf.xlu0
        %v1549 = vpop.trf.xlu0
        %1550 = vxpose.xlu0.c.b16.start [1/8] %v1160, 128
        %1551 = vxpose.xlu0.c.b16.cont [2/8] 0, 128
        %1552 = vxpose.xlu0.c.b16.cont [3/8] 0, 128
        %1553 = vxpose.xlu0.c.b16.cont [4/8] 0, 128
        %1554 = vxpose.xlu0.c.b16.cont [5/8] 0, 128
        %1555 = vxpose.xlu0.c.b16.cont [6/8] 0, 128
        %1556 = vxpose.xlu0.c.b16.cont [7/8] 0, 128
        %1557 = vxpose.xlu0.c.b16.end [8/8] 0, 128
        %v1558 = vpop.trf.xlu0
        %v1559 = vpop.trf.xlu0
        %v1560 = vpop.trf.xlu0
        %v1561 = vpop.trf.xlu0
        %v1562 = vpop.trf.xlu0
        %v1563 = vpop.trf.xlu0
        %v1564 = vpop.trf.xlu0
        %v1565 = vpop.trf.xlu0
        %1566 = vxpose.xlu0.c.b16.start [1/8] %v1161, 128
        %1567 = vxpose.xlu0.c.b16.cont [2/8] 0, 128
        %1568 = vxpose.xlu0.c.b16.cont [3/8] 0, 128
        %1569 = vxpose.xlu0.c.b16.cont [4/8] 0, 128
        %1570 = vxpose.xlu0.c.b16.cont [5/8] 0, 128
        %1571 = vxpose.xlu0.c.b16.cont [6/8] 0, 128
        %1572 = vxpose.xlu0.c.b16.cont [7/8] 0, 128
        %1573 = vxpose.xlu0.c.b16.end [8/8] 0, 128
        %v1574 = vpop.trf.xlu0
        %v1575 = vpop.trf.xlu0
        %v1576 = vpop.trf.xlu0
        %v1577 = vpop.trf.xlu0
        %v1578 = vpop.trf.xlu0
        %v1579 = vpop.trf.xlu0
        %v1580 = vpop.trf.xlu0
        %v1581 = vpop.trf.xlu0
        %1582 = vxpose.xlu0.c.b16.start [1/8] %v1162, 128
        %1583 = vxpose.xlu0.c.b16.cont [2/8] 0, 128
        %1584 = vxpose.xlu0.c.b16.cont [3/8] 0, 128
        %1585 = vxpose.xlu0.c.b16.cont [4/8] 0, 128
        %1586 = vxpose.xlu0.c.b16.cont [5/8] 0, 128
        %1587 = vxpose.xlu0.c.b16.cont [6/8] 0, 128
        %1588 = vxpose.xlu0.c.b16.cont [7/8] 0, 128
        %1589 = vxpose.xlu0.c.b16.end [8/8] 0, 128
        %v1590 = vpop.trf.xlu0
        %v1591 = vpop.trf.xlu0
        %v1592 = vpop.trf.xlu0
        %v1593 = vpop.trf.xlu0
        %v1594 = vpop.trf.xlu0
        %v1595 = vpop.trf.xlu0
        %v1596 = vpop.trf.xlu0
        %v1597 = vpop.trf.xlu0
        %1598 = vxpose.xlu0.c.b16.start [1/8] %v1163, 128
        %1599 = vxpose.xlu0.c.b16.cont [2/8] 0, 128
        %1600 = vxpose.xlu0.c.b16.cont [3/8] 0, 128
        %1601 = vxpose.xlu0.c.b16.cont [4/8] 0, 128
        %1602 = vxpose.xlu0.c.b16.cont [5/8] 0, 128
        %1603 = vxpose.xlu0.c.b16.cont [6/8] 0, 128
        %1604 = vxpose.xlu0.c.b16.cont [7/8] 0, 128
        %1605 = vxpose.xlu0.c.b16.end [8/8] 0, 128
        %v1606 = vpop.trf.xlu0
        %v1607 = vpop.trf.xlu0
        %v1608 = vpop.trf.xlu0
        %v1609 = vpop.trf.xlu0
        %v1610 = vpop.trf.xlu0
        %v1611 = vpop.trf.xlu0
        %v1612 = vpop.trf.xlu0
        %v1613 = vpop.trf.xlu0
        %1614 = vxpose.xlu0.c.b16.start [1/8] %v1164, 128
        %1615 = vxpose.xlu0.c.b16.cont [2/8] 0, 128
        %1616 = vxpose.xlu0.c.b16.cont [3/8] 0, 128
        %1617 = vxpose.xlu0.c.b16.cont [4/8] 0, 128
        %1618 = vxpose.xlu0.c.b16.cont [5/8] 0, 128
        %1619 = vxpose.xlu0.c.b16.cont [6/8] 0, 128
        %1620 = vxpose.xlu0.c.b16.cont [7/8] 0, 128
        %1621 = vxpose.xlu0.c.b16.end [8/8] 0, 128
        %v1622 = vpop.trf.xlu0
        %v1623 = vpop.trf.xlu0
        %v1624 = vpop.trf.xlu0
        %v1625 = vpop.trf.xlu0
        %v1626 = vpop.trf.xlu0
        %v1627 = vpop.trf.xlu0
        %v1628 = vpop.trf.xlu0
        %v1629 = vpop.trf.xlu0
        %1630 = vxpose.xlu0.c.b16.start [1/8] %v1165, 128
        %1631 = vxpose.xlu0.c.b16.cont [2/8] 0, 128
        %1632 = vxpose.xlu0.c.b16.cont [3/8] 0, 128
        %1633 = vxpose.xlu0.c.b16.cont [4/8] 0, 128
        %1634 = vxpose.xlu0.c.b16.cont [5/8] 0, 128
        %1635 = vxpose.xlu0.c.b16.cont [6/8] 0, 128
        %1636 = vxpose.xlu0.c.b16.cont [7/8] 0, 128
        %1637 = vxpose.xlu0.c.b16.end [8/8] 0, 128
        %v1638 = vpop.trf.xlu0
        %v1639 = vpop.trf.xlu0
        %v1640 = vpop.trf.xlu0
        %v1641 = vpop.trf.xlu0
        %v1642 = vpop.trf.xlu0
        %v1643 = vpop.trf.xlu0
        %v1644 = vpop.trf.xlu0
        %v1645 = vpop.trf.xlu0
        %1646 = vxpose.xlu0.c.b16.start [1/8] %v1166, 128
        %1647 = vxpose.xlu0.c.b16.cont [2/8] 0, 128
        %1648 = vxpose.xlu0.c.b16.cont [3/8] 0, 128
        %1649 = vxpose.xlu0.c.b16.cont [4/8] 0, 128
        %1650 = vxpose.xlu0.c.b16.cont [5/8] 0, 128
        %1651 = vxpose.xlu0.c.b16.cont [6/8] 0, 128
        %1652 = vxpose.xlu0.c.b16.cont [7/8] 0, 128
        %1653 = vxpose.xlu0.c.b16.end [8/8] 0, 128
        %v1654 = vpop.trf.xlu0
        %v1655 = vpop.trf.xlu0
        %v1656 = vpop.trf.xlu0
        %v1657 = vpop.trf.xlu0
        %v1658 = vpop.trf.xlu0
        %v1659 = vpop.trf.xlu0
        %v1660 = vpop.trf.xlu0
        %v1661 = vpop.trf.xlu0
        %1662 = vxpose.xlu0.c.b16.start [1/8] %v1167, 128
        %1663 = vxpose.xlu0.c.b16.cont [2/8] 0, 128
        %1664 = vxpose.xlu0.c.b16.cont [3/8] 0, 128
        %1665 = vxpose.xlu0.c.b16.cont [4/8] 0, 128
        %1666 = vxpose.xlu0.c.b16.cont [5/8] 0, 128
        %1667 = vxpose.xlu0.c.b16.cont [6/8] 0, 128
        %1668 = vxpose.xlu0.c.b16.cont [7/8] 0, 128
        %1669 = vxpose.xlu0.c.b16.end [8/8] 0, 128
        %v1670 = vpop.trf.xlu0
        %v1671 = vpop.trf.xlu0
        %v1672 = vpop.trf.xlu0
        %v1673 = vpop.trf.xlu0
        %v1674 = vpop.trf.xlu0
        %v1675 = vpop.trf.xlu0
        %v1676 = vpop.trf.xlu0
        %v1677 = vpop.trf.xlu0
        %1678 = vxpose.xlu0.c.b16.start [1/8] %v1168, 128
        %1679 = vxpose.xlu0.c.b16.cont [2/8] 0, 128
        %1680 = vxpose.xlu0.c.b16.cont [3/8] 0, 128
        %1681 = vxpose.xlu0.c.b16.cont [4/8] 0, 128
        %1682 = vxpose.xlu0.c.b16.cont [5/8] 0, 128
        %1683 = vxpose.xlu0.c.b16.cont [6/8] 0, 128
        %1684 = vxpose.xlu0.c.b16.cont [7/8] 0, 128
        %1685 = vxpose.xlu0.c.b16.end [8/8] 0, 128
        %v1686 = vpop.trf.xlu0
        %v1687 = vpop.trf.xlu0
        %v1688 = vpop.trf.xlu0
        %v1689 = vpop.trf.xlu0
        %v1690 = vpop.trf.xlu0
        %v1691 = vpop.trf.xlu0
        %v1692 = vpop.trf.xlu0
        %v1693 = vpop.trf.xlu0
        %1694 = vxpose.xlu0.c.b16.start [1/8] %v1169, 128
        %1695 = vxpose.xlu0.c.b16.cont [2/8] 0, 128
        %1696 = vxpose.xlu0.c.b16.cont [3/8] 0, 128
        %1697 = vxpose.xlu0.c.b16.cont [4/8] 0, 128
        %1698 = vxpose.xlu0.c.b16.cont [5/8] 0, 128
        %1699 = vxpose.xlu0.c.b16.cont [6/8] 0, 128
        %1700 = vxpose.xlu0.c.b16.cont [7/8] 0, 128
        %1701 = vxpose.xlu0.c.b16.end [8/8] 0, 128
        %v1702 = vpop.trf.xlu0
        %v1703 = vpop.trf.xlu0
        %v1704 = vpop.trf.xlu0
        %v1705 = vpop.trf.xlu0
        %v1706 = vpop.trf.xlu0
        %v1707 = vpop.trf.xlu0
        %v1708 = vpop.trf.xlu0
        %v1709 = vpop.trf.xlu0
        %v1710 = vcombine.low %v1462, %v1526
        %v1711 = vcombine.high %v1462, %v1526
        %v1713 = vunpack.c.l.s4 1983009808
        %v1714 = vunpack.c.0.s8 %v1713
        %v1715 = vlaneseq
        %v1716 = vshrl.u32 %v1715, 7
        %v1717 = vsub.s32 %v1714, %v1716
        %v1718 = vrot.slane %v1710, %v1717
        %v1720 = vunpack.c.l.s4 1983009808
        %v1721 = vunpack.c.0.s8 %v1720
        %v1722 = vlaneseq
        %v1723 = vshrl.u32 %v1722, 7
        %v1724 = vsub.s32 %v1721, %v1723
        %v1725 = vrot.slane %v1711, %v1724
        %v1726 = vcombine.low %v1494, %v1558
        %v1727 = vcombine.high %v1494, %v1558
        %v1729 = vunpack.c.l.s4 1983009808
        %v1730 = vunpack.c.0.s8 %v1729
        %v1731 = vlaneseq
        %v1732 = vshrl.u32 %v1731, 7
        %v1733 = vsub.s32 %v1730, %v1732
        %v1734 = vrot.slane %v1726, %v1733
        %v1736 = vunpack.c.l.s4 1983009808
        %v1737 = vunpack.c.0.s8 %v1736
        %v1738 = vlaneseq
        %v1739 = vshrl.u32 %v1738, 7
        %v1740 = vsub.s32 %v1737, %v1739
        %v1741 = vrot.slane %v1727, %v1740
        %v1742 = vcombine.low %v1590, %v1654
        %v1743 = vcombine.high %v1590, %v1654
        %v1745 = vunpack.c.l.s4 1983009808
        %v1746 = vunpack.c.0.s8 %v1745
        %v1747 = vlaneseq
        %v1748 = vshrl.u32 %v1747, 7
        %v1749 = vsub.s32 %v1746, %v1748
        %v1750 = vrot.slane %v1742, %v1749
        %v1752 = vunpack.c.l.s4 1983009808
        %v1753 = vunpack.c.0.s8 %v1752
        %v1754 = vlaneseq
        %v1755 = vshrl.u32 %v1754, 7
        %v1756 = vsub.s32 %v1753, %v1755
        %v1757 = vrot.slane %v1743, %v1756
        %v1758 = vcombine.low %v1622, %v1686
        %v1759 = vcombine.high %v1622, %v1686
        %v1761 = vunpack.c.l.s4 1983009808
        %v1762 = vunpack.c.0.s8 %v1761
        %v1763 = vlaneseq
        %v1764 = vshrl.u32 %v1763, 7
        %v1765 = vsub.s32 %v1762, %v1764
        %v1766 = vrot.slane %v1758, %v1765
        %v1768 = vunpack.c.l.s4 1983009808
        %v1769 = vunpack.c.0.s8 %v1768
        %v1770 = vlaneseq
        %v1771 = vshrl.u32 %v1770, 7
        %v1772 = vsub.s32 %v1769, %v1771
        %v1773 = vrot.slane %v1759, %v1772
        %v1774 = vcombine.low %v1718, %v1734
        %v1775 = vcombine.high %v1718, %v1734
        %v1777 = vunpack.c.l.s4 1934713408
        %v1778 = vunpack.c.0.s8 %v1777
        %v1779 = vlaneseq
        %v1780 = vshrl.u32 %v1779, 7
        %v1781 = vsub.s32 %v1778, %v1780
        %v1782 = vrot.slane %v1774, %v1781
        %v1784 = vunpack.c.l.s4 1934713408
        %v1785 = vunpack.c.0.s8 %v1784
        %v1786 = vlaneseq
        %v1787 = vshrl.u32 %v1786, 7
        %v1788 = vsub.s32 %v1785, %v1787
        %v1789 = vrot.slane %v1775, %v1788
        %v1790 = vcombine.low %v1725, %v1741
        %v1791 = vcombine.high %v1725, %v1741
        %v1793 = vunpack.c.l.s4 1934713408
        %v1794 = vunpack.c.0.s8 %v1793
        %v1795 = vlaneseq
        %v1796 = vshrl.u32 %v1795, 7
        %v1797 = vsub.s32 %v1794, %v1796
        %v1798 = vrot.slane %v1790, %v1797
        %v1800 = vunpack.c.l.s4 1934713408
        %v1801 = vunpack.c.0.s8 %v1800
        %v1802 = vlaneseq
        %v1803 = vshrl.u32 %v1802, 7
        %v1804 = vsub.s32 %v1801, %v1803
        %v1805 = vrot.slane %v1791, %v1804
        %v1806 = vcombine.low %v1750, %v1766
        %v1807 = vcombine.high %v1750, %v1766
        %v1809 = vunpack.c.l.s4 1934713408
        %v1810 = vunpack.c.0.s8 %v1809
        %v1811 = vlaneseq
        %v1812 = vshrl.u32 %v1811, 7
        %v1813 = vsub.s32 %v1810, %v1812
        %v1814 = vrot.slane %v1806, %v1813
        %v1816 = vunpack.c.l.s4 1934713408
        %v1817 = vunpack.c.0.s8 %v1816
        %v1818 = vlaneseq
        %v1819 = vshrl.u32 %v1818, 7
        %v1820 = vsub.s32 %v1817, %v1819
        %v1821 = vrot.slane %v1807, %v1820
        %v1822 = vcombine.low %v1757, %v1773
        %v1823 = vcombine.high %v1757, %v1773
        %v1825 = vunpack.c.l.s4 1934713408
        %v1826 = vunpack.c.0.s8 %v1825
        %v1827 = vlaneseq
        %v1828 = vshrl.u32 %v1827, 7
        %v1829 = vsub.s32 %v1826, %v1828
        %v1830 = vrot.slane %v1822, %v1829
        %v1832 = vunpack.c.l.s4 1934713408
        %v1833 = vunpack.c.0.s8 %v1832
        %v1834 = vlaneseq
        %v1835 = vshrl.u32 %v1834, 7
        %v1836 = vsub.s32 %v1833, %v1835
        %v1837 = vrot.slane %v1823, %v1836
        %v1838 = vcombine.low %v1782, %v1814
        %v1839 = vcombine.high %v1782, %v1814
        %v1840 = vcombine.low %v1789, %v1821
        %v1841 = vcombine.high %v1789, %v1821
        %v1842 = vcombine.low %v1798, %v1830
        %v1843 = vcombine.high %v1798, %v1830
        %v1844 = vcombine.low %v1805, %v1837
        %v1845 = vcombine.high %v1805, %v1837
        %v1846 = vcombine.low %v1478, %v1542
        %v1847 = vcombine.high %v1478, %v1542
        %v1849 = vunpack.c.l.s4 1983009808
        %v1850 = vunpack.c.0.s8 %v1849
        %v1851 = vlaneseq
        %v1852 = vshrl.u32 %v1851, 7
        %v1853 = vsub.s32 %v1850, %v1852
        %v1854 = vrot.slane %v1846, %v1853
        %v1856 = vunpack.c.l.s4 1983009808
        %v1857 = vunpack.c.0.s8 %v1856
        %v1858 = vlaneseq
        %v1859 = vshrl.u32 %v1858, 7
        %v1860 = vsub.s32 %v1857, %v1859
        %v1861 = vrot.slane %v1847, %v1860
        %v1862 = vcombine.low %v1510, %v1574
        %v1863 = vcombine.high %v1510, %v1574
        %v1865 = vunpack.c.l.s4 1983009808
        %v1866 = vunpack.c.0.s8 %v1865
        %v1867 = vlaneseq
        %v1868 = vshrl.u32 %v1867, 7
        %v1869 = vsub.s32 %v1866, %v1868
        %v1870 = vrot.slane %v1862, %v1869
        %v1872 = vunpack.c.l.s4 1983009808
        %v1873 = vunpack.c.0.s8 %v1872
        %v1874 = vlaneseq
        %v1875 = vshrl.u32 %v1874, 7
        %v1876 = vsub.s32 %v1873, %v1875
        %v1877 = vrot.slane %v1863, %v1876
        %v1878 = vcombine.low %v1606, %v1670
        %v1879 = vcombine.high %v1606, %v1670
        %v1881 = vunpack.c.l.s4 1983009808
        %v1882 = vunpack.c.0.s8 %v1881
        %v1883 = vlaneseq
        %v1884 = vshrl.u32 %v1883, 7
        %v1885 = vsub.s32 %v1882, %v1884
        %v1886 = vrot.slane %v1878, %v1885
        %v1888 = vunpack.c.l.s4 1983009808
        %v1889 = vunpack.c.0.s8 %v1888
        %v1890 = vlaneseq
        %v1891 = vshrl.u32 %v1890, 7
        %v1892 = vsub.s32 %v1889, %v1891
        %v1893 = vrot.slane %v1879, %v1892
        %v1894 = vcombine.low %v1638, %v1702
        %v1895 = vcombine.high %v1638, %v1702
        %v1897 = vunpack.c.l.s4 1983009808
        %v1898 = vunpack.c.0.s8 %v1897
        %v1899 = vlaneseq
        %v1900 = vshrl.u32 %v1899, 7
        %v1901 = vsub.s32 %v1898, %v1900
        %v1902 = vrot.slane %v1894, %v1901
        %v1904 = vunpack.c.l.s4 1983009808
        %v1905 = vunpack.c.0.s8 %v1904
        %v1906 = vlaneseq
        %v1907 = vshrl.u32 %v1906, 7
        %v1908 = vsub.s32 %v1905, %v1907
        %v1909 = vrot.slane %v1895, %v1908
        %v1910 = vcombine.low %v1854, %v1870
        %v1911 = vcombine.high %v1854, %v1870
        %v1913 = vunpack.c.l.s4 1934713408
        %v1914 = vunpack.c.0.s8 %v1913
        %v1915 = vlaneseq
        %v1916 = vshrl.u32 %v1915, 7
        %v1917 = vsub.s32 %v1914, %v1916
        %v1918 = vrot.slane %v1910, %v1917
        %v1920 = vunpack.c.l.s4 1934713408
        %v1921 = vunpack.c.0.s8 %v1920
        %v1922 = vlaneseq
        %v1923 = vshrl.u32 %v1922, 7
        %v1924 = vsub.s32 %v1921, %v1923
        %v1925 = vrot.slane %v1911, %v1924
        %v1926 = vcombine.low %v1861, %v1877
        %v1927 = vcombine.high %v1861, %v1877
        %v1929 = vunpack.c.l.s4 1934713408
        %v1930 = vunpack.c.0.s8 %v1929
        %v1931 = vlaneseq
        %v1932 = vshrl.u32 %v1931, 7
        %v1933 = vsub.s32 %v1930, %v1932
        %v1934 = vrot.slane %v1926, %v1933
        %v1936 = vunpack.c.l.s4 1934713408
        %v1937 = vunpack.c.0.s8 %v1936
        %v1938 = vlaneseq
        %v1939 = vshrl.u32 %v1938, 7
        %v1940 = vsub.s32 %v1937, %v1939
        %v1941 = vrot.slane %v1927, %v1940
        %v1942 = vcombine.low %v1886, %v1902
        %v1943 = vcombine.high %v1886, %v1902
        %v1945 = vunpack.c.l.s4 1934713408
        %v1946 = vunpack.c.0.s8 %v1945
        %v1947 = vlaneseq
        %v1948 = vshrl.u32 %v1947, 7
        %v1949 = vsub.s32 %v1946, %v1948
        %v1950 = vrot.slane %v1942, %v1949
        %v1952 = vunpack.c.l.s4 1934713408
        %v1953 = vunpack.c.0.s8 %v1952
        %v1954 = vlaneseq
        %v1955 = vshrl.u32 %v1954, 7
        %v1956 = vsub.s32 %v1953, %v1955
        %v1957 = vrot.slane %v1943, %v1956
        %v1958 = vcombine.low %v1893, %v1909
        %v1959 = vcombine.high %v1893, %v1909
        %v1961 = vunpack.c.l.s4 1934713408
        %v1962 = vunpack.c.0.s8 %v1961
        %v1963 = vlaneseq
        %v1964 = vshrl.u32 %v1963, 7
        %v1965 = vsub.s32 %v1962, %v1964
        %v1966 = vrot.slane %v1958, %v1965
        %v1968 = vunpack.c.l.s4 1934713408
        %v1969 = vunpack.c.0.s8 %v1968
        %v1970 = vlaneseq
        %v1971 = vshrl.u32 %v1970, 7
        %v1972 = vsub.s32 %v1969, %v1971
        %v1973 = vrot.slane %v1959, %v1972
        %v1974 = vcombine.low %v1918, %v1950
        %v1975 = vcombine.high %v1918, %v1950
        %v1976 = vcombine.low %v1925, %v1957
        %v1977 = vcombine.high %v1925, %v1957
        %v1978 = vcombine.low %v1934, %v1966
        %v1979 = vcombine.high %v1934, %v1966
        %v1980 = vcombine.low %v1941, %v1973
        %v1981 = vcombine.high %v1941, %v1973
        %v1984 = vpack.i.b16 %v1974, %v1838
        %v1986 = vshrl.u32 %v1838, 16
        %v1987 = vshrl.u32 %v1974, 16
        %v1988 = vpack.i.b16 %v1987, %v1986
        %v1992 = vpack.i.b16 %v1975, %v1839
        %v1994 = vshrl.u32 %v1839, 16
        %v1995 = vshrl.u32 %v1975, 16
        %v1996 = vpack.i.b16 %v1995, %v1994
        %v2000 = vpack.i.b16 %v1976, %v1840
        %v2002 = vshrl.u32 %v1840, 16
        %v2003 = vshrl.u32 %v1976, 16
        %v2004 = vpack.i.b16 %v2003, %v2002
        %v2008 = vpack.i.b16 %v1977, %v1841
        %v2010 = vshrl.u32 %v1841, 16
        %v2011 = vshrl.u32 %v1977, 16
        %v2012 = vpack.i.b16 %v2011, %v2010
        %v2016 = vpack.i.b16 %v1978, %v1842
        %v2018 = vshrl.u32 %v1842, 16
        %v2019 = vshrl.u32 %v1978, 16
        %v2020 = vpack.i.b16 %v2019, %v2018
        %v2024 = vpack.i.b16 %v1979, %v1843
        %v2026 = vshrl.u32 %v1843, 16
        %v2027 = vshrl.u32 %v1979, 16
        %v2028 = vpack.i.b16 %v2027, %v2026
        %v2032 = vpack.i.b16 %v1980, %v1844
        %v2034 = vshrl.u32 %v1844, 16
        %v2035 = vshrl.u32 %v1980, 16
        %v2036 = vpack.i.b16 %v2035, %v2034
        %v2040 = vpack.i.b16 %v1981, %v1845
        %v2042 = vshrl.u32 %v1845, 16
        %v2043 = vshrl.u32 %v1981, 16
        %v2044 = vpack.i.b16 %v2043, %v2042
        %2046 = vxpose.xlu0.c.b16.start [1/8] %v1984, 128
        %2047 = vxpose.xlu0.c.b16.cont [2/8] 0, 128
        %2048 = vxpose.xlu0.c.b16.cont [3/8] 0, 128
        %2049 = vxpose.xlu0.c.b16.cont [4/8] 0, 128
        %2050 = vxpose.xlu0.c.b16.cont [5/8] 0, 128
        %2051 = vxpose.xlu0.c.b16.cont [6/8] 0, 128
        %2052 = vxpose.xlu0.c.b16.cont [7/8] 0, 128
        %2053 = vxpose.xlu0.c.b16.end [8/8] 0, 128
        %v2054 = vpop.trf.xlu0
        %v2055 = vpop.trf.xlu0
        %v2056 = vpop.trf.xlu0
        %v2057 = vpop.trf.xlu0
        %v2058 = vpop.trf.xlu0
        %v2059 = vpop.trf.xlu0
        %v2060 = vpop.trf.xlu0
        %v2061 = vpop.trf.xlu0
        %2062 = vxpose.xlu0.c.b16.start [1/8] %v1988, 128
        %2063 = vxpose.xlu0.c.b16.cont [2/8] 0, 128
        %2064 = vxpose.xlu0.c.b16.cont [3/8] 0, 128
        %2065 = vxpose.xlu0.c.b16.cont [4/8] 0, 128
        %2066 = vxpose.xlu0.c.b16.cont [5/8] 0, 128
        %2067 = vxpose.xlu0.c.b16.cont [6/8] 0, 128
        %2068 = vxpose.xlu0.c.b16.cont [7/8] 0, 128
        %2069 = vxpose.xlu0.c.b16.end [8/8] 0, 128
        %v2070 = vpop.trf.xlu0
        %v2071 = vpop.trf.xlu0
        %v2072 = vpop.trf.xlu0
        %v2073 = vpop.trf.xlu0
        %v2074 = vpop.trf.xlu0
        %v2075 = vpop.trf.xlu0
        %v2076 = vpop.trf.xlu0
        %v2077 = vpop.trf.xlu0
        %2078 = vxpose.xlu0.c.b16.start [1/8] %v1992, 128
        %2079 = vxpose.xlu0.c.b16.cont [2/8] 0, 128
        %2080 = vxpose.xlu0.c.b16.cont [3/8] 0, 128
        %2081 = vxpose.xlu0.c.b16.cont [4/8] 0, 128
        %2082 = vxpose.xlu0.c.b16.cont [5/8] 0, 128
        %2083 = vxpose.xlu0.c.b16.cont [6/8] 0, 128
        %2084 = vxpose.xlu0.c.b16.cont [7/8] 0, 128
        %2085 = vxpose.xlu0.c.b16.end [8/8] 0, 128
        %v2086 = vpop.trf.xlu0
        %v2087 = vpop.trf.xlu0
        %v2088 = vpop.trf.xlu0
        %v2089 = vpop.trf.xlu0
        %v2090 = vpop.trf.xlu0
        %v2091 = vpop.trf.xlu0
        %v2092 = vpop.trf.xlu0
        %v2093 = vpop.trf.xlu0
        %2094 = vxpose.xlu0.c.b16.start [1/8] %v1996, 128
        %2095 = vxpose.xlu0.c.b16.cont [2/8] 0, 128
        %2096 = vxpose.xlu0.c.b16.cont [3/8] 0, 128
        %2097 = vxpose.xlu0.c.b16.cont [4/8] 0, 128
        %2098 = vxpose.xlu0.c.b16.cont [5/8] 0, 128
        %2099 = vxpose.xlu0.c.b16.cont [6/8] 0, 128
        %2100 = vxpose.xlu0.c.b16.cont [7/8] 0, 128
        %2101 = vxpose.xlu0.c.b16.end [8/8] 0, 128
        %v2102 = vpop.trf.xlu0
        %v2103 = vpop.trf.xlu0
        %v2104 = vpop.trf.xlu0
        %v2105 = vpop.trf.xlu0
        %v2106 = vpop.trf.xlu0
        %v2107 = vpop.trf.xlu0
        %v2108 = vpop.trf.xlu0
        %v2109 = vpop.trf.xlu0
        %2110 = vxpose.xlu0.c.b16.start [1/8] %v2000, 128
        %2111 = vxpose.xlu0.c.b16.cont [2/8] 0, 128
        %2112 = vxpose.xlu0.c.b16.cont [3/8] 0, 128
        %2113 = vxpose.xlu0.c.b16.cont [4/8] 0, 128
        %2114 = vxpose.xlu0.c.b16.cont [5/8] 0, 128
        %2115 = vxpose.xlu0.c.b16.cont [6/8] 0, 128
        %2116 = vxpose.xlu0.c.b16.cont [7/8] 0, 128
        %2117 = vxpose.xlu0.c.b16.end [8/8] 0, 128
        %v2118 = vpop.trf.xlu0
        %v2119 = vpop.trf.xlu0
        %v2120 = vpop.trf.xlu0
        %v2121 = vpop.trf.xlu0
        %v2122 = vpop.trf.xlu0
        %v2123 = vpop.trf.xlu0
        %v2124 = vpop.trf.xlu0
        %v2125 = vpop.trf.xlu0
        %2126 = vxpose.xlu0.c.b16.start [1/8] %v2004, 128
        %2127 = vxpose.xlu0.c.b16.cont [2/8] 0, 128
        %2128 = vxpose.xlu0.c.b16.cont [3/8] 0, 128
        %2129 = vxpose.xlu0.c.b16.cont [4/8] 0, 128
        %2130 = vxpose.xlu0.c.b16.cont [5/8] 0, 128
        %2131 = vxpose.xlu0.c.b16.cont [6/8] 0, 128
        %2132 = vxpose.xlu0.c.b16.cont [7/8] 0, 128
        %2133 = vxpose.xlu0.c.b16.end [8/8] 0, 128
        %v2134 = vpop.trf.xlu0
        %v2135 = vpop.trf.xlu0
        %v2136 = vpop.trf.xlu0
        %v2137 = vpop.trf.xlu0
        %v2138 = vpop.trf.xlu0
        %v2139 = vpop.trf.xlu0
        %v2140 = vpop.trf.xlu0
        %v2141 = vpop.trf.xlu0
        %2142 = vxpose.xlu0.c.b16.start [1/8] %v2008, 128
        %2143 = vxpose.xlu0.c.b16.cont [2/8] 0, 128
        %2144 = vxpose.xlu0.c.b16.cont [3/8] 0, 128
        %2145 = vxpose.xlu0.c.b16.cont [4/8] 0, 128
        %2146 = vxpose.xlu0.c.b16.cont [5/8] 0, 128
        %2147 = vxpose.xlu0.c.b16.cont [6/8] 0, 128
        %2148 = vxpose.xlu0.c.b16.cont [7/8] 0, 128
        %2149 = vxpose.xlu0.c.b16.end [8/8] 0, 128
        %v2150 = vpop.trf.xlu0
        %v2151 = vpop.trf.xlu0
        %v2152 = vpop.trf.xlu0
        %v2153 = vpop.trf.xlu0
        %v2154 = vpop.trf.xlu0
        %v2155 = vpop.trf.xlu0
        %v2156 = vpop.trf.xlu0
        %v2157 = vpop.trf.xlu0
        %2158 = vxpose.xlu0.c.b16.start [1/8] %v2012, 128
        %2159 = vxpose.xlu0.c.b16.cont [2/8] 0, 128
        %2160 = vxpose.xlu0.c.b16.cont [3/8] 0, 128
        %2161 = vxpose.xlu0.c.b16.cont [4/8] 0, 128
        %2162 = vxpose.xlu0.c.b16.cont [5/8] 0, 128
        %2163 = vxpose.xlu0.c.b16.cont [6/8] 0, 128
        %2164 = vxpose.xlu0.c.b16.cont [7/8] 0, 128
        %2165 = vxpose.xlu0.c.b16.end [8/8] 0, 128
        %v2166 = vpop.trf.xlu0
        %v2167 = vpop.trf.xlu0
        %v2168 = vpop.trf.xlu0
        %v2169 = vpop.trf.xlu0
        %v2170 = vpop.trf.xlu0
        %v2171 = vpop.trf.xlu0
        %v2172 = vpop.trf.xlu0
        %v2173 = vpop.trf.xlu0
        %2174 = vxpose.xlu0.c.b16.start [1/8] %v2016, 128
        %2175 = vxpose.xlu0.c.b16.cont [2/8] 0, 128
        %2176 = vxpose.xlu0.c.b16.cont [3/8] 0, 128
        %2177 = vxpose.xlu0.c.b16.cont [4/8] 0, 128
        %2178 = vxpose.xlu0.c.b16.cont [5/8] 0, 128
        %2179 = vxpose.xlu0.c.b16.cont [6/8] 0, 128
        %2180 = vxpose.xlu0.c.b16.cont [7/8] 0, 128
        %2181 = vxpose.xlu0.c.b16.end [8/8] 0, 128
        %v2182 = vpop.trf.xlu0
        %v2183 = vpop.trf.xlu0
        %v2184 = vpop.trf.xlu0
        %v2185 = vpop.trf.xlu0
        %v2186 = vpop.trf.xlu0
        %v2187 = vpop.trf.xlu0
        %v2188 = vpop.trf.xlu0
        %v2189 = vpop.trf.xlu0
        %2190 = vxpose.xlu0.c.b16.start [1/8] %v2020, 128
        %2191 = vxpose.xlu0.c.b16.cont [2/8] 0, 128
        %2192 = vxpose.xlu0.c.b16.cont [3/8] 0, 128
        %2193 = vxpose.xlu0.c.b16.cont [4/8] 0, 128
        %2194 = vxpose.xlu0.c.b16.cont [5/8] 0, 128
        %2195 = vxpose.xlu0.c.b16.cont [6/8] 0, 128
        %2196 = vxpose.xlu0.c.b16.cont [7/8] 0, 128
        %2197 = vxpose.xlu0.c.b16.end [8/8] 0, 128
        %v2198 = vpop.trf.xlu0
        %v2199 = vpop.trf.xlu0
        %v2200 = vpop.trf.xlu0
        %v2201 = vpop.trf.xlu0
        %v2202 = vpop.trf.xlu0
        %v2203 = vpop.trf.xlu0
        %v2204 = vpop.trf.xlu0
        %v2205 = vpop.trf.xlu0
        %2206 = vxpose.xlu0.c.b16.start [1/8] %v2024, 128
        %2207 = vxpose.xlu0.c.b16.cont [2/8] 0, 128
        %2208 = vxpose.xlu0.c.b16.cont [3/8] 0, 128
        %2209 = vxpose.xlu0.c.b16.cont [4/8] 0, 128
        %2210 = vxpose.xlu0.c.b16.cont [5/8] 0, 128
        %2211 = vxpose.xlu0.c.b16.cont [6/8] 0, 128
        %2212 = vxpose.xlu0.c.b16.cont [7/8] 0, 128
        %2213 = vxpose.xlu0.c.b16.end [8/8] 0, 128
        %v2214 = vpop.trf.xlu0
        %v2215 = vpop.trf.xlu0
        %v2216 = vpop.trf.xlu0
        %v2217 = vpop.trf.xlu0
        %v2218 = vpop.trf.xlu0
        %v2219 = vpop.trf.xlu0
        %v2220 = vpop.trf.xlu0
        %v2221 = vpop.trf.xlu0
        %2222 = vxpose.xlu0.c.b16.start [1/8] %v2028, 128
        %2223 = vxpose.xlu0.c.b16.cont [2/8] 0, 128
        %2224 = vxpose.xlu0.c.b16.cont [3/8] 0, 128
        %2225 = vxpose.xlu0.c.b16.cont [4/8] 0, 128
        %2226 = vxpose.xlu0.c.b16.cont [5/8] 0, 128
        %2227 = vxpose.xlu0.c.b16.cont [6/8] 0, 128
        %2228 = vxpose.xlu0.c.b16.cont [7/8] 0, 128
        %2229 = vxpose.xlu0.c.b16.end [8/8] 0, 128
        %v2230 = vpop.trf.xlu0
        %v2231 = vpop.trf.xlu0
        %v2232 = vpop.trf.xlu0
        %v2233 = vpop.trf.xlu0
        %v2234 = vpop.trf.xlu0
        %v2235 = vpop.trf.xlu0
        %v2236 = vpop.trf.xlu0
        %v2237 = vpop.trf.xlu0
        %2238 = vxpose.xlu0.c.b16.start [1/8] %v2032, 128
        %2239 = vxpose.xlu0.c.b16.cont [2/8] 0, 128
        %2240 = vxpose.xlu0.c.b16.cont [3/8] 0, 128
        %2241 = vxpose.xlu0.c.b16.cont [4/8] 0, 128
        %2242 = vxpose.xlu0.c.b16.cont [5/8] 0, 128
        %2243 = vxpose.xlu0.c.b16.cont [6/8] 0, 128
        %2244 = vxpose.xlu0.c.b16.cont [7/8] 0, 128
        %2245 = vxpose.xlu0.c.b16.end [8/8] 0, 128
        %v2246 = vpop.trf.xlu0
        %v2247 = vpop.trf.xlu0
        %v2248 = vpop.trf.xlu0
        %v2249 = vpop.trf.xlu0
        %v2250 = vpop.trf.xlu0
        %v2251 = vpop.trf.xlu0
        %v2252 = vpop.trf.xlu0
        %v2253 = vpop.trf.xlu0
        %2254 = vxpose.xlu0.c.b16.start [1/8] %v2036, 128
        %2255 = vxpose.xlu0.c.b16.cont [2/8] 0, 128
        %2256 = vxpose.xlu0.c.b16.cont [3/8] 0, 128
        %2257 = vxpose.xlu0.c.b16.cont [4/8] 0, 128
        %2258 = vxpose.xlu0.c.b16.cont [5/8] 0, 128
        %2259 = vxpose.xlu0.c.b16.cont [6/8] 0, 128
        %2260 = vxpose.xlu0.c.b16.cont [7/8] 0, 128
        %2261 = vxpose.xlu0.c.b16.end [8/8] 0, 128
        %v2262 = vpop.trf.xlu0
        %v2263 = vpop.trf.xlu0
        %v2264 = vpop.trf.xlu0
        %v2265 = vpop.trf.xlu0
        %v2266 = vpop.trf.xlu0
        %v2267 = vpop.trf.xlu0
        %v2268 = vpop.trf.xlu0
        %v2269 = vpop.trf.xlu0
        %2270 = vxpose.xlu0.c.b16.start [1/8] %v2040, 128
        %2271 = vxpose.xlu0.c.b16.cont [2/8] 0, 128
        %2272 = vxpose.xlu0.c.b16.cont [3/8] 0, 128
        %2273 = vxpose.xlu0.c.b16.cont [4/8] 0, 128
        %2274 = vxpose.xlu0.c.b16.cont [5/8] 0, 128
        %2275 = vxpose.xlu0.c.b16.cont [6/8] 0, 128
        %2276 = vxpose.xlu0.c.b16.cont [7/8] 0, 128
        %2277 = vxpose.xlu0.c.b16.end [8/8] 0, 128
        %v2278 = vpop.trf.xlu0
        %v2279 = vpop.trf.xlu0
        %v2280 = vpop.trf.xlu0
        %v2281 = vpop.trf.xlu0
        %v2282 = vpop.trf.xlu0
        %v2283 = vpop.trf.xlu0
        %v2284 = vpop.trf.xlu0
        %v2285 = vpop.trf.xlu0
        %2286 = vxpose.xlu0.c.b16.start [1/8] %v2044, 128
        %2287 = vxpose.xlu0.c.b16.cont [2/8] 0, 128
        %2288 = vxpose.xlu0.c.b16.cont [3/8] 0, 128
        %2289 = vxpose.xlu0.c.b16.cont [4/8] 0, 128
        %2290 = vxpose.xlu0.c.b16.cont [5/8] 0, 128
        %2291 = vxpose.xlu0.c.b16.cont [6/8] 0, 128
        %2292 = vxpose.xlu0.c.b16.cont [7/8] 0, 128
        %2293 = vxpose.xlu0.c.b16.end [8/8] 0, 128
        %v2294 = vpop.trf.xlu0
        %v2295 = vpop.trf.xlu0
        %v2296 = vpop.trf.xlu0
        %v2297 = vpop.trf.xlu0
        %v2298 = vpop.trf.xlu0
        %v2299 = vpop.trf.xlu0
        %v2300 = vpop.trf.xlu0
        %v2301 = vpop.trf.xlu0
        %v2302 = vcombine.low %v2054, %v2118
        %v2304 = vunpack.c.l.s4 1983009808
        %v2305 = vunpack.c.0.s8 %v2304
        %v2306 = vlaneseq
        %v2307 = vshrl.u32 %v2306, 7
        %v2308 = vsub.s32 %v2305, %v2307
        %v2309 = vrot.slane %v2302, %v2308
        %v2310 = vcombine.low %v2086, %v2150
        %v2312 = vunpack.c.l.s4 1983009808
        %v2313 = vunpack.c.0.s8 %v2312
        %v2314 = vlaneseq
        %v2315 = vshrl.u32 %v2314, 7
        %v2316 = vsub.s32 %v2313, %v2315
        %v2317 = vrot.slane %v2310, %v2316
        %v2318 = vcombine.low %v2182, %v2246
        %v2320 = vunpack.c.l.s4 1983009808
        %v2321 = vunpack.c.0.s8 %v2320
        %v2322 = vlaneseq
        %v2323 = vshrl.u32 %v2322, 7
        %v2324 = vsub.s32 %v2321, %v2323
        %v2325 = vrot.slane %v2318, %v2324
        %v2326 = vcombine.low %v2214, %v2278
        %v2328 = vunpack.c.l.s4 1983009808
        %v2329 = vunpack.c.0.s8 %v2328
        %v2330 = vlaneseq
        %v2331 = vshrl.u32 %v2330, 7
        %v2332 = vsub.s32 %v2329, %v2331
        %v2333 = vrot.slane %v2326, %v2332
        %v2334 = vcombine.low %v2309, %v2317
        %v2336 = vunpack.c.l.s4 1934713408
        %v2337 = vunpack.c.0.s8 %v2336
        %v2338 = vlaneseq
        %v2339 = vshrl.u32 %v2338, 7
        %v2340 = vsub.s32 %v2337, %v2339
        %v2341 = vrot.slane %v2334, %v2340
        %v2342 = vcombine.low %v2325, %v2333
        %v2344 = vunpack.c.l.s4 1934713408
        %v2345 = vunpack.c.0.s8 %v2344
        %v2346 = vlaneseq
        %v2347 = vshrl.u32 %v2346, 7
        %v2348 = vsub.s32 %v2345, %v2347
        %v2349 = vrot.slane %v2342, %v2348
        %v2350 = vcombine.low %v2341, %v2349
        %v2351 = vcombine.high %v2341, %v2349
        %v2352 = vcombine.low %v2070, %v2134
        %v2354 = vunpack.c.l.s4 1983009808
        %v2355 = vunpack.c.0.s8 %v2354
        %v2356 = vlaneseq
        %v2357 = vshrl.u32 %v2356, 7
        %v2358 = vsub.s32 %v2355, %v2357
        %v2359 = vrot.slane %v2352, %v2358
        %v2360 = vcombine.low %v2102, %v2166
        %v2362 = vunpack.c.l.s4 1983009808
        %v2363 = vunpack.c.0.s8 %v2362
        %v2364 = vlaneseq
        %v2365 = vshrl.u32 %v2364, 7
        %v2366 = vsub.s32 %v2363, %v2365
        %v2367 = vrot.slane %v2360, %v2366
        %v2368 = vcombine.low %v2198, %v2262
        %v2370 = vunpack.c.l.s4 1983009808
        %v2371 = vunpack.c.0.s8 %v2370
        %v2372 = vlaneseq
        %v2373 = vshrl.u32 %v2372, 7
        %v2374 = vsub.s32 %v2371, %v2373
        %v2375 = vrot.slane %v2368, %v2374
        %v2376 = vcombine.low %v2230, %v2294
        %v2378 = vunpack.c.l.s4 1983009808
        %v2379 = vunpack.c.0.s8 %v2378
        %v2380 = vlaneseq
        %v2381 = vshrl.u32 %v2380, 7
        %v2382 = vsub.s32 %v2379, %v2381
        %v2383 = vrot.slane %v2376, %v2382
        %v2384 = vcombine.low %v2359, %v2367
        %v2386 = vunpack.c.l.s4 1934713408
        %v2387 = vunpack.c.0.s8 %v2386
        %v2388 = vlaneseq
        %v2389 = vshrl.u32 %v2388, 7
        %v2390 = vsub.s32 %v2387, %v2389
        %v2391 = vrot.slane %v2384, %v2390
        %v2392 = vcombine.low %v2375, %v2383
        %v2394 = vunpack.c.l.s4 1934713408
        %v2395 = vunpack.c.0.s8 %v2394
        %v2396 = vlaneseq
        %v2397 = vshrl.u32 %v2396, 7
        %v2398 = vsub.s32 %v2395, %v2397
        %v2399 = vrot.slane %v2392, %v2398
        %v2400 = vcombine.low %v2391, %v2399
        %v2401 = vcombine.high %v2391, %v2399
        %v2404 = vpack.i.b16 %v2400, %v2350
        %v2406 = vshrl.u32 %v2350, 16
        %v2407 = vshrl.u32 %v2400, 16
        %v2408 = vpack.i.b16 %v2407, %v2406
        %v2412 = vpack.i.b16 %v2401, %v2351
        %v2414 = vshrl.u32 %v2351, 16
        %v2415 = vshrl.u32 %v2401, 16
        %v2416 = vpack.i.b16 %v2415, %v2414
        %vm2418 = vcmask 130048
        %v2420 = vsel %vm2418, %v1444, 0
        %2422 = vmatprep.subr.bf16.mxu0 0
        %2423 = vmatpush1.bf16.msra.mxu0 0
        %2424 = vmatprep.subr.bf16.mxu0 0
        %2425 = vmatpush1.bf16.msra.mxu0 0
        %2426 = vmatprep.subr.bf16.mxu0 0
        %2427 = vmatpush1.bf16.msra.mxu0 0
        %2428 = vmatprep.subr.bf16.mxu0 0
        %2429 = vmatpush1.bf16.msra.mxu0 0
        %2430 = vmatprep.subr.bf16.mxu0 0
        %2431 = vmatpush1.bf16.msra.mxu0 0
        %2432 = vmatprep.subr.bf16.mxu0 0
        %2433 = vmatpush1.bf16.msra.mxu0 0
        %2434 = vmatprep.subr.bf16.mxu0 0
        %2435 = vmatpush1.bf16.msra.mxu0 0
        %2436 = vmatprep.subr.bf16.mxu0 0
        %2437 = vmatpush1.bf16.msra.mxu0 %v2404
        %2438 = vmatprep.subr.bf16.mxu0 0
        %2439 = vmatpush2.bf16.msra.mxu0 0
        %2440 = vmatprep.subr.bf16.mxu0 0
        %2441 = vmatpush2.bf16.msra.mxu0 0
        %2442 = vmatprep.subr.bf16.mxu0 0
        %2443 = vmatpush2.bf16.msra.mxu0 0
        %2444 = vmatprep.subr.bf16.mxu0 0
        %2445 = vmatpush2.bf16.msra.mxu0 0
        %2446 = vmatprep.subr.bf16.mxu0 0
        %2447 = vmatpush2.bf16.msra.mxu0 0
        %2448 = vmatprep.subr.bf16.mxu0 0
        %2449 = vmatpush2.bf16.msra.mxu0 0
        %2450 = vmatprep.subr.bf16.mxu0 0
        %2451 = vmatpush2.bf16.msra.mxu0 0
        %2452 = vmatprep.subr.bf16.mxu0 0
        %2453 = vmatpush2.bf16.msra.mxu0 0
        %2454 = vmatprep.mubr.bf16.mxu0 0
        %2455 = vmatmul.mubr.bf16.gmra.mxu0 %v2420
        %v2456 = vpop.f32.mrf.mxu0
        %v2457 = vadd.f32 0.0, %v2456
        %v2458 = vpop.f32.mrf.mxu0
        %v2459 = vpop.f32.mrf.mxu0
        %v2460 = vadd.f32 0.0, %v2459
        %v2461 = vpop.f32.mrf.mxu0
        %2462 = vdwg.mxu0
        %v2464 = vsel %vm2418, %v1447, 0
        %2466 = vmatprep.subr.bf16.mxu0 0
        %2467 = vmatpush1.bf16.msra.mxu0 0
        %2468 = vmatprep.subr.bf16.mxu0 0
        %2469 = vmatpush1.bf16.msra.mxu0 0
        %2470 = vmatprep.subr.bf16.mxu0 0
        %2471 = vmatpush1.bf16.msra.mxu0 0
        %2472 = vmatprep.subr.bf16.mxu0 0
        %2473 = vmatpush1.bf16.msra.mxu0 0
        %2474 = vmatprep.subr.bf16.mxu0 0
        %2475 = vmatpush1.bf16.msra.mxu0 0
        %2476 = vmatprep.subr.bf16.mxu0 0
        %2477 = vmatpush1.bf16.msra.mxu0 0
        %2478 = vmatprep.subr.bf16.mxu0 0
        %2479 = vmatpush1.bf16.msra.mxu0 0
        %2480 = vmatprep.subr.bf16.mxu0 0
        %2481 = vmatpush1.bf16.msra.mxu0 %v2408
        %2482 = vmatprep.subr.bf16.mxu0 0
        %2483 = vmatpush2.bf16.msra.mxu0 0
        %2484 = vmatprep.subr.bf16.mxu0 0
        %2485 = vmatpush2.bf16.msra.mxu0 0
        %2486 = vmatprep.subr.bf16.mxu0 0
        %2487 = vmatpush2.bf16.msra.mxu0 0
        %2488 = vmatprep.subr.bf16.mxu0 0
        %2489 = vmatpush2.bf16.msra.mxu0 0
        %2490 = vmatprep.subr.bf16.mxu0 0
        %2491 = vmatpush2.bf16.msra.mxu0 0
        %2492 = vmatprep.subr.bf16.mxu0 0
        %2493 = vmatpush2.bf16.msra.mxu0 0
        %2494 = vmatprep.subr.bf16.mxu0 0
        %2495 = vmatpush2.bf16.msra.mxu0 0
        %2496 = vmatprep.subr.bf16.mxu0 0
        %2497 = vmatpush2.bf16.msra.mxu0 0
        %2498 = vmatprep.mubr.bf16.mxu0 0
        %2499 = vmatmul.mubr.bf16.gmra.mxu0 %v2464
        %v2500 = vpop.f32.mrf.mxu0
        %v2501 = vadd.f32 0.0, %v2500
        %v2502 = vpop.f32.mrf.mxu0
        %v2503 = vpop.f32.mrf.mxu0
        %v2504 = vadd.f32 0.0, %v2503
        %v2505 = vpop.f32.mrf.mxu0
        %2506 = vdwg.mxu0
        %v2508 = vsel %vm2418, %v1450, 0
        %2510 = vmatprep.subr.bf16.mxu0 0
        %2511 = vmatpush1.bf16.msra.mxu0 0
        %2512 = vmatprep.subr.bf16.mxu0 0
        %2513 = vmatpush1.bf16.msra.mxu0 0
        %2514 = vmatprep.subr.bf16.mxu0 0
        %2515 = vmatpush1.bf16.msra.mxu0 0
        %2516 = vmatprep.subr.bf16.mxu0 0
        %2517 = vmatpush1.bf16.msra.mxu0 0
        %2518 = vmatprep.subr.bf16.mxu0 0
        %2519 = vmatpush1.bf16.msra.mxu0 0
        %2520 = vmatprep.subr.bf16.mxu0 0
        %2521 = vmatpush1.bf16.msra.mxu0 0
        %2522 = vmatprep.subr.bf16.mxu0 0
        %2523 = vmatpush1.bf16.msra.mxu0 0
        %2524 = vmatprep.subr.bf16.mxu0 0
        %2525 = vmatpush1.bf16.msra.mxu0 %v2412
        %2526 = vmatprep.subr.bf16.mxu0 0
        %2527 = vmatpush2.bf16.msra.mxu0 0
        %2528 = vmatprep.subr.bf16.mxu0 0
        %2529 = vmatpush2.bf16.msra.mxu0 0
        %2530 = vmatprep.subr.bf16.mxu0 0
        %2531 = vmatpush2.bf16.msra.mxu0 0
        %2532 = vmatprep.subr.bf16.mxu0 0
        %2533 = vmatpush2.bf16.msra.mxu0 0
        %2534 = vmatprep.subr.bf16.mxu0 0
        %2535 = vmatpush2.bf16.msra.mxu0 0
        %2536 = vmatprep.subr.bf16.mxu0 0
        %2537 = vmatpush2.bf16.msra.mxu0 0
        %2538 = vmatprep.subr.bf16.mxu0 0
        %2539 = vmatpush2.bf16.msra.mxu0 0
        %2540 = vmatprep.subr.bf16.mxu0 0
        %2541 = vmatpush2.bf16.msra.mxu0 0
        %2542 = vmatprep.mubr.bf16.mxu0 0
        %2543 = vmatmul.mubr.bf16.gmra.mxu0 %v2508
        %v2544 = vpop.f32.mrf.mxu0
        %v2545 = vadd.f32 0.0, %v2544
        %v2546 = vpop.f32.mrf.mxu0
        %v2547 = vpop.f32.mrf.mxu0
        %v2548 = vadd.f32 0.0, %v2547
        %v2549 = vpop.f32.mrf.mxu0
        %2550 = vdwg.mxu0
        %v2552 = vsel %vm2418, %v1453, 0
        %2554 = vmatprep.subr.bf16.mxu0 0
        %2555 = vmatpush1.bf16.msra.mxu0 0
        %2556 = vmatprep.subr.bf16.mxu0 0
        %2557 = vmatpush1.bf16.msra.mxu0 0
        %2558 = vmatprep.subr.bf16.mxu0 0
        %2559 = vmatpush1.bf16.msra.mxu0 0
        %2560 = vmatprep.subr.bf16.mxu0 0
        %2561 = vmatpush1.bf16.msra.mxu0 0
        %2562 = vmatprep.subr.bf16.mxu0 0
        %2563 = vmatpush1.bf16.msra.mxu0 0
        %2564 = vmatprep.subr.bf16.mxu0 0
        %2565 = vmatpush1.bf16.msra.mxu0 0
        %2566 = vmatprep.subr.bf16.mxu0 0
        %2567 = vmatpush1.bf16.msra.mxu0 0
        %2568 = vmatprep.subr.bf16.mxu0 0
        %2569 = vmatpush1.bf16.msra.mxu0 %v2416
        %2570 = vmatprep.subr.bf16.mxu0 0
        %2571 = vmatpush2.bf16.msra.mxu0 0
        %2572 = vmatprep.subr.bf16.mxu0 0
        %2573 = vmatpush2.bf16.msra.mxu0 0
        %2574 = vmatprep.subr.bf16.mxu0 0
        %2575 = vmatpush2.bf16.msra.mxu0 0
        %2576 = vmatprep.subr.bf16.mxu0 0
        %2577 = vmatpush2.bf16.msra.mxu0 0
        %2578 = vmatprep.subr.bf16.mxu0 0
        %2579 = vmatpush2.bf16.msra.mxu0 0
        %2580 = vmatprep.subr.bf16.mxu0 0
        %2581 = vmatpush2.bf16.msra.mxu0 0
        %2582 = vmatprep.subr.bf16.mxu0 0
        %2583 = vmatpush2.bf16.msra.mxu0 0
        %2584 = vmatprep.subr.bf16.mxu0 0
        %2585 = vmatpush2.bf16.msra.mxu0 0
        %2586 = vmatprep.mubr.bf16.mxu0 0
        %2587 = vmatmul.mubr.bf16.gmra.mxu0 %v2552
        %v2588 = vpop.f32.mrf.mxu0
        %v2589 = vadd.f32 0.0, %v2588
        %v2590 = vpop.f32.mrf.mxu0
        %v2591 = vpop.f32.mrf.mxu0
        %v2592 = vadd.f32 0.0, %v2591
        %v2593 = vpop.f32.mrf.mxu0
        %2594 = vdwg.mxu0
        %v2595 = vsel %vm2418, %v2457, -inf
        %2596 = vmax.xlane.f32.xlu0 %v2595
        %v2597 = vpop.xlane.xlu0 %2596
        %v2598 = vsel %vm2418, %v2460, -inf
        %2599 = vmax.xlane.f32.xlu0 %v2598
        %v2600 = vpop.xlane.xlu0 %2599
        %v2601 = vsel %vm2418, %v2501, -inf
        %2602 = vmax.xlane.f32.xlu0 %v2601
        %v2603 = vpop.xlane.xlu0 %2602
        %v2604 = vsel %vm2418, %v2504, -inf
        %2605 = vmax.xlane.f32.xlu0 %v2604
        %v2606 = vpop.xlane.xlu0 %2605
        %v2607 = vsel %vm2418, %v2545, -inf
        %2608 = vmax.xlane.f32.xlu0 %v2607
        %v2609 = vpop.xlane.xlu0 %2608
        %v2610 = vsel %vm2418, %v2548, -inf
        %2611 = vmax.xlane.f32.xlu0 %v2610
        %v2612 = vpop.xlane.xlu0 %2611
        %v2613 = vsel %vm2418, %v2589, -inf
        %2614 = vmax.xlane.f32.xlu0 %v2613
        %v2615 = vpop.xlane.xlu0 %2614
        %v2616 = vsel %vm2418, %v2592, -inf
        %2617 = vmax.xlane.f32.xlu0 %v2616
        %v2618 = vpop.xlane.xlu0 %2617
        %v2619 = vsub.f32 %v2457, %v2597
        %v2620 = vsub.f32 %v2460, %v2600
        %v2621 = vsub.f32 %v2501, %v2603
        %v2622 = vsub.f32 %v2504, %v2606
        %v2623 = vsub.f32 %v2545, %v2609
        %v2624 = vsub.f32 %v2548, %v2612
        %v2625 = vsub.f32 %v2589, %v2615
        %v2626 = vsub.f32 %v2592, %v2618
        %v2627 = vmul.f32 %v2619, 1.442695
        %v2628 = vpow.pop %v2627
        %v2629 = vmul.f32 %v2620, 1.442695
        %v2630 = vpow.pop %v2629
        %v2631 = vmul.f32 %v2621, 1.442695
        %v2632 = vpow.pop %v2631
        %v2633 = vmul.f32 %v2622, 1.442695
        %v2634 = vpow.pop %v2633
        %v2635 = vmul.f32 %v2623, 1.442695
        %v2636 = vpow.pop %v2635
        %v2637 = vmul.f32 %v2624, 1.442695
        %v2638 = vpow.pop %v2637
        %v2639 = vmul.f32 %v2625, 1.442695
        %v2640 = vpow.pop %v2639
        %v2641 = vmul.f32 %v2626, 1.442695
        %v2642 = vpow.pop %v2641
        %v2643 = vsel %vm2418, %v2628, 0.0
        %2644 = vadd.xlane.f32.xlu0 %v2643
        %v2645 = vpop.xlane.xlu0 %2644
        %v2646 = vsel %vm2418, %v2630, 0.0
        %2647 = vadd.xlane.f32.xlu0 %v2646
        %v2648 = vpop.xlane.xlu0 %2647
        %v2649 = vsel %vm2418, %v2632, 0.0
        %2650 = vadd.xlane.f32.xlu0 %v2649
        %v2651 = vpop.xlane.xlu0 %2650
        %v2652 = vsel %vm2418, %v2634, 0.0
        %2653 = vadd.xlane.f32.xlu0 %v2652
        %v2654 = vpop.xlane.xlu0 %2653
        %v2655 = vsel %vm2418, %v2636, 0.0
        %2656 = vadd.xlane.f32.xlu0 %v2655
        %v2657 = vpop.xlane.xlu0 %2656
        %v2658 = vsel %vm2418, %v2638, 0.0
        %2659 = vadd.xlane.f32.xlu0 %v2658
        %v2660 = vpop.xlane.xlu0 %2659
        %v2661 = vsel %vm2418, %v2640, 0.0
        %2662 = vadd.xlane.f32.xlu0 %v2661
        %v2663 = vpop.xlane.xlu0 %2662
        %v2664 = vsel %vm2418, %v2642, 0.0
        %2665 = vadd.xlane.f32.xlu0 %v2664
        %v2666 = vpop.xlane.xlu0 %2665
        %v2667 = vrcp.pop %v2645
        %v2668 = vrcp.pop %v2648
        %v2669 = vrcp.pop %v2651
        %v2670 = vrcp.pop %v2654
        %v2671 = vrcp.pop %v2657
        %v2672 = vrcp.pop %v2660
        %v2673 = vrcp.pop %v2663
        %v2674 = vrcp.pop %v2666
        %v2675 = vmul.f32 %v2628, %v2667
        %v2676 = vmul.f32 %v2630, %v2668
        %v2677 = vmul.f32 %v2632, %v2669
        %v2678 = vmul.f32 %v2634, %v2670
        %v2679 = vmul.f32 %v2636, %v2671
        %v2680 = vmul.f32 %v2638, %v2672
        %v2681 = vmul.f32 %v2640, %v2673
        %v2682 = vmul.f32 %v2642, %v2674
        %v2683 = vpack.c.bf16 %v2676, %v2675
        %v2684 = vpack.c.bf16 %v2678, %v2677
        %v2685 = vpack.c.bf16 %v2680, %v2679
        %v2686 = vpack.c.bf16 %v2682, %v2681
        %2687 = vxpose.xlu0.c.b16.start [1/8] %v1326, 128
        %2688 = vxpose.xlu0.c.b16.cont [2/8] 0, 128
        %2689 = vxpose.xlu0.c.b16.cont [3/8] 0, 128
        %2690 = vxpose.xlu0.c.b16.cont [4/8] 0, 128
        %2691 = vxpose.xlu0.c.b16.cont [5/8] 0, 128
        %2692 = vxpose.xlu0.c.b16.cont [6/8] 0, 128
        %2693 = vxpose.xlu0.c.b16.cont [7/8] 0, 128
        %2694 = vxpose.xlu0.c.b16.end [8/8] 0, 128
        %v2695 = vpop.trf.xlu0
        %v2696 = vpop.trf.xlu0
        %v2697 = vpop.trf.xlu0
        %v2698 = vpop.trf.xlu0
        %v2699 = vpop.trf.xlu0
        %v2700 = vpop.trf.xlu0
        %v2701 = vpop.trf.xlu0
        %v2702 = vpop.trf.xlu0
        %2703 = vxpose.xlu0.c.b16.start [1/8] %v1327, 128
        %2704 = vxpose.xlu0.c.b16.cont [2/8] 0, 128
        %2705 = vxpose.xlu0.c.b16.cont [3/8] 0, 128
        %2706 = vxpose.xlu0.c.b16.cont [4/8] 0, 128
        %2707 = vxpose.xlu0.c.b16.cont [5/8] 0, 128
        %2708 = vxpose.xlu0.c.b16.cont [6/8] 0, 128
        %2709 = vxpose.xlu0.c.b16.cont [7/8] 0, 128
        %2710 = vxpose.xlu0.c.b16.end [8/8] 0, 128
        %v2711 = vpop.trf.xlu0
        %v2712 = vpop.trf.xlu0
        %v2713 = vpop.trf.xlu0
        %v2714 = vpop.trf.xlu0
        %v2715 = vpop.trf.xlu0
        %v2716 = vpop.trf.xlu0
        %v2717 = vpop.trf.xlu0
        %v2718 = vpop.trf.xlu0
        %2719 = vxpose.xlu0.c.b16.start [1/8] %v1328, 128
        %2720 = vxpose.xlu0.c.b16.cont [2/8] 0, 128
        %2721 = vxpose.xlu0.c.b16.cont [3/8] 0, 128
        %2722 = vxpose.xlu0.c.b16.cont [4/8] 0, 128
        %2723 = vxpose.xlu0.c.b16.cont [5/8] 0, 128
        %2724 = vxpose.xlu0.c.b16.cont [6/8] 0, 128
        %2725 = vxpose.xlu0.c.b16.cont [7/8] 0, 128
        %2726 = vxpose.xlu0.c.b16.end [8/8] 0, 128
        %v2727 = vpop.trf.xlu0
        %v2728 = vpop.trf.xlu0
        %v2729 = vpop.trf.xlu0
        %v2730 = vpop.trf.xlu0
        %v2731 = vpop.trf.xlu0
        %v2732 = vpop.trf.xlu0
        %v2733 = vpop.trf.xlu0
        %v2734 = vpop.trf.xlu0
        %2735 = vxpose.xlu0.c.b16.start [1/8] %v1329, 128
        %2736 = vxpose.xlu0.c.b16.cont [2/8] 0, 128
        %2737 = vxpose.xlu0.c.b16.cont [3/8] 0, 128
        %2738 = vxpose.xlu0.c.b16.cont [4/8] 0, 128
        %2739 = vxpose.xlu0.c.b16.cont [5/8] 0, 128
        %2740 = vxpose.xlu0.c.b16.cont [6/8] 0, 128
        %2741 = vxpose.xlu0.c.b16.cont [7/8] 0, 128
        %2742 = vxpose.xlu0.c.b16.end [8/8] 0, 128
        %v2743 = vpop.trf.xlu0
        %v2744 = vpop.trf.xlu0
        %v2745 = vpop.trf.xlu0
        %v2746 = vpop.trf.xlu0
        %v2747 = vpop.trf.xlu0
        %v2748 = vpop.trf.xlu0
        %v2749 = vpop.trf.xlu0
        %v2750 = vpop.trf.xlu0
        %2751 = vxpose.xlu0.c.b16.start [1/8] %v1330, 128
        %2752 = vxpose.xlu0.c.b16.cont [2/8] 0, 128
        %2753 = vxpose.xlu0.c.b16.cont [3/8] 0, 128
        %2754 = vxpose.xlu0.c.b16.cont [4/8] 0, 128
        %2755 = vxpose.xlu0.c.b16.cont [5/8] 0, 128
        %2756 = vxpose.xlu0.c.b16.cont [6/8] 0, 128
        %2757 = vxpose.xlu0.c.b16.cont [7/8] 0, 128
        %2758 = vxpose.xlu0.c.b16.end [8/8] 0, 128
        %v2759 = vpop.trf.xlu0
        %v2760 = vpop.trf.xlu0
        %v2761 = vpop.trf.xlu0
        %v2762 = vpop.trf.xlu0
        %v2763 = vpop.trf.xlu0
        %v2764 = vpop.trf.xlu0
        %v2765 = vpop.trf.xlu0
        %v2766 = vpop.trf.xlu0
        %2767 = vxpose.xlu0.c.b16.start [1/8] %v1331, 128
        %2768 = vxpose.xlu0.c.b16.cont [2/8] 0, 128
        %2769 = vxpose.xlu0.c.b16.cont [3/8] 0, 128
        %2770 = vxpose.xlu0.c.b16.cont [4/8] 0, 128
        %2771 = vxpose.xlu0.c.b16.cont [5/8] 0, 128
        %2772 = vxpose.xlu0.c.b16.cont [6/8] 0, 128
        %2773 = vxpose.xlu0.c.b16.cont [7/8] 0, 128
        %2774 = vxpose.xlu0.c.b16.end [8/8] 0, 128
        %v2775 = vpop.trf.xlu0
        %v2776 = vpop.trf.xlu0
        %v2777 = vpop.trf.xlu0
        %v2778 = vpop.trf.xlu0
        %v2779 = vpop.trf.xlu0
        %v2780 = vpop.trf.xlu0
        %v2781 = vpop.trf.xlu0
        %v2782 = vpop.trf.xlu0
        %2783 = vxpose.xlu0.c.b16.start [1/8] %v1332, 128
        %2784 = vxpose.xlu0.c.b16.cont [2/8] 0, 128
        %2785 = vxpose.xlu0.c.b16.cont [3/8] 0, 128
        %2786 = vxpose.xlu0.c.b16.cont [4/8] 0, 128
        %2787 = vxpose.xlu0.c.b16.cont [5/8] 0, 128
        %2788 = vxpose.xlu0.c.b16.cont [6/8] 0, 128
        %2789 = vxpose.xlu0.c.b16.cont [7/8] 0, 128
        %2790 = vxpose.xlu0.c.b16.end [8/8] 0, 128
        %v2791 = vpop.trf.xlu0
        %v2792 = vpop.trf.xlu0
        %v2793 = vpop.trf.xlu0
        %v2794 = vpop.trf.xlu0
        %v2795 = vpop.trf.xlu0
        %v2796 = vpop.trf.xlu0
        %v2797 = vpop.trf.xlu0
        %v2798 = vpop.trf.xlu0
        %2799 = vxpose.xlu0.c.b16.start [1/8] %v1333, 128
        %2800 = vxpose.xlu0.c.b16.cont [2/8] 0, 128
        %2801 = vxpose.xlu0.c.b16.cont [3/8] 0, 128
        %2802 = vxpose.xlu0.c.b16.cont [4/8] 0, 128
        %2803 = vxpose.xlu0.c.b16.cont [5/8] 0, 128
        %2804 = vxpose.xlu0.c.b16.cont [6/8] 0, 128
        %2805 = vxpose.xlu0.c.b16.cont [7/8] 0, 128
        %2806 = vxpose.xlu0.c.b16.end [8/8] 0, 128
        %v2807 = vpop.trf.xlu0
        %v2808 = vpop.trf.xlu0
        %v2809 = vpop.trf.xlu0
        %v2810 = vpop.trf.xlu0
        %v2811 = vpop.trf.xlu0
        %v2812 = vpop.trf.xlu0
        %v2813 = vpop.trf.xlu0
        %v2814 = vpop.trf.xlu0
        %2815 = vxpose.xlu0.c.b16.start [1/8] %v1334, 128
        %2816 = vxpose.xlu0.c.b16.cont [2/8] 0, 128
        %2817 = vxpose.xlu0.c.b16.cont [3/8] 0, 128
        %2818 = vxpose.xlu0.c.b16.cont [4/8] 0, 128
        %2819 = vxpose.xlu0.c.b16.cont [5/8] 0, 128
        %2820 = vxpose.xlu0.c.b16.cont [6/8] 0, 128
        %2821 = vxpose.xlu0.c.b16.cont [7/8] 0, 128
        %2822 = vxpose.xlu0.c.b16.end [8/8] 0, 128
        %v2823 = vpop.trf.xlu0
        %v2824 = vpop.trf.xlu0
        %v2825 = vpop.trf.xlu0
        %v2826 = vpop.trf.xlu0
        %v2827 = vpop.trf.xlu0
        %v2828 = vpop.trf.xlu0
        %v2829 = vpop.trf.xlu0
        %v2830 = vpop.trf.xlu0
        %2831 = vxpose.xlu0.c.b16.start [1/8] %v1335, 128
        %2832 = vxpose.xlu0.c.b16.cont [2/8] 0, 128
        %2833 = vxpose.xlu0.c.b16.cont [3/8] 0, 128
        %2834 = vxpose.xlu0.c.b16.cont [4/8] 0, 128
        %2835 = vxpose.xlu0.c.b16.cont [5/8] 0, 128
        %2836 = vxpose.xlu0.c.b16.cont [6/8] 0, 128
        %2837 = vxpose.xlu0.c.b16.cont [7/8] 0, 128
        %2838 = vxpose.xlu0.c.b16.end [8/8] 0, 128
        %v2839 = vpop.trf.xlu0
        %v2840 = vpop.trf.xlu0
        %v2841 = vpop.trf.xlu0
        %v2842 = vpop.trf.xlu0
        %v2843 = vpop.trf.xlu0
        %v2844 = vpop.trf.xlu0
        %v2845 = vpop.trf.xlu0
        %v2846 = vpop.trf.xlu0
        %2847 = vxpose.xlu0.c.b16.start [1/8] %v1336, 128
        %2848 = vxpose.xlu0.c.b16.cont [2/8] 0, 128
        %2849 = vxpose.xlu0.c.b16.cont [3/8] 0, 128
        %2850 = vxpose.xlu0.c.b16.cont [4/8] 0, 128
        %2851 = vxpose.xlu0.c.b16.cont [5/8] 0, 128
        %2852 = vxpose.xlu0.c.b16.cont [6/8] 0, 128
        %2853 = vxpose.xlu0.c.b16.cont [7/8] 0, 128
        %2854 = vxpose.xlu0.c.b16.end [8/8] 0, 128
        %v2855 = vpop.trf.xlu0
        %v2856 = vpop.trf.xlu0
        %v2857 = vpop.trf.xlu0
        %v2858 = vpop.trf.xlu0
        %v2859 = vpop.trf.xlu0
        %v2860 = vpop.trf.xlu0
        %v2861 = vpop.trf.xlu0
        %v2862 = vpop.trf.xlu0
        %2863 = vxpose.xlu0.c.b16.start [1/8] %v1337, 128
        %2864 = vxpose.xlu0.c.b16.cont [2/8] 0, 128
        %2865 = vxpose.xlu0.c.b16.cont [3/8] 0, 128
        %2866 = vxpose.xlu0.c.b16.cont [4/8] 0, 128
        %2867 = vxpose.xlu0.c.b16.cont [5/8] 0, 128
        %2868 = vxpose.xlu0.c.b16.cont [6/8] 0, 128
        %2869 = vxpose.xlu0.c.b16.cont [7/8] 0, 128
        %2870 = vxpose.xlu0.c.b16.end [8/8] 0, 128
        %v2871 = vpop.trf.xlu0
        %v2872 = vpop.trf.xlu0
        %v2873 = vpop.trf.xlu0
        %v2874 = vpop.trf.xlu0
        %v2875 = vpop.trf.xlu0
        %v2876 = vpop.trf.xlu0
        %v2877 = vpop.trf.xlu0
        %v2878 = vpop.trf.xlu0
        %2879 = vxpose.xlu0.c.b16.start [1/8] %v1338, 128
        %2880 = vxpose.xlu0.c.b16.cont [2/8] 0, 128
        %2881 = vxpose.xlu0.c.b16.cont [3/8] 0, 128
        %2882 = vxpose.xlu0.c.b16.cont [4/8] 0, 128
        %2883 = vxpose.xlu0.c.b16.cont [5/8] 0, 128
        %2884 = vxpose.xlu0.c.b16.cont [6/8] 0, 128
        %2885 = vxpose.xlu0.c.b16.cont [7/8] 0, 128
        %2886 = vxpose.xlu0.c.b16.end [8/8] 0, 128
        %v2887 = vpop.trf.xlu0
        %v2888 = vpop.trf.xlu0
        %v2889 = vpop.trf.xlu0
        %v2890 = vpop.trf.xlu0
        %v2891 = vpop.trf.xlu0
        %v2892 = vpop.trf.xlu0
        %v2893 = vpop.trf.xlu0
        %v2894 = vpop.trf.xlu0
        %2895 = vxpose.xlu0.c.b16.start [1/8] %v1339, 128
        %2896 = vxpose.xlu0.c.b16.cont [2/8] 0, 128
        %2897 = vxpose.xlu0.c.b16.cont [3/8] 0, 128
        %2898 = vxpose.xlu0.c.b16.cont [4/8] 0, 128
        %2899 = vxpose.xlu0.c.b16.cont [5/8] 0, 128
        %2900 = vxpose.xlu0.c.b16.cont [6/8] 0, 128
        %2901 = vxpose.xlu0.c.b16.cont [7/8] 0, 128
        %2902 = vxpose.xlu0.c.b16.end [8/8] 0, 128
        %v2903 = vpop.trf.xlu0
        %v2904 = vpop.trf.xlu0
        %v2905 = vpop.trf.xlu0
        %v2906 = vpop.trf.xlu0
        %v2907 = vpop.trf.xlu0
        %v2908 = vpop.trf.xlu0
        %v2909 = vpop.trf.xlu0
        %v2910 = vpop.trf.xlu0
        %2911 = vxpose.xlu0.c.b16.start [1/8] %v1340, 128
        %2912 = vxpose.xlu0.c.b16.cont [2/8] 0, 128
        %2913 = vxpose.xlu0.c.b16.cont [3/8] 0, 128
        %2914 = vxpose.xlu0.c.b16.cont [4/8] 0, 128
        %2915 = vxpose.xlu0.c.b16.cont [5/8] 0, 128
        %2916 = vxpose.xlu0.c.b16.cont [6/8] 0, 128
        %2917 = vxpose.xlu0.c.b16.cont [7/8] 0, 128
        %2918 = vxpose.xlu0.c.b16.end [8/8] 0, 128
        %v2919 = vpop.trf.xlu0
        %v2920 = vpop.trf.xlu0
        %v2921 = vpop.trf.xlu0
        %v2922 = vpop.trf.xlu0
        %v2923 = vpop.trf.xlu0
        %v2924 = vpop.trf.xlu0
        %v2925 = vpop.trf.xlu0
        %v2926 = vpop.trf.xlu0
        %2927 = vxpose.xlu0.c.b16.start [1/8] %v1341, 128
        %2928 = vxpose.xlu0.c.b16.cont [2/8] 0, 128
        %2929 = vxpose.xlu0.c.b16.cont [3/8] 0, 128
        %2930 = vxpose.xlu0.c.b16.cont [4/8] 0, 128
        %2931 = vxpose.xlu0.c.b16.cont [5/8] 0, 128
        %2932 = vxpose.xlu0.c.b16.cont [6/8] 0, 128
        %2933 = vxpose.xlu0.c.b16.cont [7/8] 0, 128
        %2934 = vxpose.xlu0.c.b16.end [8/8] 0, 128
        %v2935 = vpop.trf.xlu0
        %v2936 = vpop.trf.xlu0
        %v2937 = vpop.trf.xlu0
        %v2938 = vpop.trf.xlu0
        %v2939 = vpop.trf.xlu0
        %v2940 = vpop.trf.xlu0
        %v2941 = vpop.trf.xlu0
        %v2942 = vpop.trf.xlu0
        %v2943 = vcombine.low %v2695, %v2759
        %v2944 = vcombine.high %v2695, %v2759
        %v2946 = vunpack.c.l.s4 1983009808
        %v2947 = vunpack.c.0.s8 %v2946
        %v2948 = vlaneseq
        %v2949 = vshrl.u32 %v2948, 7
        %v2950 = vsub.s32 %v2947, %v2949
        %v2951 = vrot.slane %v2943, %v2950
        %v2953 = vunpack.c.l.s4 1983009808
        %v2954 = vunpack.c.0.s8 %v2953
        %v2955 = vlaneseq
        %v2956 = vshrl.u32 %v2955, 7
        %v2957 = vsub.s32 %v2954, %v2956
        %v2958 = vrot.slane %v2944, %v2957
        %v2959 = vcombine.low %v2727, %v2791
        %v2960 = vcombine.high %v2727, %v2791
        %v2962 = vunpack.c.l.s4 1983009808
        %v2963 = vunpack.c.0.s8 %v2962
        %v2964 = vlaneseq
        %v2965 = vshrl.u32 %v2964, 7
        %v2966 = vsub.s32 %v2963, %v2965
        %v2967 = vrot.slane %v2959, %v2966
        %v2969 = vunpack.c.l.s4 1983009808
        %v2970 = vunpack.c.0.s8 %v2969
        %v2971 = vlaneseq
        %v2972 = vshrl.u32 %v2971, 7
        %v2973 = vsub.s32 %v2970, %v2972
        %v2974 = vrot.slane %v2960, %v2973
        %v2975 = vcombine.low %v2823, %v2887
        %v2976 = vcombine.high %v2823, %v2887
        %v2978 = vunpack.c.l.s4 1983009808
        %v2979 = vunpack.c.0.s8 %v2978
        %v2980 = vlaneseq
        %v2981 = vshrl.u32 %v2980, 7
        %v2982 = vsub.s32 %v2979, %v2981
        %v2983 = vrot.slane %v2975, %v2982
        %v2985 = vunpack.c.l.s4 1983009808
        %v2986 = vunpack.c.0.s8 %v2985
        %v2987 = vlaneseq
        %v2988 = vshrl.u32 %v2987, 7
        %v2989 = vsub.s32 %v2986, %v2988
        %v2990 = vrot.slane %v2976, %v2989
        %v2991 = vcombine.low %v2855, %v2919
        %v2992 = vcombine.high %v2855, %v2919
        %v2994 = vunpack.c.l.s4 1983009808
        %v2995 = vunpack.c.0.s8 %v2994
        %v2996 = vlaneseq
        %v2997 = vshrl.u32 %v2996, 7
        %v2998 = vsub.s32 %v2995, %v2997
        %v2999 = vrot.slane %v2991, %v2998
        %v3001 = vunpack.c.l.s4 1983009808
        %v3002 = vunpack.c.0.s8 %v3001
        %v3003 = vlaneseq
        %v3004 = vshrl.u32 %v3003, 7
        %v3005 = vsub.s32 %v3002, %v3004
        %v3006 = vrot.slane %v2992, %v3005
        %v3007 = vcombine.low %v2951, %v2967
        %v3008 = vcombine.high %v2951, %v2967
        %v3010 = vunpack.c.l.s4 1934713408
        %v3011 = vunpack.c.0.s8 %v3010
        %v3012 = vlaneseq
        %v3013 = vshrl.u32 %v3012, 7
        %v3014 = vsub.s32 %v3011, %v3013
        %v3015 = vrot.slane %v3007, %v3014
        %v3017 = vunpack.c.l.s4 1934713408
        %v3018 = vunpack.c.0.s8 %v3017
        %v3019 = vlaneseq
        %v3020 = vshrl.u32 %v3019, 7
        %v3021 = vsub.s32 %v3018, %v3020
        %v3022 = vrot.slane %v3008, %v3021
        %v3023 = vcombine.low %v2958, %v2974
        %v3024 = vcombine.high %v2958, %v2974
        %v3026 = vunpack.c.l.s4 1934713408
        %v3027 = vunpack.c.0.s8 %v3026
        %v3028 = vlaneseq
        %v3029 = vshrl.u32 %v3028, 7
        %v3030 = vsub.s32 %v3027, %v3029
        %v3031 = vrot.slane %v3023, %v3030
        %v3033 = vunpack.c.l.s4 1934713408
        %v3034 = vunpack.c.0.s8 %v3033
        %v3035 = vlaneseq
        %v3036 = vshrl.u32 %v3035, 7
        %v3037 = vsub.s32 %v3034, %v3036
        %v3038 = vrot.slane %v3024, %v3037
        %v3039 = vcombine.low %v2983, %v2999
        %v3040 = vcombine.high %v2983, %v2999
        %v3042 = vunpack.c.l.s4 1934713408
        %v3043 = vunpack.c.0.s8 %v3042
        %v3044 = vlaneseq
        %v3045 = vshrl.u32 %v3044, 7
        %v3046 = vsub.s32 %v3043, %v3045
        %v3047 = vrot.slane %v3039, %v3046
        %v3049 = vunpack.c.l.s4 1934713408
        %v3050 = vunpack.c.0.s8 %v3049
        %v3051 = vlaneseq
        %v3052 = vshrl.u32 %v3051, 7
        %v3053 = vsub.s32 %v3050, %v3052
        %v3054 = vrot.slane %v3040, %v3053
        %v3055 = vcombine.low %v2990, %v3006
        %v3056 = vcombine.high %v2990, %v3006
        %v3058 = vunpack.c.l.s4 1934713408
        %v3059 = vunpack.c.0.s8 %v3058
        %v3060 = vlaneseq
        %v3061 = vshrl.u32 %v3060, 7
        %v3062 = vsub.s32 %v3059, %v3061
        %v3063 = vrot.slane %v3055, %v3062
        %v3065 = vunpack.c.l.s4 1934713408
        %v3066 = vunpack.c.0.s8 %v3065
        %v3067 = vlaneseq
        %v3068 = vshrl.u32 %v3067, 7
        %v3069 = vsub.s32 %v3066, %v3068
        %v3070 = vrot.slane %v3056, %v3069
        %v3071 = vcombine.low %v3015, %v3047
        %v3072 = vcombine.high %v3015, %v3047
        %v3073 = vcombine.low %v3022, %v3054
        %v3074 = vcombine.high %v3022, %v3054
        %v3075 = vcombine.low %v3031, %v3063
        %v3076 = vcombine.high %v3031, %v3063
        %v3077 = vcombine.low %v3038, %v3070
        %v3078 = vcombine.high %v3038, %v3070
        %v3079 = vcombine.low %v2711, %v2775
        %v3080 = vcombine.high %v2711, %v2775
        %v3082 = vunpack.c.l.s4 1983009808
        %v3083 = vunpack.c.0.s8 %v3082
        %v3084 = vlaneseq
        %v3085 = vshrl.u32 %v3084, 7
        %v3086 = vsub.s32 %v3083, %v3085
        %v3087 = vrot.slane %v3079, %v3086
        %v3089 = vunpack.c.l.s4 1983009808
        %v3090 = vunpack.c.0.s8 %v3089
        %v3091 = vlaneseq
        %v3092 = vshrl.u32 %v3091, 7
        %v3093 = vsub.s32 %v3090, %v3092
        %v3094 = vrot.slane %v3080, %v3093
        %v3095 = vcombine.low %v2743, %v2807
        %v3096 = vcombine.high %v2743, %v2807
        %v3098 = vunpack.c.l.s4 1983009808
        %v3099 = vunpack.c.0.s8 %v3098
        %v3100 = vlaneseq
        %v3101 = vshrl.u32 %v3100, 7
        %v3102 = vsub.s32 %v3099, %v3101
        %v3103 = vrot.slane %v3095, %v3102
        %v3105 = vunpack.c.l.s4 1983009808
        %v3106 = vunpack.c.0.s8 %v3105
        %v3107 = vlaneseq
        %v3108 = vshrl.u32 %v3107, 7
        %v3109 = vsub.s32 %v3106, %v3108
        %v3110 = vrot.slane %v3096, %v3109
        %v3111 = vcombine.low %v2839, %v2903
        %v3112 = vcombine.high %v2839, %v2903
        %v3114 = vunpack.c.l.s4 1983009808
        %v3115 = vunpack.c.0.s8 %v3114
        %v3116 = vlaneseq
        %v3117 = vshrl.u32 %v3116, 7
        %v3118 = vsub.s32 %v3115, %v3117
        %v3119 = vrot.slane %v3111, %v3118
        %v3121 = vunpack.c.l.s4 1983009808
        %v3122 = vunpack.c.0.s8 %v3121
        %v3123 = vlaneseq
        %v3124 = vshrl.u32 %v3123, 7
        %v3125 = vsub.s32 %v3122, %v3124
        %v3126 = vrot.slane %v3112, %v3125
        %v3127 = vcombine.low %v2871, %v2935
        %v3128 = vcombine.high %v2871, %v2935
        %v3130 = vunpack.c.l.s4 1983009808
        %v3131 = vunpack.c.0.s8 %v3130
        %v3132 = vlaneseq
        %v3133 = vshrl.u32 %v3132, 7
        %v3134 = vsub.s32 %v3131, %v3133
        %v3135 = vrot.slane %v3127, %v3134
        %v3137 = vunpack.c.l.s4 1983009808
        %v3138 = vunpack.c.0.s8 %v3137
        %v3139 = vlaneseq
        %v3140 = vshrl.u32 %v3139, 7
        %v3141 = vsub.s32 %v3138, %v3140
        %v3142 = vrot.slane %v3128, %v3141
        %v3143 = vcombine.low %v3087, %v3103
        %v3144 = vcombine.high %v3087, %v3103
        %v3146 = vunpack.c.l.s4 1934713408
        %v3147 = vunpack.c.0.s8 %v3146
        %v3148 = vlaneseq
        %v3149 = vshrl.u32 %v3148, 7
        %v3150 = vsub.s32 %v3147, %v3149
        %v3151 = vrot.slane %v3143, %v3150
        %v3153 = vunpack.c.l.s4 1934713408
        %v3154 = vunpack.c.0.s8 %v3153
        %v3155 = vlaneseq
        %v3156 = vshrl.u32 %v3155, 7
        %v3157 = vsub.s32 %v3154, %v3156
        %v3158 = vrot.slane %v3144, %v3157
        %v3159 = vcombine.low %v3094, %v3110
        %v3160 = vcombine.high %v3094, %v3110
        %v3162 = vunpack.c.l.s4 1934713408
        %v3163 = vunpack.c.0.s8 %v3162
        %v3164 = vlaneseq
        %v3165 = vshrl.u32 %v3164, 7
        %v3166 = vsub.s32 %v3163, %v3165
        %v3167 = vrot.slane %v3159, %v3166
        %v3169 = vunpack.c.l.s4 1934713408
        %v3170 = vunpack.c.0.s8 %v3169
        %v3171 = vlaneseq
        %v3172 = vshrl.u32 %v3171, 7
        %v3173 = vsub.s32 %v3170, %v3172
        %v3174 = vrot.slane %v3160, %v3173
        %v3175 = vcombine.low %v3119, %v3135
        %v3176 = vcombine.high %v3119, %v3135
        %v3178 = vunpack.c.l.s4 1934713408
        %v3179 = vunpack.c.0.s8 %v3178
        %v3180 = vlaneseq
        %v3181 = vshrl.u32 %v3180, 7
        %v3182 = vsub.s32 %v3179, %v3181
        %v3183 = vrot.slane %v3175, %v3182
        %v3185 = vunpack.c.l.s4 1934713408
        %v3186 = vunpack.c.0.s8 %v3185
        %v3187 = vlaneseq
        %v3188 = vshrl.u32 %v3187, 7
        %v3189 = vsub.s32 %v3186, %v3188
        %v3190 = vrot.slane %v3176, %v3189
        %v3191 = vcombine.low %v3126, %v3142
        %v3192 = vcombine.high %v3126, %v3142
        %v3194 = vunpack.c.l.s4 1934713408
        %v3195 = vunpack.c.0.s8 %v3194
        %v3196 = vlaneseq
        %v3197 = vshrl.u32 %v3196, 7
        %v3198 = vsub.s32 %v3195, %v3197
        %v3199 = vrot.slane %v3191, %v3198
        %v3201 = vunpack.c.l.s4 1934713408
        %v3202 = vunpack.c.0.s8 %v3201
        %v3203 = vlaneseq
        %v3204 = vshrl.u32 %v3203, 7
        %v3205 = vsub.s32 %v3202, %v3204
        %v3206 = vrot.slane %v3192, %v3205
        %v3207 = vcombine.low %v3151, %v3183
        %v3208 = vcombine.high %v3151, %v3183
        %v3209 = vcombine.low %v3158, %v3190
        %v3210 = vcombine.high %v3158, %v3190
        %v3211 = vcombine.low %v3167, %v3199
        %v3212 = vcombine.high %v3167, %v3199
        %v3213 = vcombine.low %v3174, %v3206
        %v3214 = vcombine.high %v3174, %v3206
        %v3217 = vpack.i.b16 %v3207, %v3071
        %v3219 = vshrl.u32 %v3071, 16
        %v3220 = vshrl.u32 %v3207, 16
        %v3221 = vpack.i.b16 %v3220, %v3219
        %v3225 = vpack.i.b16 %v3208, %v3072
        %v3227 = vshrl.u32 %v3072, 16
        %v3228 = vshrl.u32 %v3208, 16
        %v3229 = vpack.i.b16 %v3228, %v3227
        %v3233 = vpack.i.b16 %v3209, %v3073
        %v3235 = vshrl.u32 %v3073, 16
        %v3236 = vshrl.u32 %v3209, 16
        %v3237 = vpack.i.b16 %v3236, %v3235
        %v3241 = vpack.i.b16 %v3210, %v3074
        %v3243 = vshrl.u32 %v3074, 16
        %v3244 = vshrl.u32 %v3210, 16
        %v3245 = vpack.i.b16 %v3244, %v3243
        %v3249 = vpack.i.b16 %v3211, %v3075
        %v3251 = vshrl.u32 %v3075, 16
        %v3252 = vshrl.u32 %v3211, 16
        %v3253 = vpack.i.b16 %v3252, %v3251
        %v3257 = vpack.i.b16 %v3212, %v3076
        %v3259 = vshrl.u32 %v3076, 16
        %v3260 = vshrl.u32 %v3212, 16
        %v3261 = vpack.i.b16 %v3260, %v3259
        %v3265 = vpack.i.b16 %v3213, %v3077
        %v3267 = vshrl.u32 %v3077, 16
        %v3268 = vshrl.u32 %v3213, 16
        %v3269 = vpack.i.b16 %v3268, %v3267
        %v3273 = vpack.i.b16 %v3214, %v3078
        %v3275 = vshrl.u32 %v3078, 16
        %v3276 = vshrl.u32 %v3214, 16
        %v3277 = vpack.i.b16 %v3276, %v3275
        %3279 = vxpose.xlu0.c.b16.start [1/8] %v3217, 128
        %3280 = vxpose.xlu0.c.b16.cont [2/8] 0, 128
        %3281 = vxpose.xlu0.c.b16.cont [3/8] 0, 128
        %3282 = vxpose.xlu0.c.b16.cont [4/8] 0, 128
        %3283 = vxpose.xlu0.c.b16.cont [5/8] 0, 128
        %3284 = vxpose.xlu0.c.b16.cont [6/8] 0, 128
        %3285 = vxpose.xlu0.c.b16.cont [7/8] 0, 128
        %3286 = vxpose.xlu0.c.b16.end [8/8] 0, 128
        %v3287 = vpop.trf.xlu0
        %v3288 = vpop.trf.xlu0
        %v3289 = vpop.trf.xlu0
        %v3290 = vpop.trf.xlu0
        %v3291 = vpop.trf.xlu0
        %v3292 = vpop.trf.xlu0
        %v3293 = vpop.trf.xlu0
        %v3294 = vpop.trf.xlu0
        %3295 = vxpose.xlu0.c.b16.start [1/8] %v3221, 128
        %3296 = vxpose.xlu0.c.b16.cont [2/8] 0, 128
        %3297 = vxpose.xlu0.c.b16.cont [3/8] 0, 128
        %3298 = vxpose.xlu0.c.b16.cont [4/8] 0, 128
        %3299 = vxpose.xlu0.c.b16.cont [5/8] 0, 128
        %3300 = vxpose.xlu0.c.b16.cont [6/8] 0, 128
        %3301 = vxpose.xlu0.c.b16.cont [7/8] 0, 128
        %3302 = vxpose.xlu0.c.b16.end [8/8] 0, 128
        %v3303 = vpop.trf.xlu0
        %v3304 = vpop.trf.xlu0
        %v3305 = vpop.trf.xlu0
        %v3306 = vpop.trf.xlu0
        %v3307 = vpop.trf.xlu0
        %v3308 = vpop.trf.xlu0
        %v3309 = vpop.trf.xlu0
        %v3310 = vpop.trf.xlu0
        %3311 = vxpose.xlu0.c.b16.start [1/8] %v3225, 128
        %3312 = vxpose.xlu0.c.b16.cont [2/8] 0, 128
        %3313 = vxpose.xlu0.c.b16.cont [3/8] 0, 128
        %3314 = vxpose.xlu0.c.b16.cont [4/8] 0, 128
        %3315 = vxpose.xlu0.c.b16.cont [5/8] 0, 128
        %3316 = vxpose.xlu0.c.b16.cont [6/8] 0, 128
        %3317 = vxpose.xlu0.c.b16.cont [7/8] 0, 128
        %3318 = vxpose.xlu0.c.b16.end [8/8] 0, 128
        %v3319 = vpop.trf.xlu0
        %v3320 = vpop.trf.xlu0
        %v3321 = vpop.trf.xlu0
        %v3322 = vpop.trf.xlu0
        %v3323 = vpop.trf.xlu0
        %v3324 = vpop.trf.xlu0
        %v3325 = vpop.trf.xlu0
        %v3326 = vpop.trf.xlu0
        %3327 = vxpose.xlu0.c.b16.start [1/8] %v3229, 128
        %3328 = vxpose.xlu0.c.b16.cont [2/8] 0, 128
        %3329 = vxpose.xlu0.c.b16.cont [3/8] 0, 128
        %3330 = vxpose.xlu0.c.b16.cont [4/8] 0, 128
        %3331 = vxpose.xlu0.c.b16.cont [5/8] 0, 128
        %3332 = vxpose.xlu0.c.b16.cont [6/8] 0, 128
        %3333 = vxpose.xlu0.c.b16.cont [7/8] 0, 128
        %3334 = vxpose.xlu0.c.b16.end [8/8] 0, 128
        %v3335 = vpop.trf.xlu0
        %v3336 = vpop.trf.xlu0
        %v3337 = vpop.trf.xlu0
        %v3338 = vpop.trf.xlu0
        %v3339 = vpop.trf.xlu0
        %v3340 = vpop.trf.xlu0
        %v3341 = vpop.trf.xlu0
        %v3342 = vpop.trf.xlu0
        %3343 = vxpose.xlu0.c.b16.start [1/8] %v3233, 128
        %3344 = vxpose.xlu0.c.b16.cont [2/8] 0, 128
        %3345 = vxpose.xlu0.c.b16.cont [3/8] 0, 128
        %3346 = vxpose.xlu0.c.b16.cont [4/8] 0, 128
        %3347 = vxpose.xlu0.c.b16.cont [5/8] 0, 128
        %3348 = vxpose.xlu0.c.b16.cont [6/8] 0, 128
        %3349 = vxpose.xlu0.c.b16.cont [7/8] 0, 128
        %3350 = vxpose.xlu0.c.b16.end [8/8] 0, 128
        %v3351 = vpop.trf.xlu0
        %v3352 = vpop.trf.xlu0
        %v3353 = vpop.trf.xlu0
        %v3354 = vpop.trf.xlu0
        %v3355 = vpop.trf.xlu0
        %v3356 = vpop.trf.xlu0
        %v3357 = vpop.trf.xlu0
        %v3358 = vpop.trf.xlu0
        %3359 = vxpose.xlu0.c.b16.start [1/8] %v3237, 128
        %3360 = vxpose.xlu0.c.b16.cont [2/8] 0, 128
        %3361 = vxpose.xlu0.c.b16.cont [3/8] 0, 128
        %3362 = vxpose.xlu0.c.b16.cont [4/8] 0, 128
        %3363 = vxpose.xlu0.c.b16.cont [5/8] 0, 128
        %3364 = vxpose.xlu0.c.b16.cont [6/8] 0, 128
        %3365 = vxpose.xlu0.c.b16.cont [7/8] 0, 128
        %3366 = vxpose.xlu0.c.b16.end [8/8] 0, 128
        %v3367 = vpop.trf.xlu0
        %v3368 = vpop.trf.xlu0
        %v3369 = vpop.trf.xlu0
        %v3370 = vpop.trf.xlu0
        %v3371 = vpop.trf.xlu0
        %v3372 = vpop.trf.xlu0
        %v3373 = vpop.trf.xlu0
        %v3374 = vpop.trf.xlu0
        %3375 = vxpose.xlu0.c.b16.start [1/8] %v3241, 128
        %3376 = vxpose.xlu0.c.b16.cont [2/8] 0, 128
        %3377 = vxpose.xlu0.c.b16.cont [3/8] 0, 128
        %3378 = vxpose.xlu0.c.b16.cont [4/8] 0, 128
        %3379 = vxpose.xlu0.c.b16.cont [5/8] 0, 128
        %3380 = vxpose.xlu0.c.b16.cont [6/8] 0, 128
        %3381 = vxpose.xlu0.c.b16.cont [7/8] 0, 128
        %3382 = vxpose.xlu0.c.b16.end [8/8] 0, 128
        %v3383 = vpop.trf.xlu0
        %v3384 = vpop.trf.xlu0
        %v3385 = vpop.trf.xlu0
        %v3386 = vpop.trf.xlu0
        %v3387 = vpop.trf.xlu0
        %v3388 = vpop.trf.xlu0
        %v3389 = vpop.trf.xlu0
        %v3390 = vpop.trf.xlu0
        %3391 = vxpose.xlu0.c.b16.start [1/8] %v3245, 128
        %3392 = vxpose.xlu0.c.b16.cont [2/8] 0, 128
        %3393 = vxpose.xlu0.c.b16.cont [3/8] 0, 128
        %3394 = vxpose.xlu0.c.b16.cont [4/8] 0, 128
        %3395 = vxpose.xlu0.c.b16.cont [5/8] 0, 128
        %3396 = vxpose.xlu0.c.b16.cont [6/8] 0, 128
        %3397 = vxpose.xlu0.c.b16.cont [7/8] 0, 128
        %3398 = vxpose.xlu0.c.b16.end [8/8] 0, 128
        %v3399 = vpop.trf.xlu0
        %v3400 = vpop.trf.xlu0
        %v3401 = vpop.trf.xlu0
        %v3402 = vpop.trf.xlu0
        %v3403 = vpop.trf.xlu0
        %v3404 = vpop.trf.xlu0
        %v3405 = vpop.trf.xlu0
        %v3406 = vpop.trf.xlu0
        %3407 = vxpose.xlu0.c.b16.start [1/8] %v3249, 128
        %3408 = vxpose.xlu0.c.b16.cont [2/8] 0, 128
        %3409 = vxpose.xlu0.c.b16.cont [3/8] 0, 128
        %3410 = vxpose.xlu0.c.b16.cont [4/8] 0, 128
        %3411 = vxpose.xlu0.c.b16.cont [5/8] 0, 128
        %3412 = vxpose.xlu0.c.b16.cont [6/8] 0, 128
        %3413 = vxpose.xlu0.c.b16.cont [7/8] 0, 128
        %3414 = vxpose.xlu0.c.b16.end [8/8] 0, 128
        %v3415 = vpop.trf.xlu0
        %v3416 = vpop.trf.xlu0
        %v3417 = vpop.trf.xlu0
        %v3418 = vpop.trf.xlu0
        %v3419 = vpop.trf.xlu0
        %v3420 = vpop.trf.xlu0
        %v3421 = vpop.trf.xlu0
        %v3422 = vpop.trf.xlu0
        %3423 = vxpose.xlu0.c.b16.start [1/8] %v3253, 128
        %3424 = vxpose.xlu0.c.b16.cont [2/8] 0, 128
        %3425 = vxpose.xlu0.c.b16.cont [3/8] 0, 128
        %3426 = vxpose.xlu0.c.b16.cont [4/8] 0, 128
        %3427 = vxpose.xlu0.c.b16.cont [5/8] 0, 128
        %3428 = vxpose.xlu0.c.b16.cont [6/8] 0, 128
        %3429 = vxpose.xlu0.c.b16.cont [7/8] 0, 128
        %3430 = vxpose.xlu0.c.b16.end [8/8] 0, 128
        %v3431 = vpop.trf.xlu0
        %v3432 = vpop.trf.xlu0
        %v3433 = vpop.trf.xlu0
        %v3434 = vpop.trf.xlu0
        %v3435 = vpop.trf.xlu0
        %v3436 = vpop.trf.xlu0
        %v3437 = vpop.trf.xlu0
        %v3438 = vpop.trf.xlu0
        %3439 = vxpose.xlu0.c.b16.start [1/8] %v3257, 128
        %3440 = vxpose.xlu0.c.b16.cont [2/8] 0, 128
        %3441 = vxpose.xlu0.c.b16.cont [3/8] 0, 128
        %3442 = vxpose.xlu0.c.b16.cont [4/8] 0, 128
        %3443 = vxpose.xlu0.c.b16.cont [5/8] 0, 128
        %3444 = vxpose.xlu0.c.b16.cont [6/8] 0, 128
        %3445 = vxpose.xlu0.c.b16.cont [7/8] 0, 128
        %3446 = vxpose.xlu0.c.b16.end [8/8] 0, 128
        %v3447 = vpop.trf.xlu0
        %v3448 = vpop.trf.xlu0
        %v3449 = vpop.trf.xlu0
        %v3450 = vpop.trf.xlu0
        %v3451 = vpop.trf.xlu0
        %v3452 = vpop.trf.xlu0
        %v3453 = vpop.trf.xlu0
        %v3454 = vpop.trf.xlu0
        %3455 = vxpose.xlu0.c.b16.start [1/8] %v3261, 128
        %3456 = vxpose.xlu0.c.b16.cont [2/8] 0, 128
        %3457 = vxpose.xlu0.c.b16.cont [3/8] 0, 128
        %3458 = vxpose.xlu0.c.b16.cont [4/8] 0, 128
        %3459 = vxpose.xlu0.c.b16.cont [5/8] 0, 128
        %3460 = vxpose.xlu0.c.b16.cont [6/8] 0, 128
        %3461 = vxpose.xlu0.c.b16.cont [7/8] 0, 128
        %3462 = vxpose.xlu0.c.b16.end [8/8] 0, 128
        %v3463 = vpop.trf.xlu0
        %v3464 = vpop.trf.xlu0
        %v3465 = vpop.trf.xlu0
        %v3466 = vpop.trf.xlu0
        %v3467 = vpop.trf.xlu0
        %v3468 = vpop.trf.xlu0
        %v3469 = vpop.trf.xlu0
        %v3470 = vpop.trf.xlu0
        %3471 = vxpose.xlu0.c.b16.start [1/8] %v3265, 128
        %3472 = vxpose.xlu0.c.b16.cont [2/8] 0, 128
        %3473 = vxpose.xlu0.c.b16.cont [3/8] 0, 128
        %3474 = vxpose.xlu0.c.b16.cont [4/8] 0, 128
        %3475 = vxpose.xlu0.c.b16.cont [5/8] 0, 128
        %3476 = vxpose.xlu0.c.b16.cont [6/8] 0, 128
        %3477 = vxpose.xlu0.c.b16.cont [7/8] 0, 128
        %3478 = vxpose.xlu0.c.b16.end [8/8] 0, 128
        %v3479 = vpop.trf.xlu0
        %v3480 = vpop.trf.xlu0
        %v3481 = vpop.trf.xlu0
        %v3482 = vpop.trf.xlu0
        %v3483 = vpop.trf.xlu0
        %v3484 = vpop.trf.xlu0
        %v3485 = vpop.trf.xlu0
        %v3486 = vpop.trf.xlu0
        %3487 = vxpose.xlu0.c.b16.start [1/8] %v3269, 128
        %3488 = vxpose.xlu0.c.b16.cont [2/8] 0, 128
        %3489 = vxpose.xlu0.c.b16.cont [3/8] 0, 128
        %3490 = vxpose.xlu0.c.b16.cont [4/8] 0, 128
        %3491 = vxpose.xlu0.c.b16.cont [5/8] 0, 128
        %3492 = vxpose.xlu0.c.b16.cont [6/8] 0, 128
        %3493 = vxpose.xlu0.c.b16.cont [7/8] 0, 128
        %3494 = vxpose.xlu0.c.b16.end [8/8] 0, 128
        %v3495 = vpop.trf.xlu0
        %v3496 = vpop.trf.xlu0
        %v3497 = vpop.trf.xlu0
        %v3498 = vpop.trf.xlu0
        %v3499 = vpop.trf.xlu0
        %v3500 = vpop.trf.xlu0
        %v3501 = vpop.trf.xlu0
        %v3502 = vpop.trf.xlu0
        %3503 = vxpose.xlu0.c.b16.start [1/8] %v3273, 128
        %3504 = vxpose.xlu0.c.b16.cont [2/8] 0, 128
        %3505 = vxpose.xlu0.c.b16.cont [3/8] 0, 128
        %3506 = vxpose.xlu0.c.b16.cont [4/8] 0, 128
        %3507 = vxpose.xlu0.c.b16.cont [5/8] 0, 128
        %3508 = vxpose.xlu0.c.b16.cont [6/8] 0, 128
        %3509 = vxpose.xlu0.c.b16.cont [7/8] 0, 128
        %3510 = vxpose.xlu0.c.b16.end [8/8] 0, 128
        %v3511 = vpop.trf.xlu0
        %v3512 = vpop.trf.xlu0
        %v3513 = vpop.trf.xlu0
        %v3514 = vpop.trf.xlu0
        %v3515 = vpop.trf.xlu0
        %v3516 = vpop.trf.xlu0
        %v3517 = vpop.trf.xlu0
        %v3518 = vpop.trf.xlu0
        %3519 = vxpose.xlu0.c.b16.start [1/8] %v3277, 128
        %3520 = vxpose.xlu0.c.b16.cont [2/8] 0, 128
        %3521 = vxpose.xlu0.c.b16.cont [3/8] 0, 128
        %3522 = vxpose.xlu0.c.b16.cont [4/8] 0, 128
        %3523 = vxpose.xlu0.c.b16.cont [5/8] 0, 128
        %3524 = vxpose.xlu0.c.b16.cont [6/8] 0, 128
        %3525 = vxpose.xlu0.c.b16.cont [7/8] 0, 128
        %3526 = vxpose.xlu0.c.b16.end [8/8] 0, 128
        %v3527 = vpop.trf.xlu0
        %v3528 = vpop.trf.xlu0
        %v3529 = vpop.trf.xlu0
        %v3530 = vpop.trf.xlu0
        %v3531 = vpop.trf.xlu0
        %v3532 = vpop.trf.xlu0
        %v3533 = vpop.trf.xlu0
        %v3534 = vpop.trf.xlu0
        %v3535 = vcombine.low %v3287, %v3351
        %v3537 = vunpack.c.l.s4 1983009808
        %v3538 = vunpack.c.0.s8 %v3537
        %v3539 = vlaneseq
        %v3540 = vshrl.u32 %v3539, 7
        %v3541 = vsub.s32 %v3538, %v3540
        %v3542 = vrot.slane %v3535, %v3541
        %v3543 = vcombine.low %v3319, %v3383
        %v3545 = vunpack.c.l.s4 1983009808
        %v3546 = vunpack.c.0.s8 %v3545
        %v3547 = vlaneseq
        %v3548 = vshrl.u32 %v3547, 7
        %v3549 = vsub.s32 %v3546, %v3548
        %v3550 = vrot.slane %v3543, %v3549
        %v3551 = vcombine.low %v3415, %v3479
        %v3553 = vunpack.c.l.s4 1983009808
        %v3554 = vunpack.c.0.s8 %v3553
        %v3555 = vlaneseq
        %v3556 = vshrl.u32 %v3555, 7
        %v3557 = vsub.s32 %v3554, %v3556
        %v3558 = vrot.slane %v3551, %v3557
        %v3559 = vcombine.low %v3447, %v3511
        %v3561 = vunpack.c.l.s4 1983009808
        %v3562 = vunpack.c.0.s8 %v3561
        %v3563 = vlaneseq
        %v3564 = vshrl.u32 %v3563, 7
        %v3565 = vsub.s32 %v3562, %v3564
        %v3566 = vrot.slane %v3559, %v3565
        %v3567 = vcombine.low %v3542, %v3550
        %v3569 = vunpack.c.l.s4 1934713408
        %v3570 = vunpack.c.0.s8 %v3569
        %v3571 = vlaneseq
        %v3572 = vshrl.u32 %v3571, 7
        %v3573 = vsub.s32 %v3570, %v3572
        %v3574 = vrot.slane %v3567, %v3573
        %v3575 = vcombine.low %v3558, %v3566
        %v3577 = vunpack.c.l.s4 1934713408
        %v3578 = vunpack.c.0.s8 %v3577
        %v3579 = vlaneseq
        %v3580 = vshrl.u32 %v3579, 7
        %v3581 = vsub.s32 %v3578, %v3580
        %v3582 = vrot.slane %v3575, %v3581
        %v3583 = vcombine.low %v3574, %v3582
        %v3584 = vcombine.high %v3574, %v3582
        %v3585 = vcombine.low %v3303, %v3367
        %v3587 = vunpack.c.l.s4 1983009808
        %v3588 = vunpack.c.0.s8 %v3587
        %v3589 = vlaneseq
        %v3590 = vshrl.u32 %v3589, 7
        %v3591 = vsub.s32 %v3588, %v3590
        %v3592 = vrot.slane %v3585, %v3591
        %v3593 = vcombine.low %v3335, %v3399
        %v3595 = vunpack.c.l.s4 1983009808
        %v3596 = vunpack.c.0.s8 %v3595
        %v3597 = vlaneseq
        %v3598 = vshrl.u32 %v3597, 7
        %v3599 = vsub.s32 %v3596, %v3598
        %v3600 = vrot.slane %v3593, %v3599
        %v3601 = vcombine.low %v3431, %v3495
        %v3603 = vunpack.c.l.s4 1983009808
        %v3604 = vunpack.c.0.s8 %v3603
        %v3605 = vlaneseq
        %v3606 = vshrl.u32 %v3605, 7
        %v3607 = vsub.s32 %v3604, %v3606
        %v3608 = vrot.slane %v3601, %v3607
        %v3609 = vcombine.low %v3463, %v3527
        %v3611 = vunpack.c.l.s4 1983009808
        %v3612 = vunpack.c.0.s8 %v3611
        %v3613 = vlaneseq
        %v3614 = vshrl.u32 %v3613, 7
        %v3615 = vsub.s32 %v3612, %v3614
        %v3616 = vrot.slane %v3609, %v3615
        %v3617 = vcombine.low %v3592, %v3600
        %v3619 = vunpack.c.l.s4 1934713408
        %v3620 = vunpack.c.0.s8 %v3619
        %v3621 = vlaneseq
        %v3622 = vshrl.u32 %v3621, 7
        %v3623 = vsub.s32 %v3620, %v3622
        %v3624 = vrot.slane %v3617, %v3623
        %v3625 = vcombine.low %v3608, %v3616
        %v3627 = vunpack.c.l.s4 1934713408
        %v3628 = vunpack.c.0.s8 %v3627
        %v3629 = vlaneseq
        %v3630 = vshrl.u32 %v3629, 7
        %v3631 = vsub.s32 %v3628, %v3630
        %v3632 = vrot.slane %v3625, %v3631
        %v3633 = vcombine.low %v3624, %v3632
        %v3634 = vcombine.high %v3624, %v3632
        %v3637 = vpack.i.b16 %v3633, %v3583
        %v3638 = vshrl.u32 %v3583, 16
        %v3639 = vshrl.u32 %v3633, 16
        %v3640 = vpack.i.b16 %v3639, %v3638
        %v3643 = vpack.i.b16 %v3634, %v3584
        %v3644 = vshrl.u32 %v3584, 16
        %v3645 = vshrl.u32 %v3634, 16
        %v3646 = vpack.i.b16 %v3645, %v3644
        %v3648 = vsel %vm2418, %v3637, 0
        %v3651 = vsel %vm2418, %v2683, 0
        %3653 = vmatprep.subr.bf16.mxu0 0
        %3654 = vmatpush1.bf16.xpose.msra.mxu0 0
        %3655 = vmatprep.subr.bf16.mxu0 0
        %3656 = vmatpush1.bf16.xpose.msra.mxu0 0
        %3657 = vmatprep.subr.bf16.mxu0 0
        %3658 = vmatpush1.bf16.xpose.msra.mxu0 0
        %3659 = vmatprep.subr.bf16.mxu0 0
        %3660 = vmatpush1.bf16.xpose.msra.mxu0 0
        %3661 = vmatprep.subr.bf16.mxu0 0
        %3662 = vmatpush1.bf16.xpose.msra.mxu0 0
        %3663 = vmatprep.subr.bf16.mxu0 0
        %3664 = vmatpush1.bf16.xpose.msra.mxu0 0
        %3665 = vmatprep.subr.bf16.mxu0 0
        %3666 = vmatpush1.bf16.xpose.msra.mxu0 0
        %3667 = vmatprep.subr.bf16.mxu0 0
        %3668 = vmatpush1.bf16.xpose.msra.mxu0 %v3651
        %3669 = vmatprep.subr.bf16.mxu0 0
        %3670 = vmatpush2.bf16.xpose.msra.mxu0 0
        %3671 = vmatprep.subr.bf16.mxu0 0
        %3672 = vmatpush2.bf16.xpose.msra.mxu0 0
        %3673 = vmatprep.subr.bf16.mxu0 0
        %3674 = vmatpush2.bf16.xpose.msra.mxu0 0
        %3675 = vmatprep.subr.bf16.mxu0 0
        %3676 = vmatpush2.bf16.xpose.msra.mxu0 0
        %3677 = vmatprep.subr.bf16.mxu0 0
        %3678 = vmatpush2.bf16.xpose.msra.mxu0 0
        %3679 = vmatprep.subr.bf16.mxu0 0
        %3680 = vmatpush2.bf16.xpose.msra.mxu0 0
        %3681 = vmatprep.subr.bf16.mxu0 0
        %3682 = vmatpush2.bf16.xpose.msra.mxu0 0
        %3683 = vmatprep.subr.bf16.mxu0 0
        %3684 = vmatpush2.bf16.xpose.msra.mxu0 0
        %3685 = vmatprep.mubr.bf16.mxu0 0
        %3686 = vmatmul.mubr.bf16.gmra.mxu0 %v3648
        %v3687 = vpop.f32.mrf.mxu0
        %v3688 = vadd.f32 0.0, %v3687
        %v3689 = vpop.f32.mrf.mxu0
        %v3690 = vpop.f32.mrf.mxu0
        %v3691 = vadd.f32 0.0, %v3690
        %v3692 = vpop.f32.mrf.mxu0
        %3693 = vdwg.mxu0
        %v3695 = vsel %vm2418, %v3640, 0
        %v3698 = vsel %vm2418, %v2684, 0
        %3700 = vmatprep.subr.bf16.mxu0 0
        %3701 = vmatpush1.bf16.xpose.msra.mxu0 0
        %3702 = vmatprep.subr.bf16.mxu0 0
        %3703 = vmatpush1.bf16.xpose.msra.mxu0 0
        %3704 = vmatprep.subr.bf16.mxu0 0
        %3705 = vmatpush1.bf16.xpose.msra.mxu0 0
        %3706 = vmatprep.subr.bf16.mxu0 0
        %3707 = vmatpush1.bf16.xpose.msra.mxu0 0
        %3708 = vmatprep.subr.bf16.mxu0 0
        %3709 = vmatpush1.bf16.xpose.msra.mxu0 0
        %3710 = vmatprep.subr.bf16.mxu0 0
        %3711 = vmatpush1.bf16.xpose.msra.mxu0 0
        %3712 = vmatprep.subr.bf16.mxu0 0
        %3713 = vmatpush1.bf16.xpose.msra.mxu0 0
        %3714 = vmatprep.subr.bf16.mxu0 0
        %3715 = vmatpush1.bf16.xpose.msra.mxu0 %v3698
        %3716 = vmatprep.subr.bf16.mxu0 0
        %3717 = vmatpush2.bf16.xpose.msra.mxu0 0
        %3718 = vmatprep.subr.bf16.mxu0 0
        %3719 = vmatpush2.bf16.xpose.msra.mxu0 0
        %3720 = vmatprep.subr.bf16.mxu0 0
        %3721 = vmatpush2.bf16.xpose.msra.mxu0 0
        %3722 = vmatprep.subr.bf16.mxu0 0
        %3723 = vmatpush2.bf16.xpose.msra.mxu0 0
        %3724 = vmatprep.subr.bf16.mxu0 0
        %3725 = vmatpush2.bf16.xpose.msra.mxu0 0
        %3726 = vmatprep.subr.bf16.mxu0 0
        %3727 = vmatpush2.bf16.xpose.msra.mxu0 0
        %3728 = vmatprep.subr.bf16.mxu0 0
        %3729 = vmatpush2.bf16.xpose.msra.mxu0 0
        %3730 = vmatprep.subr.bf16.mxu0 0
        %3731 = vmatpush2.bf16.xpose.msra.mxu0 0
        %3732 = vmatprep.mubr.bf16.mxu0 0
        %3733 = vmatmul.mubr.bf16.gmra.mxu0 %v3695
        %v3734 = vpop.f32.mrf.mxu0
        %v3735 = vadd.f32 0.0, %v3734
        %v3736 = vpop.f32.mrf.mxu0
        %v3737 = vpop.f32.mrf.mxu0
        %v3738 = vadd.f32 0.0, %v3737
        %v3739 = vpop.f32.mrf.mxu0
        %3740 = vdwg.mxu0
        %v3742 = vsel %vm2418, %v3643, 0
        %v3745 = vsel %vm2418, %v2685, 0
        %3747 = vmatprep.subr.bf16.mxu0 0
        %3748 = vmatpush1.bf16.xpose.msra.mxu0 0
        %3749 = vmatprep.subr.bf16.mxu0 0
        %3750 = vmatpush1.bf16.xpose.msra.mxu0 0
        %3751 = vmatprep.subr.bf16.mxu0 0
        %3752 = vmatpush1.bf16.xpose.msra.mxu0 0
        %3753 = vmatprep.subr.bf16.mxu0 0
        %3754 = vmatpush1.bf16.xpose.msra.mxu0 0
        %3755 = vmatprep.subr.bf16.mxu0 0
        %3756 = vmatpush1.bf16.xpose.msra.mxu0 0
        %3757 = vmatprep.subr.bf16.mxu0 0
        %3758 = vmatpush1.bf16.xpose.msra.mxu0 0
        %3759 = vmatprep.subr.bf16.mxu0 0
        %3760 = vmatpush1.bf16.xpose.msra.mxu0 0
        %3761 = vmatprep.subr.bf16.mxu0 0
        %3762 = vmatpush1.bf16.xpose.msra.mxu0 %v3745
        %3763 = vmatprep.subr.bf16.mxu0 0
        %3764 = vmatpush2.bf16.xpose.msra.mxu0 0
        %3765 = vmatprep.subr.bf16.mxu0 0
        %3766 = vmatpush2.bf16.xpose.msra.mxu0 0
        %3767 = vmatprep.subr.bf16.mxu0 0
        %3768 = vmatpush2.bf16.xpose.msra.mxu0 0
        %3769 = vmatprep.subr.bf16.mxu0 0
        %3770 = vmatpush2.bf16.xpose.msra.mxu0 0
        %3771 = vmatprep.subr.bf16.mxu0 0
        %3772 = vmatpush2.bf16.xpose.msra.mxu0 0
        %3773 = vmatprep.subr.bf16.mxu0 0
        %3774 = vmatpush2.bf16.xpose.msra.mxu0 0
        %3775 = vmatprep.subr.bf16.mxu0 0
        %3776 = vmatpush2.bf16.xpose.msra.mxu0 0
        %3777 = vmatprep.subr.bf16.mxu0 0
        %3778 = vmatpush2.bf16.xpose.msra.mxu0 0
        %3779 = vmatprep.mubr.bf16.mxu0 0
        %3780 = vmatmul.mubr.bf16.gmra.mxu0 %v3742
        %v3781 = vpop.f32.mrf.mxu0
        %v3782 = vadd.f32 0.0, %v3781
        %v3783 = vpop.f32.mrf.mxu0
        %v3784 = vpop.f32.mrf.mxu0
        %v3785 = vadd.f32 0.0, %v3784
        %v3786 = vpop.f32.mrf.mxu0
        %3787 = vdwg.mxu0
        %v3789 = vsel %vm2418, %v3646, 0
        %v3792 = vsel %vm2418, %v2686, 0
        %3794 = vmatprep.subr.bf16.mxu0 0
        %3795 = vmatpush1.bf16.xpose.msra.mxu0 0
        %3796 = vmatprep.subr.bf16.mxu0 0
        %3797 = vmatpush1.bf16.xpose.msra.mxu0 0
        %3798 = vmatprep.subr.bf16.mxu0 0
        %3799 = vmatpush1.bf16.xpose.msra.mxu0 0
        %3800 = vmatprep.subr.bf16.mxu0 0
        %3801 = vmatpush1.bf16.xpose.msra.mxu0 0
        %3802 = vmatprep.subr.bf16.mxu0 0
        %3803 = vmatpush1.bf16.xpose.msra.mxu0 0
        %3804 = vmatprep.subr.bf16.mxu0 0
        %3805 = vmatpush1.bf16.xpose.msra.mxu0 0
        %3806 = vmatprep.subr.bf16.mxu0 0
        %3807 = vmatpush1.bf16.xpose.msra.mxu0 0
        %3808 = vmatprep.subr.bf16.mxu0 0
        %3809 = vmatpush1.bf16.xpose.msra.mxu0 %v3792
        %3810 = vmatprep.subr.bf16.mxu0 0
        %3811 = vmatpush2.bf16.xpose.msra.mxu0 0
        %3812 = vmatprep.subr.bf16.mxu0 0
        %3813 = vmatpush2.bf16.xpose.msra.mxu0 0
        %3814 = vmatprep.subr.bf16.mxu0 0
        %3815 = vmatpush2.bf16.xpose.msra.mxu0 0
        %3816 = vmatprep.subr.bf16.mxu0 0
        %3817 = vmatpush2.bf16.xpose.msra.mxu0 0
        %3818 = vmatprep.subr.bf16.mxu0 0
        %3819 = vmatpush2.bf16.xpose.msra.mxu0 0
        %3820 = vmatprep.subr.bf16.mxu0 0
        %3821 = vmatpush2.bf16.xpose.msra.mxu0 0
        %3822 = vmatprep.subr.bf16.mxu0 0
        %3823 = vmatpush2.bf16.xpose.msra.mxu0 0
        %3824 = vmatprep.subr.bf16.mxu0 0
        %3825 = vmatpush2.bf16.xpose.msra.mxu0 0
        %3826 = vmatprep.mubr.bf16.mxu0 0
        %3827 = vmatmul.mubr.bf16.gmra.mxu0 %v3789
        %v3828 = vpop.f32.mrf.mxu0
        %v3829 = vadd.f32 0.0, %v3828
        %v3830 = vpop.f32.mrf.mxu0
        %v3831 = vpop.f32.mrf.mxu0
        %v3832 = vadd.f32 0.0, %v3831
        %v3833 = vpop.f32.mrf.mxu0
        %3834 = vdwg.mxu0
        %3835 = vxpose.xlu0.b32.start [1/16] %v3688, 128
        %3836 = vxpose.xlu0.b32.cont [2/16] %v3691, 128
        %3837 = vxpose.xlu0.b32.cont [3/16] 0.0, 128
        %3838 = vxpose.xlu0.b32.cont [4/16] 0.0, 128
        %3839 = vxpose.xlu0.b32.cont [5/16] 0.0, 128
        %3840 = vxpose.xlu0.b32.cont [6/16] 0.0, 128
        %3841 = vxpose.xlu0.b32.cont [7/16] 0.0, 128
        %3842 = vxpose.xlu0.b32.cont [8/16] 0.0, 128
        %3843 = vxpose.xlu0.b32.cont [9/16] 0.0, 128
        %3844 = vxpose.xlu0.b32.cont [10/16] 0.0, 128
        %3845 = vxpose.xlu0.b32.cont [11/16] 0.0, 128
        %3846 = vxpose.xlu0.b32.cont [12/16] 0.0, 128
        %3847 = vxpose.xlu0.b32.cont [13/16] 0.0, 128
        %3848 = vxpose.xlu0.b32.cont [14/16] 0.0, 128
        %3849 = vxpose.xlu0.b32.cont [15/16] 0.0, 128
        %3850 = vxpose.xlu0.b32.end [16/16] 0.0, 128
        %v3851 = vpop.trf.xlu0
        %v3852 = vpop.trf.xlu0
        %v3853 = vpop.trf.xlu0
        %v3854 = vpop.trf.xlu0
        %v3855 = vpop.trf.xlu0
        %v3856 = vpop.trf.xlu0
        %v3857 = vpop.trf.xlu0
        %v3858 = vpop.trf.xlu0
        %v3859 = vpop.trf.xlu0
        %v3860 = vpop.trf.xlu0
        %v3861 = vpop.trf.xlu0
        %v3862 = vpop.trf.xlu0
        %v3863 = vpop.trf.xlu0
        %v3864 = vpop.trf.xlu0
        %v3865 = vpop.trf.xlu0
        %v3866 = vpop.trf.xlu0
        %3867 = vxpose.xlu0.b32.start [1/16] %v3735, 128
        %3868 = vxpose.xlu0.b32.cont [2/16] %v3738, 128
        %3869 = vxpose.xlu0.b32.cont [3/16] 0.0, 128
        %3870 = vxpose.xlu0.b32.cont [4/16] 0.0, 128
        %3871 = vxpose.xlu0.b32.cont [5/16] 0.0, 128
        %3872 = vxpose.xlu0.b32.cont [6/16] 0.0, 128
        %3873 = vxpose.xlu0.b32.cont [7/16] 0.0, 128
        %3874 = vxpose.xlu0.b32.cont [8/16] 0.0, 128
        %3875 = vxpose.xlu0.b32.cont [9/16] 0.0, 128
        %3876 = vxpose.xlu0.b32.cont [10/16] 0.0, 128
        %3877 = vxpose.xlu0.b32.cont [11/16] 0.0, 128
        %3878 = vxpose.xlu0.b32.cont [12/16] 0.0, 128
        %3879 = vxpose.xlu0.b32.cont [13/16] 0.0, 128
        %3880 = vxpose.xlu0.b32.cont [14/16] 0.0, 128
        %3881 = vxpose.xlu0.b32.cont [15/16] 0.0, 128
        %3882 = vxpose.xlu0.b32.end [16/16] 0.0, 128
        %v3883 = vpop.trf.xlu0
        %v3884 = vpop.trf.xlu0
        %v3885 = vpop.trf.xlu0
        %v3886 = vpop.trf.xlu0
        %v3887 = vpop.trf.xlu0
        %v3888 = vpop.trf.xlu0
        %v3889 = vpop.trf.xlu0
        %v3890 = vpop.trf.xlu0
        %v3891 = vpop.trf.xlu0
        %v3892 = vpop.trf.xlu0
        %v3893 = vpop.trf.xlu0
        %v3894 = vpop.trf.xlu0
        %v3895 = vpop.trf.xlu0
        %v3896 = vpop.trf.xlu0
        %v3897 = vpop.trf.xlu0
        %v3898 = vpop.trf.xlu0
        %3899 = vxpose.xlu0.b32.start [1/16] %v3782, 128
        %3900 = vxpose.xlu0.b32.cont [2/16] %v3785, 128
        %3901 = vxpose.xlu0.b32.cont [3/16] 0.0, 128
        %3902 = vxpose.xlu0.b32.cont [4/16] 0.0, 128
        %3903 = vxpose.xlu0.b32.cont [5/16] 0.0, 128
        %3904 = vxpose.xlu0.b32.cont [6/16] 0.0, 128
        %3905 = vxpose.xlu0.b32.cont [7/16] 0.0, 128
        %3906 = vxpose.xlu0.b32.cont [8/16] 0.0, 128
        %3907 = vxpose.xlu0.b32.cont [9/16] 0.0, 128
        %3908 = vxpose.xlu0.b32.cont [10/16] 0.0, 128
        %3909 = vxpose.xlu0.b32.cont [11/16] 0.0, 128
        %3910 = vxpose.xlu0.b32.cont [12/16] 0.0, 128
        %3911 = vxpose.xlu0.b32.cont [13/16] 0.0, 128
        %3912 = vxpose.xlu0.b32.cont [14/16] 0.0, 128
        %3913 = vxpose.xlu0.b32.cont [15/16] 0.0, 128
        %3914 = vxpose.xlu0.b32.end [16/16] 0.0, 128
        %v3915 = vpop.trf.xlu0
        %v3916 = vpop.trf.xlu0
        %v3917 = vpop.trf.xlu0
        %v3918 = vpop.trf.xlu0
        %v3919 = vpop.trf.xlu0
        %v3920 = vpop.trf.xlu0
        %v3921 = vpop.trf.xlu0
        %v3922 = vpop.trf.xlu0
        %v3923 = vpop.trf.xlu0
        %v3924 = vpop.trf.xlu0
        %v3925 = vpop.trf.xlu0
        %v3926 = vpop.trf.xlu0
        %v3927 = vpop.trf.xlu0
        %v3928 = vpop.trf.xlu0
        %v3929 = vpop.trf.xlu0
        %v3930 = vpop.trf.xlu0
        %3931 = vxpose.xlu0.b32.start [1/16] %v3829, 128
        %3932 = vxpose.xlu0.b32.cont [2/16] %v3832, 128
        %3933 = vxpose.xlu0.b32.cont [3/16] 0.0, 128
        %3934 = vxpose.xlu0.b32.cont [4/16] 0.0, 128
        %3935 = vxpose.xlu0.b32.cont [5/16] 0.0, 128
        %3936 = vxpose.xlu0.b32.cont [6/16] 0.0, 128
        %3937 = vxpose.xlu0.b32.cont [7/16] 0.0, 128
        %3938 = vxpose.xlu0.b32.cont [8/16] 0.0, 128
        %3939 = vxpose.xlu0.b32.cont [9/16] 0.0, 128
        %3940 = vxpose.xlu0.b32.cont [10/16] 0.0, 128
        %3941 = vxpose.xlu0.b32.cont [11/16] 0.0, 128
        %3942 = vxpose.xlu0.b32.cont [12/16] 0.0, 128
        %3943 = vxpose.xlu0.b32.cont [13/16] 0.0, 128
        %3944 = vxpose.xlu0.b32.cont [14/16] 0.0, 128
        %3945 = vxpose.xlu0.b32.cont [15/16] 0.0, 128
        %3946 = vxpose.xlu0.b32.end [16/16] 0.0, 128
        %v3947 = vpop.trf.xlu0
        %v3948 = vpop.trf.xlu0
        %v3949 = vpop.trf.xlu0
        %v3950 = vpop.trf.xlu0
        %v3951 = vpop.trf.xlu0
        %v3952 = vpop.trf.xlu0
        %v3953 = vpop.trf.xlu0
        %v3954 = vpop.trf.xlu0
        %v3955 = vpop.trf.xlu0
        %v3956 = vpop.trf.xlu0
        %v3957 = vpop.trf.xlu0
        %v3958 = vpop.trf.xlu0
        %v3959 = vpop.trf.xlu0
        %v3960 = vpop.trf.xlu0
        %v3961 = vpop.trf.xlu0
        %v3962 = vpop.trf.xlu0
        %v3963 = vcombine.low %v3851, %v3915
        %v3964 = vcombine.high %v3851, %v3915
        %v3966 = vunpack.c.l.s4 1983009808
        %v3967 = vunpack.c.0.s8 %v3966
        %v3968 = vlaneseq
        %v3969 = vshrl.u32 %v3968, 7
        %v3970 = vsub.s32 %v3967, %v3969
        %v3971 = vrot.slane %v3963, %v3970
        %v3973 = vunpack.c.l.s4 1983009808
        %v3974 = vunpack.c.0.s8 %v3973
        %v3975 = vlaneseq
        %v3976 = vshrl.u32 %v3975, 7
        %v3977 = vsub.s32 %v3974, %v3976
        %v3978 = vrot.slane %v3964, %v3977
        %v3979 = vcombine.low %v3883, %v3947
        %v3980 = vcombine.high %v3883, %v3947
        %v3982 = vunpack.c.l.s4 1983009808
        %v3983 = vunpack.c.0.s8 %v3982
        %v3984 = vlaneseq
        %v3985 = vshrl.u32 %v3984, 7
        %v3986 = vsub.s32 %v3983, %v3985
        %v3987 = vrot.slane %v3979, %v3986
        %v3989 = vunpack.c.l.s4 1983009808
        %v3990 = vunpack.c.0.s8 %v3989
        %v3991 = vlaneseq
        %v3992 = vshrl.u32 %v3991, 7
        %v3993 = vsub.s32 %v3990, %v3992
        %v3994 = vrot.slane %v3980, %v3993
        %v3995 = vcombine.low %v3971, %v3987
        %v3996 = vcombine.high %v3971, %v3987
        %v3998 = vunpack.c.l.s4 1934713408
        %v3999 = vunpack.c.0.s8 %v3998
        %v4000 = vlaneseq
        %v4001 = vshrl.u32 %v4000, 7
        %v4002 = vsub.s32 %v3999, %v4001
        %v4003 = vrot.slane %v3995, %v4002
        %v4005 = vunpack.c.l.s4 1934713408
        %v4006 = vunpack.c.0.s8 %v4005
        %v4007 = vlaneseq
        %v4008 = vshrl.u32 %v4007, 7
        %v4009 = vsub.s32 %v4006, %v4008
        %v4010 = vrot.slane %v3996, %v4009
        %v4011 = vcombine.low %v3978, %v3994
        %v4012 = vcombine.high %v3978, %v3994
        %v4014 = vunpack.c.l.s4 1934713408
        %v4015 = vunpack.c.0.s8 %v4014
        %v4016 = vlaneseq
        %v4017 = vshrl.u32 %v4016, 7
        %v4018 = vsub.s32 %v4015, %v4017
        %v4019 = vrot.slane %v4011, %v4018
        %v4021 = vunpack.c.l.s4 1934713408
        %v4022 = vunpack.c.0.s8 %v4021
        %v4023 = vlaneseq
        %v4024 = vshrl.u32 %v4023, 7
        %v4025 = vsub.s32 %v4022, %v4024
        %v4026 = vrot.slane %v4012, %v4025
        %v4027 = vcombine.high %v4003, 0.0
        %v4028 = vcombine.high %v4010, 0.0
        %v4029 = vcombine.high %v4019, 0.0
        %v4030 = vcombine.high %v4026, 0.0
        %v4031 = vcombine.low %v3852, %v3916
        %v4032 = vcombine.high %v3852, %v3916
        %v4034 = vunpack.c.l.s4 1983009808
        %v4035 = vunpack.c.0.s8 %v4034
        %v4036 = vlaneseq
        %v4037 = vshrl.u32 %v4036, 7
        %v4038 = vsub.s32 %v4035, %v4037
        %v4039 = vrot.slane %v4031, %v4038
        %v4041 = vunpack.c.l.s4 1983009808
        %v4042 = vunpack.c.0.s8 %v4041
        %v4043 = vlaneseq
        %v4044 = vshrl.u32 %v4043, 7
        %v4045 = vsub.s32 %v4042, %v4044
        %v4046 = vrot.slane %v4032, %v4045
        %v4047 = vcombine.low %v3884, %v3948
        %v4048 = vcombine.high %v3884, %v3948
        %v4050 = vunpack.c.l.s4 1983009808
        %v4051 = vunpack.c.0.s8 %v4050
        %v4052 = vlaneseq
        %v4053 = vshrl.u32 %v4052, 7
        %v4054 = vsub.s32 %v4051, %v4053
        %v4055 = vrot.slane %v4047, %v4054
        %v4057 = vunpack.c.l.s4 1983009808
        %v4058 = vunpack.c.0.s8 %v4057
        %v4059 = vlaneseq
        %v4060 = vshrl.u32 %v4059, 7
        %v4061 = vsub.s32 %v4058, %v4060
        %v4062 = vrot.slane %v4048, %v4061
        %v4063 = vcombine.low %v4039, %v4055
        %v4064 = vcombine.high %v4039, %v4055
        %v4066 = vunpack.c.l.s4 1934713408
        %v4067 = vunpack.c.0.s8 %v4066
        %v4068 = vlaneseq
        %v4069 = vshrl.u32 %v4068, 7
        %v4070 = vsub.s32 %v4067, %v4069
        %v4071 = vrot.slane %v4063, %v4070
        %v4073 = vunpack.c.l.s4 1934713408
        %v4074 = vunpack.c.0.s8 %v4073
        %v4075 = vlaneseq
        %v4076 = vshrl.u32 %v4075, 7
        %v4077 = vsub.s32 %v4074, %v4076
        %v4078 = vrot.slane %v4064, %v4077
        %v4079 = vcombine.low %v4046, %v4062
        %v4080 = vcombine.high %v4046, %v4062
        %v4082 = vunpack.c.l.s4 1934713408
        %v4083 = vunpack.c.0.s8 %v4082
        %v4084 = vlaneseq
        %v4085 = vshrl.u32 %v4084, 7
        %v4086 = vsub.s32 %v4083, %v4085
        %v4087 = vrot.slane %v4079, %v4086
        %v4089 = vunpack.c.l.s4 1934713408
        %v4090 = vunpack.c.0.s8 %v4089
        %v4091 = vlaneseq
        %v4092 = vshrl.u32 %v4091, 7
        %v4093 = vsub.s32 %v4090, %v4092
        %v4094 = vrot.slane %v4080, %v4093
        %v4095 = vcombine.high %v4071, 0.0
        %v4096 = vcombine.high %v4078, 0.0
        %v4097 = vcombine.high %v4087, 0.0
        %v4098 = vcombine.high %v4094, 0.0
        %v4099 = vcombine.low %v4003, %v4010
        %v4101 = vunpack.c.l.s4 1983009808
        %v4102 = vunpack.c.0.s8 %v4101
        %v4103 = vlaneseq
        %v4104 = vshrl.u32 %v4103, 7
        %v4105 = vsub.s32 %v4102, %v4104
        %v4106 = vrot.slane %v4099, %v4105
        %v4107 = vcombine.low %v4027, %v4028
        %v4109 = vunpack.c.l.s4 1983009808
        %v4110 = vunpack.c.0.s8 %v4109
        %v4111 = vlaneseq
        %v4112 = vshrl.u32 %v4111, 7
        %v4113 = vsub.s32 %v4110, %v4112
        %v4114 = vrot.slane %v4107, %v4113
        %v4115 = vcombine.low %v4019, %v4026
        %v4117 = vunpack.c.l.s4 1983009808
        %v4118 = vunpack.c.0.s8 %v4117
        %v4119 = vlaneseq
        %v4120 = vshrl.u32 %v4119, 7
        %v4121 = vsub.s32 %v4118, %v4120
        %v4122 = vrot.slane %v4115, %v4121
        %v4123 = vcombine.low %v4029, %v4030
        %v4125 = vunpack.c.l.s4 1983009808
        %v4126 = vunpack.c.0.s8 %v4125
        %v4127 = vlaneseq
        %v4128 = vshrl.u32 %v4127, 7
        %v4129 = vsub.s32 %v4126, %v4128
        %v4130 = vrot.slane %v4123, %v4129
        %v4131 = vcombine.low %v4106, %v4114
        %v4132 = vcombine.high %v4106, %v4114
        %v4134 = vunpack.c.l.s4 1934713408
        %v4135 = vunpack.c.0.s8 %v4134
        %v4136 = vlaneseq
        %v4137 = vshrl.u32 %v4136, 7
        %v4138 = vsub.s32 %v4135, %v4137
        %v4139 = vrot.slane %v4131, %v4138
        %v4141 = vunpack.c.l.s4 1934713408
        %v4142 = vunpack.c.0.s8 %v4141
        %v4143 = vlaneseq
        %v4144 = vshrl.u32 %v4143, 7
        %v4145 = vsub.s32 %v4142, %v4144
        %v4146 = vrot.slane %v4132, %v4145
        %v4147 = vcombine.low %v4122, %v4130
        %v4148 = vcombine.high %v4122, %v4130
        %v4150 = vunpack.c.l.s4 1934713408
        %v4151 = vunpack.c.0.s8 %v4150
        %v4152 = vlaneseq
        %v4153 = vshrl.u32 %v4152, 7
        %v4154 = vsub.s32 %v4151, %v4153
        %v4155 = vrot.slane %v4147, %v4154
        %v4157 = vunpack.c.l.s4 1934713408
        %v4158 = vunpack.c.0.s8 %v4157
        %v4159 = vlaneseq
        %v4160 = vshrl.u32 %v4159, 7
        %v4161 = vsub.s32 %v4158, %v4160
        %v4162 = vrot.slane %v4148, %v4161
        %v4163 = vcombine.low %v4139, %v4155
        %v4164 = vcombine.high %v4139, %v4155
        %v4165 = vcombine.low %v4146, %v4162
        %v4166 = vcombine.high %v4146, %v4162
        %v4167 = vcombine.low %v4071, %v4078
        %v4169 = vunpack.c.l.s4 1983009808
        %v4170 = vunpack.c.0.s8 %v4169
        %v4171 = vlaneseq
        %v4172 = vshrl.u32 %v4171, 7
        %v4173 = vsub.s32 %v4170, %v4172
        %v4174 = vrot.slane %v4167, %v4173
        %v4175 = vcombine.low %v4095, %v4096
        %v4177 = vunpack.c.l.s4 1983009808
        %v4178 = vunpack.c.0.s8 %v4177
        %v4179 = vlaneseq
        %v4180 = vshrl.u32 %v4179, 7
        %v4181 = vsub.s32 %v4178, %v4180
        %v4182 = vrot.slane %v4175, %v4181
        %v4183 = vcombine.low %v4087, %v4094
        %v4185 = vunpack.c.l.s4 1983009808
        %v4186 = vunpack.c.0.s8 %v4185
        %v4187 = vlaneseq
        %v4188 = vshrl.u32 %v4187, 7
        %v4189 = vsub.s32 %v4186, %v4188
        %v4190 = vrot.slane %v4183, %v4189
        %v4191 = vcombine.low %v4097, %v4098
        %v4193 = vunpack.c.l.s4 1983009808
        %v4194 = vunpack.c.0.s8 %v4193
        %v4195 = vlaneseq
        %v4196 = vshrl.u32 %v4195, 7
        %v4197 = vsub.s32 %v4194, %v4196
        %v4198 = vrot.slane %v4191, %v4197
        %v4199 = vcombine.low %v4174, %v4182
        %v4200 = vcombine.high %v4174, %v4182
        %v4202 = vunpack.c.l.s4 1934713408
        %v4203 = vunpack.c.0.s8 %v4202
        %v4204 = vlaneseq
        %v4205 = vshrl.u32 %v4204, 7
        %v4206 = vsub.s32 %v4203, %v4205
        %v4207 = vrot.slane %v4199, %v4206
        %v4209 = vunpack.c.l.s4 1934713408
        %v4210 = vunpack.c.0.s8 %v4209
        %v4211 = vlaneseq
        %v4212 = vshrl.u32 %v4211, 7
        %v4213 = vsub.s32 %v4210, %v4212
        %v4214 = vrot.slane %v4200, %v4213
        %v4215 = vcombine.low %v4190, %v4198
        %v4216 = vcombine.high %v4190, %v4198
        %v4218 = vunpack.c.l.s4 1934713408
        %v4219 = vunpack.c.0.s8 %v4218
        %v4220 = vlaneseq
        %v4221 = vshrl.u32 %v4220, 7
        %v4222 = vsub.s32 %v4219, %v4221
        %v4223 = vrot.slane %v4215, %v4222
        %v4225 = vunpack.c.l.s4 1934713408
        %v4226 = vunpack.c.0.s8 %v4225
        %v4227 = vlaneseq
        %v4228 = vshrl.u32 %v4227, 7
        %v4229 = vsub.s32 %v4226, %v4228
        %v4230 = vrot.slane %v4216, %v4229
        %v4231 = vcombine.low %v4207, %v4223
        %v4232 = vcombine.high %v4207, %v4223
        %v4233 = vcombine.low %v4214, %v4230
        %v4234 = vcombine.high %v4214, %v4230
        %4237 = vrot.lane.b32.xlu0 %v4164, 16
        %v4238 = vpop.permute.xlu0 %4237
        %4239 = vrot.lane.b32.xlu0 %v4232, 16
        %v4240 = vpop.permute.xlu0 %4239
        %4245 = vrot.lane.b32.xlu0 %v4165, 32
        %v4246 = vpop.permute.xlu0 %4245
        %4247 = vrot.lane.b32.xlu0 %v4233, 32
        %v4248 = vpop.permute.xlu0 %4247
        %4253 = vrot.lane.b32.xlu0 %v4166, 48
        %v4254 = vpop.permute.xlu0 %4253
        %4255 = vrot.lane.b32.xlu0 %v4234, 48
        %v4256 = vpop.permute.xlu0 %4255
        %v4259 = vsel %vm2418, %v4163, %v4238
        %v4260 = vsel %vm2418, %v4231, %v4240
        %vm4261 = vcmask 261120
        %v4262 = vsel %vm4261, %v4259, %v4246
        %v4263 = vsel %vm4261, %v4260, %v4248
        %vm4264 = vcmask 392192
        %v4265 = vsel %vm4264, %v4262, %v4254
        %v4266 = vsel %vm4264, %v4263, %v4256
        %v4267 = vpack.c.bf16 %v4266, %v4265
        %v4268 = vld [vmem:[%s8] sm:$0xf]
        %v4269 = vld [vmem:[%s8 + $0x4] sm:$0xf]
        %v4270 = vld [vmem:[%s8 + $0x8] sm:$0xf]
        %v4271 = vld [vmem:[%s8 + $0xc] sm:$0xf]
        %v4272 = vld [vmem:[%s8 + $0x10] sm:$0xf]
        %v4273 = vld [vmem:[%s8 + $0x14] sm:$0xf]
        %v4274 = vld [vmem:[%s8 + $0x18] sm:$0xf]
        %v4275 = vld [vmem:[%s8 + $0x1c] sm:$0xf]
        %v4276 = vld [vmem:[%s9] sm:$0x1]
        %v4278 = vlaneseq
        %v4279 = vshrl.u32 %v4278, 7
        %v4280 = vsub.s32 0, %v4279
        %v4281 = vrot.slane %v4276, %v4280
        %v4291 = vunpack.c.l.b16 %v4268
        %v4292 = vunpack.c.l.b16 %v4269
        %v4293 = vunpack.c.l.b16 %v4270
        %v4294 = vunpack.c.l.b16 %v4271
        %v4295 = vunpack.c.l.b16 %v4272
        %v4296 = vunpack.c.l.b16 %v4273
        %v4297 = vunpack.c.l.b16 %v4274
        %v4298 = vunpack.c.l.b16 %v4275
        %v4299 = vpack.c.b16 %v4292, %v4291
        %v4300 = vpack.c.b16 %v4294, %v4293
        %v4301 = vpack.c.b16 %v4296, %v4295
        %v4302 = vpack.c.b16 %v4298, %v4297
        %v4308 = vsel %vm616, %v4267, 0
        %4310 = vmatprep.subr.bf16.mxu0 0
        %4311 = vmatpush1.bf16.msra.mxu0 0
        %4312 = vmatprep.subr.bf16.mxu0 0
        %4313 = vmatpush1.bf16.msra.mxu0 0
        %4314 = vmatprep.subr.bf16.mxu0 0
        %4315 = vmatpush1.bf16.msra.mxu0 0
        %4316 = vmatprep.subr.bf16.mxu0 0
        %4317 = vmatpush1.bf16.msra.mxu0 0
        %4318 = vmatprep.subr.bf16.mxu0 0
        %4319 = vmatpush1.bf16.msra.mxu0 %v4302
        %4320 = vmatprep.subr.bf16.mxu0 0
        %4321 = vmatpush1.bf16.msra.mxu0 %v4301
        %4322 = vmatprep.subr.bf16.mxu0 0
        %4323 = vmatpush1.bf16.msra.mxu0 %v4300
        %4324 = vmatprep.subr.bf16.mxu0 0
        %4325 = vmatpush1.bf16.msra.mxu0 %v4299
        %4326 = vmatprep.subr.bf16.mxu0 0
        %4327 = vmatpush2.bf16.msra.mxu0 0
        %4328 = vmatprep.subr.bf16.mxu0 0
        %4329 = vmatpush2.bf16.msra.mxu0 0
        %4330 = vmatprep.subr.bf16.mxu0 0
        %4331 = vmatpush2.bf16.msra.mxu0 0
        %4332 = vmatprep.subr.bf16.mxu0 0
        %4333 = vmatpush2.bf16.msra.mxu0 0
        %4334 = vmatprep.subr.bf16.mxu0 0
        %4335 = vmatpush2.bf16.msra.mxu0 0
        %4336 = vmatprep.subr.bf16.mxu0 0
        %4337 = vmatpush2.bf16.msra.mxu0 0
        %4338 = vmatprep.subr.bf16.mxu0 0
        %4339 = vmatpush2.bf16.msra.mxu0 0
        %4340 = vmatprep.subr.bf16.mxu0 0
        %4341 = vmatpush2.bf16.msra.mxu0 0
        %4342 = vmatprep.mubr.bf16.mxu0 0
        %4343 = vmatmul.mubr.bf16.gmra.mxu0 %v4308
        %v4344 = vpop.f32.mrf.mxu0
        %v4345 = vadd.f32 %v4281, %v4344
        %v4346 = vpop.f32.mrf.mxu0
        %v4347 = vpop.f32.mrf.mxu0
        %v4348 = vadd.f32 %v4281, %v4347
        %v4349 = vpop.f32.mrf.mxu0
        %4350 = vdwg.mxu0
        %v4351 = vadd.f32 %v668, %v4345
        %v4352 = vadd.f32 %v669, %v4348
        %v4353 = vld [vmem:[%s10] sm:$0x1]
        %v4354 = vld [vmem:[%s11] sm:$0x1]
        %v4355 = vsel %vm616, %v4351, 0.0
        %4356 = vadd.xlane.f32.xlu0 %v4355
        %v4357 = vpop.xlane.xlu0 %4356
        %v4358 = vsel %vm616, %v4352, 0.0
        %4359 = vadd.xlane.f32.xlu0 %v4358
        %v4360 = vpop.xlane.xlu0 %4359
        %v4361 = vmul.f32 %v4357, %v678
        %v4362 = vmul.f32 %v4360, %v678
        %v4363 = vsub.f32 %v4351, %v4361
        %v4364 = vsub.f32 %v4352, %v4362
        %v4365 = vmul.f32 %v4363, %v4363
        %v4366 = vmul.f32 %v4364, %v4364
        %v4367 = vsel %vm616, %v4365, 0.0
        %4368 = vadd.xlane.f32.xlu0 %v4367
        %v4369 = vpop.xlane.xlu0 %4368
        %v4370 = vsel %vm616, %v4366, 0.0
        %4371 = vadd.xlane.f32.xlu0 %v4370
        %v4372 = vpop.xlane.xlu0 %4371
        %v4373 = vmul.f32 %v4369, %v678
        %v4374 = vmul.f32 %v4372, %v678
        %v4375 = vadd.f32 %v4373, 1e-06
        %v4376 = vadd.f32 %v4374, 1e-06
        %v4377 = vrsqrt.pop %v4375
        %v4378 = vrsqrt.pop %v4376
        %v4379 = vmul.f32 %v4363, %v4377
        %v4380 = vmul.f32 %v4364, %v4378
        %v4382 = vlaneseq
        %v4383 = vshrl.u32 %v4382, 7
        %v4384 = vsub.s32 0, %v4383
        %v4385 = vrot.slane %v4353, %v4384
        %v4387 = vmul.f32 %v4379, %v4385
        %v4388 = vmul.f32 %v4380, %v4385
        %v4390 = vlaneseq
        %v4391 = vshrl.u32 %v4390, 7
        %v4392 = vsub.s32 0, %v4391
        %v4393 = vrot.slane %v4354, %v4392
        %v4395 = vadd.f32 %v4387, %v4393
        %v4396 = vadd.f32 %v4388, %v4393
        %v4397 = vpack.c.bf16 %v4396, %v4395
        %v4398 = vld [vmem:[%s12] sm:$0xf]
        %v4399 = vld [vmem:[%s12 + $0x4] sm:$0xf]
        %v4400 = vld [vmem:[%s12 + $0x8] sm:$0xf]
        %v4401 = vld [vmem:[%s12 + $0xc] sm:$0xf]
        %v4402 = vld [vmem:[%s12 + $0x10] sm:$0xf]
        %v4403 = vld [vmem:[%s12 + $0x14] sm:$0xf]
        %v4404 = vld [vmem:[%s12 + $0x18] sm:$0xf]
        %v4405 = vld [vmem:[%s12 + $0x1c] sm:$0xf]
        %v4406 = vld [vmem:[%s13] sm:$0x1]
        %v4408 = vlaneseq
        %v4409 = vshrl.u32 %v4408, 7
        %v4410 = vsub.s32 0, %v4409
        %v4411 = vrot.slane %v4406, %v4410
        %v4421 = vunpack.c.l.b16 %v4398
        %v4422 = vunpack.c.l.b16 %v4399
        %v4423 = vunpack.c.l.b16 %v4400
        %v4424 = vunpack.c.l.b16 %v4401
        %v4425 = vunpack.c.l.b16 %v4402
        %v4426 = vunpack.c.l.b16 %v4403
        %v4427 = vunpack.c.l.b16 %v4404
        %v4428 = vunpack.c.l.b16 %v4405
        %v4429 = vpack.c.b16 %v4422, %v4421
        %v4430 = vpack.c.b16 %v4424, %v4423
        %v4431 = vpack.c.b16 %v4426, %v4425
        %v4432 = vpack.c.b16 %v4428, %v4427
        %v4438 = vsel %vm616, %v4397, 0
        %4440 = vmatprep.subr.bf16.mxu0 0
        %4441 = vmatpush1.bf16.msra.mxu0 0
        %4442 = vmatprep.subr.bf16.mxu0 0
        %4443 = vmatpush1.bf16.msra.mxu0 0
        %4444 = vmatprep.subr.bf16.mxu0 0
        %4445 = vmatpush1.bf16.msra.mxu0 0
        %4446 = vmatprep.subr.bf16.mxu0 0
        %4447 = vmatpush1.bf16.msra.mxu0 0
        %4448 = vmatprep.subr.bf16.mxu0 0
        %4449 = vmatpush1.bf16.msra.mxu0 %v4432
        %4450 = vmatprep.subr.bf16.mxu0 0
        %4451 = vmatpush1.bf16.msra.mxu0 %v4431
        %4452 = vmatprep.subr.bf16.mxu0 0
        %4453 = vmatpush1.bf16.msra.mxu0 %v4430
        %4454 = vmatprep.subr.bf16.mxu0 0
        %4455 = vmatpush1.bf16.msra.mxu0 %v4429
        %4456 = vmatprep.subr.bf16.mxu0 0
        %4457 = vmatpush2.bf16.msra.mxu0 0
        %4458 = vmatprep.subr.bf16.mxu0 0
        %4459 = vmatpush2.bf16.msra.mxu0 0
        %4460 = vmatprep.subr.bf16.mxu0 0
        %4461 = vmatpush2.bf16.msra.mxu0 0
        %4462 = vmatprep.subr.bf16.mxu0 0
        %4463 = vmatpush2.bf16.msra.mxu0 0
        %4464 = vmatprep.subr.bf16.mxu0 0
        %4465 = vmatpush2.bf16.msra.mxu0 0
        %4466 = vmatprep.subr.bf16.mxu0 0
        %4467 = vmatpush2.bf16.msra.mxu0 0
        %4468 = vmatprep.subr.bf16.mxu0 0
        %4469 = vmatpush2.bf16.msra.mxu0 0
        %4470 = vmatprep.subr.bf16.mxu0 0
        %4471 = vmatpush2.bf16.msra.mxu0 0
        %4472 = vmatprep.mubr.bf16.mxu0 0
        %4473 = vmatmul.mubr.bf16.gmra.mxu0 %v4438
        %v4474 = vpop.f32.mrf.mxu0
        %v4475 = vadd.f32 %v4411, %v4474
        %v4476 = vpop.f32.mrf.mxu0
        %v4477 = vpop.f32.mrf.mxu0
        %v4478 = vadd.f32 %v4411, %v4477
        %v4479 = vpop.f32.mrf.mxu0
        %4480 = vdwg.mxu0
        %v4481 = vmul.f32 %v4475, 1.702
        %v4482 = vmul.f32 %v4478, 1.702
        %v4483 = vxor.u32 %v4481, 2147483648
        %v4484 = vxor.u32 %v4482, 2147483648
        %v4485 = vmul.f32 %v4483, 1.442695
        %v4486 = vpow.pop %v4485
        %v4487 = vmul.f32 %v4484, 1.442695
        %v4488 = vpow.pop %v4487
        %v4489 = vadd.f32 %v4486, 1.0
        %v4490 = vadd.f32 %v4488, 1.0
        %v4491 = vrcp.pop %v4489
        %v4492 = vmul.f32 1.0, %v4491
        %v4493 = vrcp.pop %v4490
        %v4494 = vmul.f32 1.0, %v4493
        %v4495 = vmul.f32 %v4475, %v4492
        %v4496 = vmul.f32 %v4478, %v4494
        %v4497 = vpack.c.bf16 %v4496, %v4495
        %v4498 = vld [vmem:[%s14] sm:$0xf]
        %v4499 = vld [vmem:[%s14 + $0x4] sm:$0xf]
        %v4500 = vld [vmem:[%s14 + $0x8] sm:$0xf]
        %v4501 = vld [vmem:[%s14 + $0xc] sm:$0xf]
        %v4502 = vld [vmem:[%s14 + $0x10] sm:$0xf]
        %v4503 = vld [vmem:[%s14 + $0x14] sm:$0xf]
        %v4504 = vld [vmem:[%s14 + $0x18] sm:$0xf]
        %v4505 = vld [vmem:[%s14 + $0x1c] sm:$0xf]
        %v4506 = vld [vmem:[%s14 + $0x20] sm:$0xf]
        %v4507 = vld [vmem:[%s14 + $0x24] sm:$0xf]
        %v4508 = vld [vmem:[%s14 + $0x28] sm:$0xf]
        %v4509 = vld [vmem:[%s14 + $0x2c] sm:$0xf]
        %v4510 = vld [vmem:[%s14 + $0x30] sm:$0xf]
        %v4511 = vld [vmem:[%s14 + $0x34] sm:$0xf]
        %v4512 = vld [vmem:[%s14 + $0x38] sm:$0xf]
        %v4513 = vld [vmem:[%s14 + $0x3c] sm:$0xf]
        %v4514 = vld [vmem:[%s15] sm:$0x1]
        %v4516 = vlaneseq
        %v4517 = vshrl.u32 %v4516, 7
        %v4518 = vsub.s32 0, %v4517
        %v4519 = vrot.slane %v4514, %v4518
        %v4537 = vunpack.c.l.b16 %v4498
        %v4538 = vunpack.c.l.b16 %v4499
        %v4539 = vunpack.c.l.b16 %v4500
        %v4540 = vunpack.c.l.b16 %v4501
        %v4541 = vunpack.c.l.b16 %v4502
        %v4542 = vunpack.c.l.b16 %v4503
        %v4543 = vunpack.c.l.b16 %v4504
        %v4544 = vunpack.c.l.b16 %v4505
        %v4545 = vunpack.c.l.b16 %v4506
        %v4546 = vunpack.c.l.b16 %v4507
        %v4547 = vunpack.c.l.b16 %v4508
        %v4548 = vunpack.c.l.b16 %v4509
        %v4549 = vunpack.c.l.b16 %v4510
        %v4550 = vunpack.c.l.b16 %v4511
        %v4551 = vunpack.c.l.b16 %v4512
        %v4552 = vunpack.c.l.b16 %v4513
        %v4553 = vpack.c.b16 %v4538, %v4537
        %v4554 = vpack.c.b16 %v4540, %v4539
        %v4555 = vpack.c.b16 %v4542, %v4541
        %v4556 = vpack.c.b16 %v4544, %v4543
        %v4557 = vpack.c.b16 %v4546, %v4545
        %v4558 = vpack.c.b16 %v4548, %v4547
        %v4559 = vpack.c.b16 %v4550, %v4549
        %v4560 = vpack.c.b16 %v4552, %v4551
        %4569 = vmatprep.subr.bf16.mxu0 0
        %4570 = vmatpush1.bf16.msra.mxu0 %v4560
        %4571 = vmatprep.subr.bf16.mxu0 0
        %4572 = vmatpush1.bf16.msra.mxu0 %v4559
        %4573 = vmatprep.subr.bf16.mxu0 0
        %4574 = vmatpush1.bf16.msra.mxu0 %v4558
        %4575 = vmatprep.subr.bf16.mxu0 0
        %4576 = vmatpush1.bf16.msra.mxu0 %v4557
        %4577 = vmatprep.subr.bf16.mxu0 0
        %4578 = vmatpush1.bf16.msra.mxu0 %v4556
        %4579 = vmatprep.subr.bf16.mxu0 0
        %4580 = vmatpush1.bf16.msra.mxu0 %v4555
        %4581 = vmatprep.subr.bf16.mxu0 0
        %4582 = vmatpush1.bf16.msra.mxu0 %v4554
        %4583 = vmatprep.subr.bf16.mxu0 0
        %4584 = vmatpush1.bf16.msra.mxu0 %v4553
        %4585 = vmatprep.subr.bf16.mxu0 0
        %4586 = vmatpush2.bf16.msra.mxu0 0
        %4587 = vmatprep.subr.bf16.mxu0 0
        %4588 = vmatpush2.bf16.msra.mxu0 0
        %4589 = vmatprep.subr.bf16.mxu0 0
        %4590 = vmatpush2.bf16.msra.mxu0 0
        %4591 = vmatprep.subr.bf16.mxu0 0
        %4592 = vmatpush2.bf16.msra.mxu0 0
        %4593 = vmatprep.subr.bf16.mxu0 0
        %4594 = vmatpush2.bf16.msra.mxu0 0
        %4595 = vmatprep.subr.bf16.mxu0 0
        %4596 = vmatpush2.bf16.msra.mxu0 0
        %4597 = vmatprep.subr.bf16.mxu0 0
        %4598 = vmatpush2.bf16.msra.mxu0 0
        %4599 = vmatprep.subr.bf16.mxu0 0
        %4600 = vmatpush2.bf16.msra.mxu0 0
        %4601 = vmatprep.mubr.bf16.mxu0 0
        %4602 = vmatmul.mubr.bf16.gmra.mxu0 %v4497
        %v4603 = vpop.f32.mrf.mxu0
        %v4604 = vadd.f32 %v4519, %v4603
        %v4605 = vpop.f32.mrf.mxu0
        %v4606 = vpop.f32.mrf.mxu0
        %v4607 = vadd.f32 %v4519, %v4606
        %v4608 = vpop.f32.mrf.mxu0
        %4609 = vdwg.mxu0
        %v4610 = vadd.f32 %v4351, %v4604
        %v4611 = vadd.f32 %v4352, %v4607
        %s4612 = scalar_lea.vmem %s4, 1
        %v4613 = vld [vmem:[%s4612] sm:$0x1]
        %s4614 = scalar_lea.vmem %s5, 1
        %v4615 = vld [vmem:[%s4614] sm:$0x1]
        %v4616 = vsel %vm616, %v4610, 0.0
        %4617 = vadd.xlane.f32.xlu0 %v4616
        %v4618 = vpop.xlane.xlu0 %4617
        %v4619 = vsel %vm616, %v4611, 0.0
        %4620 = vadd.xlane.f32.xlu0 %v4619
        %v4621 = vpop.xlane.xlu0 %4620
        %v4622 = vmul.f32 %v4618, %v678
        %v4623 = vmul.f32 %v4621, %v678
        %v4624 = vsub.f32 %v4610, %v4622
        %v4625 = vsub.f32 %v4611, %v4623
        %v4626 = vmul.f32 %v4624, %v4624
        %v4627 = vmul.f32 %v4625, %v4625
        %v4628 = vsel %vm616, %v4626, 0.0
        %4629 = vadd.xlane.f32.xlu0 %v4628
        %v4630 = vpop.xlane.xlu0 %4629
        %v4631 = vsel %vm616, %v4627, 0.0
        %4632 = vadd.xlane.f32.xlu0 %v4631
        %v4633 = vpop.xlane.xlu0 %4632
        %v4634 = vmul.f32 %v4630, %v678
        %v4635 = vmul.f32 %v4633, %v678
        %v4636 = vadd.f32 %v4634, 1e-06
        %v4637 = vadd.f32 %v4635, 1e-06
        %v4638 = vrsqrt.pop %v4636
        %v4639 = vrsqrt.pop %v4637
        %v4640 = vmul.f32 %v4624, %v4638
        %v4641 = vmul.f32 %v4625, %v4639
        %v4643 = vlaneseq
        %v4644 = vshrl.u32 %v4643, 7
        %v4645 = vsub.s32 0, %v4644
        %v4646 = vrot.slane %v4613, %v4645
        %v4648 = vmul.f32 %v4640, %v4646
        %v4649 = vmul.f32 %v4641, %v4646
        %v4651 = vlaneseq
        %v4652 = vshrl.u32 %v4651, 7
        %v4653 = vsub.s32 0, %v4652
        %v4654 = vrot.slane %v4615, %v4653
        %v4656 = vadd.f32 %v4648, %v4654
        %v4657 = vadd.f32 %v4649, %v4654
        %v4658 = vpack.c.bf16 %v4657, %v4656
        %s4659 = scalar_lea.vmem %s6, 64
        %v4660 = vld [vmem:[%s4659] sm:$0xff]
        %v4661 = vld [vmem:[%s4659 + $0x8] sm:$0xff]
        %v4662 = vld [vmem:[%s4659 + $0x10] sm:$0xff]
        %v4663 = vld [vmem:[%s4659 + $0x18] sm:$0xff]
        %v4664 = vld [vmem:[%s4659 + $0x20] sm:$0xff]
        %v4665 = vld [vmem:[%s4659 + $0x28] sm:$0xff]
        %v4666 = vld [vmem:[%s4659 + $0x30] sm:$0xff]
        %v4667 = vld [vmem:[%s4659 + $0x38] sm:$0xff]
        %s4668 = scalar_lea.vmem %s7, 2
        %v4669 = vld [vmem:[%s4668] sm:$0x3]
        %v4671 = vlaneseq
        %v4672 = vshrl.u32 %v4671, 7
        %v4673 = vsub.s32 0, %v4672
        %v4674 = vrot.slane %v4669, %v4673
        %v4675 = vlaneseq
        %v4676 = vshrl.u32 %v4675, 7
        %v4677 = vsub.s32 1, %v4676
        %v4678 = vrot.slane %v4669, %v4677
        %v4689 = vunpack.c.l.b16 %v4660
        %v4690 = vunpack.c.h.b16 %v4660
        %v4691 = vunpack.c.l.b16 %v4661
        %v4692 = vunpack.c.h.b16 %v4661
        %v4693 = vunpack.c.l.b16 %v4662
        %v4694 = vunpack.c.h.b16 %v4662
        %v4695 = vunpack.c.l.b16 %v4663
        %v4696 = vunpack.c.h.b16 %v4663
        %v4697 = vunpack.c.l.b16 %v4664
        %v4698 = vunpack.c.h.b16 %v4664
        %v4699 = vunpack.c.l.b16 %v4665
        %v4700 = vunpack.c.h.b16 %v4665
        %v4701 = vunpack.c.l.b16 %v4666
        %v4702 = vunpack.c.h.b16 %v4666
        %v4703 = vunpack.c.l.b16 %v4667
        %v4704 = vunpack.c.h.b16 %v4667
        %v4705 = vpack.c.b16 %v4691, %v4689
        %v4706 = vpack.c.b16 %v4692, %v4690
        %v4707 = vpack.c.b16 %v4695, %v4693
        %v4708 = vpack.c.b16 %v4696, %v4694
        %v4709 = vpack.c.b16 %v4699, %v4697
        %v4710 = vpack.c.b16 %v4700, %v4698
        %v4711 = vpack.c.b16 %v4703, %v4701
        %v4712 = vpack.c.b16 %v4704, %v4702
        %v4722 = vsel %vm616, %v4658, 0
        %4724 = vmatprep.subr.bf16.mxu0 0
        %4725 = vmatpush1.bf16.msra.mxu0 0
        %4726 = vmatprep.subr.bf16.mxu0 0
        %4727 = vmatpush1.bf16.msra.mxu0 0
        %4728 = vmatprep.subr.bf16.mxu0 0
        %4729 = vmatpush1.bf16.msra.mxu0 0
        %4730 = vmatprep.subr.bf16.mxu0 0
        %4731 = vmatpush1.bf16.msra.mxu0 0
        %4732 = vmatprep.subr.bf16.mxu0 %v4712
        %4733 = vmatpush1.bf16.msra.mxu0 %v4711
        %4734 = vmatprep.subr.bf16.mxu0 %v4710
        %4735 = vmatpush1.bf16.msra.mxu0 %v4709
        %4736 = vmatprep.subr.bf16.mxu0 %v4708
        %4737 = vmatpush1.bf16.msra.mxu0 %v4707
        %4738 = vmatprep.subr.bf16.mxu0 %v4706
        %4739 = vmatpush1.bf16.msra.mxu0 %v4705
        %4740 = vmatprep.subr.bf16.mxu0 0
        %4741 = vmatpush2.bf16.msra.mxu0 0
        %4742 = vmatprep.subr.bf16.mxu0 0
        %4743 = vmatpush2.bf16.msra.mxu0 0
        %4744 = vmatprep.subr.bf16.mxu0 0
        %4745 = vmatpush2.bf16.msra.mxu0 0
        %4746 = vmatprep.subr.bf16.mxu0 0
        %4747 = vmatpush2.bf16.msra.mxu0 0
        %4748 = vmatprep.subr.bf16.mxu0 0
        %4749 = vmatpush2.bf16.msra.mxu0 0
        %4750 = vmatprep.subr.bf16.mxu0 0
        %4751 = vmatpush2.bf16.msra.mxu0 0
        %4752 = vmatprep.subr.bf16.mxu0 0
        %4753 = vmatpush2.bf16.msra.mxu0 0
        %4754 = vmatprep.subr.bf16.mxu0 0
        %4755 = vmatpush2.bf16.msra.mxu0 0
        %4756 = vmatprep.mubr.bf16.mxu0 0
        %4757 = vmatmul.mubr.bf16.gmra.mxu0 %v4722
        %v4758 = vpop.f32.mrf.mxu0
        %v4759 = vadd.f32 %v4674, %v4758
        %v4760 = vpop.f32.mrf.mxu0
        %v4761 = vadd.f32 %v4678, %v4760
        %v4762 = vpop.f32.mrf.mxu0
        %v4763 = vadd.f32 %v4674, %v4762
        %v4764 = vpop.f32.mrf.mxu0
        %v4765 = vadd.f32 %v4678, %v4764
        %4766 = vdwg.mxu0
        %4769 = vrot.lane.b32.xlu0 %v4759, 112
        %v4770 = vpop.permute.xlu0 %4769
        %4771 = vrot.lane.b32.xlu0 %v4763, 112
        %v4772 = vpop.permute.xlu0 %4771
        %4775 = vrot.lane.b32.xlu0 %v4759, 96
        %v4776 = vpop.permute.xlu0 %4775
        %4777 = vrot.lane.b32.xlu0 %v4763, 96
        %v4778 = vpop.permute.xlu0 %4777
        %4781 = vrot.lane.b32.xlu0 %v4759, 80
        %v4782 = vpop.permute.xlu0 %4781
        %4783 = vrot.lane.b32.xlu0 %v4763, 80
        %v4784 = vpop.permute.xlu0 %4783
        %v4787 = vcombine.low %v4759, %v4776
        %v4788 = vcombine.high %v4759, %v4776
        %v4790 = vunpack.c.l.s4 1983009808
        %v4791 = vunpack.c.0.s8 %v4790
        %v4792 = vlaneseq
        %v4793 = vshrl.u32 %v4792, 7
        %v4794 = vsub.s32 %v4791, %v4793
        %v4795 = vrot.slane %v4787, %v4794
        %v4797 = vunpack.c.l.s4 1983009808
        %v4798 = vunpack.c.0.s8 %v4797
        %v4799 = vlaneseq
        %v4800 = vshrl.u32 %v4799, 7
        %v4801 = vsub.s32 %v4798, %v4800
        %v4802 = vrot.slane %v4788, %v4801
        %v4803 = vcombine.low %v4770, %v4782
        %v4804 = vcombine.high %v4770, %v4782
        %v4806 = vunpack.c.l.s4 1983009808
        %v4807 = vunpack.c.0.s8 %v4806
        %v4808 = vlaneseq
        %v4809 = vshrl.u32 %v4808, 7
        %v4810 = vsub.s32 %v4807, %v4809
        %v4811 = vrot.slane %v4803, %v4810
        %v4813 = vunpack.c.l.s4 1983009808
        %v4814 = vunpack.c.0.s8 %v4813
        %v4815 = vlaneseq
        %v4816 = vshrl.u32 %v4815, 7
        %v4817 = vsub.s32 %v4814, %v4816
        %v4818 = vrot.slane %v4804, %v4817
        %v4819 = vcombine.low %v4795, %v4811
        %v4820 = vcombine.high %v4795, %v4811
        %v4822 = vunpack.c.l.s4 1934713408
        %v4823 = vunpack.c.0.s8 %v4822
        %v4824 = vlaneseq
        %v4825 = vshrl.u32 %v4824, 7
        %v4826 = vsub.s32 %v4823, %v4825
        %v4827 = vrot.slane %v4819, %v4826
        %v4829 = vunpack.c.l.s4 1934713408
        %v4830 = vunpack.c.0.s8 %v4829
        %v4831 = vlaneseq
        %v4832 = vshrl.u32 %v4831, 7
        %v4833 = vsub.s32 %v4830, %v4832
        %v4834 = vrot.slane %v4820, %v4833
        %v4835 = vcombine.low %v4802, %v4818
        %v4836 = vcombine.high %v4802, %v4818
        %v4838 = vunpack.c.l.s4 1934713408
        %v4839 = vunpack.c.0.s8 %v4838
        %v4840 = vlaneseq
        %v4841 = vshrl.u32 %v4840, 7
        %v4842 = vsub.s32 %v4839, %v4841
        %v4843 = vrot.slane %v4835, %v4842
        %v4845 = vunpack.c.l.s4 1934713408
        %v4846 = vunpack.c.0.s8 %v4845
        %v4847 = vlaneseq
        %v4848 = vshrl.u32 %v4847, 7
        %v4849 = vsub.s32 %v4846, %v4848
        %v4850 = vrot.slane %v4836, %v4849
        %v4851 = vcombine.high %v4827, 0.0
        %v4852 = vcombine.high %v4834, 0.0
        %v4853 = vcombine.high %v4843, 0.0
        %v4854 = vcombine.high %v4850, 0.0
        %v4855 = vcombine.low %v4763, %v4778
        %v4856 = vcombine.high %v4763, %v4778
        %v4858 = vunpack.c.l.s4 1983009808
        %v4859 = vunpack.c.0.s8 %v4858
        %v4860 = vlaneseq
        %v4861 = vshrl.u32 %v4860, 7
        %v4862 = vsub.s32 %v4859, %v4861
        %v4863 = vrot.slane %v4855, %v4862
        %v4865 = vunpack.c.l.s4 1983009808
        %v4866 = vunpack.c.0.s8 %v4865
        %v4867 = vlaneseq
        %v4868 = vshrl.u32 %v4867, 7
        %v4869 = vsub.s32 %v4866, %v4868
        %v4870 = vrot.slane %v4856, %v4869
        %v4871 = vcombine.low %v4772, %v4784
        %v4872 = vcombine.high %v4772, %v4784
        %v4874 = vunpack.c.l.s4 1983009808
        %v4875 = vunpack.c.0.s8 %v4874
        %v4876 = vlaneseq
        %v4877 = vshrl.u32 %v4876, 7
        %v4878 = vsub.s32 %v4875, %v4877
        %v4879 = vrot.slane %v4871, %v4878
        %v4881 = vunpack.c.l.s4 1983009808
        %v4882 = vunpack.c.0.s8 %v4881
        %v4883 = vlaneseq
        %v4884 = vshrl.u32 %v4883, 7
        %v4885 = vsub.s32 %v4882, %v4884
        %v4886 = vrot.slane %v4872, %v4885
        %v4887 = vcombine.low %v4863, %v4879
        %v4888 = vcombine.high %v4863, %v4879
        %v4890 = vunpack.c.l.s4 1934713408
        %v4891 = vunpack.c.0.s8 %v4890
        %v4892 = vlaneseq
        %v4893 = vshrl.u32 %v4892, 7
        %v4894 = vsub.s32 %v4891, %v4893
        %v4895 = vrot.slane %v4887, %v4894
        %v4897 = vunpack.c.l.s4 1934713408
        %v4898 = vunpack.c.0.s8 %v4897
        %v4899 = vlaneseq
        %v4900 = vshrl.u32 %v4899, 7
        %v4901 = vsub.s32 %v4898, %v4900
        %v4902 = vrot.slane %v4888, %v4901
        %v4903 = vcombine.low %v4870, %v4886
        %v4904 = vcombine.high %v4870, %v4886
        %v4906 = vunpack.c.l.s4 1934713408
        %v4907 = vunpack.c.0.s8 %v4906
        %v4908 = vlaneseq
        %v4909 = vshrl.u32 %v4908, 7
        %v4910 = vsub.s32 %v4907, %v4909
        %v4911 = vrot.slane %v4903, %v4910
        %v4913 = vunpack.c.l.s4 1934713408
        %v4914 = vunpack.c.0.s8 %v4913
        %v4915 = vlaneseq
        %v4916 = vshrl.u32 %v4915, 7
        %v4917 = vsub.s32 %v4914, %v4916
        %v4918 = vrot.slane %v4904, %v4917
        %v4919 = vcombine.high %v4895, 0.0
        %v4920 = vcombine.high %v4902, 0.0
        %v4921 = vcombine.high %v4911, 0.0
        %v4922 = vcombine.high %v4918, 0.0
        %v4923 = vpack.c.bf16 %v4827, %v4827
        %v4924 = vpack.c.bf16 %v4851, %v4851
        %v4925 = vpack.c.bf16 %v4834, %v4834
        %v4926 = vpack.c.bf16 %v4852, %v4852
        %v4927 = vpack.c.bf16 %v4843, %v4843
        %v4928 = vpack.c.bf16 %v4853, %v4853
        %v4929 = vpack.c.bf16 %v4850, %v4850
        %v4930 = vpack.c.bf16 %v4854, %v4854
        %v4931 = vpack.c.bf16 %v4895, %v4895
        %v4932 = vpack.c.bf16 %v4919, %v4919
        %v4933 = vpack.c.bf16 %v4902, %v4902
        %v4934 = vpack.c.bf16 %v4920, %v4920
        %v4935 = vpack.c.bf16 %v4911, %v4911
        %v4936 = vpack.c.bf16 %v4921, %v4921
        %v4937 = vpack.c.bf16 %v4918, %v4918
        %v4938 = vpack.c.bf16 %v4922, %v4922
        %4939 = vrot.lane.b32.xlu0 %v4759, 64
        %v4940 = vpop.permute.xlu0 %4939
        %4941 = vrot.lane.b32.xlu0 %v4763, 64
        %v4942 = vpop.permute.xlu0 %4941
        %4943 = vrot.lane.b32.xlu0 %v4770, 64
        %v4944 = vpop.permute.xlu0 %4943
        %4945 = vrot.lane.b32.xlu0 %v4772, 64
        %v4946 = vpop.permute.xlu0 %4945
        %4947 = vrot.lane.b32.xlu0 %v4776, 64
        %v4948 = vpop.permute.xlu0 %4947
        %4949 = vrot.lane.b32.xlu0 %v4778, 64
        %v4950 = vpop.permute.xlu0 %4949
        %4951 = vrot.lane.b32.xlu0 %v4782, 64
        %v4952 = vpop.permute.xlu0 %4951
        %4953 = vrot.lane.b32.xlu0 %v4784, 64
        %v4954 = vpop.permute.xlu0 %4953
        %v4963 = vcombine.low %v4940, %v4948
        %v4964 = vcombine.high %v4940, %v4948
        %v4966 = vunpack.c.l.s4 1983009808
        %v4967 = vunpack.c.0.s8 %v4966
        %v4968 = vlaneseq
        %v4969 = vshrl.u32 %v4968, 7
        %v4970 = vsub.s32 %v4967, %v4969
        %v4971 = vrot.slane %v4963, %v4970
        %v4973 = vunpack.c.l.s4 1983009808
        %v4974 = vunpack.c.0.s8 %v4973
        %v4975 = vlaneseq
        %v4976 = vshrl.u32 %v4975, 7
        %v4977 = vsub.s32 %v4974, %v4976
        %v4978 = vrot.slane %v4964, %v4977
        %v4979 = vcombine.low %v4944, %v4952
        %v4980 = vcombine.high %v4944, %v4952
        %v4982 = vunpack.c.l.s4 1983009808
        %v4983 = vunpack.c.0.s8 %v4982
        %v4984 = vlaneseq
        %v4985 = vshrl.u32 %v4984, 7
        %v4986 = vsub.s32 %v4983, %v4985
        %v4987 = vrot.slane %v4979, %v4986
        %v4989 = vunpack.c.l.s4 1983009808
        %v4990 = vunpack.c.0.s8 %v4989
        %v4991 = vlaneseq
        %v4992 = vshrl.u32 %v4991, 7
        %v4993 = vsub.s32 %v4990, %v4992
        %v4994 = vrot.slane %v4980, %v4993
        %v4995 = vcombine.low %v4971, %v4987
        %v4996 = vcombine.high %v4971, %v4987
        %v4998 = vunpack.c.l.s4 1934713408
        %v4999 = vunpack.c.0.s8 %v4998
        %v5000 = vlaneseq
        %v5001 = vshrl.u32 %v5000, 7
        %v5002 = vsub.s32 %v4999, %v5001
        %v5003 = vrot.slane %v4995, %v5002
        %v5005 = vunpack.c.l.s4 1934713408
        %v5006 = vunpack.c.0.s8 %v5005
        %v5007 = vlaneseq
        %v5008 = vshrl.u32 %v5007, 7
        %v5009 = vsub.s32 %v5006, %v5008
        %v5010 = vrot.slane %v4996, %v5009
        %v5011 = vcombine.low %v4978, %v4994
        %v5012 = vcombine.high %v4978, %v4994
        %v5014 = vunpack.c.l.s4 1934713408
        %v5015 = vunpack.c.0.s8 %v5014
        %v5016 = vlaneseq
        %v5017 = vshrl.u32 %v5016, 7
        %v5018 = vsub.s32 %v5015, %v5017
        %v5019 = vrot.slane %v5011, %v5018
        %v5021 = vunpack.c.l.s4 1934713408
        %v5022 = vunpack.c.0.s8 %v5021
        %v5023 = vlaneseq
        %v5024 = vshrl.u32 %v5023, 7
        %v5025 = vsub.s32 %v5022, %v5024
        %v5026 = vrot.slane %v5012, %v5025
        %v5027 = vcombine.high %v5003, 0.0
        %v5028 = vcombine.high %v5010, 0.0
        %v5029 = vcombine.high %v5019, 0.0
        %v5030 = vcombine.high %v5026, 0.0
        %v5031 = vcombine.low %v4942, %v4950
        %v5032 = vcombine.high %v4942, %v4950
        %v5034 = vunpack.c.l.s4 1983009808
        %v5035 = vunpack.c.0.s8 %v5034
        %v5036 = vlaneseq
        %v5037 = vshrl.u32 %v5036, 7
        %v5038 = vsub.s32 %v5035, %v5037
        %v5039 = vrot.slane %v5031, %v5038
        %v5041 = vunpack.c.l.s4 1983009808
        %v5042 = vunpack.c.0.s8 %v5041
        %v5043 = vlaneseq
        %v5044 = vshrl.u32 %v5043, 7
        %v5045 = vsub.s32 %v5042, %v5044
        %v5046 = vrot.slane %v5032, %v5045
        %v5047 = vcombine.low %v4946, %v4954
        %v5048 = vcombine.high %v4946, %v4954
        %v5050 = vunpack.c.l.s4 1983009808
        %v5051 = vunpack.c.0.s8 %v5050
        %v5052 = vlaneseq
        %v5053 = vshrl.u32 %v5052, 7
        %v5054 = vsub.s32 %v5051, %v5053
        %v5055 = vrot.slane %v5047, %v5054
        %v5057 = vunpack.c.l.s4 1983009808
        %v5058 = vunpack.c.0.s8 %v5057
        %v5059 = vlaneseq
        %v5060 = vshrl.u32 %v5059, 7
        %v5061 = vsub.s32 %v5058, %v5060
        %v5062 = vrot.slane %v5048, %v5061
        %v5063 = vcombine.low %v5039, %v5055
        %v5064 = vcombine.high %v5039, %v5055
        %v5066 = vunpack.c.l.s4 1934713408
        %v5067 = vunpack.c.0.s8 %v5066
        %v5068 = vlaneseq
        %v5069 = vshrl.u32 %v5068, 7
        %v5070 = vsub.s32 %v5067, %v5069
        %v5071 = vrot.slane %v5063, %v5070
        %v5073 = vunpack.c.l.s4 1934713408
        %v5074 = vunpack.c.0.s8 %v5073
        %v5075 = vlaneseq
        %v5076 = vshrl.u32 %v5075, 7
        %v5077 = vsub.s32 %v5074, %v5076
        %v5078 = vrot.slane %v5064, %v5077
        %v5079 = vcombine.low %v5046, %v5062
        %v5080 = vcombine.high %v5046, %v5062
        %v5082 = vunpack.c.l.s4 1934713408
        %v5083 = vunpack.c.0.s8 %v5082
        %v5084 = vlaneseq
        %v5085 = vshrl.u32 %v5084, 7
        %v5086 = vsub.s32 %v5083, %v5085
        %v5087 = vrot.slane %v5079, %v5086
        %v5089 = vunpack.c.l.s4 1934713408
        %v5090 = vunpack.c.0.s8 %v5089
        %v5091 = vlaneseq
        %v5092 = vshrl.u32 %v5091, 7
        %v5093 = vsub.s32 %v5090, %v5092
        %v5094 = vrot.slane %v5080, %v5093
        %v5095 = vcombine.high %v5071, 0.0
        %v5096 = vcombine.high %v5078, 0.0
        %v5097 = vcombine.high %v5087, 0.0
        %v5098 = vcombine.high %v5094, 0.0
        %v5099 = vpack.c.bf16 %v5003, %v5003
        %v5100 = vpack.c.bf16 %v5027, %v5027
        %v5101 = vpack.c.bf16 %v5010, %v5010
        %v5102 = vpack.c.bf16 %v5028, %v5028
        %v5103 = vpack.c.bf16 %v5019, %v5019
        %v5104 = vpack.c.bf16 %v5029, %v5029
        %v5105 = vpack.c.bf16 %v5026, %v5026
        %v5106 = vpack.c.bf16 %v5030, %v5030
        %v5107 = vpack.c.bf16 %v5071, %v5071
        %v5108 = vpack.c.bf16 %v5095, %v5095
        %v5109 = vpack.c.bf16 %v5078, %v5078
        %v5110 = vpack.c.bf16 %v5096, %v5096
        %v5111 = vpack.c.bf16 %v5087, %v5087
        %v5112 = vpack.c.bf16 %v5097, %v5097
        %v5113 = vpack.c.bf16 %v5094, %v5094
        %v5114 = vpack.c.bf16 %v5098, %v5098
        %5117 = vrot.lane.b32.xlu0 %v4761, 112
        %v5118 = vpop.permute.xlu0 %5117
        %5119 = vrot.lane.b32.xlu0 %v4765, 112
        %v5120 = vpop.permute.xlu0 %5119
        %5123 = vrot.lane.b32.xlu0 %v4761, 96
        %v5124 = vpop.permute.xlu0 %5123
        %5125 = vrot.lane.b32.xlu0 %v4765, 96
        %v5126 = vpop.permute.xlu0 %5125
        %5129 = vrot.lane.b32.xlu0 %v4761, 80
        %v5130 = vpop.permute.xlu0 %5129
        %5131 = vrot.lane.b32.xlu0 %v4765, 80
        %v5132 = vpop.permute.xlu0 %5131
        %v5135 = vcombine.low %v4761, %v5124
        %v5136 = vcombine.high %v4761, %v5124
        %v5138 = vunpack.c.l.s4 1983009808
        %v5139 = vunpack.c.0.s8 %v5138
        %v5140 = vlaneseq
        %v5141 = vshrl.u32 %v5140, 7
        %v5142 = vsub.s32 %v5139, %v5141
        %v5143 = vrot.slane %v5135, %v5142
        %v5145 = vunpack.c.l.s4 1983009808
        %v5146 = vunpack.c.0.s8 %v5145
        %v5147 = vlaneseq
        %v5148 = vshrl.u32 %v5147, 7
        %v5149 = vsub.s32 %v5146, %v5148
        %v5150 = vrot.slane %v5136, %v5149
        %v5151 = vcombine.low %v5118, %v5130
        %v5152 = vcombine.high %v5118, %v5130
        %v5154 = vunpack.c.l.s4 1983009808
        %v5155 = vunpack.c.0.s8 %v5154
        %v5156 = vlaneseq
        %v5157 = vshrl.u32 %v5156, 7
        %v5158 = vsub.s32 %v5155, %v5157
        %v5159 = vrot.slane %v5151, %v5158
        %v5161 = vunpack.c.l.s4 1983009808
        %v5162 = vunpack.c.0.s8 %v5161
        %v5163 = vlaneseq
        %v5164 = vshrl.u32 %v5163, 7
        %v5165 = vsub.s32 %v5162, %v5164
        %v5166 = vrot.slane %v5152, %v5165
        %v5167 = vcombine.low %v5143, %v5159
        %v5168 = vcombine.high %v5143, %v5159
        %v5170 = vunpack.c.l.s4 1934713408
        %v5171 = vunpack.c.0.s8 %v5170
        %v5172 = vlaneseq
        %v5173 = vshrl.u32 %v5172, 7
        %v5174 = vsub.s32 %v5171, %v5173
        %v5175 = vrot.slane %v5167, %v5174
        %v5177 = vunpack.c.l.s4 1934713408
        %v5178 = vunpack.c.0.s8 %v5177
        %v5179 = vlaneseq
        %v5180 = vshrl.u32 %v5179, 7
        %v5181 = vsub.s32 %v5178, %v5180
        %v5182 = vrot.slane %v5168, %v5181
        %v5183 = vcombine.low %v5150, %v5166
        %v5184 = vcombine.high %v5150, %v5166
        %v5186 = vunpack.c.l.s4 1934713408
        %v5187 = vunpack.c.0.s8 %v5186
        %v5188 = vlaneseq
        %v5189 = vshrl.u32 %v5188, 7
        %v5190 = vsub.s32 %v5187, %v5189
        %v5191 = vrot.slane %v5183, %v5190
        %v5193 = vunpack.c.l.s4 1934713408
        %v5194 = vunpack.c.0.s8 %v5193
        %v5195 = vlaneseq
        %v5196 = vshrl.u32 %v5195, 7
        %v5197 = vsub.s32 %v5194, %v5196
        %v5198 = vrot.slane %v5184, %v5197
        %v5199 = vcombine.high %v5175, 0.0
        %v5200 = vcombine.high %v5182, 0.0
        %v5201 = vcombine.high %v5191, 0.0
        %v5202 = vcombine.high %v5198, 0.0
        %v5203 = vcombine.low %v4765, %v5126
        %v5204 = vcombine.high %v4765, %v5126
        %v5206 = vunpack.c.l.s4 1983009808
        %v5207 = vunpack.c.0.s8 %v5206
        %v5208 = vlaneseq
        %v5209 = vshrl.u32 %v5208, 7
        %v5210 = vsub.s32 %v5207, %v5209
        %v5211 = vrot.slane %v5203, %v5210
        %v5213 = vunpack.c.l.s4 1983009808
        %v5214 = vunpack.c.0.s8 %v5213
        %v5215 = vlaneseq
        %v5216 = vshrl.u32 %v5215, 7
        %v5217 = vsub.s32 %v5214, %v5216
        %v5218 = vrot.slane %v5204, %v5217
        %v5219 = vcombine.low %v5120, %v5132
        %v5220 = vcombine.high %v5120, %v5132
        %v5222 = vunpack.c.l.s4 1983009808
        %v5223 = vunpack.c.0.s8 %v5222
        %v5224 = vlaneseq
        %v5225 = vshrl.u32 %v5224, 7
        %v5226 = vsub.s32 %v5223, %v5225
        %v5227 = vrot.slane %v5219, %v5226
        %v5229 = vunpack.c.l.s4 1983009808
        %v5230 = vunpack.c.0.s8 %v5229
        %v5231 = vlaneseq
        %v5232 = vshrl.u32 %v5231, 7
        %v5233 = vsub.s32 %v5230, %v5232
        %v5234 = vrot.slane %v5220, %v5233
        %v5235 = vcombine.low %v5211, %v5227
        %v5236 = vcombine.high %v5211, %v5227
        %v5238 = vunpack.c.l.s4 1934713408
        %v5239 = vunpack.c.0.s8 %v5238
        %v5240 = vlaneseq
        %v5241 = vshrl.u32 %v5240, 7
        %v5242 = vsub.s32 %v5239, %v5241
        %v5243 = vrot.slane %v5235, %v5242
        %v5245 = vunpack.c.l.s4 1934713408
        %v5246 = vunpack.c.0.s8 %v5245
        %v5247 = vlaneseq
        %v5248 = vshrl.u32 %v5247, 7
        %v5249 = vsub.s32 %v5246, %v5248
        %v5250 = vrot.slane %v5236, %v5249
        %v5251 = vcombine.low %v5218, %v5234
        %v5252 = vcombine.high %v5218, %v5234
        %v5254 = vunpack.c.l.s4 1934713408
        %v5255 = vunpack.c.0.s8 %v5254
        %v5256 = vlaneseq
        %v5257 = vshrl.u32 %v5256, 7
        %v5258 = vsub.s32 %v5255, %v5257
        %v5259 = vrot.slane %v5251, %v5258
        %v5261 = vunpack.c.l.s4 1934713408
        %v5262 = vunpack.c.0.s8 %v5261
        %v5263 = vlaneseq
        %v5264 = vshrl.u32 %v5263, 7
        %v5265 = vsub.s32 %v5262, %v5264
        %v5266 = vrot.slane %v5252, %v5265
        %v5267 = vcombine.high %v5243, 0.0
        %v5268 = vcombine.high %v5250, 0.0
        %v5269 = vcombine.high %v5259, 0.0
        %v5270 = vcombine.high %v5266, 0.0
        %v5271 = vpack.c.bf16 %v5175, %v5175
        %v5272 = vpack.c.bf16 %v5199, %v5199
        %v5273 = vpack.c.bf16 %v5182, %v5182
        %v5274 = vpack.c.bf16 %v5200, %v5200
        %v5275 = vpack.c.bf16 %v5191, %v5191
        %v5276 = vpack.c.bf16 %v5201, %v5201
        %v5277 = vpack.c.bf16 %v5198, %v5198
        %v5278 = vpack.c.bf16 %v5202, %v5202
        %v5279 = vpack.c.bf16 %v5243, %v5243
        %v5280 = vpack.c.bf16 %v5267, %v5267
        %v5281 = vpack.c.bf16 %v5250, %v5250
        %v5282 = vpack.c.bf16 %v5268, %v5268
        %v5283 = vpack.c.bf16 %v5259, %v5259
        %v5284 = vpack.c.bf16 %v5269, %v5269
        %v5285 = vpack.c.bf16 %v5266, %v5266
        %v5286 = vpack.c.bf16 %v5270, %v5270
        %v5287 = vcombine.low %v4923, %v4927
        %v5289 = vunpack.c.l.s4 1983009808
        %v5290 = vunpack.c.0.s8 %v5289
        %v5291 = vlaneseq
        %v5292 = vshrl.u32 %v5291, 7
        %v5293 = vsub.s32 %v5290, %v5292
        %v5294 = vrot.slane %v5287, %v5293
        %v5295 = vcombine.low %v4925, %v4929
        %v5297 = vunpack.c.l.s4 1983009808
        %v5298 = vunpack.c.0.s8 %v5297
        %v5299 = vlaneseq
        %v5300 = vshrl.u32 %v5299, 7
        %v5301 = vsub.s32 %v5298, %v5300
        %v5302 = vrot.slane %v5295, %v5301
        %v5303 = vcombine.low %v4931, %v4935
        %v5305 = vunpack.c.l.s4 1983009808
        %v5306 = vunpack.c.0.s8 %v5305
        %v5307 = vlaneseq
        %v5308 = vshrl.u32 %v5307, 7
        %v5309 = vsub.s32 %v5306, %v5308
        %v5310 = vrot.slane %v5303, %v5309
        %v5311 = vcombine.low %v4933, %v4937
        %v5313 = vunpack.c.l.s4 1983009808
        %v5314 = vunpack.c.0.s8 %v5313
        %v5315 = vlaneseq
        %v5316 = vshrl.u32 %v5315, 7
        %v5317 = vsub.s32 %v5314, %v5316
        %v5318 = vrot.slane %v5311, %v5317
        %v5319 = vcombine.low %v5294, %v5302
        %v5321 = vunpack.c.l.s4 1934713408
        %v5322 = vunpack.c.0.s8 %v5321
        %v5323 = vlaneseq
        %v5324 = vshrl.u32 %v5323, 7
        %v5325 = vsub.s32 %v5322, %v5324
        %v5326 = vrot.slane %v5319, %v5325
        %v5327 = vcombine.low %v5310, %v5318
        %v5329 = vunpack.c.l.s4 1934713408
        %v5330 = vunpack.c.0.s8 %v5329
        %v5331 = vlaneseq
        %v5332 = vshrl.u32 %v5331, 7
        %v5333 = vsub.s32 %v5330, %v5332
        %v5334 = vrot.slane %v5327, %v5333
        %v5335 = vcombine.low %v5326, %v5334
        %v5336 = vcombine.high %v5326, %v5334
        %v5337 = vcombine.low %v4924, %v4928
        %v5339 = vunpack.c.l.s4 1983009808
        %v5340 = vunpack.c.0.s8 %v5339
        %v5341 = vlaneseq
        %v5342 = vshrl.u32 %v5341, 7
        %v5343 = vsub.s32 %v5340, %v5342
        %v5344 = vrot.slane %v5337, %v5343
        %v5345 = vcombine.low %v4926, %v4930
        %v5347 = vunpack.c.l.s4 1983009808
        %v5348 = vunpack.c.0.s8 %v5347
        %v5349 = vlaneseq
        %v5350 = vshrl.u32 %v5349, 7
        %v5351 = vsub.s32 %v5348, %v5350
        %v5352 = vrot.slane %v5345, %v5351
        %v5353 = vcombine.low %v4932, %v4936
        %v5355 = vunpack.c.l.s4 1983009808
        %v5356 = vunpack.c.0.s8 %v5355
        %v5357 = vlaneseq
        %v5358 = vshrl.u32 %v5357, 7
        %v5359 = vsub.s32 %v5356, %v5358
        %v5360 = vrot.slane %v5353, %v5359
        %v5361 = vcombine.low %v4934, %v4938
        %v5363 = vunpack.c.l.s4 1983009808
        %v5364 = vunpack.c.0.s8 %v5363
        %v5365 = vlaneseq
        %v5366 = vshrl.u32 %v5365, 7
        %v5367 = vsub.s32 %v5364, %v5366
        %v5368 = vrot.slane %v5361, %v5367
        %v5369 = vcombine.low %v5344, %v5352
        %v5371 = vunpack.c.l.s4 1934713408
        %v5372 = vunpack.c.0.s8 %v5371
        %v5373 = vlaneseq
        %v5374 = vshrl.u32 %v5373, 7
        %v5375 = vsub.s32 %v5372, %v5374
        %v5376 = vrot.slane %v5369, %v5375
        %v5377 = vcombine.low %v5360, %v5368
        %v5379 = vunpack.c.l.s4 1934713408
        %v5380 = vunpack.c.0.s8 %v5379
        %v5381 = vlaneseq
        %v5382 = vshrl.u32 %v5381, 7
        %v5383 = vsub.s32 %v5380, %v5382
        %v5384 = vrot.slane %v5377, %v5383
        %v5385 = vcombine.low %v5376, %v5384
        %v5386 = vcombine.high %v5376, %v5384
        %v5389 = vpack.i.b16 %v5385, %v5335
        %v5390 = vshrl.u32 %v5335, 16
        %v5391 = vshrl.u32 %v5385, 16
        %v5392 = vpack.i.b16 %v5391, %v5390
        %v5395 = vpack.i.b16 %v5386, %v5336
        %v5396 = vshrl.u32 %v5336, 16
        %v5397 = vshrl.u32 %v5386, 16
        %v5398 = vpack.i.b16 %v5397, %v5396
        %5399 = vxpose.xlu0.c.b16.start [1/8] %v5099, 128
        %5400 = vxpose.xlu0.c.b16.cont [2/8] 0, 128
        %5401 = vxpose.xlu0.c.b16.cont [3/8] 0, 128
        %5402 = vxpose.xlu0.c.b16.cont [4/8] 0, 128
        %5403 = vxpose.xlu0.c.b16.cont [5/8] 0, 128
        %5404 = vxpose.xlu0.c.b16.cont [6/8] 0, 128
        %5405 = vxpose.xlu0.c.b16.cont [7/8] 0, 128
        %5406 = vxpose.xlu0.c.b16.end [8/8] 0, 128
        %v5407 = vpop.trf.xlu0
        %v5408 = vpop.trf.xlu0
        %v5409 = vpop.trf.xlu0
        %v5410 = vpop.trf.xlu0
        %v5411 = vpop.trf.xlu0
        %v5412 = vpop.trf.xlu0
        %v5413 = vpop.trf.xlu0
        %v5414 = vpop.trf.xlu0
        %5415 = vxpose.xlu0.c.b16.start [1/8] %v5100, 128
        %5416 = vxpose.xlu0.c.b16.cont [2/8] 0, 128
        %5417 = vxpose.xlu0.c.b16.cont [3/8] 0, 128
        %5418 = vxpose.xlu0.c.b16.cont [4/8] 0, 128
        %5419 = vxpose.xlu0.c.b16.cont [5/8] 0, 128
        %5420 = vxpose.xlu0.c.b16.cont [6/8] 0, 128
        %5421 = vxpose.xlu0.c.b16.cont [7/8] 0, 128
        %5422 = vxpose.xlu0.c.b16.end [8/8] 0, 128
        %v5423 = vpop.trf.xlu0
        %v5424 = vpop.trf.xlu0
        %v5425 = vpop.trf.xlu0
        %v5426 = vpop.trf.xlu0
        %v5427 = vpop.trf.xlu0
        %v5428 = vpop.trf.xlu0
        %v5429 = vpop.trf.xlu0
        %v5430 = vpop.trf.xlu0
        %5431 = vxpose.xlu0.c.b16.start [1/8] %v5101, 128
        %5432 = vxpose.xlu0.c.b16.cont [2/8] 0, 128
        %5433 = vxpose.xlu0.c.b16.cont [3/8] 0, 128
        %5434 = vxpose.xlu0.c.b16.cont [4/8] 0, 128
        %5435 = vxpose.xlu0.c.b16.cont [5/8] 0, 128
        %5436 = vxpose.xlu0.c.b16.cont [6/8] 0, 128
        %5437 = vxpose.xlu0.c.b16.cont [7/8] 0, 128
        %5438 = vxpose.xlu0.c.b16.end [8/8] 0, 128
        %v5439 = vpop.trf.xlu0
        %v5440 = vpop.trf.xlu0
        %v5441 = vpop.trf.xlu0
        %v5442 = vpop.trf.xlu0
        %v5443 = vpop.trf.xlu0
        %v5444 = vpop.trf.xlu0
        %v5445 = vpop.trf.xlu0
        %v5446 = vpop.trf.xlu0
        %5447 = vxpose.xlu0.c.b16.start [1/8] %v5102, 128
        %5448 = vxpose.xlu0.c.b16.cont [2/8] 0, 128
        %5449 = vxpose.xlu0.c.b16.cont [3/8] 0, 128
        %5450 = vxpose.xlu0.c.b16.cont [4/8] 0, 128
        %5451 = vxpose.xlu0.c.b16.cont [5/8] 0, 128
        %5452 = vxpose.xlu0.c.b16.cont [6/8] 0, 128
        %5453 = vxpose.xlu0.c.b16.cont [7/8] 0, 128
        %5454 = vxpose.xlu0.c.b16.end [8/8] 0, 128
        %v5455 = vpop.trf.xlu0
        %v5456 = vpop.trf.xlu0
        %v5457 = vpop.trf.xlu0
        %v5458 = vpop.trf.xlu0
        %v5459 = vpop.trf.xlu0
        %v5460 = vpop.trf.xlu0
        %v5461 = vpop.trf.xlu0
        %v5462 = vpop.trf.xlu0
        %5463 = vxpose.xlu0.c.b16.start [1/8] %v5103, 128
        %5464 = vxpose.xlu0.c.b16.cont [2/8] 0, 128
        %5465 = vxpose.xlu0.c.b16.cont [3/8] 0, 128
        %5466 = vxpose.xlu0.c.b16.cont [4/8] 0, 128
        %5467 = vxpose.xlu0.c.b16.cont [5/8] 0, 128
        %5468 = vxpose.xlu0.c.b16.cont [6/8] 0, 128
        %5469 = vxpose.xlu0.c.b16.cont [7/8] 0, 128
        %5470 = vxpose.xlu0.c.b16.end [8/8] 0, 128
        %v5471 = vpop.trf.xlu0
        %v5472 = vpop.trf.xlu0
        %v5473 = vpop.trf.xlu0
        %v5474 = vpop.trf.xlu0
        %v5475 = vpop.trf.xlu0
        %v5476 = vpop.trf.xlu0
        %v5477 = vpop.trf.xlu0
        %v5478 = vpop.trf.xlu0
        %5479 = vxpose.xlu0.c.b16.start [1/8] %v5104, 128
        %5480 = vxpose.xlu0.c.b16.cont [2/8] 0, 128
        %5481 = vxpose.xlu0.c.b16.cont [3/8] 0, 128
        %5482 = vxpose.xlu0.c.b16.cont [4/8] 0, 128
        %5483 = vxpose.xlu0.c.b16.cont [5/8] 0, 128
        %5484 = vxpose.xlu0.c.b16.cont [6/8] 0, 128
        %5485 = vxpose.xlu0.c.b16.cont [7/8] 0, 128
        %5486 = vxpose.xlu0.c.b16.end [8/8] 0, 128
        %v5487 = vpop.trf.xlu0
        %v5488 = vpop.trf.xlu0
        %v5489 = vpop.trf.xlu0
        %v5490 = vpop.trf.xlu0
        %v5491 = vpop.trf.xlu0
        %v5492 = vpop.trf.xlu0
        %v5493 = vpop.trf.xlu0
        %v5494 = vpop.trf.xlu0
        %5495 = vxpose.xlu0.c.b16.start [1/8] %v5105, 128
        %5496 = vxpose.xlu0.c.b16.cont [2/8] 0, 128
        %5497 = vxpose.xlu0.c.b16.cont [3/8] 0, 128
        %5498 = vxpose.xlu0.c.b16.cont [4/8] 0, 128
        %5499 = vxpose.xlu0.c.b16.cont [5/8] 0, 128
        %5500 = vxpose.xlu0.c.b16.cont [6/8] 0, 128
        %5501 = vxpose.xlu0.c.b16.cont [7/8] 0, 128
        %5502 = vxpose.xlu0.c.b16.end [8/8] 0, 128
        %v5503 = vpop.trf.xlu0
        %v5504 = vpop.trf.xlu0
        %v5505 = vpop.trf.xlu0
        %v5506 = vpop.trf.xlu0
        %v5507 = vpop.trf.xlu0
        %v5508 = vpop.trf.xlu0
        %v5509 = vpop.trf.xlu0
        %v5510 = vpop.trf.xlu0
        %5511 = vxpose.xlu0.c.b16.start [1/8] %v5106, 128
        %5512 = vxpose.xlu0.c.b16.cont [2/8] 0, 128
        %5513 = vxpose.xlu0.c.b16.cont [3/8] 0, 128
        %5514 = vxpose.xlu0.c.b16.cont [4/8] 0, 128
        %5515 = vxpose.xlu0.c.b16.cont [5/8] 0, 128
        %5516 = vxpose.xlu0.c.b16.cont [6/8] 0, 128
        %5517 = vxpose.xlu0.c.b16.cont [7/8] 0, 128
        %5518 = vxpose.xlu0.c.b16.end [8/8] 0, 128
        %v5519 = vpop.trf.xlu0
        %v5520 = vpop.trf.xlu0
        %v5521 = vpop.trf.xlu0
        %v5522 = vpop.trf.xlu0
        %v5523 = vpop.trf.xlu0
        %v5524 = vpop.trf.xlu0
        %v5525 = vpop.trf.xlu0
        %v5526 = vpop.trf.xlu0
        %5527 = vxpose.xlu0.c.b16.start [1/8] %v5107, 128
        %5528 = vxpose.xlu0.c.b16.cont [2/8] 0, 128
        %5529 = vxpose.xlu0.c.b16.cont [3/8] 0, 128
        %5530 = vxpose.xlu0.c.b16.cont [4/8] 0, 128
        %5531 = vxpose.xlu0.c.b16.cont [5/8] 0, 128
        %5532 = vxpose.xlu0.c.b16.cont [6/8] 0, 128
        %5533 = vxpose.xlu0.c.b16.cont [7/8] 0, 128
        %5534 = vxpose.xlu0.c.b16.end [8/8] 0, 128
        %v5535 = vpop.trf.xlu0
        %v5536 = vpop.trf.xlu0
        %v5537 = vpop.trf.xlu0
        %v5538 = vpop.trf.xlu0
        %v5539 = vpop.trf.xlu0
        %v5540 = vpop.trf.xlu0
        %v5541 = vpop.trf.xlu0
        %v5542 = vpop.trf.xlu0
        %5543 = vxpose.xlu0.c.b16.start [1/8] %v5108, 128
        %5544 = vxpose.xlu0.c.b16.cont [2/8] 0, 128
        %5545 = vxpose.xlu0.c.b16.cont [3/8] 0, 128
        %5546 = vxpose.xlu0.c.b16.cont [4/8] 0, 128
        %5547 = vxpose.xlu0.c.b16.cont [5/8] 0, 128
        %5548 = vxpose.xlu0.c.b16.cont [6/8] 0, 128
        %5549 = vxpose.xlu0.c.b16.cont [7/8] 0, 128
        %5550 = vxpose.xlu0.c.b16.end [8/8] 0, 128
        %v5551 = vpop.trf.xlu0
        %v5552 = vpop.trf.xlu0
        %v5553 = vpop.trf.xlu0
        %v5554 = vpop.trf.xlu0
        %v5555 = vpop.trf.xlu0
        %v5556 = vpop.trf.xlu0
        %v5557 = vpop.trf.xlu0
        %v5558 = vpop.trf.xlu0
        %5559 = vxpose.xlu0.c.b16.start [1/8] %v5109, 128
        %5560 = vxpose.xlu0.c.b16.cont [2/8] 0, 128
        %5561 = vxpose.xlu0.c.b16.cont [3/8] 0, 128
        %5562 = vxpose.xlu0.c.b16.cont [4/8] 0, 128
        %5563 = vxpose.xlu0.c.b16.cont [5/8] 0, 128
        %5564 = vxpose.xlu0.c.b16.cont [6/8] 0, 128
        %5565 = vxpose.xlu0.c.b16.cont [7/8] 0, 128
        %5566 = vxpose.xlu0.c.b16.end [8/8] 0, 128
        %v5567 = vpop.trf.xlu0
        %v5568 = vpop.trf.xlu0
        %v5569 = vpop.trf.xlu0
        %v5570 = vpop.trf.xlu0
        %v5571 = vpop.trf.xlu0
        %v5572 = vpop.trf.xlu0
        %v5573 = vpop.trf.xlu0
        %v5574 = vpop.trf.xlu0
        %5575 = vxpose.xlu0.c.b16.start [1/8] %v5110, 128
        %5576 = vxpose.xlu0.c.b16.cont [2/8] 0, 128
        %5577 = vxpose.xlu0.c.b16.cont [3/8] 0, 128
        %5578 = vxpose.xlu0.c.b16.cont [4/8] 0, 128
        %5579 = vxpose.xlu0.c.b16.cont [5/8] 0, 128
        %5580 = vxpose.xlu0.c.b16.cont [6/8] 0, 128
        %5581 = vxpose.xlu0.c.b16.cont [7/8] 0, 128
        %5582 = vxpose.xlu0.c.b16.end [8/8] 0, 128
        %v5583 = vpop.trf.xlu0
        %v5584 = vpop.trf.xlu0
        %v5585 = vpop.trf.xlu0
        %v5586 = vpop.trf.xlu0
        %v5587 = vpop.trf.xlu0
        %v5588 = vpop.trf.xlu0
        %v5589 = vpop.trf.xlu0
        %v5590 = vpop.trf.xlu0
        %5591 = vxpose.xlu0.c.b16.start [1/8] %v5111, 128
        %5592 = vxpose.xlu0.c.b16.cont [2/8] 0, 128
        %5593 = vxpose.xlu0.c.b16.cont [3/8] 0, 128
        %5594 = vxpose.xlu0.c.b16.cont [4/8] 0, 128
        %5595 = vxpose.xlu0.c.b16.cont [5/8] 0, 128
        %5596 = vxpose.xlu0.c.b16.cont [6/8] 0, 128
        %5597 = vxpose.xlu0.c.b16.cont [7/8] 0, 128
        %5598 = vxpose.xlu0.c.b16.end [8/8] 0, 128
        %v5599 = vpop.trf.xlu0
        %v5600 = vpop.trf.xlu0
        %v5601 = vpop.trf.xlu0
        %v5602 = vpop.trf.xlu0
        %v5603 = vpop.trf.xlu0
        %v5604 = vpop.trf.xlu0
        %v5605 = vpop.trf.xlu0
        %v5606 = vpop.trf.xlu0
        %5607 = vxpose.xlu0.c.b16.start [1/8] %v5112, 128
        %5608 = vxpose.xlu0.c.b16.cont [2/8] 0, 128
        %5609 = vxpose.xlu0.c.b16.cont [3/8] 0, 128
        %5610 = vxpose.xlu0.c.b16.cont [4/8] 0, 128
        %5611 = vxpose.xlu0.c.b16.cont [5/8] 0, 128
        %5612 = vxpose.xlu0.c.b16.cont [6/8] 0, 128
        %5613 = vxpose.xlu0.c.b16.cont [7/8] 0, 128
        %5614 = vxpose.xlu0.c.b16.end [8/8] 0, 128
        %v5615 = vpop.trf.xlu0
        %v5616 = vpop.trf.xlu0
        %v5617 = vpop.trf.xlu0
        %v5618 = vpop.trf.xlu0
        %v5619 = vpop.trf.xlu0
        %v5620 = vpop.trf.xlu0
        %v5621 = vpop.trf.xlu0
        %v5622 = vpop.trf.xlu0
        %5623 = vxpose.xlu0.c.b16.start [1/8] %v5113, 128
        %5624 = vxpose.xlu0.c.b16.cont [2/8] 0, 128
        %5625 = vxpose.xlu0.c.b16.cont [3/8] 0, 128
        %5626 = vxpose.xlu0.c.b16.cont [4/8] 0, 128
        %5627 = vxpose.xlu0.c.b16.cont [5/8] 0, 128
        %5628 = vxpose.xlu0.c.b16.cont [6/8] 0, 128
        %5629 = vxpose.xlu0.c.b16.cont [7/8] 0, 128
        %5630 = vxpose.xlu0.c.b16.end [8/8] 0, 128
        %v5631 = vpop.trf.xlu0
        %v5632 = vpop.trf.xlu0
        %v5633 = vpop.trf.xlu0
        %v5634 = vpop.trf.xlu0
        %v5635 = vpop.trf.xlu0
        %v5636 = vpop.trf.xlu0
        %v5637 = vpop.trf.xlu0
        %v5638 = vpop.trf.xlu0
        %5639 = vxpose.xlu0.c.b16.start [1/8] %v5114, 128
        %5640 = vxpose.xlu0.c.b16.cont [2/8] 0, 128
        %5641 = vxpose.xlu0.c.b16.cont [3/8] 0, 128
        %5642 = vxpose.xlu0.c.b16.cont [4/8] 0, 128
        %5643 = vxpose.xlu0.c.b16.cont [5/8] 0, 128
        %5644 = vxpose.xlu0.c.b16.cont [6/8] 0, 128
        %5645 = vxpose.xlu0.c.b16.cont [7/8] 0, 128
        %5646 = vxpose.xlu0.c.b16.end [8/8] 0, 128
        %v5647 = vpop.trf.xlu0
        %v5648 = vpop.trf.xlu0
        %v5649 = vpop.trf.xlu0
        %v5650 = vpop.trf.xlu0
        %v5651 = vpop.trf.xlu0
        %v5652 = vpop.trf.xlu0
        %v5653 = vpop.trf.xlu0
        %v5654 = vpop.trf.xlu0
        %v5655 = vcombine.low %v5407, %v5471
        %v5656 = vcombine.high %v5407, %v5471
        %v5658 = vunpack.c.l.s4 1983009808
        %v5659 = vunpack.c.0.s8 %v5658
        %v5660 = vlaneseq
        %v5661 = vshrl.u32 %v5660, 7
        %v5662 = vsub.s32 %v5659, %v5661
        %v5663 = vrot.slane %v5655, %v5662
        %v5665 = vunpack.c.l.s4 1983009808
        %v5666 = vunpack.c.0.s8 %v5665
        %v5667 = vlaneseq
        %v5668 = vshrl.u32 %v5667, 7
        %v5669 = vsub.s32 %v5666, %v5668
        %v5670 = vrot.slane %v5656, %v5669
        %v5671 = vcombine.low %v5439, %v5503
        %v5672 = vcombine.high %v5439, %v5503
        %v5674 = vunpack.c.l.s4 1983009808
        %v5675 = vunpack.c.0.s8 %v5674
        %v5676 = vlaneseq
        %v5677 = vshrl.u32 %v5676, 7
        %v5678 = vsub.s32 %v5675, %v5677
        %v5679 = vrot.slane %v5671, %v5678
        %v5681 = vunpack.c.l.s4 1983009808
        %v5682 = vunpack.c.0.s8 %v5681
        %v5683 = vlaneseq
        %v5684 = vshrl.u32 %v5683, 7
        %v5685 = vsub.s32 %v5682, %v5684
        %v5686 = vrot.slane %v5672, %v5685
        %v5687 = vcombine.low %v5535, %v5599
        %v5688 = vcombine.high %v5535, %v5599
        %v5690 = vunpack.c.l.s4 1983009808
        %v5691 = vunpack.c.0.s8 %v5690
        %v5692 = vlaneseq
        %v5693 = vshrl.u32 %v5692, 7
        %v5694 = vsub.s32 %v5691, %v5693
        %v5695 = vrot.slane %v5687, %v5694
        %v5697 = vunpack.c.l.s4 1983009808
        %v5698 = vunpack.c.0.s8 %v5697
        %v5699 = vlaneseq
        %v5700 = vshrl.u32 %v5699, 7
        %v5701 = vsub.s32 %v5698, %v5700
        %v5702 = vrot.slane %v5688, %v5701
        %v5703 = vcombine.low %v5567, %v5631
        %v5704 = vcombine.high %v5567, %v5631
        %v5706 = vunpack.c.l.s4 1983009808
        %v5707 = vunpack.c.0.s8 %v5706
        %v5708 = vlaneseq
        %v5709 = vshrl.u32 %v5708, 7
        %v5710 = vsub.s32 %v5707, %v5709
        %v5711 = vrot.slane %v5703, %v5710
        %v5713 = vunpack.c.l.s4 1983009808
        %v5714 = vunpack.c.0.s8 %v5713
        %v5715 = vlaneseq
        %v5716 = vshrl.u32 %v5715, 7
        %v5717 = vsub.s32 %v5714, %v5716
        %v5718 = vrot.slane %v5704, %v5717
        %v5719 = vcombine.low %v5663, %v5679
        %v5720 = vcombine.high %v5663, %v5679
        %v5722 = vunpack.c.l.s4 1934713408
        %v5723 = vunpack.c.0.s8 %v5722
        %v5724 = vlaneseq
        %v5725 = vshrl.u32 %v5724, 7
        %v5726 = vsub.s32 %v5723, %v5725
        %v5727 = vrot.slane %v5719, %v5726
        %v5729 = vunpack.c.l.s4 1934713408
        %v5730 = vunpack.c.0.s8 %v5729
        %v5731 = vlaneseq
        %v5732 = vshrl.u32 %v5731, 7
        %v5733 = vsub.s32 %v5730, %v5732
        %v5734 = vrot.slane %v5720, %v5733
        %v5735 = vcombine.low %v5670, %v5686
        %v5736 = vcombine.high %v5670, %v5686
        %v5738 = vunpack.c.l.s4 1934713408
        %v5739 = vunpack.c.0.s8 %v5738
        %v5740 = vlaneseq
        %v5741 = vshrl.u32 %v5740, 7
        %v5742 = vsub.s32 %v5739, %v5741
        %v5743 = vrot.slane %v5735, %v5742
        %v5745 = vunpack.c.l.s4 1934713408
        %v5746 = vunpack.c.0.s8 %v5745
        %v5747 = vlaneseq
        %v5748 = vshrl.u32 %v5747, 7
        %v5749 = vsub.s32 %v5746, %v5748
        %v5750 = vrot.slane %v5736, %v5749
        %v5751 = vcombine.low %v5695, %v5711
        %v5752 = vcombine.high %v5695, %v5711
        %v5754 = vunpack.c.l.s4 1934713408
        %v5755 = vunpack.c.0.s8 %v5754
        %v5756 = vlaneseq
        %v5757 = vshrl.u32 %v5756, 7
        %v5758 = vsub.s32 %v5755, %v5757
        %v5759 = vrot.slane %v5751, %v5758
        %v5761 = vunpack.c.l.s4 1934713408
        %v5762 = vunpack.c.0.s8 %v5761
        %v5763 = vlaneseq
        %v5764 = vshrl.u32 %v5763, 7
        %v5765 = vsub.s32 %v5762, %v5764
        %v5766 = vrot.slane %v5752, %v5765
        %v5767 = vcombine.low %v5702, %v5718
        %v5768 = vcombine.high %v5702, %v5718
        %v5770 = vunpack.c.l.s4 1934713408
        %v5771 = vunpack.c.0.s8 %v5770
        %v5772 = vlaneseq
        %v5773 = vshrl.u32 %v5772, 7
        %v5774 = vsub.s32 %v5771, %v5773
        %v5775 = vrot.slane %v5767, %v5774
        %v5777 = vunpack.c.l.s4 1934713408
        %v5778 = vunpack.c.0.s8 %v5777
        %v5779 = vlaneseq
        %v5780 = vshrl.u32 %v5779, 7
        %v5781 = vsub.s32 %v5778, %v5780
        %v5782 = vrot.slane %v5768, %v5781
        %v5783 = vcombine.low %v5727, %v5759
        %v5784 = vcombine.high %v5727, %v5759
        %v5785 = vcombine.low %v5734, %v5766
        %v5786 = vcombine.high %v5734, %v5766
        %v5787 = vcombine.low %v5743, %v5775
        %v5788 = vcombine.high %v5743, %v5775
        %v5789 = vcombine.low %v5750, %v5782
        %v5790 = vcombine.high %v5750, %v5782
        %v5791 = vcombine.low %v5423, %v5487
        %v5792 = vcombine.high %v5423, %v5487
        %v5794 = vunpack.c.l.s4 1983009808
        %v5795 = vunpack.c.0.s8 %v5794
        %v5796 = vlaneseq
        %v5797 = vshrl.u32 %v5796, 7
        %v5798 = vsub.s32 %v5795, %v5797
        %v5799 = vrot.slane %v5791, %v5798
        %v5801 = vunpack.c.l.s4 1983009808
        %v5802 = vunpack.c.0.s8 %v5801
        %v5803 = vlaneseq
        %v5804 = vshrl.u32 %v5803, 7
        %v5805 = vsub.s32 %v5802, %v5804
        %v5806 = vrot.slane %v5792, %v5805
        %v5807 = vcombine.low %v5455, %v5519
        %v5808 = vcombine.high %v5455, %v5519
        %v5810 = vunpack.c.l.s4 1983009808
        %v5811 = vunpack.c.0.s8 %v5810
        %v5812 = vlaneseq
        %v5813 = vshrl.u32 %v5812, 7
        %v5814 = vsub.s32 %v5811, %v5813
        %v5815 = vrot.slane %v5807, %v5814
        %v5817 = vunpack.c.l.s4 1983009808
        %v5818 = vunpack.c.0.s8 %v5817
        %v5819 = vlaneseq
        %v5820 = vshrl.u32 %v5819, 7
        %v5821 = vsub.s32 %v5818, %v5820
        %v5822 = vrot.slane %v5808, %v5821
        %v5823 = vcombine.low %v5551, %v5615
        %v5824 = vcombine.high %v5551, %v5615
        %v5826 = vunpack.c.l.s4 1983009808
        %v5827 = vunpack.c.0.s8 %v5826
        %v5828 = vlaneseq
        %v5829 = vshrl.u32 %v5828, 7
        %v5830 = vsub.s32 %v5827, %v5829
        %v5831 = vrot.slane %v5823, %v5830
        %v5833 = vunpack.c.l.s4 1983009808
        %v5834 = vunpack.c.0.s8 %v5833
        %v5835 = vlaneseq
        %v5836 = vshrl.u32 %v5835, 7
        %v5837 = vsub.s32 %v5834, %v5836
        %v5838 = vrot.slane %v5824, %v5837
        %v5839 = vcombine.low %v5583, %v5647
        %v5840 = vcombine.high %v5583, %v5647
        %v5842 = vunpack.c.l.s4 1983009808
        %v5843 = vunpack.c.0.s8 %v5842
        %v5844 = vlaneseq
        %v5845 = vshrl.u32 %v5844, 7
        %v5846 = vsub.s32 %v5843, %v5845
        %v5847 = vrot.slane %v5839, %v5846
        %v5849 = vunpack.c.l.s4 1983009808
        %v5850 = vunpack.c.0.s8 %v5849
        %v5851 = vlaneseq
        %v5852 = vshrl.u32 %v5851, 7
        %v5853 = vsub.s32 %v5850, %v5852
        %v5854 = vrot.slane %v5840, %v5853
        %v5855 = vcombine.low %v5799, %v5815
        %v5856 = vcombine.high %v5799, %v5815
        %v5858 = vunpack.c.l.s4 1934713408
        %v5859 = vunpack.c.0.s8 %v5858
        %v5860 = vlaneseq
        %v5861 = vshrl.u32 %v5860, 7
        %v5862 = vsub.s32 %v5859, %v5861
        %v5863 = vrot.slane %v5855, %v5862
        %v5865 = vunpack.c.l.s4 1934713408
        %v5866 = vunpack.c.0.s8 %v5865
        %v5867 = vlaneseq
        %v5868 = vshrl.u32 %v5867, 7
        %v5869 = vsub.s32 %v5866, %v5868
        %v5870 = vrot.slane %v5856, %v5869
        %v5871 = vcombine.low %v5806, %v5822
        %v5872 = vcombine.high %v5806, %v5822
        %v5874 = vunpack.c.l.s4 1934713408
        %v5875 = vunpack.c.0.s8 %v5874
        %v5876 = vlaneseq
        %v5877 = vshrl.u32 %v5876, 7
        %v5878 = vsub.s32 %v5875, %v5877
        %v5879 = vrot.slane %v5871, %v5878
        %v5881 = vunpack.c.l.s4 1934713408
        %v5882 = vunpack.c.0.s8 %v5881
        %v5883 = vlaneseq
        %v5884 = vshrl.u32 %v5883, 7
        %v5885 = vsub.s32 %v5882, %v5884
        %v5886 = vrot.slane %v5872, %v5885
        %v5887 = vcombine.low %v5831, %v5847
        %v5888 = vcombine.high %v5831, %v5847
        %v5890 = vunpack.c.l.s4 1934713408
        %v5891 = vunpack.c.0.s8 %v5890
        %v5892 = vlaneseq
        %v5893 = vshrl.u32 %v5892, 7
        %v5894 = vsub.s32 %v5891, %v5893
        %v5895 = vrot.slane %v5887, %v5894
        %v5897 = vunpack.c.l.s4 1934713408
        %v5898 = vunpack.c.0.s8 %v5897
        %v5899 = vlaneseq
        %v5900 = vshrl.u32 %v5899, 7
        %v5901 = vsub.s32 %v5898, %v5900
        %v5902 = vrot.slane %v5888, %v5901
        %v5903 = vcombine.low %v5838, %v5854
        %v5904 = vcombine.high %v5838, %v5854
        %v5906 = vunpack.c.l.s4 1934713408
        %v5907 = vunpack.c.0.s8 %v5906
        %v5908 = vlaneseq
        %v5909 = vshrl.u32 %v5908, 7
        %v5910 = vsub.s32 %v5907, %v5909
        %v5911 = vrot.slane %v5903, %v5910
        %v5913 = vunpack.c.l.s4 1934713408
        %v5914 = vunpack.c.0.s8 %v5913
        %v5915 = vlaneseq
        %v5916 = vshrl.u32 %v5915, 7
        %v5917 = vsub.s32 %v5914, %v5916
        %v5918 = vrot.slane %v5904, %v5917
        %v5919 = vcombine.low %v5863, %v5895
        %v5920 = vcombine.high %v5863, %v5895
        %v5921 = vcombine.low %v5870, %v5902
        %v5922 = vcombine.high %v5870, %v5902
        %v5923 = vcombine.low %v5879, %v5911
        %v5924 = vcombine.high %v5879, %v5911
        %v5925 = vcombine.low %v5886, %v5918
        %v5926 = vcombine.high %v5886, %v5918
        %v5929 = vpack.i.b16 %v5919, %v5783
        %v5931 = vshrl.u32 %v5783, 16
        %v5932 = vshrl.u32 %v5919, 16
        %v5933 = vpack.i.b16 %v5932, %v5931
        %v5937 = vpack.i.b16 %v5920, %v5784
        %v5939 = vshrl.u32 %v5784, 16
        %v5940 = vshrl.u32 %v5920, 16
        %v5941 = vpack.i.b16 %v5940, %v5939
        %v5945 = vpack.i.b16 %v5921, %v5785
        %v5947 = vshrl.u32 %v5785, 16
        %v5948 = vshrl.u32 %v5921, 16
        %v5949 = vpack.i.b16 %v5948, %v5947
        %v5953 = vpack.i.b16 %v5922, %v5786
        %v5955 = vshrl.u32 %v5786, 16
        %v5956 = vshrl.u32 %v5922, 16
        %v5957 = vpack.i.b16 %v5956, %v5955
        %v5961 = vpack.i.b16 %v5923, %v5787
        %v5963 = vshrl.u32 %v5787, 16
        %v5964 = vshrl.u32 %v5923, 16
        %v5965 = vpack.i.b16 %v5964, %v5963
        %v5969 = vpack.i.b16 %v5924, %v5788
        %v5971 = vshrl.u32 %v5788, 16
        %v5972 = vshrl.u32 %v5924, 16
        %v5973 = vpack.i.b16 %v5972, %v5971
        %v5977 = vpack.i.b16 %v5925, %v5789
        %v5979 = vshrl.u32 %v5789, 16
        %v5980 = vshrl.u32 %v5925, 16
        %v5981 = vpack.i.b16 %v5980, %v5979
        %v5985 = vpack.i.b16 %v5926, %v5790
        %v5987 = vshrl.u32 %v5790, 16
        %v5988 = vshrl.u32 %v5926, 16
        %v5989 = vpack.i.b16 %v5988, %v5987
        %5991 = vxpose.xlu0.c.b16.start [1/8] %v5929, 128
        %5992 = vxpose.xlu0.c.b16.cont [2/8] 0, 128
        %5993 = vxpose.xlu0.c.b16.cont [3/8] 0, 128
        %5994 = vxpose.xlu0.c.b16.cont [4/8] 0, 128
        %5995 = vxpose.xlu0.c.b16.cont [5/8] 0, 128
        %5996 = vxpose.xlu0.c.b16.cont [6/8] 0, 128
        %5997 = vxpose.xlu0.c.b16.cont [7/8] 0, 128
        %5998 = vxpose.xlu0.c.b16.end [8/8] 0, 128
        %v5999 = vpop.trf.xlu0
        %v6000 = vpop.trf.xlu0
        %v6001 = vpop.trf.xlu0
        %v6002 = vpop.trf.xlu0
        %v6003 = vpop.trf.xlu0
        %v6004 = vpop.trf.xlu0
        %v6005 = vpop.trf.xlu0
        %v6006 = vpop.trf.xlu0
        %6007 = vxpose.xlu0.c.b16.start [1/8] %v5933, 128
        %6008 = vxpose.xlu0.c.b16.cont [2/8] 0, 128
        %6009 = vxpose.xlu0.c.b16.cont [3/8] 0, 128
        %6010 = vxpose.xlu0.c.b16.cont [4/8] 0, 128
        %6011 = vxpose.xlu0.c.b16.cont [5/8] 0, 128
        %6012 = vxpose.xlu0.c.b16.cont [6/8] 0, 128
        %6013 = vxpose.xlu0.c.b16.cont [7/8] 0, 128
        %6014 = vxpose.xlu0.c.b16.end [8/8] 0, 128
        %v6015 = vpop.trf.xlu0
        %v6016 = vpop.trf.xlu0
        %v6017 = vpop.trf.xlu0
        %v6018 = vpop.trf.xlu0
        %v6019 = vpop.trf.xlu0
        %v6020 = vpop.trf.xlu0
        %v6021 = vpop.trf.xlu0
        %v6022 = vpop.trf.xlu0
        %6023 = vxpose.xlu0.c.b16.start [1/8] %v5937, 128
        %6024 = vxpose.xlu0.c.b16.cont [2/8] 0, 128
        %6025 = vxpose.xlu0.c.b16.cont [3/8] 0, 128
        %6026 = vxpose.xlu0.c.b16.cont [4/8] 0, 128
        %6027 = vxpose.xlu0.c.b16.cont [5/8] 0, 128
        %6028 = vxpose.xlu0.c.b16.cont [6/8] 0, 128
        %6029 = vxpose.xlu0.c.b16.cont [7/8] 0, 128
        %6030 = vxpose.xlu0.c.b16.end [8/8] 0, 128
        %v6031 = vpop.trf.xlu0
        %v6032 = vpop.trf.xlu0
        %v6033 = vpop.trf.xlu0
        %v6034 = vpop.trf.xlu0
        %v6035 = vpop.trf.xlu0
        %v6036 = vpop.trf.xlu0
        %v6037 = vpop.trf.xlu0
        %v6038 = vpop.trf.xlu0
        %6039 = vxpose.xlu0.c.b16.start [1/8] %v5941, 128
        %6040 = vxpose.xlu0.c.b16.cont [2/8] 0, 128
        %6041 = vxpose.xlu0.c.b16.cont [3/8] 0, 128
        %6042 = vxpose.xlu0.c.b16.cont [4/8] 0, 128
        %6043 = vxpose.xlu0.c.b16.cont [5/8] 0, 128
        %6044 = vxpose.xlu0.c.b16.cont [6/8] 0, 128
        %6045 = vxpose.xlu0.c.b16.cont [7/8] 0, 128
        %6046 = vxpose.xlu0.c.b16.end [8/8] 0, 128
        %v6047 = vpop.trf.xlu0
        %v6048 = vpop.trf.xlu0
        %v6049 = vpop.trf.xlu0
        %v6050 = vpop.trf.xlu0
        %v6051 = vpop.trf.xlu0
        %v6052 = vpop.trf.xlu0
        %v6053 = vpop.trf.xlu0
        %v6054 = vpop.trf.xlu0
        %6055 = vxpose.xlu0.c.b16.start [1/8] %v5945, 128
        %6056 = vxpose.xlu0.c.b16.cont [2/8] 0, 128
        %6057 = vxpose.xlu0.c.b16.cont [3/8] 0, 128
        %6058 = vxpose.xlu0.c.b16.cont [4/8] 0, 128
        %6059 = vxpose.xlu0.c.b16.cont [5/8] 0, 128
        %6060 = vxpose.xlu0.c.b16.cont [6/8] 0, 128
        %6061 = vxpose.xlu0.c.b16.cont [7/8] 0, 128
        %6062 = vxpose.xlu0.c.b16.end [8/8] 0, 128
        %v6063 = vpop.trf.xlu0
        %v6064 = vpop.trf.xlu0
        %v6065 = vpop.trf.xlu0
        %v6066 = vpop.trf.xlu0
        %v6067 = vpop.trf.xlu0
        %v6068 = vpop.trf.xlu0
        %v6069 = vpop.trf.xlu0
        %v6070 = vpop.trf.xlu0
        %6071 = vxpose.xlu0.c.b16.start [1/8] %v5949, 128
        %6072 = vxpose.xlu0.c.b16.cont [2/8] 0, 128
        %6073 = vxpose.xlu0.c.b16.cont [3/8] 0, 128
        %6074 = vxpose.xlu0.c.b16.cont [4/8] 0, 128
        %6075 = vxpose.xlu0.c.b16.cont [5/8] 0, 128
        %6076 = vxpose.xlu0.c.b16.cont [6/8] 0, 128
        %6077 = vxpose.xlu0.c.b16.cont [7/8] 0, 128
        %6078 = vxpose.xlu0.c.b16.end [8/8] 0, 128
        %v6079 = vpop.trf.xlu0
        %v6080 = vpop.trf.xlu0
        %v6081 = vpop.trf.xlu0
        %v6082 = vpop.trf.xlu0
        %v6083 = vpop.trf.xlu0
        %v6084 = vpop.trf.xlu0
        %v6085 = vpop.trf.xlu0
        %v6086 = vpop.trf.xlu0
        %6087 = vxpose.xlu0.c.b16.start [1/8] %v5953, 128
        %6088 = vxpose.xlu0.c.b16.cont [2/8] 0, 128
        %6089 = vxpose.xlu0.c.b16.cont [3/8] 0, 128
        %6090 = vxpose.xlu0.c.b16.cont [4/8] 0, 128
        %6091 = vxpose.xlu0.c.b16.cont [5/8] 0, 128
        %6092 = vxpose.xlu0.c.b16.cont [6/8] 0, 128
        %6093 = vxpose.xlu0.c.b16.cont [7/8] 0, 128
        %6094 = vxpose.xlu0.c.b16.end [8/8] 0, 128
        %v6095 = vpop.trf.xlu0
        %v6096 = vpop.trf.xlu0
        %v6097 = vpop.trf.xlu0
        %v6098 = vpop.trf.xlu0
        %v6099 = vpop.trf.xlu0
        %v6100 = vpop.trf.xlu0
        %v6101 = vpop.trf.xlu0
        %v6102 = vpop.trf.xlu0
        %6103 = vxpose.xlu0.c.b16.start [1/8] %v5957, 128
        %6104 = vxpose.xlu0.c.b16.cont [2/8] 0, 128
        %6105 = vxpose.xlu0.c.b16.cont [3/8] 0, 128
        %6106 = vxpose.xlu0.c.b16.cont [4/8] 0, 128
        %6107 = vxpose.xlu0.c.b16.cont [5/8] 0, 128
        %6108 = vxpose.xlu0.c.b16.cont [6/8] 0, 128
        %6109 = vxpose.xlu0.c.b16.cont [7/8] 0, 128
        %6110 = vxpose.xlu0.c.b16.end [8/8] 0, 128
        %v6111 = vpop.trf.xlu0
        %v6112 = vpop.trf.xlu0
        %v6113 = vpop.trf.xlu0
        %v6114 = vpop.trf.xlu0
        %v6115 = vpop.trf.xlu0
        %v6116 = vpop.trf.xlu0
        %v6117 = vpop.trf.xlu0
        %v6118 = vpop.trf.xlu0
        %6119 = vxpose.xlu0.c.b16.start [1/8] %v5961, 128
        %6120 = vxpose.xlu0.c.b16.cont [2/8] 0, 128
        %6121 = vxpose.xlu0.c.b16.cont [3/8] 0, 128
        %6122 = vxpose.xlu0.c.b16.cont [4/8] 0, 128
        %6123 = vxpose.xlu0.c.b16.cont [5/8] 0, 128
        %6124 = vxpose.xlu0.c.b16.cont [6/8] 0, 128
        %6125 = vxpose.xlu0.c.b16.cont [7/8] 0, 128
        %6126 = vxpose.xlu0.c.b16.end [8/8] 0, 128
        %v6127 = vpop.trf.xlu0
        %v6128 = vpop.trf.xlu0
        %v6129 = vpop.trf.xlu0
        %v6130 = vpop.trf.xlu0
        %v6131 = vpop.trf.xlu0
        %v6132 = vpop.trf.xlu0
        %v6133 = vpop.trf.xlu0
        %v6134 = vpop.trf.xlu0
        %6135 = vxpose.xlu0.c.b16.start [1/8] %v5965, 128
        %6136 = vxpose.xlu0.c.b16.cont [2/8] 0, 128
        %6137 = vxpose.xlu0.c.b16.cont [3/8] 0, 128
        %6138 = vxpose.xlu0.c.b16.cont [4/8] 0, 128
        %6139 = vxpose.xlu0.c.b16.cont [5/8] 0, 128
        %6140 = vxpose.xlu0.c.b16.cont [6/8] 0, 128
        %6141 = vxpose.xlu0.c.b16.cont [7/8] 0, 128
        %6142 = vxpose.xlu0.c.b16.end [8/8] 0, 128
        %v6143 = vpop.trf.xlu0
        %v6144 = vpop.trf.xlu0
        %v6145 = vpop.trf.xlu0
        %v6146 = vpop.trf.xlu0
        %v6147 = vpop.trf.xlu0
        %v6148 = vpop.trf.xlu0
        %v6149 = vpop.trf.xlu0
        %v6150 = vpop.trf.xlu0
        %6151 = vxpose.xlu0.c.b16.start [1/8] %v5969, 128
        %6152 = vxpose.xlu0.c.b16.cont [2/8] 0, 128
        %6153 = vxpose.xlu0.c.b16.cont [3/8] 0, 128
        %6154 = vxpose.xlu0.c.b16.cont [4/8] 0, 128
        %6155 = vxpose.xlu0.c.b16.cont [5/8] 0, 128
        %6156 = vxpose.xlu0.c.b16.cont [6/8] 0, 128
        %6157 = vxpose.xlu0.c.b16.cont [7/8] 0, 128
        %6158 = vxpose.xlu0.c.b16.end [8/8] 0, 128
        %v6159 = vpop.trf.xlu0
        %v6160 = vpop.trf.xlu0
        %v6161 = vpop.trf.xlu0
        %v6162 = vpop.trf.xlu0
        %v6163 = vpop.trf.xlu0
        %v6164 = vpop.trf.xlu0
        %v6165 = vpop.trf.xlu0
        %v6166 = vpop.trf.xlu0
        %6167 = vxpose.xlu0.c.b16.start [1/8] %v5973, 128
        %6168 = vxpose.xlu0.c.b16.cont [2/8] 0, 128
        %6169 = vxpose.xlu0.c.b16.cont [3/8] 0, 128
        %6170 = vxpose.xlu0.c.b16.cont [4/8] 0, 128
        %6171 = vxpose.xlu0.c.b16.cont [5/8] 0, 128
        %6172 = vxpose.xlu0.c.b16.cont [6/8] 0, 128
        %6173 = vxpose.xlu0.c.b16.cont [7/8] 0, 128
        %6174 = vxpose.xlu0.c.b16.end [8/8] 0, 128
        %v6175 = vpop.trf.xlu0
        %v6176 = vpop.trf.xlu0
        %v6177 = vpop.trf.xlu0
        %v6178 = vpop.trf.xlu0
        %v6179 = vpop.trf.xlu0
        %v6180 = vpop.trf.xlu0
        %v6181 = vpop.trf.xlu0
        %v6182 = vpop.trf.xlu0
        %6183 = vxpose.xlu0.c.b16.start [1/8] %v5977, 128
        %6184 = vxpose.xlu0.c.b16.cont [2/8] 0, 128
        %6185 = vxpose.xlu0.c.b16.cont [3/8] 0, 128
        %6186 = vxpose.xlu0.c.b16.cont [4/8] 0, 128
        %6187 = vxpose.xlu0.c.b16.cont [5/8] 0, 128
        %6188 = vxpose.xlu0.c.b16.cont [6/8] 0, 128
        %6189 = vxpose.xlu0.c.b16.cont [7/8] 0, 128
        %6190 = vxpose.xlu0.c.b16.end [8/8] 0, 128
        %v6191 = vpop.trf.xlu0
        %v6192 = vpop.trf.xlu0
        %v6193 = vpop.trf.xlu0
        %v6194 = vpop.trf.xlu0
        %v6195 = vpop.trf.xlu0
        %v6196 = vpop.trf.xlu0
        %v6197 = vpop.trf.xlu0
        %v6198 = vpop.trf.xlu0
        %6199 = vxpose.xlu0.c.b16.start [1/8] %v5981, 128
        %6200 = vxpose.xlu0.c.b16.cont [2/8] 0, 128
        %6201 = vxpose.xlu0.c.b16.cont [3/8] 0, 128
        %6202 = vxpose.xlu0.c.b16.cont [4/8] 0, 128
        %6203 = vxpose.xlu0.c.b16.cont [5/8] 0, 128
        %6204 = vxpose.xlu0.c.b16.cont [6/8] 0, 128
        %6205 = vxpose.xlu0.c.b16.cont [7/8] 0, 128
        %6206 = vxpose.xlu0.c.b16.end [8/8] 0, 128
        %v6207 = vpop.trf.xlu0
        %v6208 = vpop.trf.xlu0
        %v6209 = vpop.trf.xlu0
        %v6210 = vpop.trf.xlu0
        %v6211 = vpop.trf.xlu0
        %v6212 = vpop.trf.xlu0
        %v6213 = vpop.trf.xlu0
        %v6214 = vpop.trf.xlu0
        %6215 = vxpose.xlu0.c.b16.start [1/8] %v5985, 128
        %6216 = vxpose.xlu0.c.b16.cont [2/8] 0, 128
        %6217 = vxpose.xlu0.c.b16.cont [3/8] 0, 128
        %6218 = vxpose.xlu0.c.b16.cont [4/8] 0, 128
        %6219 = vxpose.xlu0.c.b16.cont [5/8] 0, 128
        %6220 = vxpose.xlu0.c.b16.cont [6/8] 0, 128
        %6221 = vxpose.xlu0.c.b16.cont [7/8] 0, 128
        %6222 = vxpose.xlu0.c.b16.end [8/8] 0, 128
        %v6223 = vpop.trf.xlu0
        %v6224 = vpop.trf.xlu0
        %v6225 = vpop.trf.xlu0
        %v6226 = vpop.trf.xlu0
        %v6227 = vpop.trf.xlu0
        %v6228 = vpop.trf.xlu0
        %v6229 = vpop.trf.xlu0
        %v6230 = vpop.trf.xlu0
        %6231 = vxpose.xlu0.c.b16.start [1/8] %v5989, 128
        %6232 = vxpose.xlu0.c.b16.cont [2/8] 0, 128
        %6233 = vxpose.xlu0.c.b16.cont [3/8] 0, 128
        %6234 = vxpose.xlu0.c.b16.cont [4/8] 0, 128
        %6235 = vxpose.xlu0.c.b16.cont [5/8] 0, 128
        %6236 = vxpose.xlu0.c.b16.cont [6/8] 0, 128
        %6237 = vxpose.xlu0.c.b16.cont [7/8] 0, 128
        %6238 = vxpose.xlu0.c.b16.end [8/8] 0, 128
        %v6239 = vpop.trf.xlu0
        %v6240 = vpop.trf.xlu0
        %v6241 = vpop.trf.xlu0
        %v6242 = vpop.trf.xlu0
        %v6243 = vpop.trf.xlu0
        %v6244 = vpop.trf.xlu0
        %v6245 = vpop.trf.xlu0
        %v6246 = vpop.trf.xlu0
        %v6247 = vcombine.low %v5999, %v6063
        %v6249 = vunpack.c.l.s4 1983009808
        %v6250 = vunpack.c.0.s8 %v6249
        %v6251 = vlaneseq
        %v6252 = vshrl.u32 %v6251, 7
        %v6253 = vsub.s32 %v6250, %v6252
        %v6254 = vrot.slane %v6247, %v6253
        %v6255 = vcombine.low %v6031, %v6095
        %v6257 = vunpack.c.l.s4 1983009808
        %v6258 = vunpack.c.0.s8 %v6257
        %v6259 = vlaneseq
        %v6260 = vshrl.u32 %v6259, 7
        %v6261 = vsub.s32 %v6258, %v6260
        %v6262 = vrot.slane %v6255, %v6261
        %v6263 = vcombine.low %v6127, %v6191
        %v6265 = vunpack.c.l.s4 1983009808
        %v6266 = vunpack.c.0.s8 %v6265
        %v6267 = vlaneseq
        %v6268 = vshrl.u32 %v6267, 7
        %v6269 = vsub.s32 %v6266, %v6268
        %v6270 = vrot.slane %v6263, %v6269
        %v6271 = vcombine.low %v6159, %v6223
        %v6273 = vunpack.c.l.s4 1983009808
        %v6274 = vunpack.c.0.s8 %v6273
        %v6275 = vlaneseq
        %v6276 = vshrl.u32 %v6275, 7
        %v6277 = vsub.s32 %v6274, %v6276
        %v6278 = vrot.slane %v6271, %v6277
        %v6279 = vcombine.low %v6254, %v6262
        %v6281 = vunpack.c.l.s4 1934713408
        %v6282 = vunpack.c.0.s8 %v6281
        %v6283 = vlaneseq
        %v6284 = vshrl.u32 %v6283, 7
        %v6285 = vsub.s32 %v6282, %v6284
        %v6286 = vrot.slane %v6279, %v6285
        %v6287 = vcombine.low %v6270, %v6278
        %v6289 = vunpack.c.l.s4 1934713408
        %v6290 = vunpack.c.0.s8 %v6289
        %v6291 = vlaneseq
        %v6292 = vshrl.u32 %v6291, 7
        %v6293 = vsub.s32 %v6290, %v6292
        %v6294 = vrot.slane %v6287, %v6293
        %v6295 = vcombine.low %v6286, %v6294
        %v6296 = vcombine.high %v6286, %v6294
        %v6297 = vcombine.low %v6015, %v6079
        %v6299 = vunpack.c.l.s4 1983009808
        %v6300 = vunpack.c.0.s8 %v6299
        %v6301 = vlaneseq
        %v6302 = vshrl.u32 %v6301, 7
        %v6303 = vsub.s32 %v6300, %v6302
        %v6304 = vrot.slane %v6297, %v6303
        %v6305 = vcombine.low %v6047, %v6111
        %v6307 = vunpack.c.l.s4 1983009808
        %v6308 = vunpack.c.0.s8 %v6307
        %v6309 = vlaneseq
        %v6310 = vshrl.u32 %v6309, 7
        %v6311 = vsub.s32 %v6308, %v6310
        %v6312 = vrot.slane %v6305, %v6311
        %v6313 = vcombine.low %v6143, %v6207
        %v6315 = vunpack.c.l.s4 1983009808
        %v6316 = vunpack.c.0.s8 %v6315
        %v6317 = vlaneseq
        %v6318 = vshrl.u32 %v6317, 7
        %v6319 = vsub.s32 %v6316, %v6318
        %v6320 = vrot.slane %v6313, %v6319
        %v6321 = vcombine.low %v6175, %v6239
        %v6323 = vunpack.c.l.s4 1983009808
        %v6324 = vunpack.c.0.s8 %v6323
        %v6325 = vlaneseq
        %v6326 = vshrl.u32 %v6325, 7
        %v6327 = vsub.s32 %v6324, %v6326
        %v6328 = vrot.slane %v6321, %v6327
        %v6329 = vcombine.low %v6304, %v6312
        %v6331 = vunpack.c.l.s4 1934713408
        %v6332 = vunpack.c.0.s8 %v6331
        %v6333 = vlaneseq
        %v6334 = vshrl.u32 %v6333, 7
        %v6335 = vsub.s32 %v6332, %v6334
        %v6336 = vrot.slane %v6329, %v6335
        %v6337 = vcombine.low %v6320, %v6328
        %v6339 = vunpack.c.l.s4 1934713408
        %v6340 = vunpack.c.0.s8 %v6339
        %v6341 = vlaneseq
        %v6342 = vshrl.u32 %v6341, 7
        %v6343 = vsub.s32 %v6340, %v6342
        %v6344 = vrot.slane %v6337, %v6343
        %v6345 = vcombine.low %v6336, %v6344
        %v6346 = vcombine.high %v6336, %v6344
        %v6349 = vpack.i.b16 %v6345, %v6295
        %v6351 = vshrl.u32 %v6295, 16
        %v6352 = vshrl.u32 %v6345, 16
        %v6353 = vpack.i.b16 %v6352, %v6351
        %v6357 = vpack.i.b16 %v6346, %v6296
        %v6359 = vshrl.u32 %v6296, 16
        %v6360 = vshrl.u32 %v6346, 16
        %v6361 = vpack.i.b16 %v6360, %v6359
        %v6364 = vsel %vm2418, %v5389, 0
        %6366 = vmatprep.subr.bf16.mxu0 0
        %6367 = vmatpush1.bf16.msra.mxu0 0
        %6368 = vmatprep.subr.bf16.mxu0 0
        %6369 = vmatpush1.bf16.msra.mxu0 0
        %6370 = vmatprep.subr.bf16.mxu0 0
        %6371 = vmatpush1.bf16.msra.mxu0 0
        %6372 = vmatprep.subr.bf16.mxu0 0
        %6373 = vmatpush1.bf16.msra.mxu0 0
        %6374 = vmatprep.subr.bf16.mxu0 0
        %6375 = vmatpush1.bf16.msra.mxu0 0
        %6376 = vmatprep.subr.bf16.mxu0 0
        %6377 = vmatpush1.bf16.msra.mxu0 0
        %6378 = vmatprep.subr.bf16.mxu0 0
        %6379 = vmatpush1.bf16.msra.mxu0 0
        %6380 = vmatprep.subr.bf16.mxu0 0
        %6381 = vmatpush1.bf16.msra.mxu0 %v6349
        %6382 = vmatprep.subr.bf16.mxu0 0
        %6383 = vmatpush2.bf16.msra.mxu0 0
        %6384 = vmatprep.subr.bf16.mxu0 0
        %6385 = vmatpush2.bf16.msra.mxu0 0
        %6386 = vmatprep.subr.bf16.mxu0 0
        %6387 = vmatpush2.bf16.msra.mxu0 0
        %6388 = vmatprep.subr.bf16.mxu0 0
        %6389 = vmatpush2.bf16.msra.mxu0 0
        %6390 = vmatprep.subr.bf16.mxu0 0
        %6391 = vmatpush2.bf16.msra.mxu0 0
        %6392 = vmatprep.subr.bf16.mxu0 0
        %6393 = vmatpush2.bf16.msra.mxu0 0
        %6394 = vmatprep.subr.bf16.mxu0 0
        %6395 = vmatpush2.bf16.msra.mxu0 0
        %6396 = vmatprep.subr.bf16.mxu0 0
        %6397 = vmatpush2.bf16.msra.mxu0 0
        %6398 = vmatprep.mubr.bf16.mxu0 0
        %6399 = vmatmul.mubr.bf16.gmra.mxu0 %v6364
        %v6400 = vpop.f32.mrf.mxu0
        %v6401 = vadd.f32 0.0, %v6400
        %v6402 = vpop.f32.mrf.mxu0
        %v6403 = vpop.f32.mrf.mxu0
        %v6404 = vadd.f32 0.0, %v6403
        %v6405 = vpop.f32.mrf.mxu0
        %6406 = vdwg.mxu0
        %v6408 = vsel %vm2418, %v5392, 0
        %6410 = vmatprep.subr.bf16.mxu0 0
        %6411 = vmatpush1.bf16.msra.mxu0 0
        %6412 = vmatprep.subr.bf16.mxu0 0
        %6413 = vmatpush1.bf16.msra.mxu0 0
        %6414 = vmatprep.subr.bf16.mxu0 0
        %6415 = vmatpush1.bf16.msra.mxu0 0
        %6416 = vmatprep.subr.bf16.mxu0 0
        %6417 = vmatpush1.bf16.msra.mxu0 0
        %6418 = vmatprep.subr.bf16.mxu0 0
        %6419 = vmatpush1.bf16.msra.mxu0 0
        %6420 = vmatprep.subr.bf16.mxu0 0
        %6421 = vmatpush1.bf16.msra.mxu0 0
        %6422 = vmatprep.subr.bf16.mxu0 0
        %6423 = vmatpush1.bf16.msra.mxu0 0
        %6424 = vmatprep.subr.bf16.mxu0 0
        %6425 = vmatpush1.bf16.msra.mxu0 %v6353
        %6426 = vmatprep.subr.bf16.mxu0 0
        %6427 = vmatpush2.bf16.msra.mxu0 0
        %6428 = vmatprep.subr.bf16.mxu0 0
        %6429 = vmatpush2.bf16.msra.mxu0 0
        %6430 = vmatprep.subr.bf16.mxu0 0
        %6431 = vmatpush2.bf16.msra.mxu0 0
        %6432 = vmatprep.subr.bf16.mxu0 0
        %6433 = vmatpush2.bf16.msra.mxu0 0
        %6434 = vmatprep.subr.bf16.mxu0 0
        %6435 = vmatpush2.bf16.msra.mxu0 0
        %6436 = vmatprep.subr.bf16.mxu0 0
        %6437 = vmatpush2.bf16.msra.mxu0 0
        %6438 = vmatprep.subr.bf16.mxu0 0
        %6439 = vmatpush2.bf16.msra.mxu0 0
        %6440 = vmatprep.subr.bf16.mxu0 0
        %6441 = vmatpush2.bf16.msra.mxu0 0
        %6442 = vmatprep.mubr.bf16.mxu0 0
        %6443 = vmatmul.mubr.bf16.gmra.mxu0 %v6408
        %v6444 = vpop.f32.mrf.mxu0
        %v6445 = vadd.f32 0.0, %v6444
        %v6446 = vpop.f32.mrf.mxu0
        %v6447 = vpop.f32.mrf.mxu0
        %v6448 = vadd.f32 0.0, %v6447
        %v6449 = vpop.f32.mrf.mxu0
        %6450 = vdwg.mxu0
        %v6452 = vsel %vm2418, %v5395, 0
        %6454 = vmatprep.subr.bf16.mxu0 0
        %6455 = vmatpush1.bf16.msra.mxu0 0
        %6456 = vmatprep.subr.bf16.mxu0 0
        %6457 = vmatpush1.bf16.msra.mxu0 0
        %6458 = vmatprep.subr.bf16.mxu0 0
        %6459 = vmatpush1.bf16.msra.mxu0 0
        %6460 = vmatprep.subr.bf16.mxu0 0
        %6461 = vmatpush1.bf16.msra.mxu0 0
        %6462 = vmatprep.subr.bf16.mxu0 0
        %6463 = vmatpush1.bf16.msra.mxu0 0
        %6464 = vmatprep.subr.bf16.mxu0 0
        %6465 = vmatpush1.bf16.msra.mxu0 0
        %6466 = vmatprep.subr.bf16.mxu0 0
        %6467 = vmatpush1.bf16.msra.mxu0 0
        %6468 = vmatprep.subr.bf16.mxu0 0
        %6469 = vmatpush1.bf16.msra.mxu0 %v6357
        %6470 = vmatprep.subr.bf16.mxu0 0
        %6471 = vmatpush2.bf16.msra.mxu0 0
        %6472 = vmatprep.subr.bf16.mxu0 0
        %6473 = vmatpush2.bf16.msra.mxu0 0
        %6474 = vmatprep.subr.bf16.mxu0 0
        %6475 = vmatpush2.bf16.msra.mxu0 0
        %6476 = vmatprep.subr.bf16.mxu0 0
        %6477 = vmatpush2.bf16.msra.mxu0 0
        %6478 = vmatprep.subr.bf16.mxu0 0
        %6479 = vmatpush2.bf16.msra.mxu0 0
        %6480 = vmatprep.subr.bf16.mxu0 0
        %6481 = vmatpush2.bf16.msra.mxu0 0
        %6482 = vmatprep.subr.bf16.mxu0 0
        %6483 = vmatpush2.bf16.msra.mxu0 0
        %6484 = vmatprep.subr.bf16.mxu0 0
        %6485 = vmatpush2.bf16.msra.mxu0 0
        %6486 = vmatprep.mubr.bf16.mxu0 0
        %6487 = vmatmul.mubr.bf16.gmra.mxu0 %v6452
        %v6488 = vpop.f32.mrf.mxu0
        %v6489 = vadd.f32 0.0, %v6488
        %v6490 = vpop.f32.mrf.mxu0
        %v6491 = vpop.f32.mrf.mxu0
        %v6492 = vadd.f32 0.0, %v6491
        %v6493 = vpop.f32.mrf.mxu0
        %6494 = vdwg.mxu0
        %v6496 = vsel %vm2418, %v5398, 0
        %6498 = vmatprep.subr.bf16.mxu0 0
        %6499 = vmatpush1.bf16.msra.mxu0 0
        %6500 = vmatprep.subr.bf16.mxu0 0
        %6501 = vmatpush1.bf16.msra.mxu0 0
        %6502 = vmatprep.subr.bf16.mxu0 0
        %6503 = vmatpush1.bf16.msra.mxu0 0
        %6504 = vmatprep.subr.bf16.mxu0 0
        %6505 = vmatpush1.bf16.msra.mxu0 0
        %6506 = vmatprep.subr.bf16.mxu0 0
        %6507 = vmatpush1.bf16.msra.mxu0 0
        %6508 = vmatprep.subr.bf16.mxu0 0
        %6509 = vmatpush1.bf16.msra.mxu0 0
        %6510 = vmatprep.subr.bf16.mxu0 0
        %6511 = vmatpush1.bf16.msra.mxu0 0
        %6512 = vmatprep.subr.bf16.mxu0 0
        %6513 = vmatpush1.bf16.msra.mxu0 %v6361
        %6514 = vmatprep.subr.bf16.mxu0 0
        %6515 = vmatpush2.bf16.msra.mxu0 0
        %6516 = vmatprep.subr.bf16.mxu0 0
        %6517 = vmatpush2.bf16.msra.mxu0 0
        %6518 = vmatprep.subr.bf16.mxu0 0
        %6519 = vmatpush2.bf16.msra.mxu0 0
        %6520 = vmatprep.subr.bf16.mxu0 0
        %6521 = vmatpush2.bf16.msra.mxu0 0
        %6522 = vmatprep.subr.bf16.mxu0 0
        %6523 = vmatpush2.bf16.msra.mxu0 0
        %6524 = vmatprep.subr.bf16.mxu0 0
        %6525 = vmatpush2.bf16.msra.mxu0 0
        %6526 = vmatprep.subr.bf16.mxu0 0
        %6527 = vmatpush2.bf16.msra.mxu0 0
        %6528 = vmatprep.subr.bf16.mxu0 0
        %6529 = vmatpush2.bf16.msra.mxu0 0
        %6530 = vmatprep.mubr.bf16.mxu0 0
        %6531 = vmatmul.mubr.bf16.gmra.mxu0 %v6496
        %v6532 = vpop.f32.mrf.mxu0
        %v6533 = vadd.f32 0.0, %v6532
        %v6534 = vpop.f32.mrf.mxu0
        %v6535 = vpop.f32.mrf.mxu0
        %v6536 = vadd.f32 0.0, %v6535
        %v6537 = vpop.f32.mrf.mxu0
        %6538 = vdwg.mxu0
        %v6539 = vsel %vm2418, %v6401, -inf
        %6540 = vmax.xlane.f32.xlu0 %v6539
        %v6541 = vpop.xlane.xlu0 %6540
        %v6542 = vsel %vm2418, %v6404, -inf
        %6543 = vmax.xlane.f32.xlu0 %v6542
        %v6544 = vpop.xlane.xlu0 %6543
        %v6545 = vsel %vm2418, %v6445, -inf
        %6546 = vmax.xlane.f32.xlu0 %v6545
        %v6547 = vpop.xlane.xlu0 %6546
        %v6548 = vsel %vm2418, %v6448, -inf
        %6549 = vmax.xlane.f32.xlu0 %v6548
        %v6550 = vpop.xlane.xlu0 %6549
        %v6551 = vsel %vm2418, %v6489, -inf
        %6552 = vmax.xlane.f32.xlu0 %v6551
        %v6553 = vpop.xlane.xlu0 %6552
        %v6554 = vsel %vm2418, %v6492, -inf
        %6555 = vmax.xlane.f32.xlu0 %v6554
        %v6556 = vpop.xlane.xlu0 %6555
        %v6557 = vsel %vm2418, %v6533, -inf
        %6558 = vmax.xlane.f32.xlu0 %v6557
        %v6559 = vpop.xlane.xlu0 %6558
        %v6560 = vsel %vm2418, %v6536, -inf
        %6561 = vmax.xlane.f32.xlu0 %v6560
        %v6562 = vpop.xlane.xlu0 %6561
        %v6563 = vsub.f32 %v6401, %v6541
        %v6564 = vsub.f32 %v6404, %v6544
        %v6565 = vsub.f32 %v6445, %v6547
        %v6566 = vsub.f32 %v6448, %v6550
        %v6567 = vsub.f32 %v6489, %v6553
        %v6568 = vsub.f32 %v6492, %v6556
        %v6569 = vsub.f32 %v6533, %v6559
        %v6570 = vsub.f32 %v6536, %v6562
        %v6571 = vmul.f32 %v6563, 1.442695
        %v6572 = vpow.pop %v6571
        %v6573 = vmul.f32 %v6564, 1.442695
        %v6574 = vpow.pop %v6573
        %v6575 = vmul.f32 %v6565, 1.442695
        %v6576 = vpow.pop %v6575
        %v6577 = vmul.f32 %v6566, 1.442695
        %v6578 = vpow.pop %v6577
        %v6579 = vmul.f32 %v6567, 1.442695
        %v6580 = vpow.pop %v6579
        %v6581 = vmul.f32 %v6568, 1.442695
        %v6582 = vpow.pop %v6581
        %v6583 = vmul.f32 %v6569, 1.442695
        %v6584 = vpow.pop %v6583
        %v6585 = vmul.f32 %v6570, 1.442695
        %v6586 = vpow.pop %v6585
        %v6587 = vsel %vm2418, %v6572, 0.0
        %6588 = vadd.xlane.f32.xlu0 %v6587
        %v6589 = vpop.xlane.xlu0 %6588
        %v6590 = vsel %vm2418, %v6574, 0.0
        %6591 = vadd.xlane.f32.xlu0 %v6590
        %v6592 = vpop.xlane.xlu0 %6591
        %v6593 = vsel %vm2418, %v6576, 0.0
        %6594 = vadd.xlane.f32.xlu0 %v6593
        %v6595 = vpop.xlane.xlu0 %6594
        %v6596 = vsel %vm2418, %v6578, 0.0
        %6597 = vadd.xlane.f32.xlu0 %v6596
        %v6598 = vpop.xlane.xlu0 %6597
        %v6599 = vsel %vm2418, %v6580, 0.0
        %6600 = vadd.xlane.f32.xlu0 %v6599
        %v6601 = vpop.xlane.xlu0 %6600
        %v6602 = vsel %vm2418, %v6582, 0.0
        %6603 = vadd.xlane.f32.xlu0 %v6602
        %v6604 = vpop.xlane.xlu0 %6603
        %v6605 = vsel %vm2418, %v6584, 0.0
        %6606 = vadd.xlane.f32.xlu0 %v6605
        %v6607 = vpop.xlane.xlu0 %6606
        %v6608 = vsel %vm2418, %v6586, 0.0
        %6609 = vadd.xlane.f32.xlu0 %v6608
        %v6610 = vpop.xlane.xlu0 %6609
        %v6611 = vrcp.pop %v6589
        %v6612 = vrcp.pop %v6592
        %v6613 = vrcp.pop %v6595
        %v6614 = vrcp.pop %v6598
        %v6615 = vrcp.pop %v6601
        %v6616 = vrcp.pop %v6604
        %v6617 = vrcp.pop %v6607
        %v6618 = vrcp.pop %v6610
        %v6619 = vmul.f32 %v6572, %v6611
        %v6620 = vmul.f32 %v6574, %v6612
        %v6621 = vmul.f32 %v6576, %v6613
        %v6622 = vmul.f32 %v6578, %v6614
        %v6623 = vmul.f32 %v6580, %v6615
        %v6624 = vmul.f32 %v6582, %v6616
        %v6625 = vmul.f32 %v6584, %v6617
        %v6626 = vmul.f32 %v6586, %v6618
        %v6627 = vpack.c.bf16 %v6620, %v6619
        %v6628 = vpack.c.bf16 %v6622, %v6621
        %v6629 = vpack.c.bf16 %v6624, %v6623
        %v6630 = vpack.c.bf16 %v6626, %v6625
        %6631 = vxpose.xlu0.c.b16.start [1/8] %v5271, 128
        %6632 = vxpose.xlu0.c.b16.cont [2/8] 0, 128
        %6633 = vxpose.xlu0.c.b16.cont [3/8] 0, 128
        %6634 = vxpose.xlu0.c.b16.cont [4/8] 0, 128
        %6635 = vxpose.xlu0.c.b16.cont [5/8] 0, 128
        %6636 = vxpose.xlu0.c.b16.cont [6/8] 0, 128
        %6637 = vxpose.xlu0.c.b16.cont [7/8] 0, 128
        %6638 = vxpose.xlu0.c.b16.end [8/8] 0, 128
        %v6639 = vpop.trf.xlu0
        %v6640 = vpop.trf.xlu0
        %v6641 = vpop.trf.xlu0
        %v6642 = vpop.trf.xlu0
        %v6643 = vpop.trf.xlu0
        %v6644 = vpop.trf.xlu0
        %v6645 = vpop.trf.xlu0
        %v6646 = vpop.trf.xlu0
        %6647 = vxpose.xlu0.c.b16.start [1/8] %v5272, 128
        %6648 = vxpose.xlu0.c.b16.cont [2/8] 0, 128
        %6649 = vxpose.xlu0.c.b16.cont [3/8] 0, 128
        %6650 = vxpose.xlu0.c.b16.cont [4/8] 0, 128
        %6651 = vxpose.xlu0.c.b16.cont [5/8] 0, 128
        %6652 = vxpose.xlu0.c.b16.cont [6/8] 0, 128
        %6653 = vxpose.xlu0.c.b16.cont [7/8] 0, 128
        %6654 = vxpose.xlu0.c.b16.end [8/8] 0, 128
        %v6655 = vpop.trf.xlu0
        %v6656 = vpop.trf.xlu0
        %v6657 = vpop.trf.xlu0
        %v6658 = vpop.trf.xlu0
        %v6659 = vpop.trf.xlu0
        %v6660 = vpop.trf.xlu0
        %v6661 = vpop.trf.xlu0
        %v6662 = vpop.trf.xlu0
        %6663 = vxpose.xlu0.c.b16.start [1/8] %v5273, 128
        %6664 = vxpose.xlu0.c.b16.cont [2/8] 0, 128
        %6665 = vxpose.xlu0.c.b16.cont [3/8] 0, 128
        %6666 = vxpose.xlu0.c.b16.cont [4/8] 0, 128
        %6667 = vxpose.xlu0.c.b16.cont [5/8] 0, 128
        %6668 = vxpose.xlu0.c.b16.cont [6/8] 0, 128
        %6669 = vxpose.xlu0.c.b16.cont [7/8] 0, 128
        %6670 = vxpose.xlu0.c.b16.end [8/8] 0, 128
        %v6671 = vpop.trf.xlu0
        %v6672 = vpop.trf.xlu0
        %v6673 = vpop.trf.xlu0
        %v6674 = vpop.trf.xlu0
        %v6675 = vpop.trf.xlu0
        %v6676 = vpop.trf.xlu0
        %v6677 = vpop.trf.xlu0
        %v6678 = vpop.trf.xlu0
        %6679 = vxpose.xlu0.c.b16.start [1/8] %v5274, 128
        %6680 = vxpose.xlu0.c.b16.cont [2/8] 0, 128
        %6681 = vxpose.xlu0.c.b16.cont [3/8] 0, 128
        %6682 = vxpose.xlu0.c.b16.cont [4/8] 0, 128
        %6683 = vxpose.xlu0.c.b16.cont [5/8] 0, 128
        %6684 = vxpose.xlu0.c.b16.cont [6/8] 0, 128
        %6685 = vxpose.xlu0.c.b16.cont [7/8] 0, 128
        %6686 = vxpose.xlu0.c.b16.end [8/8] 0, 128
        %v6687 = vpop.trf.xlu0
        %v6688 = vpop.trf.xlu0
        %v6689 = vpop.trf.xlu0
        %v6690 = vpop.trf.xlu0
        %v6691 = vpop.trf.xlu0
        %v6692 = vpop.trf.xlu0
        %v6693 = vpop.trf.xlu0
        %v6694 = vpop.trf.xlu0
        %6695 = vxpose.xlu0.c.b16.start [1/8] %v5275, 128
        %6696 = vxpose.xlu0.c.b16.cont [2/8] 0, 128
        %6697 = vxpose.xlu0.c.b16.cont [3/8] 0, 128
        %6698 = vxpose.xlu0.c.b16.cont [4/8] 0, 128
        %6699 = vxpose.xlu0.c.b16.cont [5/8] 0, 128
        %6700 = vxpose.xlu0.c.b16.cont [6/8] 0, 128
        %6701 = vxpose.xlu0.c.b16.cont [7/8] 0, 128
        %6702 = vxpose.xlu0.c.b16.end [8/8] 0, 128
        %v6703 = vpop.trf.xlu0
        %v6704 = vpop.trf.xlu0
        %v6705 = vpop.trf.xlu0
        %v6706 = vpop.trf.xlu0
        %v6707 = vpop.trf.xlu0
        %v6708 = vpop.trf.xlu0
        %v6709 = vpop.trf.xlu0
        %v6710 = vpop.trf.xlu0
        %6711 = vxpose.xlu0.c.b16.start [1/8] %v5276, 128
        %6712 = vxpose.xlu0.c.b16.cont [2/8] 0, 128
        %6713 = vxpose.xlu0.c.b16.cont [3/8] 0, 128
        %6714 = vxpose.xlu0.c.b16.cont [4/8] 0, 128
        %6715 = vxpose.xlu0.c.b16.cont [5/8] 0, 128
        %6716 = vxpose.xlu0.c.b16.cont [6/8] 0, 128
        %6717 = vxpose.xlu0.c.b16.cont [7/8] 0, 128
        %6718 = vxpose.xlu0.c.b16.end [8/8] 0, 128
        %v6719 = vpop.trf.xlu0
        %v6720 = vpop.trf.xlu0
        %v6721 = vpop.trf.xlu0
        %v6722 = vpop.trf.xlu0
        %v6723 = vpop.trf.xlu0
        %v6724 = vpop.trf.xlu0
        %v6725 = vpop.trf.xlu0
        %v6726 = vpop.trf.xlu0
        %6727 = vxpose.xlu0.c.b16.start [1/8] %v5277, 128
        %6728 = vxpose.xlu0.c.b16.cont [2/8] 0, 128
        %6729 = vxpose.xlu0.c.b16.cont [3/8] 0, 128
        %6730 = vxpose.xlu0.c.b16.cont [4/8] 0, 128
        %6731 = vxpose.xlu0.c.b16.cont [5/8] 0, 128
        %6732 = vxpose.xlu0.c.b16.cont [6/8] 0, 128
        %6733 = vxpose.xlu0.c.b16.cont [7/8] 0, 128
        %6734 = vxpose.xlu0.c.b16.end [8/8] 0, 128
        %v6735 = vpop.trf.xlu0
        %v6736 = vpop.trf.xlu0
        %v6737 = vpop.trf.xlu0
        %v6738 = vpop.trf.xlu0
        %v6739 = vpop.trf.xlu0
        %v6740 = vpop.trf.xlu0
        %v6741 = vpop.trf.xlu0
        %v6742 = vpop.trf.xlu0
        %6743 = vxpose.xlu0.c.b16.start [1/8] %v5278, 128
        %6744 = vxpose.xlu0.c.b16.cont [2/8] 0, 128
        %6745 = vxpose.xlu0.c.b16.cont [3/8] 0, 128
        %6746 = vxpose.xlu0.c.b16.cont [4/8] 0, 128
        %6747 = vxpose.xlu0.c.b16.cont [5/8] 0, 128
        %6748 = vxpose.xlu0.c.b16.cont [6/8] 0, 128
        %6749 = vxpose.xlu0.c.b16.cont [7/8] 0, 128
        %6750 = vxpose.xlu0.c.b16.end [8/8] 0, 128
        %v6751 = vpop.trf.xlu0
        %v6752 = vpop.trf.xlu0
        %v6753 = vpop.trf.xlu0
        %v6754 = vpop.trf.xlu0
        %v6755 = vpop.trf.xlu0
        %v6756 = vpop.trf.xlu0
        %v6757 = vpop.trf.xlu0
        %v6758 = vpop.trf.xlu0
        %6759 = vxpose.xlu0.c.b16.start [1/8] %v5279, 128
        %6760 = vxpose.xlu0.c.b16.cont [2/8] 0, 128
        %6761 = vxpose.xlu0.c.b16.cont [3/8] 0, 128
        %6762 = vxpose.xlu0.c.b16.cont [4/8] 0, 128
        %6763 = vxpose.xlu0.c.b16.cont [5/8] 0, 128
        %6764 = vxpose.xlu0.c.b16.cont [6/8] 0, 128
        %6765 = vxpose.xlu0.c.b16.cont [7/8] 0, 128
        %6766 = vxpose.xlu0.c.b16.end [8/8] 0, 128
        %v6767 = vpop.trf.xlu0
        %v6768 = vpop.trf.xlu0
        %v6769 = vpop.trf.xlu0
        %v6770 = vpop.trf.xlu0
        %v6771 = vpop.trf.xlu0
        %v6772 = vpop.trf.xlu0
        %v6773 = vpop.trf.xlu0
        %v6774 = vpop.trf.xlu0
        %6775 = vxpose.xlu0.c.b16.start [1/8] %v5280, 128
        %6776 = vxpose.xlu0.c.b16.cont [2/8] 0, 128
        %6777 = vxpose.xlu0.c.b16.cont [3/8] 0, 128
        %6778 = vxpose.xlu0.c.b16.cont [4/8] 0, 128
        %6779 = vxpose.xlu0.c.b16.cont [5/8] 0, 128
        %6780 = vxpose.xlu0.c.b16.cont [6/8] 0, 128
        %6781 = vxpose.xlu0.c.b16.cont [7/8] 0, 128
        %6782 = vxpose.xlu0.c.b16.end [8/8] 0, 128
        %v6783 = vpop.trf.xlu0
        %v6784 = vpop.trf.xlu0
        %v6785 = vpop.trf.xlu0
        %v6786 = vpop.trf.xlu0
        %v6787 = vpop.trf.xlu0
        %v6788 = vpop.trf.xlu0
        %v6789 = vpop.trf.xlu0
        %v6790 = vpop.trf.xlu0
        %6791 = vxpose.xlu0.c.b16.start [1/8] %v5281, 128
        %6792 = vxpose.xlu0.c.b16.cont [2/8] 0, 128
        %6793 = vxpose.xlu0.c.b16.cont [3/8] 0, 128
        %6794 = vxpose.xlu0.c.b16.cont [4/8] 0, 128
        %6795 = vxpose.xlu0.c.b16.cont [5/8] 0, 128
        %6796 = vxpose.xlu0.c.b16.cont [6/8] 0, 128
        %6797 = vxpose.xlu0.c.b16.cont [7/8] 0, 128
        %6798 = vxpose.xlu0.c.b16.end [8/8] 0, 128
        %v6799 = vpop.trf.xlu0
        %v6800 = vpop.trf.xlu0
        %v6801 = vpop.trf.xlu0
        %v6802 = vpop.trf.xlu0
        %v6803 = vpop.trf.xlu0
        %v6804 = vpop.trf.xlu0
        %v6805 = vpop.trf.xlu0
        %v6806 = vpop.trf.xlu0
        %6807 = vxpose.xlu0.c.b16.start [1/8] %v5282, 128
        %6808 = vxpose.xlu0.c.b16.cont [2/8] 0, 128
        %6809 = vxpose.xlu0.c.b16.cont [3/8] 0, 128
        %6810 = vxpose.xlu0.c.b16.cont [4/8] 0, 128
        %6811 = vxpose.xlu0.c.b16.cont [5/8] 0, 128
        %6812 = vxpose.xlu0.c.b16.cont [6/8] 0, 128
        %6813 = vxpose.xlu0.c.b16.cont [7/8] 0, 128
        %6814 = vxpose.xlu0.c.b16.end [8/8] 0, 128
        %v6815 = vpop.trf.xlu0
        %v6816 = vpop.trf.xlu0
        %v6817 = vpop.trf.xlu0
        %v6818 = vpop.trf.xlu0
        %v6819 = vpop.trf.xlu0
        %v6820 = vpop.trf.xlu0
        %v6821 = vpop.trf.xlu0
        %v6822 = vpop.trf.xlu0
        %6823 = vxpose.xlu0.c.b16.start [1/8] %v5283, 128
        %6824 = vxpose.xlu0.c.b16.cont [2/8] 0, 128
        %6825 = vxpose.xlu0.c.b16.cont [3/8] 0, 128
        %6826 = vxpose.xlu0.c.b16.cont [4/8] 0, 128
        %6827 = vxpose.xlu0.c.b16.cont [5/8] 0, 128
        %6828 = vxpose.xlu0.c.b16.cont [6/8] 0, 128
        %6829 = vxpose.xlu0.c.b16.cont [7/8] 0, 128
        %6830 = vxpose.xlu0.c.b16.end [8/8] 0, 128
        %v6831 = vpop.trf.xlu0
        %v6832 = vpop.trf.xlu0
        %v6833 = vpop.trf.xlu0
        %v6834 = vpop.trf.xlu0
        %v6835 = vpop.trf.xlu0
        %v6836 = vpop.trf.xlu0
        %v6837 = vpop.trf.xlu0
        %v6838 = vpop.trf.xlu0
        %6839 = vxpose.xlu0.c.b16.start [1/8] %v5284, 128
        %6840 = vxpose.xlu0.c.b16.cont [2/8] 0, 128
        %6841 = vxpose.xlu0.c.b16.cont [3/8] 0, 128
        %6842 = vxpose.xlu0.c.b16.cont [4/8] 0, 128
        %6843 = vxpose.xlu0.c.b16.cont [5/8] 0, 128
        %6844 = vxpose.xlu0.c.b16.cont [6/8] 0, 128
        %6845 = vxpose.xlu0.c.b16.cont [7/8] 0, 128
        %6846 = vxpose.xlu0.c.b16.end [8/8] 0, 128
        %v6847 = vpop.trf.xlu0
        %v6848 = vpop.trf.xlu0
        %v6849 = vpop.trf.xlu0
        %v6850 = vpop.trf.xlu0
        %v6851 = vpop.trf.xlu0
        %v6852 = vpop.trf.xlu0
        %v6853 = vpop.trf.xlu0
        %v6854 = vpop.trf.xlu0
        %6855 = vxpose.xlu0.c.b16.start [1/8] %v5285, 128
        %6856 = vxpose.xlu0.c.b16.cont [2/8] 0, 128
        %6857 = vxpose.xlu0.c.b16.cont [3/8] 0, 128
        %6858 = vxpose.xlu0.c.b16.cont [4/8] 0, 128
        %6859 = vxpose.xlu0.c.b16.cont [5/8] 0, 128
        %6860 = vxpose.xlu0.c.b16.cont [6/8] 0, 128
        %6861 = vxpose.xlu0.c.b16.cont [7/8] 0, 128
        %6862 = vxpose.xlu0.c.b16.end [8/8] 0, 128
        %v6863 = vpop.trf.xlu0
        %v6864 = vpop.trf.xlu0
        %v6865 = vpop.trf.xlu0
        %v6866 = vpop.trf.xlu0
        %v6867 = vpop.trf.xlu0
        %v6868 = vpop.trf.xlu0
        %v6869 = vpop.trf.xlu0
        %v6870 = vpop.trf.xlu0
        %6871 = vxpose.xlu0.c.b16.start [1/8] %v5286, 128
        %6872 = vxpose.xlu0.c.b16.cont [2/8] 0, 128
        %6873 = vxpose.xlu0.c.b16.cont [3/8] 0, 128
        %6874 = vxpose.xlu0.c.b16.cont [4/8] 0, 128
        %6875 = vxpose.xlu0.c.b16.cont [5/8] 0, 128
        %6876 = vxpose.xlu0.c.b16.cont [6/8] 0, 128
        %6877 = vxpose.xlu0.c.b16.cont [7/8] 0, 128
        %6878 = vxpose.xlu0.c.b16.end [8/8] 0, 128
        %v6879 = vpop.trf.xlu0
        %v6880 = vpop.trf.xlu0
        %v6881 = vpop.trf.xlu0
        %v6882 = vpop.trf.xlu0
        %v6883 = vpop.trf.xlu0
        %v6884 = vpop.trf.xlu0
        %v6885 = vpop.trf.xlu0
        %v6886 = vpop.trf.xlu0
        %v6887 = vcombine.low %v6639, %v6703
        %v6888 = vcombine.high %v6639, %v6703
        %v6890 = vunpack.c.l.s4 1983009808
        %v6891 = vunpack.c.0.s8 %v6890
        %v6892 = vlaneseq
        %v6893 = vshrl.u32 %v6892, 7
        %v6894 = vsub.s32 %v6891, %v6893
        %v6895 = vrot.slane %v6887, %v6894
        %v6897 = vunpack.c.l.s4 1983009808
        %v6898 = vunpack.c.0.s8 %v6897
        %v6899 = vlaneseq
        %v6900 = vshrl.u32 %v6899, 7
        %v6901 = vsub.s32 %v6898, %v6900
        %v6902 = vrot.slane %v6888, %v6901
        %v6903 = vcombine.low %v6671, %v6735
        %v6904 = vcombine.high %v6671, %v6735
        %v6906 = vunpack.c.l.s4 1983009808
        %v6907 = vunpack.c.0.s8 %v6906
        %v6908 = vlaneseq
        %v6909 = vshrl.u32 %v6908, 7
        %v6910 = vsub.s32 %v6907, %v6909
        %v6911 = vrot.slane %v6903, %v6910
        %v6913 = vunpack.c.l.s4 1983009808
        %v6914 = vunpack.c.0.s8 %v6913
        %v6915 = vlaneseq
        %v6916 = vshrl.u32 %v6915, 7
        %v6917 = vsub.s32 %v6914, %v6916
        %v6918 = vrot.slane %v6904, %v6917
        %v6919 = vcombine.low %v6767, %v6831
        %v6920 = vcombine.high %v6767, %v6831
        %v6922 = vunpack.c.l.s4 1983009808
        %v6923 = vunpack.c.0.s8 %v6922
        %v6924 = vlaneseq
        %v6925 = vshrl.u32 %v6924, 7
        %v6926 = vsub.s32 %v6923, %v6925
        %v6927 = vrot.slane %v6919, %v6926
        %v6929 = vunpack.c.l.s4 1983009808
        %v6930 = vunpack.c.0.s8 %v6929
        %v6931 = vlaneseq
        %v6932 = vshrl.u32 %v6931, 7
        %v6933 = vsub.s32 %v6930, %v6932
        %v6934 = vrot.slane %v6920, %v6933
        %v6935 = vcombine.low %v6799, %v6863
        %v6936 = vcombine.high %v6799, %v6863
        %v6938 = vunpack.c.l.s4 1983009808
        %v6939 = vunpack.c.0.s8 %v6938
        %v6940 = vlaneseq
        %v6941 = vshrl.u32 %v6940, 7
        %v6942 = vsub.s32 %v6939, %v6941
        %v6943 = vrot.slane %v6935, %v6942
        %v6945 = vunpack.c.l.s4 1983009808
        %v6946 = vunpack.c.0.s8 %v6945
        %v6947 = vlaneseq
        %v6948 = vshrl.u32 %v6947, 7
        %v6949 = vsub.s32 %v6946, %v6948
        %v6950 = vrot.slane %v6936, %v6949
        %v6951 = vcombine.low %v6895, %v6911
        %v6952 = vcombine.high %v6895, %v6911
        %v6954 = vunpack.c.l.s4 1934713408
        %v6955 = vunpack.c.0.s8 %v6954
        %v6956 = vlaneseq
        %v6957 = vshrl.u32 %v6956, 7
        %v6958 = vsub.s32 %v6955, %v6957
        %v6959 = vrot.slane %v6951, %v6958
        %v6961 = vunpack.c.l.s4 1934713408
        %v6962 = vunpack.c.0.s8 %v6961
        %v6963 = vlaneseq
        %v6964 = vshrl.u32 %v6963, 7
        %v6965 = vsub.s32 %v6962, %v6964
        %v6966 = vrot.slane %v6952, %v6965
        %v6967 = vcombine.low %v6902, %v6918
        %v6968 = vcombine.high %v6902, %v6918
        %v6970 = vunpack.c.l.s4 1934713408
        %v6971 = vunpack.c.0.s8 %v6970
        %v6972 = vlaneseq
        %v6973 = vshrl.u32 %v6972, 7
        %v6974 = vsub.s32 %v6971, %v6973
        %v6975 = vrot.slane %v6967, %v6974
        %v6977 = vunpack.c.l.s4 1934713408
        %v6978 = vunpack.c.0.s8 %v6977
        %v6979 = vlaneseq
        %v6980 = vshrl.u32 %v6979, 7
        %v6981 = vsub.s32 %v6978, %v6980
        %v6982 = vrot.slane %v6968, %v6981
        %v6983 = vcombine.low %v6927, %v6943
        %v6984 = vcombine.high %v6927, %v6943
        %v6986 = vunpack.c.l.s4 1934713408
        %v6987 = vunpack.c.0.s8 %v6986
        %v6988 = vlaneseq
        %v6989 = vshrl.u32 %v6988, 7
        %v6990 = vsub.s32 %v6987, %v6989
        %v6991 = vrot.slane %v6983, %v6990
        %v6993 = vunpack.c.l.s4 1934713408
        %v6994 = vunpack.c.0.s8 %v6993
        %v6995 = vlaneseq
        %v6996 = vshrl.u32 %v6995, 7
        %v6997 = vsub.s32 %v6994, %v6996
        %v6998 = vrot.slane %v6984, %v6997
        %v6999 = vcombine.low %v6934, %v6950
        %v7000 = vcombine.high %v6934, %v6950
        %v7002 = vunpack.c.l.s4 1934713408
        %v7003 = vunpack.c.0.s8 %v7002
        %v7004 = vlaneseq
        %v7005 = vshrl.u32 %v7004, 7
        %v7006 = vsub.s32 %v7003, %v7005
        %v7007 = vrot.slane %v6999, %v7006
        %v7009 = vunpack.c.l.s4 1934713408
        %v7010 = vunpack.c.0.s8 %v7009
        %v7011 = vlaneseq
        %v7012 = vshrl.u32 %v7011, 7
        %v7013 = vsub.s32 %v7010, %v7012
        %v7014 = vrot.slane %v7000, %v7013
        %v7015 = vcombine.low %v6959, %v6991
        %v7016 = vcombine.high %v6959, %v6991
        %v7017 = vcombine.low %v6966, %v6998
        %v7018 = vcombine.high %v6966, %v6998
        %v7019 = vcombine.low %v6975, %v7007
        %v7020 = vcombine.high %v6975, %v7007
        %v7021 = vcombine.low %v6982, %v7014
        %v7022 = vcombine.high %v6982, %v7014
        %v7023 = vcombine.low %v6655, %v6719
        %v7024 = vcombine.high %v6655, %v6719
        %v7026 = vunpack.c.l.s4 1983009808
        %v7027 = vunpack.c.0.s8 %v7026
        %v7028 = vlaneseq
        %v7029 = vshrl.u32 %v7028, 7
        %v7030 = vsub.s32 %v7027, %v7029
        %v7031 = vrot.slane %v7023, %v7030
        %v7033 = vunpack.c.l.s4 1983009808
        %v7034 = vunpack.c.0.s8 %v7033
        %v7035 = vlaneseq
        %v7036 = vshrl.u32 %v7035, 7
        %v7037 = vsub.s32 %v7034, %v7036
        %v7038 = vrot.slane %v7024, %v7037
        %v7039 = vcombine.low %v6687, %v6751
        %v7040 = vcombine.high %v6687, %v6751
        %v7042 = vunpack.c.l.s4 1983009808
        %v7043 = vunpack.c.0.s8 %v7042
        %v7044 = vlaneseq
        %v7045 = vshrl.u32 %v7044, 7
        %v7046 = vsub.s32 %v7043, %v7045
        %v7047 = vrot.slane %v7039, %v7046
        %v7049 = vunpack.c.l.s4 1983009808
        %v7050 = vunpack.c.0.s8 %v7049
        %v7051 = vlaneseq
        %v7052 = vshrl.u32 %v7051, 7
        %v7053 = vsub.s32 %v7050, %v7052
        %v7054 = vrot.slane %v7040, %v7053
        %v7055 = vcombine.low %v6783, %v6847
        %v7056 = vcombine.high %v6783, %v6847
        %v7058 = vunpack.c.l.s4 1983009808
        %v7059 = vunpack.c.0.s8 %v7058
        %v7060 = vlaneseq
        %v7061 = vshrl.u32 %v7060, 7
        %v7062 = vsub.s32 %v7059, %v7061
        %v7063 = vrot.slane %v7055, %v7062
        %v7065 = vunpack.c.l.s4 1983009808
        %v7066 = vunpack.c.0.s8 %v7065
        %v7067 = vlaneseq
        %v7068 = vshrl.u32 %v7067, 7
        %v7069 = vsub.s32 %v7066, %v7068
        %v7070 = vrot.slane %v7056, %v7069
        %v7071 = vcombine.low %v6815, %v6879
        %v7072 = vcombine.high %v6815, %v6879
        %v7074 = vunpack.c.l.s4 1983009808
        %v7075 = vunpack.c.0.s8 %v7074
        %v7076 = vlaneseq
        %v7077 = vshrl.u32 %v7076, 7
        %v7078 = vsub.s32 %v7075, %v7077
        %v7079 = vrot.slane %v7071, %v7078
        %v7081 = vunpack.c.l.s4 1983009808
        %v7082 = vunpack.c.0.s8 %v7081
        %v7083 = vlaneseq
        %v7084 = vshrl.u32 %v7083, 7
        %v7085 = vsub.s32 %v7082, %v7084
        %v7086 = vrot.slane %v7072, %v7085
        %v7087 = vcombine.low %v7031, %v7047
        %v7088 = vcombine.high %v7031, %v7047
        %v7090 = vunpack.c.l.s4 1934713408
        %v7091 = vunpack.c.0.s8 %v7090
        %v7092 = vlaneseq
        %v7093 = vshrl.u32 %v7092, 7
        %v7094 = vsub.s32 %v7091, %v7093
        %v7095 = vrot.slane %v7087, %v7094
        %v7097 = vunpack.c.l.s4 1934713408
        %v7098 = vunpack.c.0.s8 %v7097
        %v7099 = vlaneseq
        %v7100 = vshrl.u32 %v7099, 7
        %v7101 = vsub.s32 %v7098, %v7100
        %v7102 = vrot.slane %v7088, %v7101
        %v7103 = vcombine.low %v7038, %v7054
        %v7104 = vcombine.high %v7038, %v7054
        %v7106 = vunpack.c.l.s4 1934713408
        %v7107 = vunpack.c.0.s8 %v7106
        %v7108 = vlaneseq
        %v7109 = vshrl.u32 %v7108, 7
        %v7110 = vsub.s32 %v7107, %v7109
        %v7111 = vrot.slane %v7103, %v7110
        %v7113 = vunpack.c.l.s4 1934713408
        %v7114 = vunpack.c.0.s8 %v7113
        %v7115 = vlaneseq
        %v7116 = vshrl.u32 %v7115, 7
        %v7117 = vsub.s32 %v7114, %v7116
        %v7118 = vrot.slane %v7104, %v7117
        %v7119 = vcombine.low %v7063, %v7079
        %v7120 = vcombine.high %v7063, %v7079
        %v7122 = vunpack.c.l.s4 1934713408
        %v7123 = vunpack.c.0.s8 %v7122
        %v7124 = vlaneseq
        %v7125 = vshrl.u32 %v7124, 7
        %v7126 = vsub.s32 %v7123, %v7125
        %v7127 = vrot.slane %v7119, %v7126
        %v7129 = vunpack.c.l.s4 1934713408
        %v7130 = vunpack.c.0.s8 %v7129
        %v7131 = vlaneseq
        %v7132 = vshrl.u32 %v7131, 7
        %v7133 = vsub.s32 %v7130, %v7132
        %v7134 = vrot.slane %v7120, %v7133
        %v7135 = vcombine.low %v7070, %v7086
        %v7136 = vcombine.high %v7070, %v7086
        %v7138 = vunpack.c.l.s4 1934713408
        %v7139 = vunpack.c.0.s8 %v7138
        %v7140 = vlaneseq
        %v7141 = vshrl.u32 %v7140, 7
        %v7142 = vsub.s32 %v7139, %v7141
        %v7143 = vrot.slane %v7135, %v7142
        %v7145 = vunpack.c.l.s4 1934713408
        %v7146 = vunpack.c.0.s8 %v7145
        %v7147 = vlaneseq
        %v7148 = vshrl.u32 %v7147, 7
        %v7149 = vsub.s32 %v7146, %v7148
        %v7150 = vrot.slane %v7136, %v7149
        %v7151 = vcombine.low %v7095, %v7127
        %v7152 = vcombine.high %v7095, %v7127
        %v7153 = vcombine.low %v7102, %v7134
        %v7154 = vcombine.high %v7102, %v7134
        %v7155 = vcombine.low %v7111, %v7143
        %v7156 = vcombine.high %v7111, %v7143
        %v7157 = vcombine.low %v7118, %v7150
        %v7158 = vcombine.high %v7118, %v7150
        %v7161 = vpack.i.b16 %v7151, %v7015
        %v7163 = vshrl.u32 %v7015, 16
        %v7164 = vshrl.u32 %v7151, 16
        %v7165 = vpack.i.b16 %v7164, %v7163
        %v7169 = vpack.i.b16 %v7152, %v7016
        %v7171 = vshrl.u32 %v7016, 16
        %v7172 = vshrl.u32 %v7152, 16
        %v7173 = vpack.i.b16 %v7172, %v7171
        %v7177 = vpack.i.b16 %v7153, %v7017
        %v7179 = vshrl.u32 %v7017, 16
        %v7180 = vshrl.u32 %v7153, 16
        %v7181 = vpack.i.b16 %v7180, %v7179
        %v7185 = vpack.i.b16 %v7154, %v7018
        %v7187 = vshrl.u32 %v7018, 16
        %v7188 = vshrl.u32 %v7154, 16
        %v7189 = vpack.i.b16 %v7188, %v7187
        %v7193 = vpack.i.b16 %v7155, %v7019
        %v7195 = vshrl.u32 %v7019, 16
        %v7196 = vshrl.u32 %v7155, 16
        %v7197 = vpack.i.b16 %v7196, %v7195
        %v7201 = vpack.i.b16 %v7156, %v7020
        %v7203 = vshrl.u32 %v7020, 16
        %v7204 = vshrl.u32 %v7156, 16
        %v7205 = vpack.i.b16 %v7204, %v7203
        %v7209 = vpack.i.b16 %v7157, %v7021
        %v7211 = vshrl.u32 %v7021, 16
        %v7212 = vshrl.u32 %v7157, 16
        %v7213 = vpack.i.b16 %v7212, %v7211
        %v7217 = vpack.i.b16 %v7158, %v7022
        %v7219 = vshrl.u32 %v7022, 16
        %v7220 = vshrl.u32 %v7158, 16
        %v7221 = vpack.i.b16 %v7220, %v7219
        %7223 = vxpose.xlu0.c.b16.start [1/8] %v7161, 128
        %7224 = vxpose.xlu0.c.b16.cont [2/8] 0, 128
        %7225 = vxpose.xlu0.c.b16.cont [3/8] 0, 128
        %7226 = vxpose.xlu0.c.b16.cont [4/8] 0, 128
        %7227 = vxpose.xlu0.c.b16.cont [5/8] 0, 128
        %7228 = vxpose.xlu0.c.b16.cont [6/8] 0, 128
        %7229 = vxpose.xlu0.c.b16.cont [7/8] 0, 128
        %7230 = vxpose.xlu0.c.b16.end [8/8] 0, 128
        %v7231 = vpop.trf.xlu0
        %v7232 = vpop.trf.xlu0
        %v7233 = vpop.trf.xlu0
        %v7234 = vpop.trf.xlu0
        %v7235 = vpop.trf.xlu0
        %v7236 = vpop.trf.xlu0
        %v7237 = vpop.trf.xlu0
        %v7238 = vpop.trf.xlu0
        %7239 = vxpose.xlu0.c.b16.start [1/8] %v7165, 128
        %7240 = vxpose.xlu0.c.b16.cont [2/8] 0, 128
        %7241 = vxpose.xlu0.c.b16.cont [3/8] 0, 128
        %7242 = vxpose.xlu0.c.b16.cont [4/8] 0, 128
        %7243 = vxpose.xlu0.c.b16.cont [5/8] 0, 128
        %7244 = vxpose.xlu0.c.b16.cont [6/8] 0, 128
        %7245 = vxpose.xlu0.c.b16.cont [7/8] 0, 128
        %7246 = vxpose.xlu0.c.b16.end [8/8] 0, 128
        %v7247 = vpop.trf.xlu0
        %v7248 = vpop.trf.xlu0
        %v7249 = vpop.trf.xlu0
        %v7250 = vpop.trf.xlu0
        %v7251 = vpop.trf.xlu0
        %v7252 = vpop.trf.xlu0
        %v7253 = vpop.trf.xlu0
        %v7254 = vpop.trf.xlu0
        %7255 = vxpose.xlu0.c.b16.start [1/8] %v7169, 128
        %7256 = vxpose.xlu0.c.b16.cont [2/8] 0, 128
        %7257 = vxpose.xlu0.c.b16.cont [3/8] 0, 128
        %7258 = vxpose.xlu0.c.b16.cont [4/8] 0, 128
        %7259 = vxpose.xlu0.c.b16.cont [5/8] 0, 128
        %7260 = vxpose.xlu0.c.b16.cont [6/8] 0, 128
        %7261 = vxpose.xlu0.c.b16.cont [7/8] 0, 128
        %7262 = vxpose.xlu0.c.b16.end [8/8] 0, 128
        %v7263 = vpop.trf.xlu0
        %v7264 = vpop.trf.xlu0
        %v7265 = vpop.trf.xlu0
        %v7266 = vpop.trf.xlu0
        %v7267 = vpop.trf.xlu0
        %v7268 = vpop.trf.xlu0
        %v7269 = vpop.trf.xlu0
        %v7270 = vpop.trf.xlu0
        %7271 = vxpose.xlu0.c.b16.start [1/8] %v7173, 128
        %7272 = vxpose.xlu0.c.b16.cont [2/8] 0, 128
        %7273 = vxpose.xlu0.c.b16.cont [3/8] 0, 128
        %7274 = vxpose.xlu0.c.b16.cont [4/8] 0, 128
        %7275 = vxpose.xlu0.c.b16.cont [5/8] 0, 128
        %7276 = vxpose.xlu0.c.b16.cont [6/8] 0, 128
        %7277 = vxpose.xlu0.c.b16.cont [7/8] 0, 128
        %7278 = vxpose.xlu0.c.b16.end [8/8] 0, 128
        %v7279 = vpop.trf.xlu0
        %v7280 = vpop.trf.xlu0
        %v7281 = vpop.trf.xlu0
        %v7282 = vpop.trf.xlu0
        %v7283 = vpop.trf.xlu0
        %v7284 = vpop.trf.xlu0
        %v7285 = vpop.trf.xlu0
        %v7286 = vpop.trf.xlu0
        %7287 = vxpose.xlu0.c.b16.start [1/8] %v7177, 128
        %7288 = vxpose.xlu0.c.b16.cont [2/8] 0, 128
        %7289 = vxpose.xlu0.c.b16.cont [3/8] 0, 128
        %7290 = vxpose.xlu0.c.b16.cont [4/8] 0, 128
        %7291 = vxpose.xlu0.c.b16.cont [5/8] 0, 128
        %7292 = vxpose.xlu0.c.b16.cont [6/8] 0, 128
        %7293 = vxpose.xlu0.c.b16.cont [7/8] 0, 128
        %7294 = vxpose.xlu0.c.b16.end [8/8] 0, 128
        %v7295 = vpop.trf.xlu0
        %v7296 = vpop.trf.xlu0
        %v7297 = vpop.trf.xlu0
        %v7298 = vpop.trf.xlu0
        %v7299 = vpop.trf.xlu0
        %v7300 = vpop.trf.xlu0
        %v7301 = vpop.trf.xlu0
        %v7302 = vpop.trf.xlu0
        %7303 = vxpose.xlu0.c.b16.start [1/8] %v7181, 128
        %7304 = vxpose.xlu0.c.b16.cont [2/8] 0, 128
        %7305 = vxpose.xlu0.c.b16.cont [3/8] 0, 128
        %7306 = vxpose.xlu0.c.b16.cont [4/8] 0, 128
        %7307 = vxpose.xlu0.c.b16.cont [5/8] 0, 128
        %7308 = vxpose.xlu0.c.b16.cont [6/8] 0, 128
        %7309 = vxpose.xlu0.c.b16.cont [7/8] 0, 128
        %7310 = vxpose.xlu0.c.b16.end [8/8] 0, 128
        %v7311 = vpop.trf.xlu0
        %v7312 = vpop.trf.xlu0
        %v7313 = vpop.trf.xlu0
        %v7314 = vpop.trf.xlu0
        %v7315 = vpop.trf.xlu0
        %v7316 = vpop.trf.xlu0
        %v7317 = vpop.trf.xlu0
        %v7318 = vpop.trf.xlu0
        %7319 = vxpose.xlu0.c.b16.start [1/8] %v7185, 128
        %7320 = vxpose.xlu0.c.b16.cont [2/8] 0, 128
        %7321 = vxpose.xlu0.c.b16.cont [3/8] 0, 128
        %7322 = vxpose.xlu0.c.b16.cont [4/8] 0, 128
        %7323 = vxpose.xlu0.c.b16.cont [5/8] 0, 128
        %7324 = vxpose.xlu0.c.b16.cont [6/8] 0, 128
        %7325 = vxpose.xlu0.c.b16.cont [7/8] 0, 128
        %7326 = vxpose.xlu0.c.b16.end [8/8] 0, 128
        %v7327 = vpop.trf.xlu0
        %v7328 = vpop.trf.xlu0
        %v7329 = vpop.trf.xlu0
        %v7330 = vpop.trf.xlu0
        %v7331 = vpop.trf.xlu0
        %v7332 = vpop.trf.xlu0
        %v7333 = vpop.trf.xlu0
        %v7334 = vpop.trf.xlu0
        %7335 = vxpose.xlu0.c.b16.start [1/8] %v7189, 128
        %7336 = vxpose.xlu0.c.b16.cont [2/8] 0, 128
        %7337 = vxpose.xlu0.c.b16.cont [3/8] 0, 128
        %7338 = vxpose.xlu0.c.b16.cont [4/8] 0, 128
        %7339 = vxpose.xlu0.c.b16.cont [5/8] 0, 128
        %7340 = vxpose.xlu0.c.b16.cont [6/8] 0, 128
        %7341 = vxpose.xlu0.c.b16.cont [7/8] 0, 128
        %7342 = vxpose.xlu0.c.b16.end [8/8] 0, 128
        %v7343 = vpop.trf.xlu0
        %v7344 = vpop.trf.xlu0
        %v7345 = vpop.trf.xlu0
        %v7346 = vpop.trf.xlu0
        %v7347 = vpop.trf.xlu0
        %v7348 = vpop.trf.xlu0
        %v7349 = vpop.trf.xlu0
        %v7350 = vpop.trf.xlu0
        %7351 = vxpose.xlu0.c.b16.start [1/8] %v7193, 128
        %7352 = vxpose.xlu0.c.b16.cont [2/8] 0, 128
        %7353 = vxpose.xlu0.c.b16.cont [3/8] 0, 128
        %7354 = vxpose.xlu0.c.b16.cont [4/8] 0, 128
        %7355 = vxpose.xlu0.c.b16.cont [5/8] 0, 128
        %7356 = vxpose.xlu0.c.b16.cont [6/8] 0, 128
        %7357 = vxpose.xlu0.c.b16.cont [7/8] 0, 128
        %7358 = vxpose.xlu0.c.b16.end [8/8] 0, 128
        %v7359 = vpop.trf.xlu0
        %v7360 = vpop.trf.xlu0
        %v7361 = vpop.trf.xlu0
        %v7362 = vpop.trf.xlu0
        %v7363 = vpop.trf.xlu0
        %v7364 = vpop.trf.xlu0
        %v7365 = vpop.trf.xlu0
        %v7366 = vpop.trf.xlu0
        %7367 = vxpose.xlu0.c.b16.start [1/8] %v7197, 128
        %7368 = vxpose.xlu0.c.b16.cont [2/8] 0, 128
        %7369 = vxpose.xlu0.c.b16.cont [3/8] 0, 128
        %7370 = vxpose.xlu0.c.b16.cont [4/8] 0, 128
        %7371 = vxpose.xlu0.c.b16.cont [5/8] 0, 128
        %7372 = vxpose.xlu0.c.b16.cont [6/8] 0, 128
        %7373 = vxpose.xlu0.c.b16.cont [7/8] 0, 128
        %7374 = vxpose.xlu0.c.b16.end [8/8] 0, 128
        %v7375 = vpop.trf.xlu0
        %v7376 = vpop.trf.xlu0
        %v7377 = vpop.trf.xlu0
        %v7378 = vpop.trf.xlu0
        %v7379 = vpop.trf.xlu0
        %v7380 = vpop.trf.xlu0
        %v7381 = vpop.trf.xlu0
        %v7382 = vpop.trf.xlu0
        %7383 = vxpose.xlu0.c.b16.start [1/8] %v7201, 128
        %7384 = vxpose.xlu0.c.b16.cont [2/8] 0, 128
        %7385 = vxpose.xlu0.c.b16.cont [3/8] 0, 128
        %7386 = vxpose.xlu0.c.b16.cont [4/8] 0, 128
        %7387 = vxpose.xlu0.c.b16.cont [5/8] 0, 128
        %7388 = vxpose.xlu0.c.b16.cont [6/8] 0, 128
        %7389 = vxpose.xlu0.c.b16.cont [7/8] 0, 128
        %7390 = vxpose.xlu0.c.b16.end [8/8] 0, 128
        %v7391 = vpop.trf.xlu0
        %v7392 = vpop.trf.xlu0
        %v7393 = vpop.trf.xlu0
        %v7394 = vpop.trf.xlu0
        %v7395 = vpop.trf.xlu0
        %v7396 = vpop.trf.xlu0
        %v7397 = vpop.trf.xlu0
        %v7398 = vpop.trf.xlu0
        %7399 = vxpose.xlu0.c.b16.start [1/8] %v7205, 128
        %7400 = vxpose.xlu0.c.b16.cont [2/8] 0, 128
        %7401 = vxpose.xlu0.c.b16.cont [3/8] 0, 128
        %7402 = vxpose.xlu0.c.b16.cont [4/8] 0, 128
        %7403 = vxpose.xlu0.c.b16.cont [5/8] 0, 128
        %7404 = vxpose.xlu0.c.b16.cont [6/8] 0, 128
        %7405 = vxpose.xlu0.c.b16.cont [7/8] 0, 128
        %7406 = vxpose.xlu0.c.b16.end [8/8] 0, 128
        %v7407 = vpop.trf.xlu0
        %v7408 = vpop.trf.xlu0
        %v7409 = vpop.trf.xlu0
        %v7410 = vpop.trf.xlu0
        %v7411 = vpop.trf.xlu0
        %v7412 = vpop.trf.xlu0
        %v7413 = vpop.trf.xlu0
        %v7414 = vpop.trf.xlu0
        %7415 = vxpose.xlu0.c.b16.start [1/8] %v7209, 128
        %7416 = vxpose.xlu0.c.b16.cont [2/8] 0, 128
        %7417 = vxpose.xlu0.c.b16.cont [3/8] 0, 128
        %7418 = vxpose.xlu0.c.b16.cont [4/8] 0, 128
        %7419 = vxpose.xlu0.c.b16.cont [5/8] 0, 128
        %7420 = vxpose.xlu0.c.b16.cont [6/8] 0, 128
        %7421 = vxpose.xlu0.c.b16.cont [7/8] 0, 128
        %7422 = vxpose.xlu0.c.b16.end [8/8] 0, 128
        %v7423 = vpop.trf.xlu0
        %v7424 = vpop.trf.xlu0
        %v7425 = vpop.trf.xlu0
        %v7426 = vpop.trf.xlu0
        %v7427 = vpop.trf.xlu0
        %v7428 = vpop.trf.xlu0
        %v7429 = vpop.trf.xlu0
        %v7430 = vpop.trf.xlu0
        %7431 = vxpose.xlu0.c.b16.start [1/8] %v7213, 128
        %7432 = vxpose.xlu0.c.b16.cont [2/8] 0, 128
        %7433 = vxpose.xlu0.c.b16.cont [3/8] 0, 128
        %7434 = vxpose.xlu0.c.b16.cont [4/8] 0, 128
        %7435 = vxpose.xlu0.c.b16.cont [5/8] 0, 128
        %7436 = vxpose.xlu0.c.b16.cont [6/8] 0, 128
        %7437 = vxpose.xlu0.c.b16.cont [7/8] 0, 128
        %7438 = vxpose.xlu0.c.b16.end [8/8] 0, 128
        %v7439 = vpop.trf.xlu0
        %v7440 = vpop.trf.xlu0
        %v7441 = vpop.trf.xlu0
        %v7442 = vpop.trf.xlu0
        %v7443 = vpop.trf.xlu0
        %v7444 = vpop.trf.xlu0
        %v7445 = vpop.trf.xlu0
        %v7446 = vpop.trf.xlu0
        %7447 = vxpose.xlu0.c.b16.start [1/8] %v7217, 128
        %7448 = vxpose.xlu0.c.b16.cont [2/8] 0, 128
        %7449 = vxpose.xlu0.c.b16.cont [3/8] 0, 128
        %7450 = vxpose.xlu0.c.b16.cont [4/8] 0, 128
        %7451 = vxpose.xlu0.c.b16.cont [5/8] 0, 128
        %7452 = vxpose.xlu0.c.b16.cont [6/8] 0, 128
        %7453 = vxpose.xlu0.c.b16.cont [7/8] 0, 128
        %7454 = vxpose.xlu0.c.b16.end [8/8] 0, 128
        %v7455 = vpop.trf.xlu0
        %v7456 = vpop.trf.xlu0
        %v7457 = vpop.trf.xlu0
        %v7458 = vpop.trf.xlu0
        %v7459 = vpop.trf.xlu0
        %v7460 = vpop.trf.xlu0
        %v7461 = vpop.trf.xlu0
        %v7462 = vpop.trf.xlu0
        %7463 = vxpose.xlu0.c.b16.start [1/8] %v7221, 128
        %7464 = vxpose.xlu0.c.b16.cont [2/8] 0, 128
        %7465 = vxpose.xlu0.c.b16.cont [3/8] 0, 128
        %7466 = vxpose.xlu0.c.b16.cont [4/8] 0, 128
        %7467 = vxpose.xlu0.c.b16.cont [5/8] 0, 128
        %7468 = vxpose.xlu0.c.b16.cont [6/8] 0, 128
        %7469 = vxpose.xlu0.c.b16.cont [7/8] 0, 128
        %7470 = vxpose.xlu0.c.b16.end [8/8] 0, 128
        %v7471 = vpop.trf.xlu0
        %v7472 = vpop.trf.xlu0
        %v7473 = vpop.trf.xlu0
        %v7474 = vpop.trf.xlu0
        %v7475 = vpop.trf.xlu0
        %v7476 = vpop.trf.xlu0
        %v7477 = vpop.trf.xlu0
        %v7478 = vpop.trf.xlu0
        %v7479 = vcombine.low %v7231, %v7295
        %v7481 = vunpack.c.l.s4 1983009808
        %v7482 = vunpack.c.0.s8 %v7481
        %v7483 = vlaneseq
        %v7484 = vshrl.u32 %v7483, 7
        %v7485 = vsub.s32 %v7482, %v7484
        %v7486 = vrot.slane %v7479, %v7485
        %v7487 = vcombine.low %v7263, %v7327
        %v7489 = vunpack.c.l.s4 1983009808
        %v7490 = vunpack.c.0.s8 %v7489
        %v7491 = vlaneseq
        %v7492 = vshrl.u32 %v7491, 7
        %v7493 = vsub.s32 %v7490, %v7492
        %v7494 = vrot.slane %v7487, %v7493
        %v7495 = vcombine.low %v7359, %v7423
        %v7497 = vunpack.c.l.s4 1983009808
        %v7498 = vunpack.c.0.s8 %v7497
        %v7499 = vlaneseq
        %v7500 = vshrl.u32 %v7499, 7
        %v7501 = vsub.s32 %v7498, %v7500
        %v7502 = vrot.slane %v7495, %v7501
        %v7503 = vcombine.low %v7391, %v7455
        %v7505 = vunpack.c.l.s4 1983009808
        %v7506 = vunpack.c.0.s8 %v7505
        %v7507 = vlaneseq
        %v7508 = vshrl.u32 %v7507, 7
        %v7509 = vsub.s32 %v7506, %v7508
        %v7510 = vrot.slane %v7503, %v7509
        %v7511 = vcombine.low %v7486, %v7494
        %v7513 = vunpack.c.l.s4 1934713408
        %v7514 = vunpack.c.0.s8 %v7513
        %v7515 = vlaneseq
        %v7516 = vshrl.u32 %v7515, 7
        %v7517 = vsub.s32 %v7514, %v7516
        %v7518 = vrot.slane %v7511, %v7517
        %v7519 = vcombine.low %v7502, %v7510
        %v7521 = vunpack.c.l.s4 1934713408
        %v7522 = vunpack.c.0.s8 %v7521
        %v7523 = vlaneseq
        %v7524 = vshrl.u32 %v7523, 7
        %v7525 = vsub.s32 %v7522, %v7524
        %v7526 = vrot.slane %v7519, %v7525
        %v7527 = vcombine.low %v7518, %v7526
        %v7528 = vcombine.high %v7518, %v7526
        %v7529 = vcombine.low %v7247, %v7311
        %v7531 = vunpack.c.l.s4 1983009808
        %v7532 = vunpack.c.0.s8 %v7531
        %v7533 = vlaneseq
        %v7534 = vshrl.u32 %v7533, 7
        %v7535 = vsub.s32 %v7532, %v7534
        %v7536 = vrot.slane %v7529, %v7535
        %v7537 = vcombine.low %v7279, %v7343
        %v7539 = vunpack.c.l.s4 1983009808
        %v7540 = vunpack.c.0.s8 %v7539
        %v7541 = vlaneseq
        %v7542 = vshrl.u32 %v7541, 7
        %v7543 = vsub.s32 %v7540, %v7542
        %v7544 = vrot.slane %v7537, %v7543
        %v7545 = vcombine.low %v7375, %v7439
        %v7547 = vunpack.c.l.s4 1983009808
        %v7548 = vunpack.c.0.s8 %v7547
        %v7549 = vlaneseq
        %v7550 = vshrl.u32 %v7549, 7
        %v7551 = vsub.s32 %v7548, %v7550
        %v7552 = vrot.slane %v7545, %v7551
        %v7553 = vcombine.low %v7407, %v7471
        %v7555 = vunpack.c.l.s4 1983009808
        %v7556 = vunpack.c.0.s8 %v7555
        %v7557 = vlaneseq
        %v7558 = vshrl.u32 %v7557, 7
        %v7559 = vsub.s32 %v7556, %v7558
        %v7560 = vrot.slane %v7553, %v7559
        %v7561 = vcombine.low %v7536, %v7544
        %v7563 = vunpack.c.l.s4 1934713408
        %v7564 = vunpack.c.0.s8 %v7563
        %v7565 = vlaneseq
        %v7566 = vshrl.u32 %v7565, 7
        %v7567 = vsub.s32 %v7564, %v7566
        %v7568 = vrot.slane %v7561, %v7567
        %v7569 = vcombine.low %v7552, %v7560
        %v7571 = vunpack.c.l.s4 1934713408
        %v7572 = vunpack.c.0.s8 %v7571
        %v7573 = vlaneseq
        %v7574 = vshrl.u32 %v7573, 7
        %v7575 = vsub.s32 %v7572, %v7574
        %v7576 = vrot.slane %v7569, %v7575
        %v7577 = vcombine.low %v7568, %v7576
        %v7578 = vcombine.high %v7568, %v7576
        %v7581 = vpack.i.b16 %v7577, %v7527
        %v7582 = vshrl.u32 %v7527, 16
        %v7583 = vshrl.u32 %v7577, 16
        %v7584 = vpack.i.b16 %v7583, %v7582
        %v7587 = vpack.i.b16 %v7578, %v7528
        %v7588 = vshrl.u32 %v7528, 16
        %v7589 = vshrl.u32 %v7578, 16
        %v7590 = vpack.i.b16 %v7589, %v7588
        %v7592 = vsel %vm2418, %v7581, 0
        %v7595 = vsel %vm2418, %v6627, 0
        %7597 = vmatprep.subr.bf16.mxu0 0
        %7598 = vmatpush1.bf16.xpose.msra.mxu0 0
        %7599 = vmatprep.subr.bf16.mxu0 0
        %7600 = vmatpush1.bf16.xpose.msra.mxu0 0
        %7601 = vmatprep.subr.bf16.mxu0 0
        %7602 = vmatpush1.bf16.xpose.msra.mxu0 0
        %7603 = vmatprep.subr.bf16.mxu0 0
        %7604 = vmatpush1.bf16.xpose.msra.mxu0 0
        %7605 = vmatprep.subr.bf16.mxu0 0
        %7606 = vmatpush1.bf16.xpose.msra.mxu0 0
        %7607 = vmatprep.subr.bf16.mxu0 0
        %7608 = vmatpush1.bf16.xpose.msra.mxu0 0
        %7609 = vmatprep.subr.bf16.mxu0 0
        %7610 = vmatpush1.bf16.xpose.msra.mxu0 0
        %7611 = vmatprep.subr.bf16.mxu0 0
        %7612 = vmatpush1.bf16.xpose.msra.mxu0 %v7595
        %7613 = vmatprep.subr.bf16.mxu0 0
        %7614 = vmatpush2.bf16.xpose.msra.mxu0 0
        %7615 = vmatprep.subr.bf16.mxu0 0
        %7616 = vmatpush2.bf16.xpose.msra.mxu0 0
        %7617 = vmatprep.subr.bf16.mxu0 0
        %7618 = vmatpush2.bf16.xpose.msra.mxu0 0
        %7619 = vmatprep.subr.bf16.mxu0 0
        %7620 = vmatpush2.bf16.xpose.msra.mxu0 0
        %7621 = vmatprep.subr.bf16.mxu0 0
        %7622 = vmatpush2.bf16.xpose.msra.mxu0 0
        %7623 = vmatprep.subr.bf16.mxu0 0
        %7624 = vmatpush2.bf16.xpose.msra.mxu0 0
        %7625 = vmatprep.subr.bf16.mxu0 0
        %7626 = vmatpush2.bf16.xpose.msra.mxu0 0
        %7627 = vmatprep.subr.bf16.mxu0 0
        %7628 = vmatpush2.bf16.xpose.msra.mxu0 0
        %7629 = vmatprep.mubr.bf16.mxu0 0
        %7630 = vmatmul.mubr.bf16.gmra.mxu0 %v7592
        %v7631 = vpop.f32.mrf.mxu0
        %v7632 = vadd.f32 0.0, %v7631
        %v7633 = vpop.f32.mrf.mxu0
        %v7634 = vpop.f32.mrf.mxu0
        %v7635 = vadd.f32 0.0, %v7634
        %v7636 = vpop.f32.mrf.mxu0
        %7637 = vdwg.mxu0
        %v7639 = vsel %vm2418, %v7584, 0
        %v7642 = vsel %vm2418, %v6628, 0
        %7644 = vmatprep.subr.bf16.mxu0 0
        %7645 = vmatpush1.bf16.xpose.msra.mxu0 0
        %7646 = vmatprep.subr.bf16.mxu0 0
        %7647 = vmatpush1.bf16.xpose.msra.mxu0 0
        %7648 = vmatprep.subr.bf16.mxu0 0
        %7649 = vmatpush1.bf16.xpose.msra.mxu0 0
        %7650 = vmatprep.subr.bf16.mxu0 0
        %7651 = vmatpush1.bf16.xpose.msra.mxu0 0
        %7652 = vmatprep.subr.bf16.mxu0 0
        %7653 = vmatpush1.bf16.xpose.msra.mxu0 0
        %7654 = vmatprep.subr.bf16.mxu0 0
        %7655 = vmatpush1.bf16.xpose.msra.mxu0 0
        %7656 = vmatprep.subr.bf16.mxu0 0
        %7657 = vmatpush1.bf16.xpose.msra.mxu0 0
        %7658 = vmatprep.subr.bf16.mxu0 0
        %7659 = vmatpush1.bf16.xpose.msra.mxu0 %v7642
        %7660 = vmatprep.subr.bf16.mxu0 0
        %7661 = vmatpush2.bf16.xpose.msra.mxu0 0
        %7662 = vmatprep.subr.bf16.mxu0 0
        %7663 = vmatpush2.bf16.xpose.msra.mxu0 0
        %7664 = vmatprep.subr.bf16.mxu0 0
        %7665 = vmatpush2.bf16.xpose.msra.mxu0 0
        %7666 = vmatprep.subr.bf16.mxu0 0
        %7667 = vmatpush2.bf16.xpose.msra.mxu0 0
        %7668 = vmatprep.subr.bf16.mxu0 0
        %7669 = vmatpush2.bf16.xpose.msra.mxu0 0
        %7670 = vmatprep.subr.bf16.mxu0 0
        %7671 = vmatpush2.bf16.xpose.msra.mxu0 0
        %7672 = vmatprep.subr.bf16.mxu0 0
        %7673 = vmatpush2.bf16.xpose.msra.mxu0 0
        %7674 = vmatprep.subr.bf16.mxu0 0
        %7675 = vmatpush2.bf16.xpose.msra.mxu0 0
        %7676 = vmatprep.mubr.bf16.mxu0 0
        %7677 = vmatmul.mubr.bf16.gmra.mxu0 %v7639
        %v7678 = vpop.f32.mrf.mxu0
        %v7679 = vadd.f32 0.0, %v7678
        %v7680 = vpop.f32.mrf.mxu0
        %v7681 = vpop.f32.mrf.mxu0
        %v7682 = vadd.f32 0.0, %v7681
        %v7683 = vpop.f32.mrf.mxu0
        %7684 = vdwg.mxu0
        %v7686 = vsel %vm2418, %v7587, 0
        %v7689 = vsel %vm2418, %v6629, 0
        %7691 = vmatprep.subr.bf16.mxu0 0
        %7692 = vmatpush1.bf16.xpose.msra.mxu0 0
        %7693 = vmatprep.subr.bf16.mxu0 0
        %7694 = vmatpush1.bf16.xpose.msra.mxu0 0
        %7695 = vmatprep.subr.bf16.mxu0 0
        %7696 = vmatpush1.bf16.xpose.msra.mxu0 0
        %7697 = vmatprep.subr.bf16.mxu0 0
        %7698 = vmatpush1.bf16.xpose.msra.mxu0 0
        %7699 = vmatprep.subr.bf16.mxu0 0
        %7700 = vmatpush1.bf16.xpose.msra.mxu0 0
        %7701 = vmatprep.subr.bf16.mxu0 0
        %7702 = vmatpush1.bf16.xpose.msra.mxu0 0
        %7703 = vmatprep.subr.bf16.mxu0 0
        %7704 = vmatpush1.bf16.xpose.msra.mxu0 0
        %7705 = vmatprep.subr.bf16.mxu0 0
        %7706 = vmatpush1.bf16.xpose.msra.mxu0 %v7689
        %7707 = vmatprep.subr.bf16.mxu0 0
        %7708 = vmatpush2.bf16.xpose.msra.mxu0 0
        %7709 = vmatprep.subr.bf16.mxu0 0
        %7710 = vmatpush2.bf16.xpose.msra.mxu0 0
        %7711 = vmatprep.subr.bf16.mxu0 0
        %7712 = vmatpush2.bf16.xpose.msra.mxu0 0
        %7713 = vmatprep.subr.bf16.mxu0 0
        %7714 = vmatpush2.bf16.xpose.msra.mxu0 0
        %7715 = vmatprep.subr.bf16.mxu0 0
        %7716 = vmatpush2.bf16.xpose.msra.mxu0 0
        %7717 = vmatprep.subr.bf16.mxu0 0
        %7718 = vmatpush2.bf16.xpose.msra.mxu0 0
        %7719 = vmatprep.subr.bf16.mxu0 0
        %7720 = vmatpush2.bf16.xpose.msra.mxu0 0
        %7721 = vmatprep.subr.bf16.mxu0 0
        %7722 = vmatpush2.bf16.xpose.msra.mxu0 0
        %7723 = vmatprep.mubr.bf16.mxu0 0
        %7724 = vmatmul.mubr.bf16.gmra.mxu0 %v7686
        %v7725 = vpop.f32.mrf.mxu0
        %v7726 = vadd.f32 0.0, %v7725
        %v7727 = vpop.f32.mrf.mxu0
        %v7728 = vpop.f32.mrf.mxu0
        %v7729 = vadd.f32 0.0, %v7728
        %v7730 = vpop.f32.mrf.mxu0
        %7731 = vdwg.mxu0
        %v7733 = vsel %vm2418, %v7590, 0
        %v7736 = vsel %vm2418, %v6630, 0
        %7738 = vmatprep.subr.bf16.mxu0 0
        %7739 = vmatpush1.bf16.xpose.msra.mxu0 0
        %7740 = vmatprep.subr.bf16.mxu0 0
        %7741 = vmatpush1.bf16.xpose.msra.mxu0 0
        %7742 = vmatprep.subr.bf16.mxu0 0
        %7743 = vmatpush1.bf16.xpose.msra.mxu0 0
        %7744 = vmatprep.subr.bf16.mxu0 0
        %7745 = vmatpush1.bf16.xpose.msra.mxu0 0
        %7746 = vmatprep.subr.bf16.mxu0 0
        %7747 = vmatpush1.bf16.xpose.msra.mxu0 0
        %7748 = vmatprep.subr.bf16.mxu0 0
        %7749 = vmatpush1.bf16.xpose.msra.mxu0 0
        %7750 = vmatprep.subr.bf16.mxu0 0
        %7751 = vmatpush1.bf16.xpose.msra.mxu0 0
        %7752 = vmatprep.subr.bf16.mxu0 0
        %7753 = vmatpush1.bf16.xpose.msra.mxu0 %v7736
        %7754 = vmatprep.subr.bf16.mxu0 0
        %7755 = vmatpush2.bf16.xpose.msra.mxu0 0
        %7756 = vmatprep.subr.bf16.mxu0 0
        %7757 = vmatpush2.bf16.xpose.msra.mxu0 0
        %7758 = vmatprep.subr.bf16.mxu0 0
        %7759 = vmatpush2.bf16.xpose.msra.mxu0 0
        %7760 = vmatprep.subr.bf16.mxu0 0
        %7761 = vmatpush2.bf16.xpose.msra.mxu0 0
        %7762 = vmatprep.subr.bf16.mxu0 0
        %7763 = vmatpush2.bf16.xpose.msra.mxu0 0
        %7764 = vmatprep.subr.bf16.mxu0 0
        %7765 = vmatpush2.bf16.xpose.msra.mxu0 0
        %7766 = vmatprep.subr.bf16.mxu0 0
        %7767 = vmatpush2.bf16.xpose.msra.mxu0 0
        %7768 = vmatprep.subr.bf16.mxu0 0
        %7769 = vmatpush2.bf16.xpose.msra.mxu0 0
        %7770 = vmatprep.mubr.bf16.mxu0 0
        %7771 = vmatmul.mubr.bf16.gmra.mxu0 %v7733
        %v7772 = vpop.f32.mrf.mxu0
        %v7773 = vadd.f32 0.0, %v7772
        %v7774 = vpop.f32.mrf.mxu0
        %v7775 = vpop.f32.mrf.mxu0
        %v7776 = vadd.f32 0.0, %v7775
        %v7777 = vpop.f32.mrf.mxu0
        %7778 = vdwg.mxu0
        %7779 = vxpose.xlu0.b32.start [1/16] %v7632, 128
        %7780 = vxpose.xlu0.b32.cont [2/16] %v7635, 128
        %7781 = vxpose.xlu0.b32.cont [3/16] 0.0, 128
        %7782 = vxpose.xlu0.b32.cont [4/16] 0.0, 128
        %7783 = vxpose.xlu0.b32.cont [5/16] 0.0, 128
        %7784 = vxpose.xlu0.b32.cont [6/16] 0.0, 128
        %7785 = vxpose.xlu0.b32.cont [7/16] 0.0, 128
        %7786 = vxpose.xlu0.b32.cont [8/16] 0.0, 128
        %7787 = vxpose.xlu0.b32.cont [9/16] 0.0, 128
        %7788 = vxpose.xlu0.b32.cont [10/16] 0.0, 128
        %7789 = vxpose.xlu0.b32.cont [11/16] 0.0, 128
        %7790 = vxpose.xlu0.b32.cont [12/16] 0.0, 128
        %7791 = vxpose.xlu0.b32.cont [13/16] 0.0, 128
        %7792 = vxpose.xlu0.b32.cont [14/16] 0.0, 128
        %7793 = vxpose.xlu0.b32.cont [15/16] 0.0, 128
        %7794 = vxpose.xlu0.b32.end [16/16] 0.0, 128
        %v7795 = vpop.trf.xlu0
        %v7796 = vpop.trf.xlu0
        %v7797 = vpop.trf.xlu0
        %v7798 = vpop.trf.xlu0
        %v7799 = vpop.trf.xlu0
        %v7800 = vpop.trf.xlu0
        %v7801 = vpop.trf.xlu0
        %v7802 = vpop.trf.xlu0
        %v7803 = vpop.trf.xlu0
        %v7804 = vpop.trf.xlu0
        %v7805 = vpop.trf.xlu0
        %v7806 = vpop.trf.xlu0
        %v7807 = vpop.trf.xlu0
        %v7808 = vpop.trf.xlu0
        %v7809 = vpop.trf.xlu0
        %v7810 = vpop.trf.xlu0
        %7811 = vxpose.xlu0.b32.start [1/16] %v7679, 128
        %7812 = vxpose.xlu0.b32.cont [2/16] %v7682, 128
        %7813 = vxpose.xlu0.b32.cont [3/16] 0.0, 128
        %7814 = vxpose.xlu0.b32.cont [4/16] 0.0, 128
        %7815 = vxpose.xlu0.b32.cont [5/16] 0.0, 128
        %7816 = vxpose.xlu0.b32.cont [6/16] 0.0, 128
        %7817 = vxpose.xlu0.b32.cont [7/16] 0.0, 128
        %7818 = vxpose.xlu0.b32.cont [8/16] 0.0, 128
        %7819 = vxpose.xlu0.b32.cont [9/16] 0.0, 128
        %7820 = vxpose.xlu0.b32.cont [10/16] 0.0, 128
        %7821 = vxpose.xlu0.b32.cont [11/16] 0.0, 128
        %7822 = vxpose.xlu0.b32.cont [12/16] 0.0, 128
        %7823 = vxpose.xlu0.b32.cont [13/16] 0.0, 128
        %7824 = vxpose.xlu0.b32.cont [14/16] 0.0, 128
        %7825 = vxpose.xlu0.b32.cont [15/16] 0.0, 128
        %7826 = vxpose.xlu0.b32.end [16/16] 0.0, 128
        %v7827 = vpop.trf.xlu0
        %v7828 = vpop.trf.xlu0
        %v7829 = vpop.trf.xlu0
        %v7830 = vpop.trf.xlu0
        %v7831 = vpop.trf.xlu0
        %v7832 = vpop.trf.xlu0
        %v7833 = vpop.trf.xlu0
        %v7834 = vpop.trf.xlu0
        %v7835 = vpop.trf.xlu0
        %v7836 = vpop.trf.xlu0
        %v7837 = vpop.trf.xlu0
        %v7838 = vpop.trf.xlu0
        %v7839 = vpop.trf.xlu0
        %v7840 = vpop.trf.xlu0
        %v7841 = vpop.trf.xlu0
        %v7842 = vpop.trf.xlu0
        %7843 = vxpose.xlu0.b32.start [1/16] %v7726, 128
        %7844 = vxpose.xlu0.b32.cont [2/16] %v7729, 128
        %7845 = vxpose.xlu0.b32.cont [3/16] 0.0, 128
        %7846 = vxpose.xlu0.b32.cont [4/16] 0.0, 128
        %7847 = vxpose.xlu0.b32.cont [5/16] 0.0, 128
        %7848 = vxpose.xlu0.b32.cont [6/16] 0.0, 128
        %7849 = vxpose.xlu0.b32.cont [7/16] 0.0, 128
        %7850 = vxpose.xlu0.b32.cont [8/16] 0.0, 128
        %7851 = vxpose.xlu0.b32.cont [9/16] 0.0, 128
        %7852 = vxpose.xlu0.b32.cont [10/16] 0.0, 128
        %7853 = vxpose.xlu0.b32.cont [11/16] 0.0, 128
        %7854 = vxpose.xlu0.b32.cont [12/16] 0.0, 128
        %7855 = vxpose.xlu0.b32.cont [13/16] 0.0, 128
        %7856 = vxpose.xlu0.b32.cont [14/16] 0.0, 128
        %7857 = vxpose.xlu0.b32.cont [15/16] 0.0, 128
        %7858 = vxpose.xlu0.b32.end [16/16] 0.0, 128
        %v7859 = vpop.trf.xlu0
        %v7860 = vpop.trf.xlu0
        %v7861 = vpop.trf.xlu0
        %v7862 = vpop.trf.xlu0
        %v7863 = vpop.trf.xlu0
        %v7864 = vpop.trf.xlu0
        %v7865 = vpop.trf.xlu0
        %v7866 = vpop.trf.xlu0
        %v7867 = vpop.trf.xlu0
        %v7868 = vpop.trf.xlu0
        %v7869 = vpop.trf.xlu0
        %v7870 = vpop.trf.xlu0
        %v7871 = vpop.trf.xlu0
        %v7872 = vpop.trf.xlu0
        %v7873 = vpop.trf.xlu0
        %v7874 = vpop.trf.xlu0
        %7875 = vxpose.xlu0.b32.start [1/16] %v7773, 128
        %7876 = vxpose.xlu0.b32.cont [2/16] %v7776, 128
        %7877 = vxpose.xlu0.b32.cont [3/16] 0.0, 128
        %7878 = vxpose.xlu0.b32.cont [4/16] 0.0, 128
        %7879 = vxpose.xlu0.b32.cont [5/16] 0.0, 128
        %7880 = vxpose.xlu0.b32.cont [6/16] 0.0, 128
        %7881 = vxpose.xlu0.b32.cont [7/16] 0.0, 128
        %7882 = vxpose.xlu0.b32.cont [8/16] 0.0, 128
        %7883 = vxpose.xlu0.b32.cont [9/16] 0.0, 128
        %7884 = vxpose.xlu0.b32.cont [10/16] 0.0, 128
        %7885 = vxpose.xlu0.b32.cont [11/16] 0.0, 128
        %7886 = vxpose.xlu0.b32.cont [12/16] 0.0, 128
        %7887 = vxpose.xlu0.b32.cont [13/16] 0.0, 128
        %7888 = vxpose.xlu0.b32.cont [14/16] 0.0, 128
        %7889 = vxpose.xlu0.b32.cont [15/16] 0.0, 128
        %7890 = vxpose.xlu0.b32.end [16/16] 0.0, 128
        %v7891 = vpop.trf.xlu0
        %v7892 = vpop.trf.xlu0
        %v7893 = vpop.trf.xlu0
        %v7894 = vpop.trf.xlu0
        %v7895 = vpop.trf.xlu0
        %v7896 = vpop.trf.xlu0
        %v7897 = vpop.trf.xlu0
        %v7898 = vpop.trf.xlu0
        %v7899 = vpop.trf.xlu0
        %v7900 = vpop.trf.xlu0
        %v7901 = vpop.trf.xlu0
        %v7902 = vpop.trf.xlu0
        %v7903 = vpop.trf.xlu0
        %v7904 = vpop.trf.xlu0
        %v7905 = vpop.trf.xlu0
        %v7906 = vpop.trf.xlu0
        %v7907 = vcombine.low %v7795, %v7859
        %v7908 = vcombine.high %v7795, %v7859
        %v7910 = vunpack.c.l.s4 1983009808
        %v7911 = vunpack.c.0.s8 %v7910
        %v7912 = vlaneseq
        %v7913 = vshrl.u32 %v7912, 7
        %v7914 = vsub.s32 %v7911, %v7913
        %v7915 = vrot.slane %v7907, %v7914
        %v7917 = vunpack.c.l.s4 1983009808
        %v7918 = vunpack.c.0.s8 %v7917
        %v7919 = vlaneseq
        %v7920 = vshrl.u32 %v7919, 7
        %v7921 = vsub.s32 %v7918, %v7920
        %v7922 = vrot.slane %v7908, %v7921
        %v7923 = vcombine.low %v7827, %v7891
        %v7924 = vcombine.high %v7827, %v7891
        %v7926 = vunpack.c.l.s4 1983009808
        %v7927 = vunpack.c.0.s8 %v7926
        %v7928 = vlaneseq
        %v7929 = vshrl.u32 %v7928, 7
        %v7930 = vsub.s32 %v7927, %v7929
        %v7931 = vrot.slane %v7923, %v7930
        %v7933 = vunpack.c.l.s4 1983009808
        %v7934 = vunpack.c.0.s8 %v7933
        %v7935 = vlaneseq
        %v7936 = vshrl.u32 %v7935, 7
        %v7937 = vsub.s32 %v7934, %v7936
        %v7938 = vrot.slane %v7924, %v7937
        %v7939 = vcombine.low %v7915, %v7931
        %v7940 = vcombine.high %v7915, %v7931
        %v7942 = vunpack.c.l.s4 1934713408
        %v7943 = vunpack.c.0.s8 %v7942
        %v7944 = vlaneseq
        %v7945 = vshrl.u32 %v7944, 7
        %v7946 = vsub.s32 %v7943, %v7945
        %v7947 = vrot.slane %v7939, %v7946
        %v7949 = vunpack.c.l.s4 1934713408
        %v7950 = vunpack.c.0.s8 %v7949
        %v7951 = vlaneseq
        %v7952 = vshrl.u32 %v7951, 7
        %v7953 = vsub.s32 %v7950, %v7952
        %v7954 = vrot.slane %v7940, %v7953
        %v7955 = vcombine.low %v7922, %v7938
        %v7956 = vcombine.high %v7922, %v7938
        %v7958 = vunpack.c.l.s4 1934713408
        %v7959 = vunpack.c.0.s8 %v7958
        %v7960 = vlaneseq
        %v7961 = vshrl.u32 %v7960, 7
        %v7962 = vsub.s32 %v7959, %v7961
        %v7963 = vrot.slane %v7955, %v7962
        %v7965 = vunpack.c.l.s4 1934713408
        %v7966 = vunpack.c.0.s8 %v7965
        %v7967 = vlaneseq
        %v7968 = vshrl.u32 %v7967, 7
        %v7969 = vsub.s32 %v7966, %v7968
        %v7970 = vrot.slane %v7956, %v7969
        %v7971 = vcombine.high %v7947, 0.0
        %v7972 = vcombine.high %v7954, 0.0
        %v7973 = vcombine.high %v7963, 0.0
        %v7974 = vcombine.high %v7970, 0.0
        %v7975 = vcombine.low %v7796, %v7860
        %v7976 = vcombine.high %v7796, %v7860
        %v7978 = vunpack.c.l.s4 1983009808
        %v7979 = vunpack.c.0.s8 %v7978
        %v7980 = vlaneseq
        %v7981 = vshrl.u32 %v7980, 7
        %v7982 = vsub.s32 %v7979, %v7981
        %v7983 = vrot.slane %v7975, %v7982
        %v7985 = vunpack.c.l.s4 1983009808
        %v7986 = vunpack.c.0.s8 %v7985
        %v7987 = vlaneseq
        %v7988 = vshrl.u32 %v7987, 7
        %v7989 = vsub.s32 %v7986, %v7988
        %v7990 = vrot.slane %v7976, %v7989
        %v7991 = vcombine.low %v7828, %v7892
        %v7992 = vcombine.high %v7828, %v7892
        %v7994 = vunpack.c.l.s4 1983009808
        %v7995 = vunpack.c.0.s8 %v7994
        %v7996 = vlaneseq
        %v7997 = vshrl.u32 %v7996, 7
        %v7998 = vsub.s32 %v7995, %v7997
        %v7999 = vrot.slane %v7991, %v7998
        %v8001 = vunpack.c.l.s4 1983009808
        %v8002 = vunpack.c.0.s8 %v8001
        %v8003 = vlaneseq
        %v8004 = vshrl.u32 %v8003, 7
        %v8005 = vsub.s32 %v8002, %v8004
        %v8006 = vrot.slane %v7992, %v8005
        %v8007 = vcombine.low %v7983, %v7999
        %v8008 = vcombine.high %v7983, %v7999
        %v8010 = vunpack.c.l.s4 1934713408
        %v8011 = vunpack.c.0.s8 %v8010
        %v8012 = vlaneseq
        %v8013 = vshrl.u32 %v8012, 7
        %v8014 = vsub.s32 %v8011, %v8013
        %v8015 = vrot.slane %v8007, %v8014
        %v8017 = vunpack.c.l.s4 1934713408
        %v8018 = vunpack.c.0.s8 %v8017
        %v8019 = vlaneseq
        %v8020 = vshrl.u32 %v8019, 7
        %v8021 = vsub.s32 %v8018, %v8020
        %v8022 = vrot.slane %v8008, %v8021
        %v8023 = vcombine.low %v7990, %v8006
        %v8024 = vcombine.high %v7990, %v8006
        %v8026 = vunpack.c.l.s4 1934713408
        %v8027 = vunpack.c.0.s8 %v8026
        %v8028 = vlaneseq
        %v8029 = vshrl.u32 %v8028, 7
        %v8030 = vsub.s32 %v8027, %v8029
        %v8031 = vrot.slane %v8023, %v8030
        %v8033 = vunpack.c.l.s4 1934713408
        %v8034 = vunpack.c.0.s8 %v8033
        %v8035 = vlaneseq
        %v8036 = vshrl.u32 %v8035, 7
        %v8037 = vsub.s32 %v8034, %v8036
        %v8038 = vrot.slane %v8024, %v8037
        %v8039 = vcombine.high %v8015, 0.0
        %v8040 = vcombine.high %v8022, 0.0
        %v8041 = vcombine.high %v8031, 0.0
        %v8042 = vcombine.high %v8038, 0.0
        %v8043 = vcombine.low %v7947, %v7954
        %v8045 = vunpack.c.l.s4 1983009808
        %v8046 = vunpack.c.0.s8 %v8045
        %v8047 = vlaneseq
        %v8048 = vshrl.u32 %v8047, 7
        %v8049 = vsub.s32 %v8046, %v8048
        %v8050 = vrot.slane %v8043, %v8049
        %v8051 = vcombine.low %v7971, %v7972
        %v8053 = vunpack.c.l.s4 1983009808
        %v8054 = vunpack.c.0.s8 %v8053
        %v8055 = vlaneseq
        %v8056 = vshrl.u32 %v8055, 7
        %v8057 = vsub.s32 %v8054, %v8056
        %v8058 = vrot.slane %v8051, %v8057
        %v8059 = vcombine.low %v7963, %v7970
        %v8061 = vunpack.c.l.s4 1983009808
        %v8062 = vunpack.c.0.s8 %v8061
        %v8063 = vlaneseq
        %v8064 = vshrl.u32 %v8063, 7
        %v8065 = vsub.s32 %v8062, %v8064
        %v8066 = vrot.slane %v8059, %v8065
        %v8067 = vcombine.low %v7973, %v7974
        %v8069 = vunpack.c.l.s4 1983009808
        %v8070 = vunpack.c.0.s8 %v8069
        %v8071 = vlaneseq
        %v8072 = vshrl.u32 %v8071, 7
        %v8073 = vsub.s32 %v8070, %v8072
        %v8074 = vrot.slane %v8067, %v8073
        %v8075 = vcombine.low %v8050, %v8058
        %v8076 = vcombine.high %v8050, %v8058
        %v8078 = vunpack.c.l.s4 1934713408
        %v8079 = vunpack.c.0.s8 %v8078
        %v8080 = vlaneseq
        %v8081 = vshrl.u32 %v8080, 7
        %v8082 = vsub.s32 %v8079, %v8081
        %v8083 = vrot.slane %v8075, %v8082
        %v8085 = vunpack.c.l.s4 1934713408
        %v8086 = vunpack.c.0.s8 %v8085
        %v8087 = vlaneseq
        %v8088 = vshrl.u32 %v8087, 7
        %v8089 = vsub.s32 %v8086, %v8088
        %v8090 = vrot.slane %v8076, %v8089
        %v8091 = vcombine.low %v8066, %v8074
        %v8092 = vcombine.high %v8066, %v8074
        %v8094 = vunpack.c.l.s4 1934713408
        %v8095 = vunpack.c.0.s8 %v8094
        %v8096 = vlaneseq
        %v8097 = vshrl.u32 %v8096, 7
        %v8098 = vsub.s32 %v8095, %v8097
        %v8099 = vrot.slane %v8091, %v8098
        %v8101 = vunpack.c.l.s4 1934713408
        %v8102 = vunpack.c.0.s8 %v8101
        %v8103 = vlaneseq
        %v8104 = vshrl.u32 %v8103, 7
        %v8105 = vsub.s32 %v8102, %v8104
        %v8106 = vrot.slane %v8092, %v8105
        %v8107 = vcombine.low %v8083, %v8099
        %v8108 = vcombine.high %v8083, %v8099
        %v8109 = vcombine.low %v8090, %v8106
        %v8110 = vcombine.high %v8090, %v8106
        %v8111 = vcombine.low %v8015, %v8022
        %v8113 = vunpack.c.l.s4 1983009808
        %v8114 = vunpack.c.0.s8 %v8113
        %v8115 = vlaneseq
        %v8116 = vshrl.u32 %v8115, 7
        %v8117 = vsub.s32 %v8114, %v8116
        %v8118 = vrot.slane %v8111, %v8117
        %v8119 = vcombine.low %v8039, %v8040
        %v8121 = vunpack.c.l.s4 1983009808
        %v8122 = vunpack.c.0.s8 %v8121
        %v8123 = vlaneseq
        %v8124 = vshrl.u32 %v8123, 7
        %v8125 = vsub.s32 %v8122, %v8124
        %v8126 = vrot.slane %v8119, %v8125
        %v8127 = vcombine.low %v8031, %v8038
        %v8129 = vunpack.c.l.s4 1983009808
        %v8130 = vunpack.c.0.s8 %v8129
        %v8131 = vlaneseq
        %v8132 = vshrl.u32 %v8131, 7
        %v8133 = vsub.s32 %v8130, %v8132
        %v8134 = vrot.slane %v8127, %v8133
        %v8135 = vcombine.low %v8041, %v8042
        %v8137 = vunpack.c.l.s4 1983009808
        %v8138 = vunpack.c.0.s8 %v8137
        %v8139 = vlaneseq
        %v8140 = vshrl.u32 %v8139, 7
        %v8141 = vsub.s32 %v8138, %v8140
        %v8142 = vrot.slane %v8135, %v8141
        %v8143 = vcombine.low %v8118, %v8126
        %v8144 = vcombine.high %v8118, %v8126
        %v8146 = vunpack.c.l.s4 1934713408
        %v8147 = vunpack.c.0.s8 %v8146
        %v8148 = vlaneseq
        %v8149 = vshrl.u32 %v8148, 7
        %v8150 = vsub.s32 %v8147, %v8149
        %v8151 = vrot.slane %v8143, %v8150
        %v8153 = vunpack.c.l.s4 1934713408
        %v8154 = vunpack.c.0.s8 %v8153
        %v8155 = vlaneseq
        %v8156 = vshrl.u32 %v8155, 7
        %v8157 = vsub.s32 %v8154, %v8156
        %v8158 = vrot.slane %v8144, %v8157
        %v8159 = vcombine.low %v8134, %v8142
        %v8160 = vcombine.high %v8134, %v8142
        %v8162 = vunpack.c.l.s4 1934713408
        %v8163 = vunpack.c.0.s8 %v8162
        %v8164 = vlaneseq
        %v8165 = vshrl.u32 %v8164, 7
        %v8166 = vsub.s32 %v8163, %v8165
        %v8167 = vrot.slane %v8159, %v8166
        %v8169 = vunpack.c.l.s4 1934713408
        %v8170 = vunpack.c.0.s8 %v8169
        %v8171 = vlaneseq
        %v8172 = vshrl.u32 %v8171, 7
        %v8173 = vsub.s32 %v8170, %v8172
        %v8174 = vrot.slane %v8160, %v8173
        %v8175 = vcombine.low %v8151, %v8167
        %v8176 = vcombine.high %v8151, %v8167
        %v8177 = vcombine.low %v8158, %v8174
        %v8178 = vcombine.high %v8158, %v8174
        %8181 = vrot.lane.b32.xlu0 %v8108, 16
        %v8182 = vpop.permute.xlu0 %8181
        %8183 = vrot.lane.b32.xlu0 %v8176, 16
        %v8184 = vpop.permute.xlu0 %8183
        %8189 = vrot.lane.b32.xlu0 %v8109, 32
        %v8190 = vpop.permute.xlu0 %8189
        %8191 = vrot.lane.b32.xlu0 %v8177, 32
        %v8192 = vpop.permute.xlu0 %8191
        %8197 = vrot.lane.b32.xlu0 %v8110, 48
        %v8198 = vpop.permute.xlu0 %8197
        %8199 = vrot.lane.b32.xlu0 %v8178, 48
        %v8200 = vpop.permute.xlu0 %8199
        %v8203 = vsel %vm2418, %v8107, %v8182
        %v8204 = vsel %vm2418, %v8175, %v8184
        %v8205 = vsel %vm4261, %v8203, %v8190
        %v8206 = vsel %vm4261, %v8204, %v8192
        %v8207 = vsel %vm4264, %v8205, %v8198
        %v8208 = vsel %vm4264, %v8206, %v8200
        %v8209 = vpack.c.bf16 %v8208, %v8207
        %s8210 = scalar_lea.vmem %s8, 32
        %v8211 = vld [vmem:[%s8210] sm:$0xf]
        %v8212 = vld [vmem:[%s8210 + $0x4] sm:$0xf]
        %v8213 = vld [vmem:[%s8210 + $0x8] sm:$0xf]
        %v8214 = vld [vmem:[%s8210 + $0xc] sm:$0xf]
        %v8215 = vld [vmem:[%s8210 + $0x10] sm:$0xf]
        %v8216 = vld [vmem:[%s8210 + $0x14] sm:$0xf]
        %v8217 = vld [vmem:[%s8210 + $0x18] sm:$0xf]
        %v8218 = vld [vmem:[%s8210 + $0x1c] sm:$0xf]
        %s8219 = scalar_lea.vmem %s9, 1
        %v8220 = vld [vmem:[%s8219] sm:$0x1]
        %v8222 = vlaneseq
        %v8223 = vshrl.u32 %v8222, 7
        %v8224 = vsub.s32 0, %v8223
        %v8225 = vrot.slane %v8220, %v8224
        %v8235 = vunpack.c.l.b16 %v8211
        %v8236 = vunpack.c.l.b16 %v8212
        %v8237 = vunpack.c.l.b16 %v8213
        %v8238 = vunpack.c.l.b16 %v8214
        %v8239 = vunpack.c.l.b16 %v8215
        %v8240 = vunpack.c.l.b16 %v8216
        %v8241 = vunpack.c.l.b16 %v8217
        %v8242 = vunpack.c.l.b16 %v8218
        %v8243 = vpack.c.b16 %v8236, %v8235
        %v8244 = vpack.c.b16 %v8238, %v8237
        %v8245 = vpack.c.b16 %v8240, %v8239
        %v8246 = vpack.c.b16 %v8242, %v8241
        %v8252 = vsel %vm616, %v8209, 0
        %8254 = vmatprep.subr.bf16.mxu0 0
        %8255 = vmatpush1.bf16.msra.mxu0 0
        %8256 = vmatprep.subr.bf16.mxu0 0
        %8257 = vmatpush1.bf16.msra.mxu0 0
        %8258 = vmatprep.subr.bf16.mxu0 0
        %8259 = vmatpush1.bf16.msra.mxu0 0
        %8260 = vmatprep.subr.bf16.mxu0 0
        %8261 = vmatpush1.bf16.msra.mxu0 0
        %8262 = vmatprep.subr.bf16.mxu0 0
        %8263 = vmatpush1.bf16.msra.mxu0 %v8246
        %8264 = vmatprep.subr.bf16.mxu0 0
        %8265 = vmatpush1.bf16.msra.mxu0 %v8245
        %8266 = vmatprep.subr.bf16.mxu0 0
        %8267 = vmatpush1.bf16.msra.mxu0 %v8244
        %8268 = vmatprep.subr.bf16.mxu0 0
        %8269 = vmatpush1.bf16.msra.mxu0 %v8243
        %8270 = vmatprep.subr.bf16.mxu0 0
        %8271 = vmatpush2.bf16.msra.mxu0 0
        %8272 = vmatprep.subr.bf16.mxu0 0
        %8273 = vmatpush2.bf16.msra.mxu0 0
        %8274 = vmatprep.subr.bf16.mxu0 0
        %8275 = vmatpush2.bf16.msra.mxu0 0
        %8276 = vmatprep.subr.bf16.mxu0 0
        %8277 = vmatpush2.bf16.msra.mxu0 0
        %8278 = vmatprep.subr.bf16.mxu0 0
        %8279 = vmatpush2.bf16.msra.mxu0 0
        %8280 = vmatprep.subr.bf16.mxu0 0
        %8281 = vmatpush2.bf16.msra.mxu0 0
        %8282 = vmatprep.subr.bf16.mxu0 0
        %8283 = vmatpush2.bf16.msra.mxu0 0
        %8284 = vmatprep.subr.bf16.mxu0 0
        %8285 = vmatpush2.bf16.msra.mxu0 0
        %8286 = vmatprep.mubr.bf16.mxu0 0
        %8287 = vmatmul.mubr.bf16.gmra.mxu0 %v8252
        %v8288 = vpop.f32.mrf.mxu0
        %v8289 = vadd.f32 %v8225, %v8288
        %v8290 = vpop.f32.mrf.mxu0
        %v8291 = vpop.f32.mrf.mxu0
        %v8292 = vadd.f32 %v8225, %v8291
        %v8293 = vpop.f32.mrf.mxu0
        %8294 = vdwg.mxu0
        %v8295 = vadd.f32 %v4610, %v8289
        %v8296 = vadd.f32 %v4611, %v8292
        %s8297 = scalar_lea.vmem %s10, 1
        %v8298 = vld [vmem:[%s8297] sm:$0x1]
        %s8299 = scalar_lea.vmem %s11, 1
        %v8300 = vld [vmem:[%s8299] sm:$0x1]
        %v8301 = vsel %vm616, %v8295, 0.0
        %8302 = vadd.xlane.f32.xlu0 %v8301
        %v8303 = vpop.xlane.xlu0 %8302
        %v8304 = vsel %vm616, %v8296, 0.0
        %8305 = vadd.xlane.f32.xlu0 %v8304
        %v8306 = vpop.xlane.xlu0 %8305
        %v8307 = vmul.f32 %v8303, %v678
        %v8308 = vmul.f32 %v8306, %v678
        %v8309 = vsub.f32 %v8295, %v8307
        %v8310 = vsub.f32 %v8296, %v8308
        %v8311 = vmul.f32 %v8309, %v8309
        %v8312 = vmul.f32 %v8310, %v8310
        %v8313 = vsel %vm616, %v8311, 0.0
        %8314 = vadd.xlane.f32.xlu0 %v8313
        %v8315 = vpop.xlane.xlu0 %8314
        %v8316 = vsel %vm616, %v8312, 0.0
        %8317 = vadd.xlane.f32.xlu0 %v8316
        %v8318 = vpop.xlane.xlu0 %8317
        %v8319 = vmul.f32 %v8315, %v678
        %v8320 = vmul.f32 %v8318, %v678
        %v8321 = vadd.f32 %v8319, 1e-06
        %v8322 = vadd.f32 %v8320, 1e-06
        %v8323 = vrsqrt.pop %v8321
        %v8324 = vrsqrt.pop %v8322
        %v8325 = vmul.f32 %v8309, %v8323
        %v8326 = vmul.f32 %v8310, %v8324
        %v8328 = vlaneseq
        %v8329 = vshrl.u32 %v8328, 7
        %v8330 = vsub.s32 0, %v8329
        %v8331 = vrot.slane %v8298, %v8330
        %v8333 = vmul.f32 %v8325, %v8331
        %v8334 = vmul.f32 %v8326, %v8331
        %v8336 = vlaneseq
        %v8337 = vshrl.u32 %v8336, 7
        %v8338 = vsub.s32 0, %v8337
        %v8339 = vrot.slane %v8300, %v8338
        %v8341 = vadd.f32 %v8333, %v8339
        %v8342 = vadd.f32 %v8334, %v8339
        %v8343 = vpack.c.bf16 %v8342, %v8341
        %s8344 = scalar_lea.vmem %s12, 32
        %v8345 = vld [vmem:[%s8344] sm:$0xf]
        %v8346 = vld [vmem:[%s8344 + $0x4] sm:$0xf]
        %v8347 = vld [vmem:[%s8344 + $0x8] sm:$0xf]
        %v8348 = vld [vmem:[%s8344 + $0xc] sm:$0xf]
        %v8349 = vld [vmem:[%s8344 + $0x10] sm:$0xf]
        %v8350 = vld [vmem:[%s8344 + $0x14] sm:$0xf]
        %v8351 = vld [vmem:[%s8344 + $0x18] sm:$0xf]
        %v8352 = vld [vmem:[%s8344 + $0x1c] sm:$0xf]
        %s8353 = scalar_lea.vmem %s13, 1
        %v8354 = vld [vmem:[%s8353] sm:$0x1]
        %v8356 = vlaneseq
        %v8357 = vshrl.u32 %v8356, 7
        %v8358 = vsub.s32 0, %v8357
        %v8359 = vrot.slane %v8354, %v8358
        %v8369 = vunpack.c.l.b16 %v8345
        %v8370 = vunpack.c.l.b16 %v8346
        %v8371 = vunpack.c.l.b16 %v8347
        %v8372 = vunpack.c.l.b16 %v8348
        %v8373 = vunpack.c.l.b16 %v8349
        %v8374 = vunpack.c.l.b16 %v8350
        %v8375 = vunpack.c.l.b16 %v8351
        %v8376 = vunpack.c.l.b16 %v8352
        %v8377 = vpack.c.b16 %v8370, %v8369
        %v8378 = vpack.c.b16 %v8372, %v8371
        %v8379 = vpack.c.b16 %v8374, %v8373
        %v8380 = vpack.c.b16 %v8376, %v8375
        %v8386 = vsel %vm616, %v8343, 0
        %8388 = vmatprep.subr.bf16.mxu0 0
        %8389 = vmatpush1.bf16.msra.mxu0 0
        %8390 = vmatprep.subr.bf16.mxu0 0
        %8391 = vmatpush1.bf16.msra.mxu0 0
        %8392 = vmatprep.subr.bf16.mxu0 0
        %8393 = vmatpush1.bf16.msra.mxu0 0
        %8394 = vmatprep.subr.bf16.mxu0 0
        %8395 = vmatpush1.bf16.msra.mxu0 0
        %8396 = vmatprep.subr.bf16.mxu0 0
        %8397 = vmatpush1.bf16.msra.mxu0 %v8380
        %8398 = vmatprep.subr.bf16.mxu0 0
        %8399 = vmatpush1.bf16.msra.mxu0 %v8379
        %8400 = vmatprep.subr.bf16.mxu0 0
        %8401 = vmatpush1.bf16.msra.mxu0 %v8378
        %8402 = vmatprep.subr.bf16.mxu0 0
        %8403 = vmatpush1.bf16.msra.mxu0 %v8377
        %8404 = vmatprep.subr.bf16.mxu0 0
        %8405 = vmatpush2.bf16.msra.mxu0 0
        %8406 = vmatprep.subr.bf16.mxu0 0
        %8407 = vmatpush2.bf16.msra.mxu0 0
        %8408 = vmatprep.subr.bf16.mxu0 0
        %8409 = vmatpush2.bf16.msra.mxu0 0
        %8410 = vmatprep.subr.bf16.mxu0 0
        %8411 = vmatpush2.bf16.msra.mxu0 0
        %8412 = vmatprep.subr.bf16.mxu0 0
        %8413 = vmatpush2.bf16.msra.mxu0 0
        %8414 = vmatprep.subr.bf16.mxu0 0
        %8415 = vmatpush2.bf16.msra.mxu0 0
        %8416 = vmatprep.subr.bf16.mxu0 0
        %8417 = vmatpush2.bf16.msra.mxu0 0
        %8418 = vmatprep.subr.bf16.mxu0 0
        %8419 = vmatpush2.bf16.msra.mxu0 0
        %8420 = vmatprep.mubr.bf16.mxu0 0
        %8421 = vmatmul.mubr.bf16.gmra.mxu0 %v8386
        %v8422 = vpop.f32.mrf.mxu0
        %v8423 = vadd.f32 %v8359, %v8422
        %v8424 = vpop.f32.mrf.mxu0
        %v8425 = vpop.f32.mrf.mxu0
        %v8426 = vadd.f32 %v8359, %v8425
        %v8427 = vpop.f32.mrf.mxu0
        %8428 = vdwg.mxu0
        %v8429 = vmul.f32 %v8423, 1.702
        %v8430 = vmul.f32 %v8426, 1.702
        %v8431 = vxor.u32 %v8429, 2147483648
        %v8432 = vxor.u32 %v8430, 2147483648
        %v8433 = vmul.f32 %v8431, 1.442695
        %v8434 = vpow.pop %v8433
        %v8435 = vmul.f32 %v8432, 1.442695
        %v8436 = vpow.pop %v8435
        %v8437 = vadd.f32 %v8434, 1.0
        %v8438 = vadd.f32 %v8436, 1.0
        %v8439 = vrcp.pop %v8437
        %v8440 = vmul.f32 1.0, %v8439
        %v8441 = vrcp.pop %v8438
        %v8442 = vmul.f32 1.0, %v8441
        %v8443 = vmul.f32 %v8423, %v8440
        %v8444 = vmul.f32 %v8426, %v8442
        %v8445 = vpack.c.bf16 %v8444, %v8443
        %s8446 = scalar_lea.vmem %s14, 64
        %v8447 = vld [vmem:[%s8446] sm:$0xf]
        %v8448 = vld [vmem:[%s8446 + $0x4] sm:$0xf]
        %v8449 = vld [vmem:[%s8446 + $0x8] sm:$0xf]
        %v8450 = vld [vmem:[%s8446 + $0xc] sm:$0xf]
        %v8451 = vld [vmem:[%s8446 + $0x10] sm:$0xf]
        %v8452 = vld [vmem:[%s8446 + $0x14] sm:$0xf]
        %v8453 = vld [vmem:[%s8446 + $0x18] sm:$0xf]
        %v8454 = vld [vmem:[%s8446 + $0x1c] sm:$0xf]
        %v8455 = vld [vmem:[%s8446 + $0x20] sm:$0xf]
        %v8456 = vld [vmem:[%s8446 + $0x24] sm:$0xf]
        %v8457 = vld [vmem:[%s8446 + $0x28] sm:$0xf]
        %v8458 = vld [vmem:[%s8446 + $0x2c] sm:$0xf]
        %v8459 = vld [vmem:[%s8446 + $0x30] sm:$0xf]
        %v8460 = vld [vmem:[%s8446 + $0x34] sm:$0xf]
        %v8461 = vld [vmem:[%s8446 + $0x38] sm:$0xf]
        %v8462 = vld [vmem:[%s8446 + $0x3c] sm:$0xf]
        %s8463 = scalar_lea.vmem %s15, 1
        %v8464 = vld [vmem:[%s8463] sm:$0x1]
        %v8466 = vlaneseq
        %v8467 = vshrl.u32 %v8466, 7
        %v8468 = vsub.s32 0, %v8467
        %v8469 = vrot.slane %v8464, %v8468
        %v8487 = vunpack.c.l.b16 %v8447
        %v8488 = vunpack.c.l.b16 %v8448
        %v8489 = vunpack.c.l.b16 %v8449
        %v8490 = vunpack.c.l.b16 %v8450
        %v8491 = vunpack.c.l.b16 %v8451
        %v8492 = vunpack.c.l.b16 %v8452
        %v8493 = vunpack.c.l.b16 %v8453
        %v8494 = vunpack.c.l.b16 %v8454
        %v8495 = vunpack.c.l.b16 %v8455
        %v8496 = vunpack.c.l.b16 %v8456
        %v8497 = vunpack.c.l.b16 %v8457
        %v8498 = vunpack.c.l.b16 %v8458
        %v8499 = vunpack.c.l.b16 %v8459
        %v8500 = vunpack.c.l.b16 %v8460
        %v8501 = vunpack.c.l.b16 %v8461
        %v8502 = vunpack.c.l.b16 %v8462
        %v8503 = vpack.c.b16 %v8488, %v8487
        %v8504 = vpack.c.b16 %v8490, %v8489
        %v8505 = vpack.c.b16 %v8492, %v8491
        %v8506 = vpack.c.b16 %v8494, %v8493
        %v8507 = vpack.c.b16 %v8496, %v8495
        %v8508 = vpack.c.b16 %v8498, %v8497
        %v8509 = vpack.c.b16 %v8500, %v8499
        %v8510 = vpack.c.b16 %v8502, %v8501
        %8519 = vmatprep.subr.bf16.mxu0 0
        %8520 = vmatpush1.bf16.msra.mxu0 %v8510
        %8521 = vmatprep.subr.bf16.mxu0 0
        %8522 = vmatpush1.bf16.msra.mxu0 %v8509
        %8523 = vmatprep.subr.bf16.mxu0 0
        %8524 = vmatpush1.bf16.msra.mxu0 %v8508
        %8525 = vmatprep.subr.bf16.mxu0 0
        %8526 = vmatpush1.bf16.msra.mxu0 %v8507
        %8527 = vmatprep.subr.bf16.mxu0 0
        %8528 = vmatpush1.bf16.msra.mxu0 %v8506
        %8529 = vmatprep.subr.bf16.mxu0 0
        %8530 = vmatpush1.bf16.msra.mxu0 %v8505
        %8531 = vmatprep.subr.bf16.mxu0 0
        %8532 = vmatpush1.bf16.msra.mxu0 %v8504
        %8533 = vmatprep.subr.bf16.mxu0 0
        %8534 = vmatpush1.bf16.msra.mxu0 %v8503
        %8535 = vmatprep.subr.bf16.mxu0 0
        %8536 = vmatpush2.bf16.msra.mxu0 0
        %8537 = vmatprep.subr.bf16.mxu0 0
        %8538 = vmatpush2.bf16.msra.mxu0 0
        %8539 = vmatprep.subr.bf16.mxu0 0
        %8540 = vmatpush2.bf16.msra.mxu0 0
        %8541 = vmatprep.subr.bf16.mxu0 0
        %8542 = vmatpush2.bf16.msra.mxu0 0
        %8543 = vmatprep.subr.bf16.mxu0 0
        %8544 = vmatpush2.bf16.msra.mxu0 0
        %8545 = vmatprep.subr.bf16.mxu0 0
        %8546 = vmatpush2.bf16.msra.mxu0 0
        %8547 = vmatprep.subr.bf16.mxu0 0
        %8548 = vmatpush2.bf16.msra.mxu0 0
        %8549 = vmatprep.subr.bf16.mxu0 0
        %8550 = vmatpush2.bf16.msra.mxu0 0
        %8551 = vmatprep.mubr.bf16.mxu0 0
        %8552 = vmatmul.mubr.bf16.gmra.mxu0 %v8445
        %v8553 = vpop.f32.mrf.mxu0
        %v8554 = vadd.f32 %v8469, %v8553
        %v8555 = vpop.f32.mrf.mxu0
        %v8556 = vpop.f32.mrf.mxu0
        %v8557 = vadd.f32 %v8469, %v8556
        %v8558 = vpop.f32.mrf.mxu0
        %8559 = vdwg.mxu0
        %v8560 = vadd.f32 %v8295, %v8554
        %v8561 = vadd.f32 %v8296, %v8557
        %v8562 = vld [vmem:[%s16] sm:$0x1]
        %v8563 = vld [vmem:[%s17] sm:$0x1]
        %v8564 = vsel %vm616, %v8560, 0.0
        %8565 = vadd.xlane.f32.xlu0 %v8564
        %v8566 = vpop.xlane.xlu0 %8565
        %v8567 = vsel %vm616, %v8561, 0.0
        %8568 = vadd.xlane.f32.xlu0 %v8567
        %v8569 = vpop.xlane.xlu0 %8568
        %v8570 = vmul.f32 %v8566, %v678
        %v8571 = vmul.f32 %v8569, %v678
        %v8572 = vsub.f32 %v8560, %v8570
        %v8573 = vsub.f32 %v8561, %v8571
        %v8574 = vmul.f32 %v8572, %v8572
        %v8575 = vmul.f32 %v8573, %v8573
        %v8576 = vsel %vm616, %v8574, 0.0
        %8577 = vadd.xlane.f32.xlu0 %v8576
        %v8578 = vpop.xlane.xlu0 %8577
        %v8579 = vsel %vm616, %v8575, 0.0
        %8580 = vadd.xlane.f32.xlu0 %v8579
        %v8581 = vpop.xlane.xlu0 %8580
        %v8582 = vmul.f32 %v8578, %v678
        %v8583 = vmul.f32 %v8581, %v678
        %v8584 = vadd.f32 %v8582, 1e-06
        %v8585 = vadd.f32 %v8583, 1e-06
        %v8586 = vrsqrt.pop %v8584
        %v8587 = vrsqrt.pop %v8585
        %v8588 = vmul.f32 %v8572, %v8586
        %v8589 = vmul.f32 %v8573, %v8587
        %v8591 = vlaneseq
        %v8592 = vshrl.u32 %v8591, 7
        %v8593 = vsub.s32 0, %v8592
        %v8594 = vrot.slane %v8562, %v8593
        %v8596 = vmul.f32 %v8588, %v8594
        %v8597 = vmul.f32 %v8589, %v8594
        %v8599 = vlaneseq
        %v8600 = vshrl.u32 %v8599, 7
        %v8601 = vsub.s32 0, %v8600
        %v8602 = vrot.slane %v8563, %v8601
        %v8604 = vadd.f32 %v8596, %v8602
        %v8605 = vadd.f32 %v8597, %v8602
        %8606 = vst.msk [vmem:[%s568] sm:$0xff] %vm616, %v8604
        %8607 = vst.msk [vmem:[%s568 + $0x8] sm:$0xff] %vm616, %v8605
        %s8608 = sand.u32 %s423, 1
        %s8609 = scalar_lea.sflag [#allocation3], %s8608
        %s8610 = sand.u32 %s423, 1
        %s8611 = smul.addr %s8610, 16
        %s8612 = scalar_lea.vmem [#allocation2], %s8611
        // Predicated region
        $region93: #{siglip_vision_model.1} parent=91 // pred_check
          %p8613 = pneg %p433
        $region94: #{siglip_vision_model.1} parent=91 // pred_check_branch
          %8615 = sbr.rel (%p8613) target = $region96
        $region95: #{siglip_vision_model.1} parent=91 // pred_region
          %s8617 = ssub.s32 256, 256
          %8618 = vsyncadd %s8609, %s8617
          %s8619 = smul.addr %s32, 2
          %s8620 = smul.addr %s8619, 128
          %s8621 = scalar_lea.hbm %s18, %s8620
          %s8622 = sshll.u32 %s8612, 4
          %s8623 = int_to_ptr.vmem [resolvable:$true] %s8622
          %8628 = dma.vmem_to_hbm [thread:$0]  %s8623, 256, %s8621, %s8609, 128, 128, 8
        $region96: #{siglip_vision_model.1} parent=91 // pred_fallthru
          _
      $region92: #{siglip_vision_model.1} parent=5 // pred_fallthru
        _
      %p8629 = scmp.le.s32.totalorder 2, %s27
      // Predicated region
      $region97: #{siglip_vision_model.1} parent=5 // pred_check
        %p8630 = pneg %p8629
      $region98: #{siglip_vision_model.1} parent=5 // pred_check_branch
        %8632 = sbr.rel (%p8630) target = $region100
      $region99: #{siglip_vision_model.1} parent=5 // pred_region
        %s8633 = ssub.s32 %s27, 2
        // Predicated region
        $region101: #{siglip_vision_model.1} parent=99 // pred_check
          %p8634 = pneg %p439
        $region102: #{siglip_vision_model.1} parent=99 // pred_check_branch
          %8636 = sbr.rel (%p8634) target = $region104
        $region103: #{siglip_vision_model.1} parent=99 // pred_region
          %s8637 = sand.u32 %s424, 1
          %s8638 = scalar_lea.sflag [#allocation3], %s8637
          %s8639 = sand.u32 %s424, 1
          %s8640 = smul.addr %s8639, 16
          %s8641 = scalar_lea.vmem [#allocation2], %s8640
          %8642 = dma.done %s8638, 256
        $region104: #{siglip_vision_model.1} parent=99 // pred_fallthru
          _
      $region100: #{siglip_vision_model.1} parent=5 // pred_fallthru
        _
    $region6: #{siglip_vision_model.1} parent=1 // loop_footer
      %s31 = sadd.s32 1, %s27
    $region7: #{siglip_vision_model.1} parent=1 // loop_footer_branch
      %26 = sbr.rel target = $region3
    $region8: #{siglip_vision_model.1} parent=1 // loop_exit
      _
    %8643 = vsyncpa [#allocation3], 1
    %s8644 = scalar_lea.sflag [#allocation3], 1
    %8645 = vsyncpa %s8644, 1

</llo_original>
